<compile_context>
chip_gen: v7x
topology: tpu7x:2x2x1
jax: 0.10.0
libtpu: 0.0.40
codegen_flags: <defaults>
</compile_context>

<pallas_src>
import functools

import jax
import jax.numpy as jnp
from jax.experimental import pallas as pl
from jax.experimental.pallas import tpu as pltpu


# Packed per-layer D-wide vectors (biases / gammas / betas), one (L, 16, D) array.
# row: 0 bq1  1 bk1  2 bv1  3 bo1  4 g1  5 be1
#      6 bq2  7 bk2  8 bv2  9 bo2 10 g2 11 be2
#     12 b_ffn2 13 g3 14 be3 15 pad
_VEC_ROWS = 16


def _device_kind():
    try:
        return jax.devices()[0].device_kind.lower()
    except Exception:
        return ""


def _pick_batch_blocks(batch):
    # v7x has 2 TensorCores (megacore): keep >=2 parallel batch blocks.
    # v5e/v6e are single-TC: splitting only halves M, doubles weight DMA and
    # grid-step overhead, so keep the whole batch in one block.
    kind = _device_kind()
    if "v7" in kind and batch % 2 == 0:
        return 2
    return 1


# ---------------------------------------------------------------------------
# In-kernel helpers (traced inside the Pallas kernel body)
# ---------------------------------------------------------------------------
def _layernorm(x, gamma, beta, eps=1e-12):
    # matches repo LayerNorm: mean / biased var over last dim, eps=1e-12
    mean = jnp.mean(x, axis=-1, keepdims=True)
    var = jnp.mean((x - mean) ** 2, axis=-1, keepdims=True)
    return gamma * ((x - mean) * jax.lax.rsqrt(var + eps)) + beta


def _attention(q, k, v, wo_bf, bo, bias, n_head):
    """Flattened-batch multi-head attention.

    q:(m,D) f32, k/v:(mk,D) f32, wo_bf:(D,D) bf16,
    bias:(m,mk) f32 additive block-diagonal score bias (causal/pad within a
    batch element, -1e9 across batch elements).
    """
    mq, d = q.shape
    dh = d // n_head
    scale = 1.0 / float(dh) ** 0.5
    ctx_heads = []
    # TODO(synk): if T/S grow, switch this static head loop to the batched-head
    # form (or lax.fori_loop(unroll=True)) to bound vreg live ranges.
    for h in range(n_head):
        lo = h * dh
        qh = q[:, lo:lo + dh].astype(jnp.bfloat16)
        kh = k[:, lo:lo + dh].astype(jnp.bfloat16)
        vh = v[:, lo:lo + dh].astype(jnp.bfloat16)
        # lane-dense (m, mk) score tile; f32 accumulation on the MXU
        s = jnp.einsum('md,nd->mn', qh, kh,
                       preferred_element_type=jnp.float32) * scale + bias
        s = s - jnp.max(s, axis=-1, keepdims=True)
        e = jnp.exp(s)
        p = e * pl.reciprocal(jnp.sum(e, axis=-1, keepdims=True), approx=True)
        ctx_heads.append(jnp.dot(p.astype(jnp.bfloat16), vh,
                                 preferred_element_type=jnp.float32))  # (m, dh)
    # heads back on the lane axis -> single K=128 output projection
    ctx = jnp.concatenate(ctx_heads, axis=-1)                           # (m, d)
    return jnp.dot(ctx.astype(jnp.bfloat16), wo_bf,
                   preferred_element_type=jnp.float32) + bo


# ---------------------------------------------------------------------------
# Fused decoder-stack kernel: grid = (batch_blocks, n_layers)
# NOTE: the layer axis MUST stay the innermost (fastest-varying) grid axis;
# the x_sc accumulator relies on it.
# ---------------------------------------------------------------------------
def fused_decoder_kernel(n_head, nb, t, s,
                         x_ref, enc_ref, tbias_ref, sbias_ref,
                         wqkv1_ref, wo1_ref, wq2_ref, wkv2_ref, wo2_ref,
                         wf1_ref, wf2_ref, vecd_ref, vech_ref,
                         out_ref, x_sc):
    l = pl.program_id(1)
    d = x_sc.shape[1]
    m = nb * t
    ms = nb * s

    @pl.when(l == 0)
    def _():
        x_sc[...] = x_ref[...].reshape(m, d)

    x = x_sc[...]                                  # (m, d) f32, resident across layers
    vd = vecd_ref[0]                               # (16, d) biases / gammas / betas
    tbias = tbias_ref[0]                           # (m, m)  flattened self-attn bias
    sbias = sbias_ref[0]                           # (m, ms) flattened cross-attn bias

    # ---- 1) masked self-attention + residual + layernorm -------------------
    qkv = jnp.dot(x.astype(jnp.bfloat16), wqkv1_ref[0],
                  preferred_element_type=jnp.float32)                # (m, 3d)
    q = qkv[:, 0:d] + vd[0:1, :]
    k = qkv[:, d:2 * d] + vd[1:2, :]
    v = qkv[:, 2 * d:3 * d] + vd[2:3, :]
    attn = _attention(q, k, v, wo1_ref[0], vd[3:4, :], tbias, n_head)
    x = _layernorm(attn + x, vd[4:5, :], vd[5:6, :])

    # ---- 2) encoder-decoder attention + residual + layernorm ---------------
    enc2d = enc_ref[...].reshape(ms, d)            # already bf16 (MXU operand only)
    q = jnp.dot(x.astype(jnp.bfloat16), wq2_ref[0],
                preferred_element_type=jnp.float32) + vd[6:7, :]
    kv = jnp.dot(enc2d, wkv2_ref[0], preferred_element_type=jnp.float32)  # (ms, 2d)
    k = kv[:, 0:d] + vd[7:8, :]
    v = kv[:, d:2 * d] + vd[8:9, :]
    attn = _attention(q, k, v, wo2_ref[0], vd[9:10, :], sbias, n_head)
    x = _layernorm(attn + x, vd[10:11, :], vd[11:12, :])

    # ---- 3) position-wise FFN + residual + layernorm ------------------------
    # TODO(synk): dropout1/2/3 are identity (eval-mode semantics)
    h = jnp.dot(x.astype(jnp.bfloat16), wf1_ref[0],
                preferred_element_type=jnp.float32) + vech_ref[0]
    h = jnp.maximum(h, 0.0)
    f = jnp.dot(h.astype(jnp.bfloat16), wf2_ref[0],
                preferred_element_type=jnp.float32) + vd[12:13, :]
    x = _layernorm(f + x, vd[13:14, :], vd[14:15, :])

    x_sc[...] = x

    @pl.when(l == pl.num_programs(1) - 1)
    def _():
        out_ref[...] = x.reshape(nb, t, d)


def decoder_stack(x, enc, tbias, sbias, params, n_head, n_bblk):
    B, T, D = x.shape
    S = enc.shape[1]
    L, _, H = params["wf1"].shape
    Bb = B // n_bblk
    m, ms = Bb * T, Bb * S

    def wspec(shape):
        return pl.BlockSpec((1,) + shape, lambda b, l: (l, 0, 0))

    # NOTE: on v5e (lowest HBM BW, most VMEM headroom) the heavy weight streams
    # (wqkv1/wf1/wf2) can additionally use pipeline_mode=pl.Buffered(3); at
    # production sizes on v7x, tile wf1/wf2 along H via an extra 'arbitrary'
    # grid axis instead of shrinking the batch block.
    in_specs = [
        pl.BlockSpec((Bb, T, D), lambda b, l: (b, 0, 0)),   # embedded trg (f32)
        pl.BlockSpec((Bb, S, D), lambda b, l: (b, 0, 0)),   # enc_src (bf16)
        pl.BlockSpec((1, m, m), lambda b, l: (b, 0, 0)),    # flattened trg-mask bias
        pl.BlockSpec((1, m, ms), lambda b, l: (b, 0, 0)),   # flattened src-mask bias
        wspec((D, 3 * D)),       # wqkv1
        wspec((D, D)),           # wo1
        wspec((D, D)),           # wq2
        wspec((D, 2 * D)),       # wkv2
        wspec((D, D)),           # wo2
        wspec((D, H)),           # wf1
        wspec((H, D)),           # wf2
        wspec((_VEC_ROWS, D)),   # packed D-wide vectors
        wspec((1, H)),           # FFN hidden bias
    ]

    # VMEM budget: ~double-buffered per-layer weight slice + activations + headroom.
    wbytes = 2 * (8 * D * D + 2 * D * H)                         # bf16 weights / layer
    abytes = 3 * Bb * T * D * 4 + Bb * S * D * 2 + (m * m + m * ms) * 4
    vmem_limit = int(min(64 * 2**20, max(16 * 2**20, 3 * wbytes + 4 * abytes + 4 * 2**20)))

    flops = L * (2 * B * T * D * (6 * D) + 4 * B * S * D * D + 4 * B * T * D * H
                 + n_bblk * 4 * D * (m * m + m * ms))
    cost = pl.CostEstimate(
        flops=int(flops),
        transcendentals=int(L * n_head * n_bblk * (m * m + m * ms)),
        bytes_accessed=int(n_bblk * L * wbytes + 3 * B * T * D * 4 + B * S * D * 2
                           + n_bblk * (m * m + m * ms) * 4))

    return pl.pallas_call(
        functools.partial(fused_decoder_kernel, n_head, Bb, T, S),
        out_shape=jax.ShapeDtypeStruct((B, T, D), jnp.float32),
        grid=(n_bblk, L),
        in_specs=in_specs,
        out_specs=pl.BlockSpec((Bb, T, D), lambda b, l: (b, 0, 0)),
        scratch_shapes=[pltpu.VMEM((Bb * T, D), jnp.float32)],
        compiler_params=pltpu.CompilerParams(
            dimension_semantics=("parallel", "arbitrary"),
            vmem_limit_bytes=vmem_limit),
        cost_estimate=cost,
    )(x, enc, tbias, sbias,
      params["wqkv1"], params["wo1"], params["wq2"], params["wkv2"],
      params["wo2"], params["wf1"], params["wf2"],
      params["vec_d"], params["vec_h"])


# ---------------------------------------------------------------------------
# Final linear (tiled over batch blocks and, for large vocabs, vocab tiles)
# ---------------------------------------------------------------------------
def final_linear(x, w_bf, b, n_bblk, v_tile_max=None):
    B, T, D = x.shape
    V = w_bf.shape[1]
    Bb = B // n_bblk
    if v_tile_max is None:
        # v7x has only 64 MiB VMEM -> smaller vocab tile cap
        v_tile_max = 4096 if "v7" in _device_kind() else 8192
    v_tile = V if V <= v_tile_max else v_tile_max
    assert V % v_tile == 0, "vocab size must be divisible by the vocab tile"
    n_vblk = V // v_tile

    def kernel(x_ref, w_ref, b_ref, out_ref):
        xm = x_ref[...].reshape(Bb * T, D).astype(jnp.bfloat16)
        y = jnp.dot(xm, w_ref[...], preferred_element_type=jnp.float32) + b_ref[...]
        out_ref[...] = y.reshape(Bb, T, v_tile)

    cost = pl.CostEstimate(
        flops=int(2 * B * T * D * V),
        transcendentals=0,
        bytes_accessed=int(B * T * D * 4 + n_bblk * D * V * 2 + B * T * V * 4))

    # TODO(synk): emit bf16 logits if downstream allows (halves HBM writeback).
    return pl.pallas_call(
        kernel,
        out_shape=jax.ShapeDtypeStruct((B, T, V), jnp.float32),
        grid=(n_bblk, n_vblk),
        in_specs=[pl.BlockSpec((Bb, T, D), lambda i, j: (i, 0, 0)),
                  pl.BlockSpec((D, v_tile), lambda i, j: (0, j)),
                  pl.BlockSpec((1, v_tile), lambda i, j: (0, j))],
        out_specs=pl.BlockSpec((Bb, T, v_tile), lambda i, j: (i, 0, j)),
        compiler_params=pltpu.CompilerParams(
            dimension_semantics=("parallel", "parallel")),
        cost_estimate=cost,
    )(x, w_bf, b)


# ---------------------------------------------------------------------------
# Parameters / embedding / mask glue
# ---------------------------------------------------------------------------
def sinusoid_pos_encoding(max_len, d_model):
    pos = jnp.arange(max_len, dtype=jnp.float32)[:, None]
    i2 = jnp.arange(0, d_model, 2, dtype=jnp.float32)[None, :]
    angle = pos / jnp.power(10000.0, i2 / d_model)
    enc = jnp.zeros((max_len, d_model), jnp.float32)
    enc = enc.at[:, 0::2].set(jnp.sin(angle))
    enc = enc.at[:, 1::2].set(jnp.cos(angle))
    return enc


def init_decoder_params(key, dec_voc_size, max_len, d_model, ffn_hidden, n_layers):
    D, H, L = d_model, ffn_hidden, n_layers
    ks = iter(jax.random.split(key, 10))

    def w(shape, scale=0.02):
        return (scale * jax.random.normal(next(ks), shape)).astype(jnp.float32)

    emb_table = w((dec_voc_size, D)).at[1].set(0.0)      # padding_idx=1 row is zero
    pos_enc = sinusoid_pos_encoding(max_len, D)

    vec_d = jnp.zeros((L, _VEC_ROWS, D), jnp.float32)
    vec_d = vec_d.at[:, 4].set(1.0).at[:, 10].set(1.0).at[:, 13].set(1.0)  # gammas=1
    vec_h = jnp.zeros((L, 1, H), jnp.float32)

    return {
        "emb_table": emb_table,
        "pos_enc": pos_enc,
        # per-layer MXU weights, stacked over L and stored in bf16
        "wqkv1": w((L, D, 3 * D)).astype(jnp.bfloat16),
        "wo1":   w((L, D, D)).astype(jnp.bfloat16),
        "wq2":   w((L, D, D)).astype(jnp.bfloat16),
        "wkv2":  w((L, D, 2 * D)).astype(jnp.bfloat16),
        "wo2":   w((L, D, D)).astype(jnp.bfloat16),
        "wf1":   w((L, D, H)).astype(jnp.bfloat16),
        "wf2":   w((L, H, D)).astype(jnp.bfloat16),
        "vec_d": vec_d,
        "vec_h": vec_h,
        "out_w": w((D, dec_voc_size)).astype(jnp.bfloat16),
        "out_b": jnp.zeros((1, dec_voc_size), jnp.float32),
    }


def _block_diag_bias(bias, n_bblk, fill=-1e9):
    """(B, Tq, Tk) additive bias -> (n_bblk, Bb*Tq, Bb*Tk) block-diagonal bias."""
    B, Tq, Tk = bias.shape
    Bb = B // n_bblk
    b = bias.reshape(n_bblk, Bb, Tq, Tk)
    eye = jnp.eye(Bb, dtype=bool)                                   # (Bb, Bb)
    full = jnp.where(eye[None, :, None, :, None],                   # (1,Bb,1,Bb,1)
                     b[:, :, :, None, :],                           # (n,Bb,Tq,1,Tk)
                     jnp.float32(fill))
    return full.reshape(n_bblk, Bb * Tq, Bb * Tk).astype(jnp.float32)


def decoder_forward(trg, enc_src, trg_mask, src_mask, params, n_head):
    """trg:(B,T) int ids; enc_src:(B,S,D); trg_mask:(B,1,T,T); src_mask:(B,1,1,S)."""
    B, T = trg.shape
    S = enc_src.shape[1]
    # TransformerEmbedding: token embedding + positional encoding (dropout=identity)
    x = (params["emb_table"][trg] + params["pos_enc"][:T][None]).astype(jnp.float32)

    # precompute masks once as additive score biases (masked_fill(mask==0,-10000) equiv)
    tbias = jnp.where(trg_mask[:, 0] == 0, -10000.0, 0.0).astype(jnp.float32)  # (B,T,T)
    sbias = jnp.where(src_mask[:, 0] == 0, -10000.0, 0.0).astype(jnp.float32)  # (B,1,S)
    sbias = jnp.broadcast_to(sbias, (B, T, S))

    n_bblk = _pick_batch_blocks(B)
    # flatten the batch into the score matmul: block-diagonal additive biases
    tbias_f = _block_diag_bias(tbias, n_bblk)       # (n_bblk, Bb*T, Bb*T)
    sbias_f = _block_diag_bias(sbias, n_bblk)       # (n_bblk, Bb*T, Bb*S)

    x = decoder_stack(x, enc_src.astype(jnp.bfloat16), tbias_f, sbias_f,
                      params, n_head, n_bblk)
    return final_linear(x, params["out_w"], params["out_b"], n_bblk)


# ---------------------------------------------------------------------------
# Pure-JAX f32 reference (PyTorch semantics) for a numerical sanity check
# ---------------------------------------------------------------------------
def _reference_forward(trg, enc_src, trg_mask, src_mask, params, n_head):
    D = params["emb_table"].shape[1]
    B, T = trg.shape
    S = enc_src.shape[1]
    x = params["emb_table"][trg] + params["pos_enc"][:T][None]
    tm = trg_mask[:, 0]
    sm = jnp.broadcast_to(src_mask[:, 0], (B, T, S))

    def ln(x, g, b):
        mu = x.mean(-1, keepdims=True)
        var = ((x - mu) ** 2).mean(-1, keepdims=True)
        return g * (x - mu) / jnp.sqrt(var + 1e-12) + b

    def mha(q_in, kv_in, mask, wq, bq, wk, bk, wv, bv, wo, bo):
        Tq, Tk = q_in.shape[1], kv_in.shape[1]
        dh = D // n_head
        q = (q_in @ wq + bq).reshape(B, Tq, n_head, dh).transpose(0, 2, 1, 3)
        k = (kv_in @ wk + bk).reshape(B, Tk, n_head, dh).transpose(0, 2, 1, 3)
        v = (kv_in @ wv + bv).reshape(B, Tk, n_head, dh).transpose(0, 2, 1, 3)
        s = jnp.einsum('bhqd,bhkd->bhqk', q, k) / float(dh) ** 0.5
        s = jnp.where(mask[:, None] == 0, -10000.0, s)
        p = jax.nn.softmax(s, axis=-1)
        ctx = jnp.einsum('bhqk,bhkd->bhqd', p, v).transpose(0, 2, 1, 3).reshape(B, Tq, D)
        return ctx @ wo + bo

    L = params["wqkv1"].shape[0]
    for l in range(L):
        wqkv1 = params["wqkv1"][l].astype(jnp.float32)
        wo1 = params["wo1"][l].astype(jnp.float32)
        wq2 = params["wq2"][l].astype(jnp.float32)
        wkv2 = params["wkv2"][l].astype(jnp.float32)
        wo2 = params["wo2"][l].astype(jnp.float32)
        wf1 = params["wf1"][l].astype(jnp.float32)
        wf2 = params["wf2"][l].astype(jnp.float32)
        vd, vh = params["vec_d"][l], params["vec_h"][l]
        a = mha(x, x, tm, wqkv1[:, :D], vd[0], wqkv1[:, D:2 * D], vd[1],
                wqkv1[:, 2 * D:], vd[2], wo1, vd[3])
        x = ln(a + x, vd[4], vd[5])
        a = mha(x, enc_src, sm, wq2, vd[6], wkv2[:, :D], vd[7],
                wkv2[:, D:], vd[8], wo2, vd[9])
        x = ln(a + x, vd[10], vd[11])
        f = jnp.maximum(x @ wf1 + vh[0], 0.0) @ wf2 + vd[12]
        x = ln(f + x, vd[13], vd[14])
    return x @ params["out_w"].astype(jnp.float32) + params["out_b"]


# ---------------------------------------------------------------------------
if __name__ == "__main__":
    B, T, S = 16, 8, 8
    D, H, NH, L = 128, 256, 4, 3
    V, MAX_LEN, PAD = 128, 16, 1

    key = jax.random.PRNGKey(0)
    kp, kt, ke = jax.random.split(key, 3)

    params = init_decoder_params(kp, V, MAX_LEN, D, H, L)

    trg = jax.random.randint(kt, (B, T), 2, V).astype(jnp.int32)
    trg = trg.at[:, -1].set(PAD)                                  # exercise pad masking
    enc_src = (0.1 * jax.random.normal(ke, (B, S, D))).astype(jnp.float32)

    trg_pad_mask = (trg != PAD)[:, None, None, :]                 # (B,1,1,T)
    causal = jnp.tril(jnp.ones((T, T), dtype=bool))[None, None]   # (1,1,T,T)
    trg_mask = (trg_pad_mask & causal).astype(jnp.float32)        # (B,1,T,T)
    src_mask = jnp.ones((B, 1, 1, S), jnp.float32)                # (B,1,1,S)

    out = decoder_forward(trg, enc_src, trg_mask, src_mask, params, NH)
    out = jax.block_until_ready(out)

    assert out.shape == (B, T, V), out.shape
    assert bool(jnp.all(jnp.isfinite(out)))

    ref = _reference_forward(trg, enc_src, trg_mask, src_mask, params, NH)
    max_err = float(jnp.max(jnp.abs(out - ref)))
    assert max_err < 5e-2, f"max abs error vs f32 reference: {max_err}"

    print("KERNEL_OK")
</pallas_src>

<mosaic_0001>
module attributes {stable_mosaic.version = 11 : i64} {
  func.func @fused_decoder_kernel(%arg0: i32, %arg1: i32, %arg2: memref<16x8x128xf32, #tpu.memory_space<vmem>>, %arg3: memref<16x8x128xbf16, #tpu.memory_space<vmem>>, %arg4: memref<1x128x128xf32, #tpu.memory_space<vmem>>, %arg5: memref<1x128x128xf32, #tpu.memory_space<vmem>>, %arg6: memref<1x128x384xbf16, #tpu.memory_space<vmem>>, %arg7: memref<1x128x128xbf16, #tpu.memory_space<vmem>>, %arg8: memref<1x128x128xbf16, #tpu.memory_space<vmem>>, %arg9: memref<1x128x256xbf16, #tpu.memory_space<vmem>>, %arg10: memref<1x128x128xbf16, #tpu.memory_space<vmem>>, %arg11: memref<1x128x256xbf16, #tpu.memory_space<vmem>>, %arg12: memref<1x256x128xbf16, #tpu.memory_space<vmem>>, %arg13: memref<1x16x128xf32, #tpu.memory_space<vmem>>, %arg14: memref<1x1x256xf32, #tpu.memory_space<vmem>>, %arg15: memref<16x8x128xf32, #tpu.memory_space<vmem>>, %arg16: memref<128x128xf32, #tpu.memory_space<vmem>>) attributes {dimension_semantics = [#tpu.dimension_semantics<parallel>, #tpu.dimension_semantics<arbitrary>], iteration_bounds = array<i64: 1, 3>, scalar_prefetch = 0 : i64, scratch_operands = 1 : i64, tpu.core_type = #tpu.core_type<tc>, window_params = [{transform_indices = @transform_0, window_bounds = array<i64: 16, 8, 128>}, {transform_indices = @transform_1, window_bounds = array<i64: 16, 8, 128>}, {transform_indices = @transform_2, window_bounds = array<i64: 1, 128, 128>}, {transform_indices = @transform_3, window_bounds = array<i64: 1, 128, 128>}, {transform_indices = @transform_4, window_bounds = array<i64: 1, 128, 384>}, {transform_indices = @transform_5, window_bounds = array<i64: 1, 128, 128>}, {transform_indices = @transform_6, window_bounds = array<i64: 1, 128, 128>}, {transform_indices = @transform_7, window_bounds = array<i64: 1, 128, 256>}, {transform_indices = @transform_8, window_bounds = array<i64: 1, 128, 128>}, {transform_indices = @transform_9, window_bounds = array<i64: 1, 128, 256>}, {transform_indices = @transform_10, window_bounds = array<i64: 1, 256, 128>}, {transform_indices = @transform_11, window_bounds = array<i64: 1, 16, 128>}, {transform_indices = @transform_12, window_bounds = array<i64: 1, 1, 256>}, {transform_indices = @transform_13, window_bounds = array<i64: 16, 8, 128>}]} {
    %c0_i32 = arith.constant 0 : i32
    %0 = arith.cmpi eq, %arg1, %c0_i32 : i32
    %1 = arith.extui %0 : i1 to i32
    %c0_i32_0 = arith.constant 0 : i32
    %2 = arith.cmpi ne, %1, %c0_i32_0 : i32
    scf.if %2 {
      %c0_103 = arith.constant 0 : index
      %c0_104 = arith.constant 0 : index
      %c0_105 = arith.constant 0 : index
      %334 = vector.load %arg2[%c0_103, %c0_104, %c0_105] : memref<16x8x128xf32, #tpu.memory_space<vmem>>, vector<16x8x128xf32>
      %335 = vector.shape_cast %334 : vector<16x8x128xf32> to vector<128x128xf32>
      %c0_106 = arith.constant 0 : index
      %c0_107 = arith.constant 0 : index
      %336 = vector.load %arg16[%c0_106, %c0_107] : memref<128x128xf32, #tpu.memory_space<vmem>>, vector<128x128xf32>
      tpu.vector_store %arg16[%c0_106, %c0_107], %335 {strides = array<i32>} : memref<128x128xf32, #tpu.memory_space<vmem>>, vector<128x128xf32>,
    } else {
    }
    %c0 = arith.constant 0 : index
    %c0_1 = arith.constant 0 : index
    %3 = vector.load %arg16[%c0, %c0_1] : memref<128x128xf32, #tpu.memory_space<vmem>>, vector<128x128xf32>
    %c0_2 = arith.constant 0 : index
    %c0_3 = arith.constant 0 : index
    %c0_4 = arith.constant 0 : index
    %4 = vector.load %arg13[%c0_2, %c0_3, %c0_4] : memref<1x16x128xf32, #tpu.memory_space<vmem>>, vector<1x16x128xf32>
    %5 = vector.shape_cast %4 : vector<1x16x128xf32> to vector<16x128xf32>
    %c0_5 = arith.constant 0 : index
    %c0_6 = arith.constant 0 : index
    %c0_7 = arith.constant 0 : index
    %6 = vector.load %arg4[%c0_5, %c0_6, %c0_7] : memref<1x128x128xf32, #tpu.memory_space<vmem>>, vector<1x128x128xf32>
    %7 = vector.shape_cast %6 : vector<1x128x128xf32> to vector<128x128xf32>
    %c0_8 = arith.constant 0 : index
    %c0_9 = arith.constant 0 : index
    %c0_10 = arith.constant 0 : index
    %8 = vector.load %arg5[%c0_8, %c0_9, %c0_10] : memref<1x128x128xf32, #tpu.memory_space<vmem>>, vector<1x128x128xf32>
    %9 = vector.shape_cast %8 : vector<1x128x128xf32> to vector<128x128xf32>
    %10 = arith.truncf %3 : vector<128x128xf32> to vector<128x128xbf16>
    %c0_11 = arith.constant 0 : index
    %c0_12 = arith.constant 0 : index
    %c0_13 = arith.constant 0 : index
    %11 = vector.load %arg6[%c0_11, %c0_12, %c0_13] : memref<1x128x384xbf16, #tpu.memory_space<vmem>>, vector<1x128x384xbf16>
    %12 = vector.shape_cast %11 : vector<1x128x384xbf16> to vector<128x384xbf16>
    %cst = arith.constant dense<0.000000e+00> : vector<128x384xf32>
    %13 = tpu.matmul %10, %12, %cst {dimension_numbers = #tpu.dot_dimension_numbers<[1], [0], [0], [1], [0, 0, 1, 1], [], []>} : vector<128x128xbf16>, vector<128x384xbf16>, vector<128x384xf32> -> vector<128x384xf32>
    %14 = vector.extract_strided_slice %13 {offsets = [0, 0], sizes = [128, 128], strides = [1, 1]} : vector<128x384xf32> to vector<128x128xf32>
    %15 = vector.extract_strided_slice %5 {offsets = [0, 0], sizes = [1, 128], strides = [1, 1]} : vector<16x128xf32> to vector<1x128xf32>
    %16 = vector.broadcast %15 : vector<1x128xf32> to vector<128x128xf32>
    %17 = arith.addf %14, %16 : vector<128x128xf32>
    %18 = vector.extract_strided_slice %13 {offsets = [0, 128], sizes = [128, 128], strides = [1, 1]} : vector<128x384xf32> to vector<128x128xf32>
    %19 = vector.extract_strided_slice %5 {offsets = [1, 0], sizes = [1, 128], strides = [1, 1]} : vector<16x128xf32> to vector<1x128xf32>
    %20 = vector.broadcast %19 : vector<1x128xf32> to vector<128x128xf32>
    %21 = arith.addf %18, %20 : vector<128x128xf32>
    %22 = vector.extract_strided_slice %13 {offsets = [0, 256], sizes = [128, 128], strides = [1, 1]} : vector<128x384xf32> to vector<128x128xf32>
    %23 = vector.extract_strided_slice %5 {offsets = [2, 0], sizes = [1, 128], strides = [1, 1]} : vector<16x128xf32> to vector<1x128xf32>
    %24 = vector.broadcast %23 : vector<1x128xf32> to vector<128x128xf32>
    %25 = arith.addf %22, %24 : vector<128x128xf32>
    %c0_14 = arith.constant 0 : index
    %c0_15 = arith.constant 0 : index
    %c0_16 = arith.constant 0 : index
    %26 = vector.load %arg7[%c0_14, %c0_15, %c0_16] : memref<1x128x128xbf16, #tpu.memory_space<vmem>>, vector<1x128x128xbf16>
    %27 = vector.shape_cast %26 : vector<1x128x128xbf16> to vector<128x128xbf16>
    %28 = vector.extract_strided_slice %5 {offsets = [3, 0], sizes = [1, 128], strides = [1, 1]} : vector<16x128xf32> to vector<1x128xf32>
    %29 = vector.extract_strided_slice %17 {offsets = [0, 0], sizes = [128, 32], strides = [1, 1]} : vector<128x128xf32> to vector<128x32xf32>
    %30 = arith.truncf %29 : vector<128x32xf32> to vector<128x32xbf16>
    %31 = vector.extract_strided_slice %21 {offsets = [0, 0], sizes = [128, 32], strides = [1, 1]} : vector<128x128xf32> to vector<128x32xf32>
    %32 = arith.truncf %31 : vector<128x32xf32> to vector<128x32xbf16>
    %33 = vector.extract_strided_slice %25 {offsets = [0, 0], sizes = [128, 32], strides = [1, 1]} : vector<128x128xf32> to vector<128x32xf32>
    %34 = arith.truncf %33 : vector<128x32xf32> to vector<128x32xbf16>
    "tpu.trace_start"() <{level = 10 : i32, message = "md,nd->mn"}> : () -> ()
    %cst_17 = arith.constant dense<0.000000e+00> : vector<128x128xf32>
    %35 = tpu.matmul %30, %32, %cst_17 {dimension_numbers = #tpu.dot_dimension_numbers<[1], [1], [0], [0], [0, 0, 1, 0], [], []>} : vector<128x32xbf16>, vector<128x32xbf16>, vector<128x128xf32> -> vector<128x128xf32>
    "tpu.trace_stop"() : () -> ()
    %cst_18 = arith.constant 0.176776692 : f32
    %36 = vector.broadcast %cst_18 : f32 to vector<128x128xf32>
    %37 = arith.mulf %35, %36 : vector<128x128xf32>
    %38 = arith.addf %37, %7 : vector<128x128xf32>
    %cst_19 = arith.constant dense<0xFF800000> : vector<128xf32>
    %39 = vector.multi_reduction <maximumf>, %38, %cst_19 [1] : vector<128x128xf32> to vector<128xf32>
    %40 = vector.shape_cast %39 : vector<128xf32> to vector<128x1xf32>
    %41 = vector.broadcast %40 : vector<128x1xf32> to vector<128x128xf32>
    %42 = arith.subf %38, %41 : vector<128x128xf32>
    %43 = math.exp %42 : vector<128x128xf32>
    %cst_20 = arith.constant dense<0.000000e+00> : vector<128xf32>
    %44 = vector.multi_reduction <add>, %43, %cst_20 [1] : vector<128x128xf32> to vector<128xf32>
    %45 = vector.shape_cast %44 : vector<128xf32> to vector<128x1xf32>
    %46 = tpu.reciprocal %45 {approx = true} : vector<128x1xf32> -> vector<128x1xf32>
    %47 = vector.broadcast %46 : vector<128x1xf32> to vector<128x128xf32>
    %48 = arith.mulf %43, %47 : vector<128x128xf32>
    %49 = arith.truncf %48 : vector<128x128xf32> to vector<128x128xbf16>
    %cst_21 = arith.constant dense<0.000000e+00> : vector<128x32xf32>
    %50 = tpu.matmul %49, %34, %cst_21 {dimension_numbers = #tpu.dot_dimension_numbers<[1], [0], [0], [1], [0, 0, 1, 1], [], []>} : vector<128x128xbf16>, vector<128x32xbf16>, vector<128x32xf32> -> vector<128x32xf32>
    %51 = vector.extract_strided_slice %17 {offsets = [0, 32], sizes = [128, 32], strides = [1, 1]} : vector<128x128xf32> to vector<128x32xf32>
    %52 = arith.truncf %51 : vector<128x32xf32> to vector<128x32xbf16>
    %53 = vector.extract_strided_slice %21 {offsets = [0, 32], sizes = [128, 32], strides = [1, 1]} : vector<128x128xf32> to vector<128x32xf32>
    %54 = arith.truncf %53 : vector<128x32xf32> to vector<128x32xbf16>
    %55 = vector.extract_strided_slice %25 {offsets = [0, 32], sizes = [128, 32], strides = [1, 1]} : vector<128x128xf32> to vector<128x32xf32>
    %56 = arith.truncf %55 : vector<128x32xf32> to vector<128x32xbf16>
    "tpu.trace_start"() <{level = 10 : i32, message = "md,nd->mn"}> : () -> ()
    %cst_22 = arith.constant dense<0.000000e+00> : vector<128x128xf32>
    %57 = tpu.matmul %52, %54, %cst_22 {dimension_numbers = #tpu.dot_dimension_numbers<[1], [1], [0], [0], [0, 0, 1, 0], [], []>} : vector<128x32xbf16>, vector<128x32xbf16>, vector<128x128xf32> -> vector<128x128xf32>
    "tpu.trace_stop"() : () -> ()
    %cst_23 = arith.constant 0.176776692 : f32
    %58 = vector.broadcast %cst_23 : f32 to vector<128x128xf32>
    %59 = arith.mulf %57, %58 : vector<128x128xf32>
    %60 = arith.addf %59, %7 : vector<128x128xf32>
    %cst_24 = arith.constant dense<0xFF800000> : vector<128xf32>
    %61 = vector.multi_reduction <maximumf>, %60, %cst_24 [1] : vector<128x128xf32> to vector<128xf32>
    %62 = vector.shape_cast %61 : vector<128xf32> to vector<128x1xf32>
    %63 = vector.broadcast %62 : vector<128x1xf32> to vector<128x128xf32>
    %64 = arith.subf %60, %63 : vector<128x128xf32>
    %65 = math.exp %64 : vector<128x128xf32>
    %cst_25 = arith.constant dense<0.000000e+00> : vector<128xf32>
    %66 = vector.multi_reduction <add>, %65, %cst_25 [1] : vector<128x128xf32> to vector<128xf32>
    %67 = vector.shape_cast %66 : vector<128xf32> to vector<128x1xf32>
    %68 = tpu.reciprocal %67 {approx = true} : vector<128x1xf32> -> vector<128x1xf32>
    %69 = vector.broadcast %68 : vector<128x1xf32> to vector<128x128xf32>
    %70 = arith.mulf %65, %69 : vector<128x128xf32>
    %71 = arith.truncf %70 : vector<128x128xf32> to vector<128x128xbf16>
    %cst_26 = arith.constant dense<0.000000e+00> : vector<128x32xf32>
    %72 = tpu.matmul %71, %56, %cst_26 {dimension_numbers = #tpu.dot_dimension_numbers<[1], [0], [0], [1], [0, 0, 1, 1], [], []>} : vector<128x128xbf16>, vector<128x32xbf16>, vector<128x32xf32> -> vector<128x32xf32>
    %73 = vector.extract_strided_slice %17 {offsets = [0, 64], sizes = [128, 32], strides = [1, 1]} : vector<128x128xf32> to vector<128x32xf32>
    %74 = arith.truncf %73 : vector<128x32xf32> to vector<128x32xbf16>
    %75 = vector.extract_strided_slice %21 {offsets = [0, 64], sizes = [128, 32], strides = [1, 1]} : vector<128x128xf32> to vector<128x32xf32>
    %76 = arith.truncf %75 : vector<128x32xf32> to vector<128x32xbf16>
    %77 = vector.extract_strided_slice %25 {offsets = [0, 64], sizes = [128, 32], strides = [1, 1]} : vector<128x128xf32> to vector<128x32xf32>
    %78 = arith.truncf %77 : vector<128x32xf32> to vector<128x32xbf16>
    "tpu.trace_start"() <{level = 10 : i32, message = "md,nd->mn"}> : () -> ()
    %cst_27 = arith.constant dense<0.000000e+00> : vector<128x128xf32>
    %79 = tpu.matmul %74, %76, %cst_27 {dimension_numbers = #tpu.dot_dimension_numbers<[1], [1], [0], [0], [0, 0, 1, 0], [], []>} : vector<128x32xbf16>, vector<128x32xbf16>, vector<128x128xf32> -> vector<128x128xf32>
    "tpu.trace_stop"() : () -> ()
    %cst_28 = arith.constant 0.176776692 : f32
    %80 = vector.broadcast %cst_28 : f32 to vector<128x128xf32>
    %81 = arith.mulf %79, %80 : vector<128x128xf32>
    %82 = arith.addf %81, %7 : vector<128x128xf32>
    %cst_29 = arith.constant dense<0xFF800000> : vector<128xf32>
    %83 = vector.multi_reduction <maximumf>, %82, %cst_29 [1] : vector<128x128xf32> to vector<128xf32>
    %84 = vector.shape_cast %83 : vector<128xf32> to vector<128x1xf32>
    %85 = vector.broadcast %84 : vector<128x1xf32> to vector<128x128xf32>
    %86 = arith.subf %82, %85 : vector<128x128xf32>
    %87 = math.exp %86 : vector<128x128xf32>
    %cst_30 = arith.constant dense<0.000000e+00> : vector<128xf32>
    %88 = vector.multi_reduction <add>, %87, %cst_30 [1] : vector<128x128xf32> to vector<128xf32>
    %89 = vector.shape_cast %88 : vector<128xf32> to vector<128x1xf32>
    %90 = tpu.reciprocal %89 {approx = true} : vector<128x1xf32> -> vector<128x1xf32>
    %91 = vector.broadcast %90 : vector<128x1xf32> to vector<128x128xf32>
    %92 = arith.mulf %87, %91 : vector<128x128xf32>
    %93 = arith.truncf %92 : vector<128x128xf32> to vector<128x128xbf16>
    %cst_31 = arith.constant dense<0.000000e+00> : vector<128x32xf32>
    %94 = tpu.matmul %93, %78, %cst_31 {dimension_numbers = #tpu.dot_dimension_numbers<[1], [0], [0], [1], [0, 0, 1, 1], [], []>} : vector<128x128xbf16>, vector<128x32xbf16>, vector<128x32xf32> -> vector<128x32xf32>
    %95 = vector.extract_strided_slice %17 {offsets = [0, 96], sizes = [128, 32], strides = [1, 1]} : vector<128x128xf32> to vector<128x32xf32>
    %96 = arith.truncf %95 : vector<128x32xf32> to vector<128x32xbf16>
    %97 = vector.extract_strided_slice %21 {offsets = [0, 96], sizes = [128, 32], strides = [1, 1]} : vector<128x128xf32> to vector<128x32xf32>
    %98 = arith.truncf %97 : vector<128x32xf32> to vector<128x32xbf16>
    %99 = vector.extract_strided_slice %25 {offsets = [0, 96], sizes = [128, 32], strides = [1, 1]} : vector<128x128xf32> to vector<128x32xf32>
    %100 = arith.truncf %99 : vector<128x32xf32> to vector<128x32xbf16>
    "tpu.trace_start"() <{level = 10 : i32, message = "md,nd->mn"}> : () -> ()
    %cst_32 = arith.constant dense<0.000000e+00> : vector<128x128xf32>
    %101 = tpu.matmul %96, %98, %cst_32 {dimension_numbers = #tpu.dot_dimension_numbers<[1], [1], [0], [0], [0, 0, 1, 0], [], []>} : vector<128x32xbf16>, vector<128x32xbf16>, vector<128x128xf32> -> vector<128x128xf32>
    "tpu.trace_stop"() : () -> ()
    %cst_33 = arith.constant 0.176776692 : f32
    %102 = vector.broadcast %cst_33 : f32 to vector<128x128xf32>
    %103 = arith.mulf %101, %102 : vector<128x128xf32>
    %104 = arith.addf %103, %7 : vector<128x128xf32>
    %cst_34 = arith.constant dense<0xFF800000> : vector<128xf32>
    %105 = vector.multi_reduction <maximumf>, %104, %cst_34 [1] : vector<128x128xf32> to vector<128xf32>
    %106 = vector.shape_cast %105 : vector<128xf32> to vector<128x1xf32>
    %107 = vector.broadcast %106 : vector<128x1xf32> to vector<128x128xf32>
    %108 = arith.subf %104, %107 : vector<128x128xf32>
    %109 = math.exp %108 : vector<128x128xf32>
    %cst_35 = arith.constant dense<0.000000e+00> : vector<128xf32>
    %110 = vector.multi_reduction <add>, %109, %cst_35 [1] : vector<128x128xf32> to vector<128xf32>
    %111 = vector.shape_cast %110 : vector<128xf32> to vector<128x1xf32>
    %112 = tpu.reciprocal %111 {approx = true} : vector<128x1xf32> -> vector<128x1xf32>
    %113 = vector.broadcast %112 : vector<128x1xf32> to vector<128x128xf32>
    %114 = arith.mulf %109, %113 : vector<128x128xf32>
    %115 = arith.truncf %114 : vector<128x128xf32> to vector<128x128xbf16>
    %cst_36 = arith.constant dense<0.000000e+00> : vector<128x32xf32>
    %116 = tpu.matmul %115, %100, %cst_36 {dimension_numbers = #tpu.dot_dimension_numbers<[1], [0], [0], [1], [0, 0, 1, 1], [], []>} : vector<128x128xbf16>, vector<128x32xbf16>, vector<128x32xf32> -> vector<128x32xf32>
    %117 = tpu.concatenate %50, %72, %94, %116 in 1 : vector<128x32xf32>, vector<128x32xf32>, vector<128x32xf32>, vector<128x32xf32> -> vector<128x128xf32>
    %118 = arith.truncf %117 : vector<128x128xf32> to vector<128x128xbf16>
    %cst_37 = arith.constant dense<0.000000e+00> : vector<128x128xf32>
    %119 = tpu.matmul %118, %27, %cst_37 {dimension_numbers = #tpu.dot_dimension_numbers<[1], [0], [0], [1], [0, 0, 1, 1], [], []>} : vector<128x128xbf16>, vector<128x128xbf16>, vector<128x128xf32> -> vector<128x128xf32>
    %120 = vector.broadcast %28 : vector<1x128xf32> to vector<128x128xf32>
    %121 = arith.addf %119, %120 : vector<128x128xf32>
    %122 = arith.addf %121, %3 : vector<128x128xf32>
    %123 = vector.extract_strided_slice %5 {offsets = [4, 0], sizes = [1, 128], strides = [1, 1]} : vector<16x128xf32> to vector<1x128xf32>
    %124 = vector.extract_strided_slice %5 {offsets = [5, 0], sizes = [1, 128], strides = [1, 1]} : vector<16x128xf32> to vector<1x128xf32>
    %cst_38 = arith.constant dense<0.000000e+00> : vector<128xf32>
    %125 = vector.multi_reduction <add>, %122, %cst_38 [1] : vector<128x128xf32> to vector<128xf32>
    %126 = vector.shape_cast %125 : vector<128xf32> to vector<128x1xf32>
    %cst_39 = arith.constant 1.280000e+02 : f32
    %127 = vector.broadcast %cst_39 : f32 to vector<128x1xf32>
    %128 = arith.divf %126, %127 : vector<128x1xf32>
    %129 = vector.broadcast %128 : vector<128x1xf32> to vector<128x128xf32>
    %130 = arith.subf %122, %129 : vector<128x128xf32>
    %131 = arith.mulf %130, %130 : vector<128x128xf32>
    %cst_40 = arith.constant dense<0.000000e+00> : vector<128xf32>
    %132 = vector.multi_reduction <add>, %131, %cst_40 [1] : vector<128x128xf32> to vector<128xf32>
    %133 = vector.shape_cast %132 : vector<128xf32> to vector<128x1xf32>
    %cst_41 = arith.constant 1.280000e+02 : f32
    %134 = vector.broadcast %cst_41 : f32 to vector<128x1xf32>
    %135 = arith.divf %133, %134 : vector<128x1xf32>
    %136 = vector.broadcast %128 : vector<128x1xf32> to vector<128x128xf32>
    %137 = arith.subf %122, %136 : vector<128x128xf32>
    %cst_42 = arith.constant 9.99999996E-13 : f32
    %138 = vector.broadcast %cst_42 : f32 to vector<128x1xf32>
    %139 = arith.addf %135, %138 : vector<128x1xf32>
    %140 = math.rsqrt %139 : vector<128x1xf32>
    %141 = vector.broadcast %140 : vector<128x1xf32> to vector<128x128xf32>
    %142 = arith.mulf %137, %141 : vector<128x128xf32>
    %143 = vector.broadcast %123 : vector<1x128xf32> to vector<128x128xf32>
    %144 = arith.mulf %143, %142 : vector<128x128xf32>
    %145 = vector.broadcast %124 : vector<1x128xf32> to vector<128x128xf32>
    %146 = arith.addf %144, %145 : vector<128x128xf32>
    %c0_43 = arith.constant 0 : index
    %c0_44 = arith.constant 0 : index
    %c0_45 = arith.constant 0 : index
    %147 = vector.load %arg3[%c0_43, %c0_44, %c0_45] : memref<16x8x128xbf16, #tpu.memory_space<vmem>>, vector<16x8x128xbf16>
    %148 = vector.shape_cast %147 : vector<16x8x128xbf16> to vector<128x128xbf16>
    %149 = arith.truncf %146 : vector<128x128xf32> to vector<128x128xbf16>
    %c0_46 = arith.constant 0 : index
    %c0_47 = arith.constant 0 : index
    %c0_48 = arith.constant 0 : index
    %150 = vector.load %arg8[%c0_46, %c0_47, %c0_48] : memref<1x128x128xbf16, #tpu.memory_space<vmem>>, vector<1x128x128xbf16>
    %151 = vector.shape_cast %150 : vector<1x128x128xbf16> to vector<128x128xbf16>
    %cst_49 = arith.constant dense<0.000000e+00> : vector<128x128xf32>
    %152 = tpu.matmul %149, %151, %cst_49 {dimension_numbers = #tpu.dot_dimension_numbers<[1], [0], [0], [1], [0, 0, 1, 1], [], []>} : vector<128x128xbf16>, vector<128x128xbf16>, vector<128x128xf32> -> vector<128x128xf32>
    %153 = vector.extract_strided_slice %5 {offsets = [6, 0], sizes = [1, 128], strides = [1, 1]} : vector<16x128xf32> to vector<1x128xf32>
    %154 = vector.broadcast %153 : vector<1x128xf32> to vector<128x128xf32>
    %155 = arith.addf %152, %154 : vector<128x128xf32>
    %c0_50 = arith.constant 0 : index
    %c0_51 = arith.constant 0 : index
    %c0_52 = arith.constant 0 : index
    %156 = vector.load %arg9[%c0_50, %c0_51, %c0_52] : memref<1x128x256xbf16, #tpu.memory_space<vmem>>, vector<1x128x256xbf16>
    %157 = vector.shape_cast %156 : vector<1x128x256xbf16> to vector<128x256xbf16>
    %cst_53 = arith.constant dense<0.000000e+00> : vector<128x256xf32>
    %158 = tpu.matmul %148, %157, %cst_53 {dimension_numbers = #tpu.dot_dimension_numbers<[1], [0], [0], [1], [0, 0, 1, 1], [], []>} : vector<128x128xbf16>, vector<128x256xbf16>, vector<128x256xf32> -> vector<128x256xf32>
    %159 = vector.extract_strided_slice %158 {offsets = [0, 0], sizes = [128, 128], strides = [1, 1]} : vector<128x256xf32> to vector<128x128xf32>
    %160 = vector.extract_strided_slice %5 {offsets = [7, 0], sizes = [1, 128], strides = [1, 1]} : vector<16x128xf32> to vector<1x128xf32>
    %161 = vector.broadcast %160 : vector<1x128xf32> to vector<128x128xf32>
    %162 = arith.addf %159, %161 : vector<128x128xf32>
    %163 = vector.extract_strided_slice %158 {offsets = [0, 128], sizes = [128, 128], strides = [1, 1]} : vector<128x256xf32> to vector<128x128xf32>
    %164 = vector.extract_strided_slice %5 {offsets = [8, 0], sizes = [1, 128], strides = [1, 1]} : vector<16x128xf32> to vector<1x128xf32>
    %165 = vector.broadcast %164 : vector<1x128xf32> to vector<128x128xf32>
    %166 = arith.addf %163, %165 : vector<128x128xf32>
    %c0_54 = arith.constant 0 : index
    %c0_55 = arith.constant 0 : index
    %c0_56 = arith.constant 0 : index
    %167 = vector.load %arg10[%c0_54, %c0_55, %c0_56] : memref<1x128x128xbf16, #tpu.memory_space<vmem>>, vector<1x128x128xbf16>
    %168 = vector.shape_cast %167 : vector<1x128x128xbf16> to vector<128x128xbf16>
    %169 = vector.extract_strided_slice %5 {offsets = [9, 0], sizes = [1, 128], strides = [1, 1]} : vector<16x128xf32> to vector<1x128xf32>
    %170 = vector.extract_strided_slice %155 {offsets = [0, 0], sizes = [128, 32], strides = [1, 1]} : vector<128x128xf32> to vector<128x32xf32>
    %171 = arith.truncf %170 : vector<128x32xf32> to vector<128x32xbf16>
    %172 = vector.extract_strided_slice %162 {offsets = [0, 0], sizes = [128, 32], strides = [1, 1]} : vector<128x128xf32> to vector<128x32xf32>
    %173 = arith.truncf %172 : vector<128x32xf32> to vector<128x32xbf16>
    %174 = vector.extract_strided_slice %166 {offsets = [0, 0], sizes = [128, 32], strides = [1, 1]} : vector<128x128xf32> to vector<128x32xf32>
    %175 = arith.truncf %174 : vector<128x32xf32> to vector<128x32xbf16>
    "tpu.trace_start"() <{level = 10 : i32, message = "md,nd->mn"}> : () -> ()
    %cst_57 = arith.constant dense<0.000000e+00> : vector<128x128xf32>
    %176 = tpu.matmul %171, %173, %cst_57 {dimension_numbers = #tpu.dot_dimension_numbers<[1], [1], [0], [0], [0, 0, 1, 0], [], []>} : vector<128x32xbf16>, vector<128x32xbf16>, vector<128x128xf32> -> vector<128x128xf32>
    "tpu.trace_stop"() : () -> ()
    %cst_58 = arith.constant 0.176776692 : f32
    %177 = vector.broadcast %cst_58 : f32 to vector<128x128xf32>
    %178 = arith.mulf %176, %177 : vector<128x128xf32>
    %179 = arith.addf %178, %9 : vector<128x128xf32>
    %cst_59 = arith.constant dense<0xFF800000> : vector<128xf32>
    %180 = vector.multi_reduction <maximumf>, %179, %cst_59 [1] : vector<128x128xf32> to vector<128xf32>
    %181 = vector.shape_cast %180 : vector<128xf32> to vector<128x1xf32>
    %182 = vector.broadcast %181 : vector<128x1xf32> to vector<128x128xf32>
    %183 = arith.subf %179, %182 : vector<128x128xf32>
    %184 = math.exp %183 : vector<128x128xf32>
    %cst_60 = arith.constant dense<0.000000e+00> : vector<128xf32>
    %185 = vector.multi_reduction <add>, %184, %cst_60 [1] : vector<128x128xf32> to vector<128xf32>
    %186 = vector.shape_cast %185 : vector<128xf32> to vector<128x1xf32>
    %187 = tpu.reciprocal %186 {approx = true} : vector<128x1xf32> -> vector<128x1xf32>
    %188 = vector.broadcast %187 : vector<128x1xf32> to vector<128x128xf32>
    %189 = arith.mulf %184, %188 : vector<128x128xf32>
    %190 = arith.truncf %189 : vector<128x128xf32> to vector<128x128xbf16>
    %cst_61 = arith.constant dense<0.000000e+00> : vector<128x32xf32>
    %191 = tpu.matmul %190, %175, %cst_61 {dimension_numbers = #tpu.dot_dimension_numbers<[1], [0], [0], [1], [0, 0, 1, 1], [], []>} : vector<128x128xbf16>, vector<128x32xbf16>, vector<128x32xf32> -> vector<128x32xf32>
    %192 = vector.extract_strided_slice %155 {offsets = [0, 32], sizes = [128, 32], strides = [1, 1]} : vector<128x128xf32> to vector<128x32xf32>
    %193 = arith.truncf %192 : vector<128x32xf32> to vector<128x32xbf16>
    %194 = vector.extract_strided_slice %162 {offsets = [0, 32], sizes = [128, 32], strides = [1, 1]} : vector<128x128xf32> to vector<128x32xf32>
    %195 = arith.truncf %194 : vector<128x32xf32> to vector<128x32xbf16>
    %196 = vector.extract_strided_slice %166 {offsets = [0, 32], sizes = [128, 32], strides = [1, 1]} : vector<128x128xf32> to vector<128x32xf32>
    %197 = arith.truncf %196 : vector<128x32xf32> to vector<128x32xbf16>
    "tpu.trace_start"() <{level = 10 : i32, message = "md,nd->mn"}> : () -> ()
    %cst_62 = arith.constant dense<0.000000e+00> : vector<128x128xf32>
    %198 = tpu.matmul %193, %195, %cst_62 {dimension_numbers = #tpu.dot_dimension_numbers<[1], [1], [0], [0], [0, 0, 1, 0], [], []>} : vector<128x32xbf16>, vector<128x32xbf16>, vector<128x128xf32> -> vector<128x128xf32>
    "tpu.trace_stop"() : () -> ()
    %cst_63 = arith.constant 0.176776692 : f32
    %199 = vector.broadcast %cst_63 : f32 to vector<128x128xf32>
    %200 = arith.mulf %198, %199 : vector<128x128xf32>
    %201 = arith.addf %200, %9 : vector<128x128xf32>
    %cst_64 = arith.constant dense<0xFF800000> : vector<128xf32>
    %202 = vector.multi_reduction <maximumf>, %201, %cst_64 [1] : vector<128x128xf32> to vector<128xf32>
    %203 = vector.shape_cast %202 : vector<128xf32> to vector<128x1xf32>
    %204 = vector.broadcast %203 : vector<128x1xf32> to vector<128x128xf32>
    %205 = arith.subf %201, %204 : vector<128x128xf32>
    %206 = math.exp %205 : vector<128x128xf32>
    %cst_65 = arith.constant dense<0.000000e+00> : vector<128xf32>
    %207 = vector.multi_reduction <add>, %206, %cst_65 [1] : vector<128x128xf32> to vector<128xf32>
    %208 = vector.shape_cast %207 : vector<128xf32> to vector<128x1xf32>
    %209 = tpu.reciprocal %208 {approx = true} : vector<128x1xf32> -> vector<128x1xf32>
    %210 = vector.broadcast %209 : vector<128x1xf32> to vector<128x128xf32>
    %211 = arith.mulf %206, %210 : vector<128x128xf32>
    %212 = arith.truncf %211 : vector<128x128xf32> to vector<128x128xbf16>
    %cst_66 = arith.constant dense<0.000000e+00> : vector<128x32xf32>
    %213 = tpu.matmul %212, %197, %cst_66 {dimension_numbers = #tpu.dot_dimension_numbers<[1], [0], [0], [1], [0, 0, 1, 1], [], []>} : vector<128x128xbf16>, vector<128x32xbf16>, vector<128x32xf32> -> vector<128x32xf32>
    %214 = vector.extract_strided_slice %155 {offsets = [0, 64], sizes = [128, 32], strides = [1, 1]} : vector<128x128xf32> to vector<128x32xf32>
    %215 = arith.truncf %214 : vector<128x32xf32> to vector<128x32xbf16>
    %216 = vector.extract_strided_slice %162 {offsets = [0, 64], sizes = [128, 32], strides = [1, 1]} : vector<128x128xf32> to vector<128x32xf32>
    %217 = arith.truncf %216 : vector<128x32xf32> to vector<128x32xbf16>
    %218 = vector.extract_strided_slice %166 {offsets = [0, 64], sizes = [128, 32], strides = [1, 1]} : vector<128x128xf32> to vector<128x32xf32>
    %219 = arith.truncf %218 : vector<128x32xf32> to vector<128x32xbf16>
    "tpu.trace_start"() <{level = 10 : i32, message = "md,nd->mn"}> : () -> ()
    %cst_67 = arith.constant dense<0.000000e+00> : vector<128x128xf32>
    %220 = tpu.matmul %215, %217, %cst_67 {dimension_numbers = #tpu.dot_dimension_numbers<[1], [1], [0], [0], [0, 0, 1, 0], [], []>} : vector<128x32xbf16>, vector<128x32xbf16>, vector<128x128xf32> -> vector<128x128xf32>
    "tpu.trace_stop"() : () -> ()
    %cst_68 = arith.constant 0.176776692 : f32
    %221 = vector.broadcast %cst_68 : f32 to vector<128x128xf32>
    %222 = arith.mulf %220, %221 : vector<128x128xf32>
    %223 = arith.addf %222, %9 : vector<128x128xf32>
    %cst_69 = arith.constant dense<0xFF800000> : vector<128xf32>
    %224 = vector.multi_reduction <maximumf>, %223, %cst_69 [1] : vector<128x128xf32> to vector<128xf32>
    %225 = vector.shape_cast %224 : vector<128xf32> to vector<128x1xf32>
    %226 = vector.broadcast %225 : vector<128x1xf32> to vector<128x128xf32>
    %227 = arith.subf %223, %226 : vector<128x128xf32>
    %228 = math.exp %227 : vector<128x128xf32>
    %cst_70 = arith.constant dense<0.000000e+00> : vector<128xf32>
    %229 = vector.multi_reduction <add>, %228, %cst_70 [1] : vector<128x128xf32> to vector<128xf32>
    %230 = vector.shape_cast %229 : vector<128xf32> to vector<128x1xf32>
    %231 = tpu.reciprocal %230 {approx = true} : vector<128x1xf32> -> vector<128x1xf32>
    %232 = vector.broadcast %231 : vector<128x1xf32> to vector<128x128xf32>
    %233 = arith.mulf %228, %232 : vector<128x128xf32>
    %234 = arith.truncf %233 : vector<128x128xf32> to vector<128x128xbf16>
    %cst_71 = arith.constant dense<0.000000e+00> : vector<128x32xf32>
    %235 = tpu.matmul %234, %219, %cst_71 {dimension_numbers = #tpu.dot_dimension_numbers<[1], [0], [0], [1], [0, 0, 1, 1], [], []>} : vector<128x128xbf16>, vector<128x32xbf16>, vector<128x32xf32> -> vector<128x32xf32>
    %236 = vector.extract_strided_slice %155 {offsets = [0, 96], sizes = [128, 32], strides = [1, 1]} : vector<128x128xf32> to vector<128x32xf32>
    %237 = arith.truncf %236 : vector<128x32xf32> to vector<128x32xbf16>
    %238 = vector.extract_strided_slice %162 {offsets = [0, 96], sizes = [128, 32], strides = [1, 1]} : vector<128x128xf32> to vector<128x32xf32>
    %239 = arith.truncf %238 : vector<128x32xf32> to vector<128x32xbf16>
    %240 = vector.extract_strided_slice %166 {offsets = [0, 96], sizes = [128, 32], strides = [1, 1]} : vector<128x128xf32> to vector<128x32xf32>
    %241 = arith.truncf %240 : vector<128x32xf32> to vector<128x32xbf16>
    "tpu.trace_start"() <{level = 10 : i32, message = "md,nd->mn"}> : () -> ()
    %cst_72 = arith.constant dense<0.000000e+00> : vector<128x128xf32>
    %242 = tpu.matmul %237, %239, %cst_72 {dimension_numbers = #tpu.dot_dimension_numbers<[1], [1], [0], [0], [0, 0, 1, 0], [], []>} : vector<128x32xbf16>, vector<128x32xbf16>, vector<128x128xf32> -> vector<128x128xf32>
    "tpu.trace_stop"() : () -> ()
    %cst_73 = arith.constant 0.176776692 : f32
    %243 = vector.broadcast %cst_73 : f32 to vector<128x128xf32>
    %244 = arith.mulf %242, %243 : vector<128x128xf32>
    %245 = arith.addf %244, %9 : vector<128x128xf32>
    %cst_74 = arith.constant dense<0xFF800000> : vector<128xf32>
    %246 = vector.multi_reduction <maximumf>, %245, %cst_74 [1] : vector<128x128xf32> to vector<128xf32>
    %247 = vector.shape_cast %246 : vector<128xf32> to vector<128x1xf32>
    %248 = vector.broadcast %247 : vector<128x1xf32> to vector<128x128xf32>
    %249 = arith.subf %245, %248 : vector<128x128xf32>
    %250 = math.exp %249 : vector<128x128xf32>
    %cst_75 = arith.constant dense<0.000000e+00> : vector<128xf32>
    %251 = vector.multi_reduction <add>, %250, %cst_75 [1] : vector<128x128xf32> to vector<128xf32>
    %252 = vector.shape_cast %251 : vector<128xf32> to vector<128x1xf32>
    %253 = tpu.reciprocal %252 {approx = true} : vector<128x1xf32> -> vector<128x1xf32>
    %254 = vector.broadcast %253 : vector<128x1xf32> to vector<128x128xf32>
    %255 = arith.mulf %250, %254 : vector<128x128xf32>
    %256 = arith.truncf %255 : vector<128x128xf32> to vector<128x128xbf16>
    %cst_76 = arith.constant dense<0.000000e+00> : vector<128x32xf32>
    %257 = tpu.matmul %256, %241, %cst_76 {dimension_numbers = #tpu.dot_dimension_numbers<[1], [0], [0], [1], [0, 0, 1, 1], [], []>} : vector<128x128xbf16>, vector<128x32xbf16>, vector<128x32xf32> -> vector<128x32xf32>
    %258 = tpu.concatenate %191, %213, %235, %257 in 1 : vector<128x32xf32>, vector<128x32xf32>, vector<128x32xf32>, vector<128x32xf32> -> vector<128x128xf32>
    %259 = arith.truncf %258 : vector<128x128xf32> to vector<128x128xbf16>
    %cst_77 = arith.constant dense<0.000000e+00> : vector<128x128xf32>
    %260 = tpu.matmul %259, %168, %cst_77 {dimension_numbers = #tpu.dot_dimension_numbers<[1], [0], [0], [1], [0, 0, 1, 1], [], []>} : vector<128x128xbf16>, vector<128x128xbf16>, vector<128x128xf32> -> vector<128x128xf32>
    %261 = vector.broadcast %169 : vector<1x128xf32> to vector<128x128xf32>
    %262 = arith.addf %260, %261 : vector<128x128xf32>
    %263 = arith.addf %262, %146 : vector<128x128xf32>
    %264 = vector.extract_strided_slice %5 {offsets = [10, 0], sizes = [1, 128], strides = [1, 1]} : vector<16x128xf32> to vector<1x128xf32>
    %265 = vector.extract_strided_slice %5 {offsets = [11, 0], sizes = [1, 128], strides = [1, 1]} : vector<16x128xf32> to vector<1x128xf32>
    %cst_78 = arith.constant dense<0.000000e+00> : vector<128xf32>
    %266 = vector.multi_reduction <add>, %263, %cst_78 [1] : vector<128x128xf32> to vector<128xf32>
    %267 = vector.shape_cast %266 : vector<128xf32> to vector<128x1xf32>
    %cst_79 = arith.constant 1.280000e+02 : f32
    %268 = vector.broadcast %cst_79 : f32 to vector<128x1xf32>
    %269 = arith.divf %267, %268 : vector<128x1xf32>
    %270 = vector.broadcast %269 : vector<128x1xf32> to vector<128x128xf32>
    %271 = arith.subf %263, %270 : vector<128x128xf32>
    %272 = arith.mulf %271, %271 : vector<128x128xf32>
    %cst_80 = arith.constant dense<0.000000e+00> : vector<128xf32>
    %273 = vector.multi_reduction <add>, %272, %cst_80 [1] : vector<128x128xf32> to vector<128xf32>
    %274 = vector.shape_cast %273 : vector<128xf32> to vector<128x1xf32>
    %cst_81 = arith.constant 1.280000e+02 : f32
    %275 = vector.broadcast %cst_81 : f32 to vector<128x1xf32>
    %276 = arith.divf %274, %275 : vector<128x1xf32>
    %277 = vector.broadcast %269 : vector<128x1xf32> to vector<128x128xf32>
    %278 = arith.subf %263, %277 : vector<128x128xf32>
    %cst_82 = arith.constant 9.99999996E-13 : f32
    %279 = vector.broadcast %cst_82 : f32 to vector<128x1xf32>
    %280 = arith.addf %276, %279 : vector<128x1xf32>
    %281 = math.rsqrt %280 : vector<128x1xf32>
    %282 = vector.broadcast %281 : vector<128x1xf32> to vector<128x128xf32>
    %283 = arith.mulf %278, %282 : vector<128x128xf32>
    %284 = vector.broadcast %264 : vector<1x128xf32> to vector<128x128xf32>
    %285 = arith.mulf %284, %283 : vector<128x128xf32>
    %286 = vector.broadcast %265 : vector<1x128xf32> to vector<128x128xf32>
    %287 = arith.addf %285, %286 : vector<128x128xf32>
    %288 = arith.truncf %287 : vector<128x128xf32> to vector<128x128xbf16>
    %c0_83 = arith.constant 0 : index
    %c0_84 = arith.constant 0 : index
    %c0_85 = arith.constant 0 : index
    %289 = vector.load %arg11[%c0_83, %c0_84, %c0_85] : memref<1x128x256xbf16, #tpu.memory_space<vmem>>, vector<1x128x256xbf16>
    %290 = vector.shape_cast %289 : vector<1x128x256xbf16> to vector<128x256xbf16>
    %cst_86 = arith.constant dense<0.000000e+00> : vector<128x256xf32>
    %291 = tpu.matmul %288, %290, %cst_86 {dimension_numbers = #tpu.dot_dimension_numbers<[1], [0], [0], [1], [0, 0, 1, 1], [], []>} : vector<128x128xbf16>, vector<128x256xbf16>, vector<128x256xf32> -> vector<128x256xf32>
    %c0_87 = arith.constant 0 : index
    %c0_88 = arith.constant 0 : index
    %c0_89 = arith.constant 0 : index
    %292 = vector.load %arg14[%c0_87, %c0_88, %c0_89] : memref<1x1x256xf32, #tpu.memory_space<vmem>>, vector<1x1x256xf32>
    %293 = vector.shape_cast %292 : vector<1x1x256xf32> to vector<1x256xf32>
    %294 = vector.broadcast %293 : vector<1x256xf32> to vector<128x256xf32>
    %295 = arith.addf %291, %294 : vector<128x256xf32>
    %cst_90 = arith.constant 0.000000e+00 : f32
    %296 = vector.broadcast %cst_90 : f32 to vector<128x256xf32>
    %297 = arith.maximumf %295, %296 : vector<128x256xf32>
    %298 = arith.truncf %297 : vector<128x256xf32> to vector<128x256xbf16>
    %c0_91 = arith.constant 0 : index
    %c0_92 = arith.constant 0 : index
    %c0_93 = arith.constant 0 : index
    %299 = vector.load %arg12[%c0_91, %c0_92, %c0_93] : memref<1x256x128xbf16, #tpu.memory_space<vmem>>, vector<1x256x128xbf16>
    %300 = vector.shape_cast %299 : vector<1x256x128xbf16> to vector<256x128xbf16>
    %cst_94 = arith.constant dense<0.000000e+00> : vector<128x128xf32>
    %301 = tpu.matmul %298, %300, %cst_94 {dimension_numbers = #tpu.dot_dimension_numbers<[1], [0], [0], [1], [0, 0, 1, 1], [], []>} : vector<128x256xbf16>, vector<256x128xbf16>, vector<128x128xf32> -> vector<128x128xf32>
    %302 = vector.extract_strided_slice %5 {offsets = [12, 0], sizes = [1, 128], strides = [1, 1]} : vector<16x128xf32> to vector<1x128xf32>
    %303 = vector.broadcast %302 : vector<1x128xf32> to vector<128x128xf32>
    %304 = arith.addf %301, %303 : vector<128x128xf32>
    %305 = arith.addf %304, %287 : vector<128x128xf32>
    %306 = vector.extract_strided_slice %5 {offsets = [13, 0], sizes = [1, 128], strides = [1, 1]} : vector<16x128xf32> to vector<1x128xf32>
    %307 = vector.extract_strided_slice %5 {offsets = [14, 0], sizes = [1, 128], strides = [1, 1]} : vector<16x128xf32> to vector<1x128xf32>
    %cst_95 = arith.constant dense<0.000000e+00> : vector<128xf32>
    %308 = vector.multi_reduction <add>, %305, %cst_95 [1] : vector<128x128xf32> to vector<128xf32>
    %309 = vector.shape_cast %308 : vector<128xf32> to vector<128x1xf32>
    %cst_96 = arith.constant 1.280000e+02 : f32
    %310 = vector.broadcast %cst_96 : f32 to vector<128x1xf32>
    %311 = arith.divf %309, %310 : vector<128x1xf32>
    %312 = vector.broadcast %311 : vector<128x1xf32> to vector<128x128xf32>
    %313 = arith.subf %305, %312 : vector<128x128xf32>
    %314 = arith.mulf %313, %313 : vector<128x128xf32>
    %cst_97 = arith.constant dense<0.000000e+00> : vector<128xf32>
    %315 = vector.multi_reduction <add>, %314, %cst_97 [1] : vector<128x128xf32> to vector<128xf32>
    %316 = vector.shape_cast %315 : vector<128xf32> to vector<128x1xf32>
    %cst_98 = arith.constant 1.280000e+02 : f32
    %317 = vector.broadcast %cst_98 : f32 to vector<128x1xf32>
    %318 = arith.divf %316, %317 : vector<128x1xf32>
    %319 = vector.broadcast %311 : vector<128x1xf32> to vector<128x128xf32>
    %320 = arith.subf %305, %319 : vector<128x128xf32>
    %cst_99 = arith.constant 9.99999996E-13 : f32
    %321 = vector.broadcast %cst_99 : f32 to vector<128x1xf32>
    %322 = arith.addf %318, %321 : vector<128x1xf32>
    %323 = math.rsqrt %322 : vector<128x1xf32>
    %324 = vector.broadcast %323 : vector<128x1xf32> to vector<128x128xf32>
    %325 = arith.mulf %320, %324 : vector<128x128xf32>
    %326 = vector.broadcast %306 : vector<1x128xf32> to vector<128x128xf32>
    %327 = arith.mulf %326, %325 : vector<128x128xf32>
    %328 = vector.broadcast %307 : vector<1x128xf32> to vector<128x128xf32>
    %329 = arith.addf %327, %328 : vector<128x128xf32>
    %c0_100 = arith.constant 0 : index
    %c0_101 = arith.constant 0 : index
    %330 = vector.load %arg16[%c0_100, %c0_101] : memref<128x128xf32, #tpu.memory_space<vmem>>, vector<128x128xf32>
    tpu.vector_store %arg16[%c0_100, %c0_101], %329 {strides = array<i32>} : memref<128x128xf32, #tpu.memory_space<vmem>>, vector<128x128xf32>,
    %c2_i32 = arith.constant 2 : i32
    %331 = arith.cmpi eq, %arg1, %c2_i32 : i32
    %332 = arith.extui %331 : i1 to i32
    %c0_i32_102 = arith.constant 0 : i32
    %333 = arith.cmpi ne, %332, %c0_i32_102 : i32
    scf.if %333 {
      %334 = vector.shape_cast %329 : vector<128x128xf32> to vector<16x8x128xf32>
      %c0_103 = arith.constant 0 : index
      %c0_104 = arith.constant 0 : index
      %c0_105 = arith.constant 0 : index
      %335 = vector.load %arg15[%c0_103, %c0_104, %c0_105] : memref<16x8x128xf32, #tpu.memory_space<vmem>>, vector<16x8x128xf32>
      tpu.vector_store %arg15[%c0_103, %c0_104, %c0_105], %334 {strides = array<i32>} : memref<16x8x128xf32, #tpu.memory_space<vmem>>, vector<16x8x128xf32>,
    } else {
    }
    return
  }
  func.func @transform_0(%arg0: i32, %arg1: i32) -> (i32, i32, i32) {
    %c0_i32 = arith.constant 0 : i32
    %c0_i32_0 = arith.constant 0 : i32
    %c0_i32_1 = arith.constant 0 : i32
    return %arg0, %c0_i32, %c0_i32_0 : i32, i32, i32
  }
  func.func @transform_1(%arg0: i32, %arg1: i32) -> (i32, i32, i32) {
    %c0_i32 = arith.constant 0 : i32
    %c0_i32_0 = arith.constant 0 : i32
    %c0_i32_1 = arith.constant 0 : i32
    return %arg0, %c0_i32, %c0_i32_0 : i32, i32, i32
  }
  func.func @transform_2(%arg0: i32, %arg1: i32) -> (i32, i32, i32) {
    %c0_i32 = arith.constant 0 : i32
    %c0_i32_0 = arith.constant 0 : i32
    %c0_i32_1 = arith.constant 0 : i32
    return %arg0, %c0_i32, %c0_i32_0 : i32, i32, i32
  }
  func.func @transform_3(%arg0: i32, %arg1: i32) -> (i32, i32, i32) {
    %c0_i32 = arith.constant 0 : i32
    %c0_i32_0 = arith.constant 0 : i32
    %c0_i32_1 = arith.constant 0 : i32
    return %arg0, %c0_i32, %c0_i32_0 : i32, i32, i32
  }
  func.func @transform_4(%arg0: i32, %arg1: i32) -> (i32, i32, i32) {
    %c0_i32 = arith.constant 0 : i32
    %c0_i32_0 = arith.constant 0 : i32
    %c0_i32_1 = arith.constant 0 : i32
    return %arg1, %c0_i32, %c0_i32_0 : i32, i32, i32
  }
  func.func @transform_5(%arg0: i32, %arg1: i32) -> (i32, i32, i32) {
    %c0_i32 = arith.constant 0 : i32
    %c0_i32_0 = arith.constant 0 : i32
    %c0_i32_1 = arith.constant 0 : i32
    return %arg1, %c0_i32, %c0_i32_0 : i32, i32, i32
  }
  func.func @transform_6(%arg0: i32, %arg1: i32) -> (i32, i32, i32) {
    %c0_i32 = arith.constant 0 : i32
    %c0_i32_0 = arith.constant 0 : i32
    %c0_i32_1 = arith.constant 0 : i32
    return %arg1, %c0_i32, %c0_i32_0 : i32, i32, i32
  }
  func.func @transform_7(%arg0: i32, %arg1: i32) -> (i32, i32, i32) {
    %c0_i32 = arith.constant 0 : i32
    %c0_i32_0 = arith.constant 0 : i32
    %c0_i32_1 = arith.constant 0 : i32
    return %arg1, %c0_i32, %c0_i32_0 : i32, i32, i32
  }
  func.func @transform_8(%arg0: i32, %arg1: i32) -> (i32, i32, i32) {
    %c0_i32 = arith.constant 0 : i32
    %c0_i32_0 = arith.constant 0 : i32
    %c0_i32_1 = arith.constant 0 : i32
    return %arg1, %c0_i32, %c0_i32_0 : i32, i32, i32
  }
  func.func @transform_9(%arg0: i32, %arg1: i32) -> (i32, i32, i32) {
    %c0_i32 = arith.constant 0 : i32
    %c0_i32_0 = arith.constant 0 : i32
    %c0_i32_1 = arith.constant 0 : i32
    return %arg1, %c0_i32, %c0_i32_0 : i32, i32, i32
  }
  func.func @transform_10(%arg0: i32, %arg1: i32) -> (i32, i32, i32) {
    %c0_i32 = arith.constant 0 : i32
    %c0_i32_0 = arith.constant 0 : i32
    %c0_i32_1 = arith.constant 0 : i32
    return %arg1, %c0_i32, %c0_i32_0 : i32, i32, i32
  }
  func.func @transform_11(%arg0: i32, %arg1: i32) -> (i32, i32, i32) {
    %c0_i32 = arith.constant 0 : i32
    %c0_i32_0 = arith.constant 0 : i32
    %c0_i32_1 = arith.constant 0 : i32
    return %arg1, %c0_i32, %c0_i32_0 : i32, i32, i32
  }
  func.func @transform_12(%arg0: i32, %arg1: i32) -> (i32, i32, i32) {
    %c0_i32 = arith.constant 0 : i32
    %c0_i32_0 = arith.constant 0 : i32
    %c0_i32_1 = arith.constant 0 : i32
    return %arg1, %c0_i32, %c0_i32_0 : i32, i32, i32
  }
  func.func @transform_13(%arg0: i32, %arg1: i32) -> (i32, i32, i32) {
    %c0_i32 = arith.constant 0 : i32
    %c0_i32_0 = arith.constant 0 : i32
    %c0_i32_1 = arith.constant 0 : i32
    return %arg0, %c0_i32, %c0_i32_0 : i32, i32, i32
  }
}

</mosaic_0001>

<llo_original>
// kernel: tpu_custom_call.1
$region0: #{tpu_custom_call.1}
  #allocation0 [shape = 'u32[]', space=smem, size = 0x4, offset = 0x4, fixed_abs, tag = 'smem constant byte address 0x4 - core index']
  #allocation1 [shape = 'u32[144,128]{1,0:T(1,128)}', space=vmem, size = 0x12000, scoped, tag = 'internal scratch']
  #allocation2 [shape = 'f32[128,128]{1,0:T(8,128)}', space=vmem, size = 0x10000, scoped, tag = 'scratch operand']
  %s0 = inlined_call_operand.hbm [shape: f32[16,8,128], index: 0, kind: input, shape index: {}]
  %s1 = inlined_call_operand.hbm [shape: bf16[16,8,128], index: 1, kind: input, shape index: {}]
  %s2 = inlined_call_operand.hbm [shape: f32[1,128,128], index: 2, kind: input, shape index: {}]
  %s3 = inlined_call_operand.hbm [shape: f32[1,128,128], index: 3, kind: input, shape index: {}]
  %s4 = inlined_call_operand.hbm [shape: bf16[3,128,384], index: 4, kind: input, shape index: {}]
  %s5 = inlined_call_operand.hbm [shape: bf16[3,128,128], index: 5, kind: input, shape index: {}]
  %s6 = inlined_call_operand.hbm [shape: bf16[3,128,128], index: 6, kind: input, shape index: {}]
  %s7 = inlined_call_operand.hbm [shape: bf16[3,128,256], index: 7, kind: input, shape index: {}]
  %s8 = inlined_call_operand.hbm [shape: bf16[3,128,128], index: 8, kind: input, shape index: {}]
  %s9 = inlined_call_operand.hbm [shape: bf16[3,128,256], index: 9, kind: input, shape index: {}]
  %s10 = inlined_call_operand.hbm [shape: bf16[3,256,128], index: 10, kind: input, shape index: {}]
  %s11 = inlined_call_operand.hbm [shape: f32[3,16,128], index: 11, kind: input, shape index: {}]
  %s12 = inlined_call_operand.vmem [shape: f32[3,1,256], index: 12, kind: input, shape index: {}]
  %s13 = inlined_call_operand.hbm [shape: f32[16,8,128], index: 13, kind: output, shape index: {}]
  %s14 = sld [smem:[#allocation0]]
  $region141: #{tpu_custom_call.1} parent=0
    _
  %s16 = ssub.s32 1, %s14
  %s17 = scalar_select 0, %s16, %s14
  $region1: #{tpu_custom_call.1} parent=0
    #allocation3 [shape = 'u8[65536]{0}', space=vmem, size = 0x10000, scoped, tag = 'input window, operand 0, single buffered']
    #allocation4 [shape = 's32[2]{0}', space=sflag, size = 0x8, scoped, tag = 'scoped memory for tpu_custom_call.1']
    #allocation5 [shape = 's32[2]{0}', space=sflag, size = 0x8, scoped, tag = 'scoped memory for tpu_custom_call.1']
    #allocation6 [shape = 'u8[32768]{0}', space=vmem, size = 0x8000, scoped, tag = 'input window, operand 1, single buffered']
    #allocation7 [shape = 's32[1]{0}', space=sflag, size = 0x4, scoped, tag = 'scoped memory for tpu_custom_call.1']
    #allocation8 [shape = 'u8[65536]{0}', space=vmem, size = 0x10000, scoped, tag = 'input window, operand 2, single buffered']
    #allocation9 [shape = 'u8[65536]{0}', space=vmem, size = 0x10000, scoped, tag = 'input window, operand 3, single buffered']
    #allocation10 [shape = 's32[1]{0}', space=sflag, size = 0x4, scoped, tag = 'scoped memory for tpu_custom_call.1']
    #allocation11 [shape = 'u8[196608]{0}', space=vmem, size = 0x30000, scoped, tag = 'input window, operand 4']
    #allocation12 [shape = 'u8[65536]{0}', space=vmem, size = 0x10000, scoped, tag = 'input window, operand 5']
    #allocation13 [shape = 'u8[65536]{0}', space=vmem, size = 0x10000, scoped, tag = 'input window, operand 6']
    #allocation14 [shape = 'u8[131072]{0}', space=vmem, size = 0x20000, scoped, tag = 'input window, operand 7']
    #allocation15 [shape = 'u8[65536]{0}', space=vmem, size = 0x10000, scoped, tag = 'input window, operand 8']
    #allocation16 [shape = 'u8[131072]{0}', space=vmem, size = 0x20000, scoped, tag = 'input window, operand 9']
    #allocation17 [shape = 'u8[131072]{0}', space=vmem, size = 0x20000, scoped, tag = 'input window, operand 10']
    #allocation18 [shape = 'u8[16384]{0}', space=vmem, size = 0x4000, scoped, tag = 'input window, operand 11']
    #allocation19 [shape = 'u8[65536]{0}', space=vmem, size = 0x10000, scoped, tag = 'output window, operand 0, single buffered']
    %18 = vsyncpa [#allocation4], 0
    %19 = vsyncpa [#allocation7], 0
    %20 = vsyncpa [#allocation10], 0
    %21 = vsyncpa [#allocation5], 0
    loop: start=0, step=1, limit=5
    $region2: #{tpu_custom_call.1} parent=1 // loop_pre_header
      _
    $region3: #{tpu_custom_call.1} parent=1 // loop_header
      %s23 = sphi 0, %s27
      %p24 = scmp.ge.s32.totalorder %s23, 5
      %s30 = sphi 0, %s42
      %s31 = sphi 0, %s38
      %s32 = sphi 0, %s30
      %s33 = sphi 0, %s31
      %s34 = sphi 0, %s32
      %s35 = sphi 0, %s33
      %s45 = sphi 0, %s47
      %s48 = sphi 0, %s45
      %s49 = sphi 0, %s48
      %s65 = sphi 0, %s49
      %s71 = sphi 0, %s73
      %s74 = sphi 0, %s71
      %s75 = sphi 0, %s74
      %s91 = sphi 0, %s75
      %s97 = sphi 0, %s99
      %s100 = sphi 0, %s97
      %s101 = sphi 0, %s100
      %s117 = sphi 0, %s101
      %s123 = sphi 0, %s125
      %s126 = sphi 0, %s123
      %s127 = sphi 0, %s126
      %s143 = sphi 0, %s127
      %s149 = sphi 0, %s151
      %s152 = sphi 0, %s149
      %s153 = sphi 0, %s152
      %s169 = sphi 0, %s153
      %s175 = sphi 0, %s177
      %s178 = sphi 0, %s175
      %s179 = sphi 0, %s178
      %s195 = sphi 0, %s179
      %s201 = sphi 0, %s203
      %s204 = sphi 0, %s201
      %s205 = sphi 0, %s204
      %s221 = sphi 0, %s205
      %s227 = sphi 0, %s229
      %s230 = sphi 0, %s227
      %s231 = sphi 0, %s230
      %s247 = sphi 0, %s231
      %s253 = sphi 0, %s255
      %s256 = sphi 0, %s253
      %s257 = sphi 0, %s256
      %s273 = sphi 0, %s257
      %s279 = sphi 0, %s281
      %s282 = sphi 0, %s279
      %s283 = sphi 0, %s282
      %s299 = sphi 0, %s283
      %s305 = sphi 0, %s307
      %s308 = sphi 0, %s305
      %s309 = sphi 0, %s308
      %s325 = sphi 0, %s309
      %s331 = sphi 0, %s333
      %s334 = sphi 0, %s331
      %s335 = sphi 0, %s334
      %s351 = sphi 0, %s335
      %s357 = sphi 0, %s359
      %s360 = sphi 0, %s357
      %s361 = sphi 0, %s360
      %s377 = sphi 0, %s361
      %s383 = sphi 0, %s385
      %s386 = sphi 0, %s383
      %s387 = sphi 0, %s386
      %s403 = sphi 0, %s387
    $region4: #{tpu_custom_call.1} parent=1 // loop_header_branch
      %26 = sbr.rel (%p24) target = $region8
    $region5: #{tpu_custom_call.1} parent=1 // loop_body
      %s28 = ssub.s32 %s23, 1
      %s29 = ssub.s32 %s23, 2
      %s36 = sadd.s32 1, %s31
      %p37 = scmp.ge.s32.totalorder %s36, 3
      %s38 = scalar_select %p37, 0, %s36
      %s39 = sadd.s32 1, %s30
      %s40 = scalar_select %p37, %s39, %s30
      %p41 = scmp.ge.s32.totalorder %s40, 1
      %s42 = scalar_select %p41, 0, %s40
      %s43 = ssub.s32 %s30, %s42
      %p44 = scmp.eq.s32.totalorder %s43, 0
      %s46 = sadd.s32 %s45, 1
      %s47 = scalar_select %p44, %s45, %s46
      %p50 = pneg %p44
      %p51 = scmp.eq.s32.totalorder %s23, 2
      %p52 = por %p50, %p51
      %p53 = scmp.ne.s32.totalorder %s45, %s48
      %p54 = scmp.eq.s32.totalorder %s23, 0
      %p55 = por %p53, %p54
      %p56 = scmp.ne.s32.totalorder %s45, %s48
      %p57 = scmp.eq.s32.totalorder %s28, 2
      %p58 = por %p56, %p57
      %p59 = scmp.ne.s32.totalorder %s48, %s49
      %p60 = scmp.eq.s32.totalorder %s28, 0
      %p61 = por %p59, %p60
      %p62 = scmp.ne.s32.totalorder %s48, %s49
      %p63 = scmp.eq.s32.totalorder %s29, 2
      %p64 = por %p62, %p63
      %p66 = scmp.ne.s32.totalorder %s49, %s65
      %p67 = scmp.eq.s32.totalorder %s29, 0
      %p68 = por %p66, %p67
      %s69 = ssub.s32 %s30, %s42
      %p70 = scmp.eq.s32.totalorder %s69, 0
      %s72 = sadd.s32 %s71, 1
      %s73 = scalar_select %p70, %s71, %s72
      %p76 = pneg %p70
      %p77 = scmp.eq.s32.totalorder %s23, 2
      %p78 = por %p76, %p77
      %p79 = scmp.ne.s32.totalorder %s71, %s74
      %p80 = scmp.eq.s32.totalorder %s23, 0
      %p81 = por %p79, %p80
      %p82 = scmp.ne.s32.totalorder %s71, %s74
      %p83 = scmp.eq.s32.totalorder %s28, 2
      %p84 = por %p82, %p83
      %p85 = scmp.ne.s32.totalorder %s74, %s75
      %p86 = scmp.eq.s32.totalorder %s28, 0
      %p87 = por %p85, %p86
      %p88 = scmp.ne.s32.totalorder %s74, %s75
      %p89 = scmp.eq.s32.totalorder %s29, 2
      %p90 = por %p88, %p89
      %p92 = scmp.ne.s32.totalorder %s75, %s91
      %p93 = scmp.eq.s32.totalorder %s29, 0
      %p94 = por %p92, %p93
      %s95 = ssub.s32 %s30, %s42
      %p96 = scmp.eq.s32.totalorder %s95, 0
      %s98 = sadd.s32 %s97, 1
      %s99 = scalar_select %p96, %s97, %s98
      %p102 = pneg %p96
      %p103 = scmp.eq.s32.totalorder %s23, 2
      %p104 = por %p102, %p103
      %p105 = scmp.ne.s32.totalorder %s97, %s100
      %p106 = scmp.eq.s32.totalorder %s23, 0
      %p107 = por %p105, %p106
      %p108 = scmp.ne.s32.totalorder %s97, %s100
      %p109 = scmp.eq.s32.totalorder %s28, 2
      %p110 = por %p108, %p109
      %p111 = scmp.ne.s32.totalorder %s100, %s101
      %p112 = scmp.eq.s32.totalorder %s28, 0
      %p113 = por %p111, %p112
      %p114 = scmp.ne.s32.totalorder %s100, %s101
      %p115 = scmp.eq.s32.totalorder %s29, 2
      %p116 = por %p114, %p115
      %p118 = scmp.ne.s32.totalorder %s101, %s117
      %p119 = scmp.eq.s32.totalorder %s29, 0
      %p120 = por %p118, %p119
      %s121 = ssub.s32 %s30, %s42
      %p122 = scmp.eq.s32.totalorder %s121, 0
      %s124 = sadd.s32 %s123, 1
      %s125 = scalar_select %p122, %s123, %s124
      %p128 = pneg %p122
      %p129 = scmp.eq.s32.totalorder %s23, 2
      %p130 = por %p128, %p129
      %p131 = scmp.ne.s32.totalorder %s123, %s126
      %p132 = scmp.eq.s32.totalorder %s23, 0
      %p133 = por %p131, %p132
      %p134 = scmp.ne.s32.totalorder %s123, %s126
      %p135 = scmp.eq.s32.totalorder %s28, 2
      %p136 = por %p134, %p135
      %p137 = scmp.ne.s32.totalorder %s126, %s127
      %p138 = scmp.eq.s32.totalorder %s28, 0
      %p139 = por %p137, %p138
      %p140 = scmp.ne.s32.totalorder %s126, %s127
      %p141 = scmp.eq.s32.totalorder %s29, 2
      %p142 = por %p140, %p141
      %p144 = scmp.ne.s32.totalorder %s127, %s143
      %p145 = scmp.eq.s32.totalorder %s29, 0
      %p146 = por %p144, %p145
      %s147 = ssub.s32 %s31, %s38
      %p148 = scmp.eq.s32.totalorder %s147, 0
      %s150 = sadd.s32 %s149, 1
      %s151 = scalar_select %p148, %s149, %s150
      %p154 = pneg %p148
      %p155 = scmp.eq.s32.totalorder %s23, 2
      %p156 = por %p154, %p155
      %p157 = scmp.ne.s32.totalorder %s149, %s152
      %p158 = scmp.eq.s32.totalorder %s23, 0
      %p159 = por %p157, %p158
      %p160 = scmp.ne.s32.totalorder %s149, %s152
      %p161 = scmp.eq.s32.totalorder %s28, 2
      %p162 = por %p160, %p161
      %p163 = scmp.ne.s32.totalorder %s152, %s153
      %p164 = scmp.eq.s32.totalorder %s28, 0
      %p165 = por %p163, %p164
      %p166 = scmp.ne.s32.totalorder %s152, %s153
      %p167 = scmp.eq.s32.totalorder %s29, 2
      %p168 = por %p166, %p167
      %p170 = scmp.ne.s32.totalorder %s153, %s169
      %p171 = scmp.eq.s32.totalorder %s29, 0
      %p172 = por %p170, %p171
      %s173 = ssub.s32 %s31, %s38
      %p174 = scmp.eq.s32.totalorder %s173, 0
      %s176 = sadd.s32 %s175, 1
      %s177 = scalar_select %p174, %s175, %s176
      %p180 = pneg %p174
      %p181 = scmp.eq.s32.totalorder %s23, 2
      %p182 = por %p180, %p181
      %p183 = scmp.ne.s32.totalorder %s175, %s178
      %p184 = scmp.eq.s32.totalorder %s23, 0
      %p185 = por %p183, %p184
      %p186 = scmp.ne.s32.totalorder %s175, %s178
      %p187 = scmp.eq.s32.totalorder %s28, 2
      %p188 = por %p186, %p187
      %p189 = scmp.ne.s32.totalorder %s178, %s179
      %p190 = scmp.eq.s32.totalorder %s28, 0
      %p191 = por %p189, %p190
      %p192 = scmp.ne.s32.totalorder %s178, %s179
      %p193 = scmp.eq.s32.totalorder %s29, 2
      %p194 = por %p192, %p193
      %p196 = scmp.ne.s32.totalorder %s179, %s195
      %p197 = scmp.eq.s32.totalorder %s29, 0
      %p198 = por %p196, %p197
      %s199 = ssub.s32 %s31, %s38
      %p200 = scmp.eq.s32.totalorder %s199, 0
      %s202 = sadd.s32 %s201, 1
      %s203 = scalar_select %p200, %s201, %s202
      %p206 = pneg %p200
      %p207 = scmp.eq.s32.totalorder %s23, 2
      %p208 = por %p206, %p207
      %p209 = scmp.ne.s32.totalorder %s201, %s204
      %p210 = scmp.eq.s32.totalorder %s23, 0
      %p211 = por %p209, %p210
      %p212 = scmp.ne.s32.totalorder %s201, %s204
      %p213 = scmp.eq.s32.totalorder %s28, 2
      %p214 = por %p212, %p213
      %p215 = scmp.ne.s32.totalorder %s204, %s205
      %p216 = scmp.eq.s32.totalorder %s28, 0
      %p217 = por %p215, %p216
      %p218 = scmp.ne.s32.totalorder %s204, %s205
      %p219 = scmp.eq.s32.totalorder %s29, 2
      %p220 = por %p218, %p219
      %p222 = scmp.ne.s32.totalorder %s205, %s221
      %p223 = scmp.eq.s32.totalorder %s29, 0
      %p224 = por %p222, %p223
      %s225 = ssub.s32 %s31, %s38
      %p226 = scmp.eq.s32.totalorder %s225, 0
      %s228 = sadd.s32 %s227, 1
      %s229 = scalar_select %p226, %s227, %s228
      %p232 = pneg %p226
      %p233 = scmp.eq.s32.totalorder %s23, 2
      %p234 = por %p232, %p233
      %p235 = scmp.ne.s32.totalorder %s227, %s230
      %p236 = scmp.eq.s32.totalorder %s23, 0
      %p237 = por %p235, %p236
      %p238 = scmp.ne.s32.totalorder %s227, %s230
      %p239 = scmp.eq.s32.totalorder %s28, 2
      %p240 = por %p238, %p239
      %p241 = scmp.ne.s32.totalorder %s230, %s231
      %p242 = scmp.eq.s32.totalorder %s28, 0
      %p243 = por %p241, %p242
      %p244 = scmp.ne.s32.totalorder %s230, %s231
      %p245 = scmp.eq.s32.totalorder %s29, 2
      %p246 = por %p244, %p245
      %p248 = scmp.ne.s32.totalorder %s231, %s247
      %p249 = scmp.eq.s32.totalorder %s29, 0
      %p250 = por %p248, %p249
      %s251 = ssub.s32 %s31, %s38
      %p252 = scmp.eq.s32.totalorder %s251, 0
      %s254 = sadd.s32 %s253, 1
      %s255 = scalar_select %p252, %s253, %s254
      %p258 = pneg %p252
      %p259 = scmp.eq.s32.totalorder %s23, 2
      %p260 = por %p258, %p259
      %p261 = scmp.ne.s32.totalorder %s253, %s256
      %p262 = scmp.eq.s32.totalorder %s23, 0
      %p263 = por %p261, %p262
      %p264 = scmp.ne.s32.totalorder %s253, %s256
      %p265 = scmp.eq.s32.totalorder %s28, 2
      %p266 = por %p264, %p265
      %p267 = scmp.ne.s32.totalorder %s256, %s257
      %p268 = scmp.eq.s32.totalorder %s28, 0
      %p269 = por %p267, %p268
      %p270 = scmp.ne.s32.totalorder %s256, %s257
      %p271 = scmp.eq.s32.totalorder %s29, 2
      %p272 = por %p270, %p271
      %p274 = scmp.ne.s32.totalorder %s257, %s273
      %p275 = scmp.eq.s32.totalorder %s29, 0
      %p276 = por %p274, %p275
      %s277 = ssub.s32 %s31, %s38
      %p278 = scmp.eq.s32.totalorder %s277, 0
      %s280 = sadd.s32 %s279, 1
      %s281 = scalar_select %p278, %s279, %s280
      %p284 = pneg %p278
      %p285 = scmp.eq.s32.totalorder %s23, 2
      %p286 = por %p284, %p285
      %p287 = scmp.ne.s32.totalorder %s279, %s282
      %p288 = scmp.eq.s32.totalorder %s23, 0
      %p289 = por %p287, %p288
      %p290 = scmp.ne.s32.totalorder %s279, %s282
      %p291 = scmp.eq.s32.totalorder %s28, 2
      %p292 = por %p290, %p291
      %p293 = scmp.ne.s32.totalorder %s282, %s283
      %p294 = scmp.eq.s32.totalorder %s28, 0
      %p295 = por %p293, %p294
      %p296 = scmp.ne.s32.totalorder %s282, %s283
      %p297 = scmp.eq.s32.totalorder %s29, 2
      %p298 = por %p296, %p297
      %p300 = scmp.ne.s32.totalorder %s283, %s299
      %p301 = scmp.eq.s32.totalorder %s29, 0
      %p302 = por %p300, %p301
      %s303 = ssub.s32 %s31, %s38
      %p304 = scmp.eq.s32.totalorder %s303, 0
      %s306 = sadd.s32 %s305, 1
      %s307 = scalar_select %p304, %s305, %s306
      %p310 = pneg %p304
      %p311 = scmp.eq.s32.totalorder %s23, 2
      %p312 = por %p310, %p311
      %p313 = scmp.ne.s32.totalorder %s305, %s308
      %p314 = scmp.eq.s32.totalorder %s23, 0
      %p315 = por %p313, %p314
      %p316 = scmp.ne.s32.totalorder %s305, %s308
      %p317 = scmp.eq.s32.totalorder %s28, 2
      %p318 = por %p316, %p317
      %p319 = scmp.ne.s32.totalorder %s308, %s309
      %p320 = scmp.eq.s32.totalorder %s28, 0
      %p321 = por %p319, %p320
      %p322 = scmp.ne.s32.totalorder %s308, %s309
      %p323 = scmp.eq.s32.totalorder %s29, 2
      %p324 = por %p322, %p323
      %p326 = scmp.ne.s32.totalorder %s309, %s325
      %p327 = scmp.eq.s32.totalorder %s29, 0
      %p328 = por %p326, %p327
      %s329 = ssub.s32 %s31, %s38
      %p330 = scmp.eq.s32.totalorder %s329, 0
      %s332 = sadd.s32 %s331, 1
      %s333 = scalar_select %p330, %s331, %s332
      %p336 = pneg %p330
      %p337 = scmp.eq.s32.totalorder %s23, 2
      %p338 = por %p336, %p337
      %p339 = scmp.ne.s32.totalorder %s331, %s334
      %p340 = scmp.eq.s32.totalorder %s23, 0
      %p341 = por %p339, %p340
      %p342 = scmp.ne.s32.totalorder %s331, %s334
      %p343 = scmp.eq.s32.totalorder %s28, 2
      %p344 = por %p342, %p343
      %p345 = scmp.ne.s32.totalorder %s334, %s335
      %p346 = scmp.eq.s32.totalorder %s28, 0
      %p347 = por %p345, %p346
      %p348 = scmp.ne.s32.totalorder %s334, %s335
      %p349 = scmp.eq.s32.totalorder %s29, 2
      %p350 = por %p348, %p349
      %p352 = scmp.ne.s32.totalorder %s335, %s351
      %p353 = scmp.eq.s32.totalorder %s29, 0
      %p354 = por %p352, %p353
      %s355 = ssub.s32 %s31, %s38
      %p356 = scmp.eq.s32.totalorder %s355, 0
      %s358 = sadd.s32 %s357, 1
      %s359 = scalar_select %p356, %s357, %s358
      %p362 = pneg %p356
      %p363 = scmp.eq.s32.totalorder %s23, 2
      %p364 = por %p362, %p363
      %p365 = scmp.ne.s32.totalorder %s357, %s360
      %p366 = scmp.eq.s32.totalorder %s23, 0
      %p367 = por %p365, %p366
      %p368 = scmp.ne.s32.totalorder %s357, %s360
      %p369 = scmp.eq.s32.totalorder %s28, 2
      %p370 = por %p368, %p369
      %p371 = scmp.ne.s32.totalorder %s360, %s361
      %p372 = scmp.eq.s32.totalorder %s28, 0
      %p373 = por %p371, %p372
      %p374 = scmp.ne.s32.totalorder %s360, %s361
      %p375 = scmp.eq.s32.totalorder %s29, 2
      %p376 = por %p374, %p375
      %p378 = scmp.ne.s32.totalorder %s361, %s377
      %p379 = scmp.eq.s32.totalorder %s29, 0
      %p380 = por %p378, %p379
      %s381 = ssub.s32 %s30, %s42
      %p382 = scmp.eq.s32.totalorder %s381, 0
      %s384 = sadd.s32 %s383, 1
      %s385 = scalar_select %p382, %s383, %s384
      %p388 = pneg %p382
      %p389 = scmp.eq.s32.totalorder %s23, 2
      %p390 = por %p388, %p389
      %p391 = scmp.ne.s32.totalorder %s383, %s386
      %p392 = scmp.eq.s32.totalorder %s23, 0
      %p393 = por %p391, %p392
      %p394 = scmp.ne.s32.totalorder %s383, %s386
      %p395 = scmp.eq.s32.totalorder %s28, 2
      %p396 = por %p394, %p395
      %p397 = scmp.ne.s32.totalorder %s386, %s387
      %p398 = scmp.eq.s32.totalorder %s28, 0
      %p399 = por %p397, %p398
      %p400 = scmp.ne.s32.totalorder %s386, %s387
      %p401 = scmp.eq.s32.totalorder %s29, 2
      %p402 = por %p400, %p401
      %p404 = scmp.ne.s32.totalorder %s387, %s403
      %p405 = scmp.eq.s32.totalorder %s29, 0
      %p406 = por %p404, %p405
      %p407 = scmp.le.s32.totalorder 1, %s23
      %p408 = scmp.lt.s32.totalorder %s23, 4
      %p409 = pnand %p407, %p408
      %p410 = pneg %p409
      // Predicated region
      $region9: #{tpu_custom_call.1} parent=5 // pred_check
        _
      $region10: #{tpu_custom_call.1} parent=5 // pred_check_branch
        %412 = sbr.rel (%p409) target = $region12
      $region11: #{tpu_custom_call.1} parent=5 // pred_region
        %s413 = ssub.s32 %s23, 1
        // Predicated region
        $region13: #{tpu_custom_call.1} parent=11 // pred_check
          %p414 = pneg %p61
        $region14: #{tpu_custom_call.1} parent=11 // pred_check_branch
          %416 = sbr.rel (%p414) target = $region16
        $region15: #{tpu_custom_call.1} parent=11 // pred_region
          %s417 = smul.u32 16, %s32
          %s419 = ssub.s32 2048, 2048
          %420 = vsyncadd [#allocation4], %s419
          %s421 = smul.addr %s417, 128
          %s422 = scalar_lea.hbm %s0, %s421
          %s423 = sshll.u32 [#allocation3], 4
          %s424 = int_to_ptr.vmem [resolvable:$true] %s423
          %429 = dma.hbm_to_vmem [thread:$0]  %s422, 2048, %s424, [#allocation4], 128, 128, 8
        $region16: #{tpu_custom_call.1} parent=11 // pred_fallthru
          _
        // Predicated region
        $region17: #{tpu_custom_call.1} parent=11 // pred_check
          %p430 = pneg %p87
        $region18: #{tpu_custom_call.1} parent=11 // pred_check_branch
          %432 = sbr.rel (%p430) target = $region20
        $region19: #{tpu_custom_call.1} parent=11 // pred_region
          %s433 = smul.u32 16, %s32
          %s435 = ssub.s32 1024, 1024
          %436 = vsyncadd [#allocation7], %s435
          %s437 = smul.addr %s433, 64
          %s438 = scalar_lea.hbm %s1, %s437
          %s439 = sshll.u32 [#allocation6], 4
          %s440 = int_to_ptr.vmem [resolvable:$true] %s439
          %445 = dma.hbm_to_vmem [thread:$0]  %s438, 1024, %s440, [#allocation7], 64, 64, 4
        $region20: #{tpu_custom_call.1} parent=11 // pred_fallthru
          _
        // Predicated region
        $region21: #{tpu_custom_call.1} parent=11 // pred_check
          %p446 = pneg %p113
        $region22: #{tpu_custom_call.1} parent=11 // pred_check_branch
          %448 = sbr.rel (%p446) target = $region24
        $region23: #{tpu_custom_call.1} parent=11 // pred_region
          %s450 = ssub.s32 2048, 2048
          %451 = vsyncadd [#allocation7], %s450
          %s452 = smul.addr %s32, 16
          %s453 = smul.addr %s452, 128
          %s454 = scalar_lea.hbm %s2, %s453
          %s455 = sshll.u32 [#allocation8], 4
          %s456 = int_to_ptr.vmem [resolvable:$true] %s455
          %461 = dma.hbm_to_vmem [thread:$0]  %s454, 2048, %s456, [#allocation7], 128, 128, 8
        $region24: #{tpu_custom_call.1} parent=11 // pred_fallthru
          _
        // Predicated region
        $region25: #{tpu_custom_call.1} parent=11 // pred_check
          %p462 = pneg %p139
        $region26: #{tpu_custom_call.1} parent=11 // pred_check_branch
          %464 = sbr.rel (%p462) target = $region28
        $region27: #{tpu_custom_call.1} parent=11 // pred_region
          %s466 = ssub.s32 2048, 2048
          %467 = vsyncadd [#allocation10], %s466
          %s468 = smul.addr %s32, 16
          %s469 = smul.addr %s468, 128
          %s470 = scalar_lea.hbm %s3, %s469
          %s471 = sshll.u32 [#allocation9], 4
          %s472 = int_to_ptr.vmem [resolvable:$true] %s471
          %477 = dma.hbm_to_vmem [thread:$0]  %s470, 2048, %s472, [#allocation10], 128, 128, 8
        $region28: #{tpu_custom_call.1} parent=11 // pred_fallthru
          _
      $region12: #{tpu_custom_call.1} parent=5 // pred_fallthru
        _
      %p478 = scmp.lt.s32.totalorder %s23, 3
      // Predicated region
      $region29: #{tpu_custom_call.1} parent=5 // pred_check
        %p479 = pneg %p478
      $region30: #{tpu_custom_call.1} parent=5 // pred_check_branch
        %481 = sbr.rel (%p479) target = $region32
      $region31: #{tpu_custom_call.1} parent=5 // pred_region
        // Predicated region
        $region33: #{tpu_custom_call.1} parent=31 // pred_check
          %p482 = pneg %p159
        $region34: #{tpu_custom_call.1} parent=31 // pred_check_branch
          %484 = sbr.rel (%p482) target = $region36
        $region35: #{tpu_custom_call.1} parent=31 // pred_region
          %s485 = sand.u32 %s23, 1
          %s486 = scalar_lea.sflag [#allocation4], %s485
          %s487 = sand.u32 %s149, 1
          %s488 = smul.addr %s487, 192
          %s489 = scalar_lea.vmem [#allocation11], %s488
          %s491 = ssub.s32 3072, 3072
          %492 = vsyncadd %s486, %s491
          %s493 = smul.addr %s31, 48
          %s494 = smul.addr %s493, 64
          %s495 = scalar_lea.hbm %s4, %s494
          %s496 = sshll.u32 %s489, 4
          %s497 = int_to_ptr.vmem [resolvable:$true] %s496
          %502 = dma.hbm_to_vmem [thread:$0]  %s495, 3072, %s497, %s486, 192, 192, 12
        $region36: #{tpu_custom_call.1} parent=31 // pred_fallthru
          _
        // Predicated region
        $region37: #{tpu_custom_call.1} parent=31 // pred_check
          %p503 = pneg %p185
        $region38: #{tpu_custom_call.1} parent=31 // pred_check_branch
          %505 = sbr.rel (%p503) target = $region40
        $region39: #{tpu_custom_call.1} parent=31 // pred_region
          %s506 = sand.u32 %s23, 1
          %s507 = scalar_lea.sflag [#allocation4], %s506
          %s508 = sand.u32 %s175, 1
          %s509 = smul.addr %s508, 64
          %s510 = scalar_lea.vmem [#allocation12], %s509
          %s512 = ssub.s32 1024, 1024
          %513 = vsyncadd %s507, %s512
          %s514 = smul.addr %s31, 16
          %s515 = smul.addr %s514, 64
          %s516 = scalar_lea.hbm %s5, %s515
          %s517 = sshll.u32 %s510, 4
          %s518 = int_to_ptr.vmem [resolvable:$true] %s517
          %523 = dma.hbm_to_vmem [thread:$0]  %s516, 1024, %s518, %s507, 64, 64, 4
        $region40: #{tpu_custom_call.1} parent=31 // pred_fallthru
          _
        // Predicated region
        $region41: #{tpu_custom_call.1} parent=31 // pred_check
          %p524 = pneg %p211
        $region42: #{tpu_custom_call.1} parent=31 // pred_check_branch
          %526 = sbr.rel (%p524) target = $region44
        $region43: #{tpu_custom_call.1} parent=31 // pred_region
          %s527 = sand.u32 %s23, 1
          %s528 = scalar_lea.sflag [#allocation4], %s527
          %s529 = sand.u32 %s201, 1
          %s530 = smul.addr %s529, 64
          %s531 = scalar_lea.vmem [#allocation13], %s530
          %s533 = ssub.s32 1024, 1024
          %534 = vsyncadd %s528, %s533
          %s535 = smul.addr %s31, 16
          %s536 = smul.addr %s535, 64
          %s537 = scalar_lea.hbm %s6, %s536
          %s538 = sshll.u32 %s531, 4
          %s539 = int_to_ptr.vmem [resolvable:$true] %s538
          %544 = dma.hbm_to_vmem [thread:$0]  %s537, 1024, %s539, %s528, 64, 64, 4
        $region44: #{tpu_custom_call.1} parent=31 // pred_fallthru
          _
        // Predicated region
        $region45: #{tpu_custom_call.1} parent=31 // pred_check
          %p545 = pneg %p237
        $region46: #{tpu_custom_call.1} parent=31 // pred_check_branch
          %547 = sbr.rel (%p545) target = $region48
        $region47: #{tpu_custom_call.1} parent=31 // pred_region
          %s548 = sand.u32 %s23, 1
          %s549 = scalar_lea.sflag [#allocation4], %s548
          %s550 = sand.u32 %s227, 1
          %s551 = smul.addr %s550, 128
          %s552 = scalar_lea.vmem [#allocation14], %s551
          %s554 = ssub.s32 2048, 2048
          %555 = vsyncadd %s549, %s554
          %s556 = smul.addr %s31, 32
          %s557 = smul.addr %s556, 64
          %s558 = scalar_lea.hbm %s7, %s557
          %s559 = sshll.u32 %s552, 4
          %s560 = int_to_ptr.vmem [resolvable:$true] %s559
          %565 = dma.hbm_to_vmem [thread:$0]  %s558, 2048, %s560, %s549, 128, 128, 8
        $region48: #{tpu_custom_call.1} parent=31 // pred_fallthru
          _
        // Predicated region
        $region49: #{tpu_custom_call.1} parent=31 // pred_check
          %p566 = pneg %p263
        $region50: #{tpu_custom_call.1} parent=31 // pred_check_branch
          %568 = sbr.rel (%p566) target = $region52
        $region51: #{tpu_custom_call.1} parent=31 // pred_region
          %s569 = sand.u32 %s23, 1
          %s570 = scalar_lea.sflag [#allocation4], %s569
          %s571 = sand.u32 %s253, 1
          %s572 = smul.addr %s571, 64
          %s573 = scalar_lea.vmem [#allocation15], %s572
          %s575 = ssub.s32 1024, 1024
          %576 = vsyncadd %s570, %s575
          %s577 = smul.addr %s31, 16
          %s578 = smul.addr %s577, 64
          %s579 = scalar_lea.hbm %s8, %s578
          %s580 = sshll.u32 %s573, 4
          %s581 = int_to_ptr.vmem [resolvable:$true] %s580
          %586 = dma.hbm_to_vmem [thread:$0]  %s579, 1024, %s581, %s570, 64, 64, 4
        $region52: #{tpu_custom_call.1} parent=31 // pred_fallthru
          _
        // Predicated region
        $region53: #{tpu_custom_call.1} parent=31 // pred_check
          %p587 = pneg %p289
        $region54: #{tpu_custom_call.1} parent=31 // pred_check_branch
          %589 = sbr.rel (%p587) target = $region56
        $region55: #{tpu_custom_call.1} parent=31 // pred_region
          %s590 = sand.u32 %s23, 1
          %s591 = scalar_lea.sflag [#allocation4], %s590
          %s592 = sand.u32 %s279, 1
          %s593 = smul.addr %s592, 128
          %s594 = scalar_lea.vmem [#allocation16], %s593
          %s596 = ssub.s32 2048, 2048
          %597 = vsyncadd %s591, %s596
          %s598 = smul.addr %s31, 32
          %s599 = smul.addr %s598, 64
          %s600 = scalar_lea.hbm %s9, %s599
          %s601 = sshll.u32 %s594, 4
          %s602 = int_to_ptr.vmem [resolvable:$true] %s601
          %607 = dma.hbm_to_vmem [thread:$0]  %s600, 2048, %s602, %s591, 128, 128, 8
        $region56: #{tpu_custom_call.1} parent=31 // pred_fallthru
          _
        // Predicated region
        $region57: #{tpu_custom_call.1} parent=31 // pred_check
          %p608 = pneg %p315
        $region58: #{tpu_custom_call.1} parent=31 // pred_check_branch
          %610 = sbr.rel (%p608) target = $region60
        $region59: #{tpu_custom_call.1} parent=31 // pred_region
          %s611 = sand.u32 %s23, 1
          %s612 = scalar_lea.sflag [#allocation4], %s611
          %s613 = sand.u32 %s305, 1
          %s614 = smul.addr %s613, 128
          %s615 = scalar_lea.vmem [#allocation17], %s614
          %s617 = ssub.s32 2048, 2048
          %618 = vsyncadd %s612, %s617
          %s619 = smul.addr %s31, 32
          %s620 = smul.addr %s619, 64
          %s621 = scalar_lea.hbm %s10, %s620
          %s622 = sshll.u32 %s615, 4
          %s623 = int_to_ptr.vmem [resolvable:$true] %s622
          %628 = dma.hbm_to_vmem [thread:$0]  %s621, 2048, %s623, %s612, 64, 64, 4
        $region60: #{tpu_custom_call.1} parent=31 // pred_fallthru
          _
        // Predicated region
        $region61: #{tpu_custom_call.1} parent=31 // pred_check
          %p629 = pneg %p341
        $region62: #{tpu_custom_call.1} parent=31 // pred_check_branch
          %631 = sbr.rel (%p629) target = $region64
        $region63: #{tpu_custom_call.1} parent=31 // pred_region
          %s632 = sand.u32 %s23, 1
          %s633 = scalar_lea.sflag [#allocation4], %s632
          %s634 = sand.u32 %s331, 1
          %s635 = smul.addr %s634, 16
          %s636 = scalar_lea.vmem [#allocation18], %s635
          %s638 = ssub.s32 256, 256
          %639 = vsyncadd %s633, %s638
          %s640 = smul.addr %s31, 2
          %s641 = smul.addr %s640, 128
          %s642 = scalar_lea.hbm %s11, %s641
          %s643 = sshll.u32 %s636, 4
          %s644 = int_to_ptr.vmem [resolvable:$true] %s643
          %649 = dma.hbm_to_vmem [thread:$0]  %s642, 256, %s644, %s633, 128, 128, 8
        $region64: #{tpu_custom_call.1} parent=31 // pred_fallthru
          _
        // Predicated region
        $region65: #{tpu_custom_call.1} parent=31 // pred_check
          %p650 = pneg %p367
        $region66: #{tpu_custom_call.1} parent=31 // pred_check_branch
          %652 = sbr.rel (%p650) target = $region68
        $region67: #{tpu_custom_call.1} parent=31 // pred_region
          %p653 = scmp.lt.s32.totalorder %s31, 2
          %s654 = scalar_select %p653, %s31, 2
          %s655 = smul.addr %s654, 2
          %s656 = scalar_lea.vmem %s12, %s655
        $region68: #{tpu_custom_call.1} parent=31 // pred_fallthru
          _
      $region32: #{tpu_custom_call.1} parent=5 // pred_fallthru
        _
      %p657 = scmp.le.s32.totalorder 1, %s23
      %p658 = scmp.lt.s32.totalorder %s23, 4
      %p659 = pnand %p657, %p658
      %p660 = pneg %p659
      // Predicated region
      $region69: #{tpu_custom_call.1} parent=5 // pred_check
        _
      $region70: #{tpu_custom_call.1} parent=5 // pred_check_branch
        %662 = sbr.rel (%p659) target = $region72
      $region71: #{tpu_custom_call.1} parent=5 // pred_region
        %s663 = ssub.s32 %s23, 1
        // Predicated region
        $region73: #{tpu_custom_call.1} parent=71 // pred_check
          %p664 = pneg %p61
        $region74: #{tpu_custom_call.1} parent=71 // pred_check_branch
          %666 = sbr.rel (%p664) target = $region76
        $region75: #{tpu_custom_call.1} parent=71 // pred_region
          %667 = dma.done [#allocation4], 2048
        $region76: #{tpu_custom_call.1} parent=71 // pred_fallthru
          _
        // Predicated region
        $region77: #{tpu_custom_call.1} parent=71 // pred_check
          %p668 = pneg %p87
        $region78: #{tpu_custom_call.1} parent=71 // pred_check_branch
          %670 = sbr.rel (%p668) target = $region80
        $region79: #{tpu_custom_call.1} parent=71 // pred_region
          %671 = dma.done [#allocation7], 1024
        $region80: #{tpu_custom_call.1} parent=71 // pred_fallthru
          _
        // Predicated region
        $region81: #{tpu_custom_call.1} parent=71 // pred_check
          %p672 = pneg %p113
        $region82: #{tpu_custom_call.1} parent=71 // pred_check_branch
          %674 = sbr.rel (%p672) target = $region84
        $region83: #{tpu_custom_call.1} parent=71 // pred_region
          %675 = dma.done [#allocation7], 2048
        $region84: #{tpu_custom_call.1} parent=71 // pred_fallthru
          _
        // Predicated region
        $region85: #{tpu_custom_call.1} parent=71 // pred_check
          %p676 = pneg %p139
        $region86: #{tpu_custom_call.1} parent=71 // pred_check_branch
          %678 = sbr.rel (%p676) target = $region88
        $region87: #{tpu_custom_call.1} parent=71 // pred_region
          %679 = dma.done [#allocation10], 2048
        $region88: #{tpu_custom_call.1} parent=71 // pred_fallthru
          _
        %s680 = sand.u32 %s28, 1
        %s681 = scalar_lea.sflag [#allocation4], %s680
        %s682 = sand.u32 %s152, 1
        %s683 = smul.addr %s682, 192
        %s684 = scalar_lea.vmem [#allocation11], %s683
        // Predicated region
        $region89: #{tpu_custom_call.1} parent=71 // pred_check
          %p685 = pneg %p165
        $region90: #{tpu_custom_call.1} parent=71 // pred_check_branch
          %687 = sbr.rel (%p685) target = $region92
        $region91: #{tpu_custom_call.1} parent=71 // pred_region
          %688 = dma.done %s681, 3072
        $region92: #{tpu_custom_call.1} parent=71 // pred_fallthru
          _
        %s689 = sand.u32 %s28, 1
        %s690 = scalar_lea.sflag [#allocation4], %s689
        %s691 = sand.u32 %s178, 1
        %s692 = smul.addr %s691, 64
        %s693 = scalar_lea.vmem [#allocation12], %s692
        // Predicated region
        $region93: #{tpu_custom_call.1} parent=71 // pred_check
          %p694 = pneg %p191
        $region94: #{tpu_custom_call.1} parent=71 // pred_check_branch
          %696 = sbr.rel (%p694) target = $region96
        $region95: #{tpu_custom_call.1} parent=71 // pred_region
          %697 = dma.done %s690, 1024
        $region96: #{tpu_custom_call.1} parent=71 // pred_fallthru
          _
        %s698 = sand.u32 %s28, 1
        %s699 = scalar_lea.sflag [#allocation4], %s698
        %s700 = sand.u32 %s204, 1
        %s701 = smul.addr %s700, 64
        %s702 = scalar_lea.vmem [#allocation13], %s701
        // Predicated region
        $region97: #{tpu_custom_call.1} parent=71 // pred_check
          %p703 = pneg %p217
        $region98: #{tpu_custom_call.1} parent=71 // pred_check_branch
          %705 = sbr.rel (%p703) target = $region100
        $region99: #{tpu_custom_call.1} parent=71 // pred_region
          %706 = dma.done %s699, 1024
        $region100: #{tpu_custom_call.1} parent=71 // pred_fallthru
          _
        %s707 = sand.u32 %s28, 1
        %s708 = scalar_lea.sflag [#allocation4], %s707
        %s709 = sand.u32 %s230, 1
        %s710 = smul.addr %s709, 128
        %s711 = scalar_lea.vmem [#allocation14], %s710
        // Predicated region
        $region101: #{tpu_custom_call.1} parent=71 // pred_check
          %p712 = pneg %p243
        $region102: #{tpu_custom_call.1} parent=71 // pred_check_branch
          %714 = sbr.rel (%p712) target = $region104
        $region103: #{tpu_custom_call.1} parent=71 // pred_region
          %715 = dma.done %s708, 2048
        $region104: #{tpu_custom_call.1} parent=71 // pred_fallthru
          _
        %s716 = sand.u32 %s28, 1
        %s717 = scalar_lea.sflag [#allocation4], %s716
        %s718 = sand.u32 %s256, 1
        %s719 = smul.addr %s718, 64
        %s720 = scalar_lea.vmem [#allocation15], %s719
        // Predicated region
        $region105: #{tpu_custom_call.1} parent=71 // pred_check
          %p721 = pneg %p269
        $region106: #{tpu_custom_call.1} parent=71 // pred_check_branch
          %723 = sbr.rel (%p721) target = $region108
        $region107: #{tpu_custom_call.1} parent=71 // pred_region
          %724 = dma.done %s717, 1024
        $region108: #{tpu_custom_call.1} parent=71 // pred_fallthru
          _
        %s725 = sand.u32 %s28, 1
        %s726 = scalar_lea.sflag [#allocation4], %s725
        %s727 = sand.u32 %s282, 1
        %s728 = smul.addr %s727, 128
        %s729 = scalar_lea.vmem [#allocation16], %s728
        // Predicated region
        $region109: #{tpu_custom_call.1} parent=71 // pred_check
          %p730 = pneg %p295
        $region110: #{tpu_custom_call.1} parent=71 // pred_check_branch
          %732 = sbr.rel (%p730) target = $region112
        $region111: #{tpu_custom_call.1} parent=71 // pred_region
          %733 = dma.done %s726, 2048
        $region112: #{tpu_custom_call.1} parent=71 // pred_fallthru
          _
        %s734 = sand.u32 %s28, 1
        %s735 = scalar_lea.sflag [#allocation4], %s734
        %s736 = sand.u32 %s308, 1
        %s737 = smul.addr %s736, 128
        %s738 = scalar_lea.vmem [#allocation17], %s737
        // Predicated region
        $region113: #{tpu_custom_call.1} parent=71 // pred_check
          %p739 = pneg %p321
        $region114: #{tpu_custom_call.1} parent=71 // pred_check_branch
          %741 = sbr.rel (%p739) target = $region116
        $region115: #{tpu_custom_call.1} parent=71 // pred_region
          %742 = dma.done %s735, 2048
        $region116: #{tpu_custom_call.1} parent=71 // pred_fallthru
          _
        %s743 = sand.u32 %s28, 1
        %s744 = scalar_lea.sflag [#allocation4], %s743
        %s745 = sand.u32 %s334, 1
        %s746 = smul.addr %s745, 16
        %s747 = scalar_lea.vmem [#allocation18], %s746
        // Predicated region
        $region117: #{tpu_custom_call.1} parent=71 // pred_check
          %p748 = pneg %p347
        $region118: #{tpu_custom_call.1} parent=71 // pred_check_branch
          %750 = sbr.rel (%p748) target = $region120
        $region119: #{tpu_custom_call.1} parent=71 // pred_region
          %751 = dma.done %s744, 256
        $region120: #{tpu_custom_call.1} parent=71 // pred_fallthru
          _
        %p752 = pneg %p61
        %p753 = pneg %p58
        %p754 = pneg %p87
        %p755 = pneg %p84
        %p756 = pneg %p113
        %p757 = pneg %p110
        %p758 = pneg %p139
        %p759 = pneg %p136
        %s760 = sand.u32 %s28, 1
        %s761 = scalar_lea.sflag [#allocation4], %s760
        %s762 = sand.u32 %s152, 1
        %s763 = smul.addr %s762, 192
        %s764 = scalar_lea.vmem [#allocation11], %s763
        %p765 = pneg %p165
        %p766 = pneg %p162
        %s767 = sand.u32 %s28, 1
        %s768 = scalar_lea.sflag [#allocation4], %s767
        %s769 = sand.u32 %s178, 1
        %s770 = smul.addr %s769, 64
        %s771 = scalar_lea.vmem [#allocation12], %s770
        %p772 = pneg %p191
        %p773 = pneg %p188
        %s774 = sand.u32 %s28, 1
        %s775 = scalar_lea.sflag [#allocation4], %s774
        %s776 = sand.u32 %s204, 1
        %s777 = smul.addr %s776, 64
        %s778 = scalar_lea.vmem [#allocation13], %s777
        %p779 = pneg %p217
        %p780 = pneg %p214
        %s781 = sand.u32 %s28, 1
        %s782 = scalar_lea.sflag [#allocation4], %s781
        %s783 = sand.u32 %s230, 1
        %s784 = smul.addr %s783, 128
        %s785 = scalar_lea.vmem [#allocation14], %s784
        %p786 = pneg %p243
        %p787 = pneg %p240
        %s788 = sand.u32 %s28, 1
        %s789 = scalar_lea.sflag [#allocation4], %s788
        %s790 = sand.u32 %s256, 1
        %s791 = smul.addr %s790, 64
        %s792 = scalar_lea.vmem [#allocation15], %s791
        %p793 = pneg %p269
        %p794 = pneg %p266
        %s795 = sand.u32 %s28, 1
        %s796 = scalar_lea.sflag [#allocation4], %s795
        %s797 = sand.u32 %s282, 1
        %s798 = smul.addr %s797, 128
        %s799 = scalar_lea.vmem [#allocation16], %s798
        %p800 = pneg %p295
        %p801 = pneg %p292
        %s802 = sand.u32 %s28, 1
        %s803 = scalar_lea.sflag [#allocation4], %s802
        %s804 = sand.u32 %s308, 1
        %s805 = smul.addr %s804, 128
        %s806 = scalar_lea.vmem [#allocation17], %s805
        %p807 = pneg %p321
        %p808 = pneg %p318
        %s809 = sand.u32 %s28, 1
        %s810 = scalar_lea.sflag [#allocation4], %s809
        %s811 = sand.u32 %s334, 1
        %s812 = smul.addr %s811, 16
        %s813 = scalar_lea.vmem [#allocation18], %s812
        %p814 = pneg %p347
        %p815 = pneg %p344
        %p816 = scmp.lt.s32.totalorder %s33, 2
        %s817 = scalar_select %p816, %s33, 2
        %s818 = smul.addr %s817, 2
        %s819 = scalar_lea.vmem %s12, %s818
        %p820 = pneg %p373
        %p821 = pneg %p370
        %p822 = pneg %p399
        %p823 = pneg %p396
        %s824 = smul.u32 16, %s32
        %s825 = smul.u32 16, %s32
        %p826 = scmp.lt.s32.totalorder %s33, 2
        %s827 = scalar_select %p826, %s33, 2
        %s828 = smul.addr %s827, 2
        %s829 = scalar_lea.vmem %s12, %s828
        %s830 = smul.u32 16, %s32
        %p832 = scmp.eq.s32.totalorder %s33, 0
        // Predicated region
        $region121: #{tpu_custom_call.1} parent=71 // pred_check
          %p833 = pneg %p832
        $region122: #{tpu_custom_call.1} parent=71 // pred_check_branch
          %835 = sbr.rel (%p833) target = $region124
        $region123: #{tpu_custom_call.1} parent=71 // pred_region
          %v836 = vld [vmem:[#allocation3] sm:$0xff]
          %v837 = vld [vmem:[#allocation3 + $0x8] sm:$0xff]
          %v838 = vld [vmem:[#allocation3 + $0x10] sm:$0xff]
          %v839 = vld [vmem:[#allocation3 + $0x18] sm:$0xff]
          %v840 = vld [vmem:[#allocation3 + $0x20] sm:$0xff]
          %v841 = vld [vmem:[#allocation3 + $0x28] sm:$0xff]
          %v842 = vld [vmem:[#allocation3 + $0x30] sm:$0xff]
          %v843 = vld [vmem:[#allocation3 + $0x38] sm:$0xff]
          %v844 = vld [vmem:[#allocation3 + $0x40] sm:$0xff]
          %v845 = vld [vmem:[#allocation3 + $0x48] sm:$0xff]
          %v846 = vld [vmem:[#allocation3 + $0x50] sm:$0xff]
          %v847 = vld [vmem:[#allocation3 + $0x58] sm:$0xff]
          %v848 = vld [vmem:[#allocation3 + $0x60] sm:$0xff]
          %v849 = vld [vmem:[#allocation3 + $0x68] sm:$0xff]
          %v850 = vld [vmem:[#allocation3 + $0x70] sm:$0xff]
          %v851 = vld [vmem:[#allocation3 + $0x78] sm:$0xff]
          %852 = vst [vmem:[#allocation2] sm:$0xff] %v836
          %853 = vst [vmem:[#allocation2 + $0x8] sm:$0xff] %v837
          %854 = vst [vmem:[#allocation2 + $0x10] sm:$0xff] %v838
          %855 = vst [vmem:[#allocation2 + $0x18] sm:$0xff] %v839
          %856 = vst [vmem:[#allocation2 + $0x20] sm:$0xff] %v840
          %857 = vst [vmem:[#allocation2 + $0x28] sm:$0xff] %v841
          %858 = vst [vmem:[#allocation2 + $0x30] sm:$0xff] %v842
          %859 = vst [vmem:[#allocation2 + $0x38] sm:$0xff] %v843
          %860 = vst [vmem:[#allocation2 + $0x40] sm:$0xff] %v844
          %861 = vst [vmem:[#allocation2 + $0x48] sm:$0xff] %v845
          %862 = vst [vmem:[#allocation2 + $0x50] sm:$0xff] %v846
          %863 = vst [vmem:[#allocation2 + $0x58] sm:$0xff] %v847
          %864 = vst [vmem:[#allocation2 + $0x60] sm:$0xff] %v848
          %865 = vst [vmem:[#allocation2 + $0x68] sm:$0xff] %v849
          %866 = vst [vmem:[#allocation2 + $0x70] sm:$0xff] %v850
          %867 = vst [vmem:[#allocation2 + $0x78] sm:$0xff] %v851
        $region124: #{tpu_custom_call.1} parent=71 // pred_fallthru
          _
        %v868 = vld [vmem:[#allocation2] sm:$0xff]
        %v869 = vld [vmem:[#allocation2 + $0x8] sm:$0xff]
        %v870 = vld [vmem:[#allocation2 + $0x10] sm:$0xff]
        %v871 = vld [vmem:[#allocation2 + $0x18] sm:$0xff]
        %v872 = vld [vmem:[#allocation2 + $0x20] sm:$0xff]
        %v873 = vld [vmem:[#allocation2 + $0x28] sm:$0xff]
        %v874 = vld [vmem:[#allocation2 + $0x30] sm:$0xff]
        %v875 = vld [vmem:[#allocation2 + $0x38] sm:$0xff]
        %v876 = vld [vmem:[#allocation2 + $0x40] sm:$0xff]
        %v877 = vld [vmem:[#allocation2 + $0x48] sm:$0xff]
        %v878 = vld [vmem:[#allocation2 + $0x50] sm:$0xff]
        %v879 = vld [vmem:[#allocation2 + $0x58] sm:$0xff]
        %v880 = vld [vmem:[#allocation2 + $0x60] sm:$0xff]
        %v881 = vld [vmem:[#allocation2 + $0x68] sm:$0xff]
        %v882 = vld [vmem:[#allocation2 + $0x70] sm:$0xff]
        %v883 = vld [vmem:[#allocation2 + $0x78] sm:$0xff]
        %v884 = vld [vmem:[%s747] sm:$0xff]
        %v885 = vld [vmem:[%s747 + $0x8] sm:$0xff]
        %v886 = vld [vmem:[#allocation8] sm:$0xff]
        %v887 = vld [vmem:[#allocation8 + $0x8] sm:$0xff]
        %v888 = vld [vmem:[#allocation8 + $0x10] sm:$0xff]
        %v889 = vld [vmem:[#allocation8 + $0x18] sm:$0xff]
        %v890 = vld [vmem:[#allocation8 + $0x20] sm:$0xff]
        %v891 = vld [vmem:[#allocation8 + $0x28] sm:$0xff]
        %v892 = vld [vmem:[#allocation8 + $0x30] sm:$0xff]
        %v893 = vld [vmem:[#allocation8 + $0x38] sm:$0xff]
        %v894 = vld [vmem:[#allocation8 + $0x40] sm:$0xff]
        %v895 = vld [vmem:[#allocation8 + $0x48] sm:$0xff]
        %v896 = vld [vmem:[#allocation8 + $0x50] sm:$0xff]
        %v897 = vld [vmem:[#allocation8 + $0x58] sm:$0xff]
        %v898 = vld [vmem:[#allocation8 + $0x60] sm:$0xff]
        %v899 = vld [vmem:[#allocation8 + $0x68] sm:$0xff]
        %v900 = vld [vmem:[#allocation8 + $0x70] sm:$0xff]
        %v901 = vld [vmem:[#allocation8 + $0x78] sm:$0xff]
        %v902 = vld [vmem:[#allocation9] sm:$0xff]
        %v903 = vld [vmem:[#allocation9 + $0x8] sm:$0xff]
        %v904 = vld [vmem:[#allocation9 + $0x10] sm:$0xff]
        %v905 = vld [vmem:[#allocation9 + $0x18] sm:$0xff]
        %v906 = vld [vmem:[#allocation9 + $0x20] sm:$0xff]
        %v907 = vld [vmem:[#allocation9 + $0x28] sm:$0xff]
        %v908 = vld [vmem:[#allocation9 + $0x30] sm:$0xff]
        %v909 = vld [vmem:[#allocation9 + $0x38] sm:$0xff]
        %v910 = vld [vmem:[#allocation9 + $0x40] sm:$0xff]
        %v911 = vld [vmem:[#allocation9 + $0x48] sm:$0xff]
        %v912 = vld [vmem:[#allocation9 + $0x50] sm:$0xff]
        %v913 = vld [vmem:[#allocation9 + $0x58] sm:$0xff]
        %v914 = vld [vmem:[#allocation9 + $0x60] sm:$0xff]
        %v915 = vld [vmem:[#allocation9 + $0x68] sm:$0xff]
        %v916 = vld [vmem:[#allocation9 + $0x70] sm:$0xff]
        %v917 = vld [vmem:[#allocation9 + $0x78] sm:$0xff]
        %v918 = vpack.c.bf16 %v869, %v868
        %v919 = vpack.c.bf16 %v871, %v870
        %v920 = vpack.c.bf16 %v873, %v872
        %v921 = vpack.c.bf16 %v875, %v874
        %v922 = vpack.c.bf16 %v877, %v876
        %v923 = vpack.c.bf16 %v879, %v878
        %v924 = vpack.c.bf16 %v881, %v880
        %v925 = vpack.c.bf16 %v883, %v882
        %v926 = vld [vmem:[%s684] sm:$0xff]
        %v927 = vld [vmem:[%s684 + $0x8] sm:$0xf]
        %v928 = vld [vmem:[%s684 + $0xc] sm:$0xff]
        %v929 = vld [vmem:[%s684 + $0x14] sm:$0xf]
        %v930 = vld [vmem:[%s684 + $0x18] sm:$0xff]
        %v931 = vld [vmem:[%s684 + $0x20] sm:$0xf]
        %v932 = vld [vmem:[%s684 + $0x24] sm:$0xff]
        %v933 = vld [vmem:[%s684 + $0x2c] sm:$0xf]
        %v934 = vld [vmem:[%s684 + $0x30] sm:$0xff]
        %v935 = vld [vmem:[%s684 + $0x38] sm:$0xf]
        %v936 = vld [vmem:[%s684 + $0x3c] sm:$0xff]
        %v937 = vld [vmem:[%s684 + $0x44] sm:$0xf]
        %v938 = vld [vmem:[%s684 + $0x48] sm:$0xff]
        %v939 = vld [vmem:[%s684 + $0x50] sm:$0xf]
        %v940 = vld [vmem:[%s684 + $0x54] sm:$0xff]
        %v941 = vld [vmem:[%s684 + $0x5c] sm:$0xf]
        %v942 = vld [vmem:[%s684 + $0x60] sm:$0xff]
        %v943 = vld [vmem:[%s684 + $0x68] sm:$0xf]
        %v944 = vld [vmem:[%s684 + $0x6c] sm:$0xff]
        %v945 = vld [vmem:[%s684 + $0x74] sm:$0xf]
        %v946 = vld [vmem:[%s684 + $0x78] sm:$0xff]
        %v947 = vld [vmem:[%s684 + $0x80] sm:$0xf]
        %v948 = vld [vmem:[%s684 + $0x84] sm:$0xff]
        %v949 = vld [vmem:[%s684 + $0x8c] sm:$0xf]
        %v950 = vld [vmem:[%s684 + $0x90] sm:$0xff]
        %v951 = vld [vmem:[%s684 + $0x98] sm:$0xf]
        %v952 = vld [vmem:[%s684 + $0x9c] sm:$0xff]
        %v953 = vld [vmem:[%s684 + $0xa4] sm:$0xf]
        %v954 = vld [vmem:[%s684 + $0xa8] sm:$0xff]
        %v955 = vld [vmem:[%s684 + $0xb0] sm:$0xf]
        %v956 = vld [vmem:[%s684 + $0xb4] sm:$0xff]
        %v957 = vld [vmem:[%s684 + $0xbc] sm:$0xf]
        %v990 = vunpack.c.l.b16 %v926
        %v991 = vunpack.c.h.b16 %v926
        %v992 = vunpack.c.l.b16 %v927
        %v993 = vunpack.c.l.b16 %v928
        %v994 = vunpack.c.h.b16 %v928
        %v995 = vunpack.c.l.b16 %v929
        %v996 = vunpack.c.l.b16 %v930
        %v997 = vunpack.c.h.b16 %v930
        %v998 = vunpack.c.l.b16 %v931
        %v999 = vunpack.c.l.b16 %v932
        %v1000 = vunpack.c.h.b16 %v932
        %v1001 = vunpack.c.l.b16 %v933
        %v1002 = vunpack.c.l.b16 %v934
        %v1003 = vunpack.c.h.b16 %v934
        %v1004 = vunpack.c.l.b16 %v935
        %v1005 = vunpack.c.l.b16 %v936
        %v1006 = vunpack.c.h.b16 %v936
        %v1007 = vunpack.c.l.b16 %v937
        %v1008 = vunpack.c.l.b16 %v938
        %v1009 = vunpack.c.h.b16 %v938
        %v1010 = vunpack.c.l.b16 %v939
        %v1011 = vunpack.c.l.b16 %v940
        %v1012 = vunpack.c.h.b16 %v940
        %v1013 = vunpack.c.l.b16 %v941
        %v1014 = vunpack.c.l.b16 %v942
        %v1015 = vunpack.c.h.b16 %v942
        %v1016 = vunpack.c.l.b16 %v943
        %v1017 = vunpack.c.l.b16 %v944
        %v1018 = vunpack.c.h.b16 %v944
        %v1019 = vunpack.c.l.b16 %v945
        %v1020 = vunpack.c.l.b16 %v946
        %v1021 = vunpack.c.h.b16 %v946
        %v1022 = vunpack.c.l.b16 %v947
        %v1023 = vunpack.c.l.b16 %v948
        %v1024 = vunpack.c.h.b16 %v948
        %v1025 = vunpack.c.l.b16 %v949
        %v1026 = vunpack.c.l.b16 %v950
        %v1027 = vunpack.c.h.b16 %v950
        %v1028 = vunpack.c.l.b16 %v951
        %v1029 = vunpack.c.l.b16 %v952
        %v1030 = vunpack.c.h.b16 %v952
        %v1031 = vunpack.c.l.b16 %v953
        %v1032 = vunpack.c.l.b16 %v954
        %v1033 = vunpack.c.h.b16 %v954
        %v1034 = vunpack.c.l.b16 %v955
        %v1035 = vunpack.c.l.b16 %v956
        %v1036 = vunpack.c.h.b16 %v956
        %v1037 = vunpack.c.l.b16 %v957
        %v1038 = vpack.c.b16 %v993, %v990
        %v1039 = vpack.c.b16 %v994, %v991
        %v1040 = vpack.c.b16 %v995, %v992
        %v1041 = vpack.c.b16 %v999, %v996
        %v1042 = vpack.c.b16 %v1000, %v997
        %v1043 = vpack.c.b16 %v1001, %v998
        %v1044 = vpack.c.b16 %v1005, %v1002
        %v1045 = vpack.c.b16 %v1006, %v1003
        %v1046 = vpack.c.b16 %v1007, %v1004
        %v1047 = vpack.c.b16 %v1011, %v1008
        %v1048 = vpack.c.b16 %v1012, %v1009
        %v1049 = vpack.c.b16 %v1013, %v1010
        %v1050 = vpack.c.b16 %v1017, %v1014
        %v1051 = vpack.c.b16 %v1018, %v1015
        %v1052 = vpack.c.b16 %v1019, %v1016
        %v1053 = vpack.c.b16 %v1023, %v1020
        %v1054 = vpack.c.b16 %v1024, %v1021
        %v1055 = vpack.c.b16 %v1025, %v1022
        %v1056 = vpack.c.b16 %v1029, %v1026
        %v1057 = vpack.c.b16 %v1030, %v1027
        %v1058 = vpack.c.b16 %v1031, %v1028
        %v1059 = vpack.c.b16 %v1035, %v1032
        %v1060 = vpack.c.b16 %v1036, %v1033
        %v1061 = vpack.c.b16 %v1037, %v1034
        %1086 = vmatprep.subr.bf16.mxu0 %v1039
        %1087 = vmatpush1.bf16.msra.mxu0 %v1038
        %1088 = vmatprep.subr.bf16.mxu0 %v1042
        %1089 = vmatpush1.bf16.msra.mxu0 %v1041
        %1090 = vmatprep.subr.bf16.mxu0 %v1045
        %1091 = vmatpush1.bf16.msra.mxu0 %v1044
        %1092 = vmatprep.subr.bf16.mxu0 %v1048
        %1093 = vmatpush1.bf16.msra.mxu0 %v1047
        %1094 = vmatprep.subr.bf16.mxu0 %v1051
        %1095 = vmatpush1.bf16.msra.mxu0 %v1050
        %1096 = vmatprep.subr.bf16.mxu0 %v1054
        %1097 = vmatpush1.bf16.msra.mxu0 %v1053
        %1098 = vmatprep.subr.bf16.mxu0 %v1057
        %1099 = vmatpush1.bf16.msra.mxu0 %v1056
        %1100 = vmatprep.subr.bf16.mxu0 %v1060
        %1101 = vmatpush1.bf16.msra.mxu0 %v1059
        %1102 = vmatprep.subr.bf16.mxu0 0
        %1103 = vmatpush1.bf16.msra.mxu0 0
        %1104 = vmatprep.subr.bf16.mxu0 0
        %1105 = vmatpush1.bf16.msra.mxu0 0
        %1106 = vmatprep.subr.bf16.mxu0 0
        %1107 = vmatpush1.bf16.msra.mxu0 0
        %1108 = vmatprep.subr.bf16.mxu0 0
        %1109 = vmatpush1.bf16.msra.mxu0 0
        %1110 = vmatprep.subr.bf16.mxu0 0
        %1111 = vmatpush1.bf16.msra.mxu0 0
        %1112 = vmatprep.subr.bf16.mxu0 0
        %1113 = vmatpush1.bf16.msra.mxu0 0
        %1114 = vmatprep.subr.bf16.mxu0 0
        %1115 = vmatpush1.bf16.msra.mxu0 0
        %1116 = vmatprep.subr.bf16.mxu0 0
        %1117 = vmatpush1.bf16.msra.mxu0 0
        %1118 = vmatprep.mubr.bf16.mxu0 0
        %1119 = vmatmul.mubr.bf16.gmra.mrb[0].mxu0 %v918
        %v1120 = vpop.f32.mrb[0].mxu0
        %v1121 = vadd.f32 0.0, %v1120
        %v1122 = vpop.f32.mrb[0].mxu0
        %v1123 = vadd.f32 0.0, %v1122
        %v1124 = vpop.f32.mrb[0].mxu0
        %v1125 = vadd.f32 0.0, %v1124
        %v1126 = vpop.f32.mrb[0].mxu0
        %v1127 = vadd.f32 0.0, %v1126
        %1128 = vmatprep.mubr.bf16.mxu0 0
        %1129 = vmatmul.mubr.bf16.gmra.mrb[0].mxu0 %v919
        %v1130 = vpop.f32.mrb[0].mxu0
        %v1131 = vadd.f32 0.0, %v1130
        %v1132 = vpop.f32.mrb[0].mxu0
        %v1133 = vadd.f32 0.0, %v1132
        %v1134 = vpop.f32.mrb[0].mxu0
        %v1135 = vadd.f32 0.0, %v1134
        %v1136 = vpop.f32.mrb[0].mxu0
        %v1137 = vadd.f32 0.0, %v1136
        %1138 = vmatprep.mubr.bf16.mxu0 0
        %1139 = vmatmul.mubr.bf16.gmra.mrb[0].mxu0 %v920
        %v1140 = vpop.f32.mrb[0].mxu0
        %v1141 = vadd.f32 0.0, %v1140
        %v1142 = vpop.f32.mrb[0].mxu0
        %v1143 = vadd.f32 0.0, %v1142
        %v1144 = vpop.f32.mrb[0].mxu0
        %v1145 = vadd.f32 0.0, %v1144
        %v1146 = vpop.f32.mrb[0].mxu0
        %v1147 = vadd.f32 0.0, %v1146
        %1148 = vmatprep.mubr.bf16.mxu0 0
        %1149 = vmatmul.mubr.bf16.gmra.mrb[0].mxu0 %v921
        %v1150 = vpop.f32.mrb[0].mxu0
        %v1151 = vadd.f32 0.0, %v1150
        %v1152 = vpop.f32.mrb[0].mxu0
        %v1153 = vadd.f32 0.0, %v1152
        %v1154 = vpop.f32.mrb[0].mxu0
        %v1155 = vadd.f32 0.0, %v1154
        %v1156 = vpop.f32.mrb[0].mxu0
        %v1157 = vadd.f32 0.0, %v1156
        %1158 = vmatprep.mubr.bf16.mxu0 0
        %1159 = vmatmul.mubr.bf16.gmra.mrb[0].mxu0 %v922
        %v1160 = vpop.f32.mrb[0].mxu0
        %v1161 = vadd.f32 0.0, %v1160
        %v1162 = vpop.f32.mrb[0].mxu0
        %v1163 = vadd.f32 0.0, %v1162
        %v1164 = vpop.f32.mrb[0].mxu0
        %v1165 = vadd.f32 0.0, %v1164
        %v1166 = vpop.f32.mrb[0].mxu0
        %v1167 = vadd.f32 0.0, %v1166
        %1168 = vmatprep.mubr.bf16.mxu0 0
        %1169 = vmatmul.mubr.bf16.gmra.mrb[0].mxu0 %v923
        %v1170 = vpop.f32.mrb[0].mxu0
        %v1171 = vadd.f32 0.0, %v1170
        %v1172 = vpop.f32.mrb[0].mxu0
        %v1173 = vadd.f32 0.0, %v1172
        %v1174 = vpop.f32.mrb[0].mxu0
        %v1175 = vadd.f32 0.0, %v1174
        %v1176 = vpop.f32.mrb[0].mxu0
        %v1177 = vadd.f32 0.0, %v1176
        %1178 = vmatprep.mubr.bf16.mxu0 0
        %1179 = vmatmul.mubr.bf16.gmra.mrb[0].mxu0 %v924
        %v1180 = vpop.f32.mrb[0].mxu0
        %v1181 = vadd.f32 0.0, %v1180
        %v1182 = vpop.f32.mrb[0].mxu0
        %v1183 = vadd.f32 0.0, %v1182
        %v1184 = vpop.f32.mrb[0].mxu0
        %v1185 = vadd.f32 0.0, %v1184
        %v1186 = vpop.f32.mrb[0].mxu0
        %v1187 = vadd.f32 0.0, %v1186
        %1188 = vmatprep.mubr.bf16.mxu0 0
        %1189 = vmatmul.mubr.bf16.gmra.mrb[0].mxu0 %v925
        %v1190 = vpop.f32.mrb[0].mxu0
        %v1191 = vadd.f32 0.0, %v1190
        %v1192 = vpop.f32.mrb[0].mxu0
        %v1193 = vadd.f32 0.0, %v1192
        %v1194 = vpop.f32.mrb[0].mxu0
        %v1195 = vadd.f32 0.0, %v1194
        %v1196 = vpop.f32.mrb[0].mxu0
        %v1197 = vadd.f32 0.0, %v1196
        %1198 = vdwg.mxu0
        %1199 = vmatprep.subr.bf16.mxu0 0
        %1200 = vmatpush1.bf16.msra.mxu0 %v1040
        %1201 = vmatprep.subr.bf16.mxu0 0
        %1202 = vmatpush1.bf16.msra.mxu0 %v1043
        %1203 = vmatprep.subr.bf16.mxu0 0
        %1204 = vmatpush1.bf16.msra.mxu0 %v1046
        %1205 = vmatprep.subr.bf16.mxu0 0
        %1206 = vmatpush1.bf16.msra.mxu0 %v1049
        %1207 = vmatprep.subr.bf16.mxu0 0
        %1208 = vmatpush1.bf16.msra.mxu0 %v1052
        %1209 = vmatprep.subr.bf16.mxu0 0
        %1210 = vmatpush1.bf16.msra.mxu0 %v1055
        %1211 = vmatprep.subr.bf16.mxu0 0
        %1212 = vmatpush1.bf16.msra.mxu0 %v1058
        %1213 = vmatprep.subr.bf16.mxu0 0
        %1214 = vmatpush1.bf16.msra.mxu0 %v1061
        %1215 = vmatprep.subr.bf16.mxu0 0
        %1216 = vmatpush1.bf16.msra.mxu0 0
        %1217 = vmatprep.subr.bf16.mxu0 0
        %1218 = vmatpush1.bf16.msra.mxu0 0
        %1219 = vmatprep.subr.bf16.mxu0 0
        %1220 = vmatpush1.bf16.msra.mxu0 0
        %1221 = vmatprep.subr.bf16.mxu0 0
        %1222 = vmatpush1.bf16.msra.mxu0 0
        %1223 = vmatprep.subr.bf16.mxu0 0
        %1224 = vmatpush1.bf16.msra.mxu0 0
        %1225 = vmatprep.subr.bf16.mxu0 0
        %1226 = vmatpush1.bf16.msra.mxu0 0
        %1227 = vmatprep.subr.bf16.mxu0 0
        %1228 = vmatpush1.bf16.msra.mxu0 0
        %1229 = vmatprep.subr.bf16.mxu0 0
        %1230 = vmatpush1.bf16.msra.mxu0 0
        %1231 = vmatprep.mubr.bf16.mxu0 0
        %1232 = vmatmul.mubr.bf16.gmra.mrb[0].mxu0 %v918
        %v1233 = vpop.f32.mrb[0].mxu0
        %v1234 = vadd.f32 0.0, %v1233
        %v1235 = vpop.f32.mrb[0].mxu0
        %v1236 = vpop.f32.mrb[0].mxu0
        %v1237 = vadd.f32 0.0, %v1236
        %v1238 = vpop.f32.mrb[0].mxu0
        %1239 = vmatprep.mubr.bf16.mxu0 0
        %1240 = vmatmul.mubr.bf16.gmra.mrb[0].mxu0 %v919
        %v1241 = vpop.f32.mrb[0].mxu0
        %v1242 = vadd.f32 0.0, %v1241
        %v1243 = vpop.f32.mrb[0].mxu0
        %v1244 = vpop.f32.mrb[0].mxu0
        %v1245 = vadd.f32 0.0, %v1244
        %v1246 = vpop.f32.mrb[0].mxu0
        %1247 = vmatprep.mubr.bf16.mxu0 0
        %1248 = vmatmul.mubr.bf16.gmra.mrb[0].mxu0 %v920
        %v1249 = vpop.f32.mrb[0].mxu0
        %v1250 = vadd.f32 0.0, %v1249
        %v1251 = vpop.f32.mrb[0].mxu0
        %v1252 = vpop.f32.mrb[0].mxu0
        %v1253 = vadd.f32 0.0, %v1252
        %v1254 = vpop.f32.mrb[0].mxu0
        %1255 = vmatprep.mubr.bf16.mxu0 0
        %1256 = vmatmul.mubr.bf16.gmra.mrb[0].mxu0 %v921
        %v1257 = vpop.f32.mrb[0].mxu0
        %v1258 = vadd.f32 0.0, %v1257
        %v1259 = vpop.f32.mrb[0].mxu0
        %v1260 = vpop.f32.mrb[0].mxu0
        %v1261 = vadd.f32 0.0, %v1260
        %v1262 = vpop.f32.mrb[0].mxu0
        %1263 = vmatprep.mubr.bf16.mxu0 0
        %1264 = vmatmul.mubr.bf16.gmra.mrb[0].mxu0 %v922
        %v1265 = vpop.f32.mrb[0].mxu0
        %v1266 = vadd.f32 0.0, %v1265
        %v1267 = vpop.f32.mrb[0].mxu0
        %v1268 = vpop.f32.mrb[0].mxu0
        %v1269 = vadd.f32 0.0, %v1268
        %v1270 = vpop.f32.mrb[0].mxu0
        %1271 = vmatprep.mubr.bf16.mxu0 0
        %1272 = vmatmul.mubr.bf16.gmra.mrb[0].mxu0 %v923
        %v1273 = vpop.f32.mrb[0].mxu0
        %v1274 = vadd.f32 0.0, %v1273
        %v1275 = vpop.f32.mrb[0].mxu0
        %v1276 = vpop.f32.mrb[0].mxu0
        %v1277 = vadd.f32 0.0, %v1276
        %v1278 = vpop.f32.mrb[0].mxu0
        %1279 = vmatprep.mubr.bf16.mxu0 0
        %1280 = vmatmul.mubr.bf16.gmra.mrb[0].mxu0 %v924
        %v1281 = vpop.f32.mrb[0].mxu0
        %v1282 = vadd.f32 0.0, %v1281
        %v1283 = vpop.f32.mrb[0].mxu0
        %v1284 = vpop.f32.mrb[0].mxu0
        %v1285 = vadd.f32 0.0, %v1284
        %v1286 = vpop.f32.mrb[0].mxu0
        %1287 = vmatprep.mubr.bf16.mxu0 0
        %1288 = vmatmul.mubr.bf16.gmra.mrb[0].mxu0 %v925
        %v1289 = vpop.f32.mrb[0].mxu0
        %v1290 = vadd.f32 0.0, %v1289
        %v1291 = vpop.f32.mrb[0].mxu0
        %v1292 = vpop.f32.mrb[0].mxu0
        %v1293 = vadd.f32 0.0, %v1292
        %v1294 = vpop.f32.mrb[0].mxu0
        %1295 = vdwg.mxu0
        %v1296 = vlaneseq
        %v1297 = vshrl.u32 %v1296, 7
        %v1298 = vsub.s32 0, %v1297
        %v1299 = vrot.slane %v884, %v1298
        %v1300 = vadd.f32 %v1121, %v1299
        %v1301 = vadd.f32 %v1125, %v1299
        %v1302 = vadd.f32 %v1131, %v1299
        %v1303 = vadd.f32 %v1135, %v1299
        %v1304 = vadd.f32 %v1141, %v1299
        %v1305 = vadd.f32 %v1145, %v1299
        %v1306 = vadd.f32 %v1151, %v1299
        %v1307 = vadd.f32 %v1155, %v1299
        %v1308 = vadd.f32 %v1161, %v1299
        %v1309 = vadd.f32 %v1165, %v1299
        %v1310 = vadd.f32 %v1171, %v1299
        %v1311 = vadd.f32 %v1175, %v1299
        %v1312 = vadd.f32 %v1181, %v1299
        %v1313 = vadd.f32 %v1185, %v1299
        %v1314 = vadd.f32 %v1191, %v1299
        %v1315 = vadd.f32 %v1195, %v1299
        %v1316 = vlaneseq
        %v1317 = vshrl.u32 %v1316, 7
        %v1318 = vsub.s32 1, %v1317
        %v1319 = vrot.slane %v884, %v1318
        %v1320 = vadd.f32 %v1123, %v1319
        %v1321 = vadd.f32 %v1127, %v1319
        %v1322 = vadd.f32 %v1133, %v1319
        %v1323 = vadd.f32 %v1137, %v1319
        %v1324 = vadd.f32 %v1143, %v1319
        %v1325 = vadd.f32 %v1147, %v1319
        %v1326 = vadd.f32 %v1153, %v1319
        %v1327 = vadd.f32 %v1157, %v1319
        %v1328 = vadd.f32 %v1163, %v1319
        %v1329 = vadd.f32 %v1167, %v1319
        %v1330 = vadd.f32 %v1173, %v1319
        %v1331 = vadd.f32 %v1177, %v1319
        %v1332 = vadd.f32 %v1183, %v1319
        %v1333 = vadd.f32 %v1187, %v1319
        %v1334 = vadd.f32 %v1193, %v1319
        %v1335 = vadd.f32 %v1197, %v1319
        %v1336 = vlaneseq
        %v1337 = vshrl.u32 %v1336, 7
        %v1338 = vsub.s32 2, %v1337
        %v1339 = vrot.slane %v884, %v1338
        %v1340 = vadd.f32 %v1234, %v1339
        %v1341 = vadd.f32 %v1237, %v1339
        %v1342 = vadd.f32 %v1242, %v1339
        %v1343 = vadd.f32 %v1245, %v1339
        %v1344 = vadd.f32 %v1250, %v1339
        %v1345 = vadd.f32 %v1253, %v1339
        %v1346 = vadd.f32 %v1258, %v1339
        %v1347 = vadd.f32 %v1261, %v1339
        %v1348 = vadd.f32 %v1266, %v1339
        %v1349 = vadd.f32 %v1269, %v1339
        %v1350 = vadd.f32 %v1274, %v1339
        %v1351 = vadd.f32 %v1277, %v1339
        %v1352 = vadd.f32 %v1282, %v1339
        %v1353 = vadd.f32 %v1285, %v1339
        %v1354 = vadd.f32 %v1290, %v1339
        %v1355 = vadd.f32 %v1293, %v1339
        %v1356 = vld [vmem:[%s693] sm:$0xf]
        %v1357 = vld [vmem:[%s693 + $0x4] sm:$0xf]
        %v1358 = vld [vmem:[%s693 + $0x8] sm:$0xf]
        %v1359 = vld [vmem:[%s693 + $0xc] sm:$0xf]
        %v1360 = vld [vmem:[%s693 + $0x10] sm:$0xf]
        %v1361 = vld [vmem:[%s693 + $0x14] sm:$0xf]
        %v1362 = vld [vmem:[%s693 + $0x18] sm:$0xf]
        %v1363 = vld [vmem:[%s693 + $0x1c] sm:$0xf]
        %v1364 = vld [vmem:[%s693 + $0x20] sm:$0xf]
        %v1365 = vld [vmem:[%s693 + $0x24] sm:$0xf]
        %v1366 = vld [vmem:[%s693 + $0x28] sm:$0xf]
        %v1367 = vld [vmem:[%s693 + $0x2c] sm:$0xf]
        %v1368 = vld [vmem:[%s693 + $0x30] sm:$0xf]
        %v1369 = vld [vmem:[%s693 + $0x34] sm:$0xf]
        %v1370 = vld [vmem:[%s693 + $0x38] sm:$0xf]
        %v1371 = vld [vmem:[%s693 + $0x3c] sm:$0xf]
        %v1372 = vpack.c.bf16 %v1301, %v1300
        %v1373 = vpack.c.bf16 %v1303, %v1302
        %v1374 = vpack.c.bf16 %v1305, %v1304
        %v1375 = vpack.c.bf16 %v1307, %v1306
        %v1376 = vpack.c.bf16 %v1309, %v1308
        %v1377 = vpack.c.bf16 %v1311, %v1310
        %v1378 = vpack.c.bf16 %v1313, %v1312
        %v1379 = vpack.c.bf16 %v1315, %v1314
        %v1380 = vpack.c.bf16 %v1321, %v1320
        %v1381 = vpack.c.bf16 %v1323, %v1322
        %v1382 = vpack.c.bf16 %v1325, %v1324
        %v1383 = vpack.c.bf16 %v1327, %v1326
        %v1384 = vpack.c.bf16 %v1329, %v1328
        %v1385 = vpack.c.bf16 %v1331, %v1330
        %v1386 = vpack.c.bf16 %v1333, %v1332
        %v1387 = vpack.c.bf16 %v1335, %v1334
        %v1388 = vpack.c.bf16 %v1341, %v1340
        %v1389 = vpack.c.bf16 %v1343, %v1342
        %v1390 = vpack.c.bf16 %v1345, %v1344
        %v1391 = vpack.c.bf16 %v1347, %v1346
        %v1392 = vpack.c.bf16 %v1349, %v1348
        %v1393 = vpack.c.bf16 %v1351, %v1350
        %v1394 = vpack.c.bf16 %v1353, %v1352
        %v1395 = vpack.c.bf16 %v1355, %v1354
        %vm1396 = vcmask 261120
        %v1398 = vsel %vm1396, %v1372, 0
        %v1401 = vsel %vm1396, %v1373, 0
        %v1404 = vsel %vm1396, %v1374, 0
        %v1407 = vsel %vm1396, %v1375, 0
        %v1410 = vsel %vm1396, %v1376, 0
        %v1413 = vsel %vm1396, %v1377, 0
        %v1416 = vsel %vm1396, %v1378, 0
        %v1419 = vsel %vm1396, %v1379, 0
        %v1422 = vsel %vm1396, %v1380, 0
        %v1425 = vsel %vm1396, %v1381, 0
        %v1428 = vsel %vm1396, %v1382, 0
        %v1431 = vsel %vm1396, %v1383, 0
        %v1434 = vsel %vm1396, %v1384, 0
        %v1437 = vsel %vm1396, %v1385, 0
        %v1440 = vsel %vm1396, %v1386, 0
        %v1443 = vsel %vm1396, %v1387, 0
        %1445 = vmatprep.subr.bf16.mxu0 0
        %1446 = vmatpush1.bf16.xpose.msra.mxu0 %v1422
        %1447 = vmatprep.subr.bf16.mxu0 0
        %1448 = vmatpush1.bf16.xpose.msra.mxu0 %v1425
        %1449 = vmatprep.subr.bf16.mxu0 0
        %1450 = vmatpush1.bf16.xpose.msra.mxu0 %v1428
        %1451 = vmatprep.subr.bf16.mxu0 0
        %1452 = vmatpush1.bf16.xpose.msra.mxu0 %v1431
        %1453 = vmatprep.subr.bf16.mxu0 0
        %1454 = vmatpush1.bf16.xpose.msra.mxu0 %v1434
        %1455 = vmatprep.subr.bf16.mxu0 0
        %1456 = vmatpush1.bf16.xpose.msra.mxu0 %v1437
        %1457 = vmatprep.subr.bf16.mxu0 0
        %1458 = vmatpush1.bf16.xpose.msra.mxu0 %v1440
        %1459 = vmatprep.subr.bf16.mxu0 0
        %1460 = vmatpush1.bf16.xpose.msra.mxu0 %v1443
        %1461 = vmatprep.subr.bf16.mxu0 0
        %1462 = vmatpush1.bf16.xpose.msra.mxu0 0
        %1463 = vmatprep.subr.bf16.mxu0 0
        %1464 = vmatpush1.bf16.xpose.msra.mxu0 0
        %1465 = vmatprep.subr.bf16.mxu0 0
        %1466 = vmatpush1.bf16.xpose.msra.mxu0 0
        %1467 = vmatprep.subr.bf16.mxu0 0
        %1468 = vmatpush1.bf16.xpose.msra.mxu0 0
        %1469 = vmatprep.subr.bf16.mxu0 0
        %1470 = vmatpush1.bf16.xpose.msra.mxu0 0
        %1471 = vmatprep.subr.bf16.mxu0 0
        %1472 = vmatpush1.bf16.xpose.msra.mxu0 0
        %1473 = vmatprep.subr.bf16.mxu0 0
        %1474 = vmatpush1.bf16.xpose.msra.mxu0 0
        %1475 = vmatprep.subr.bf16.mxu0 0
        %1476 = vmatpush1.bf16.xpose.msra.mxu0 0
        %1477 = vmatprep.mubr.bf16.mxu0 0
        %1478 = vmatmul.mubr.bf16.gmra.mrb[0].mxu0 %v1398
        %v1479 = vpop.f32.mrb[0].mxu0
        %v1480 = vadd.f32 0.0, %v1479
        %v1481 = vpop.f32.mrb[0].mxu0
        %v1482 = vpop.f32.mrb[0].mxu0
        %v1483 = vadd.f32 0.0, %v1482
        %v1484 = vpop.f32.mrb[0].mxu0
        %1485 = vmatprep.mubr.bf16.mxu0 0
        %1486 = vmatmul.mubr.bf16.gmra.mrb[0].mxu0 %v1401
        %v1487 = vpop.f32.mrb[0].mxu0
        %v1488 = vadd.f32 0.0, %v1487
        %v1489 = vpop.f32.mrb[0].mxu0
        %v1490 = vpop.f32.mrb[0].mxu0
        %v1491 = vadd.f32 0.0, %v1490
        %v1492 = vpop.f32.mrb[0].mxu0
        %1493 = vmatprep.mubr.bf16.mxu0 0
        %1494 = vmatmul.mubr.bf16.gmra.mrb[0].mxu0 %v1404
        %v1495 = vpop.f32.mrb[0].mxu0
        %v1496 = vadd.f32 0.0, %v1495
        %v1497 = vpop.f32.mrb[0].mxu0
        %v1498 = vpop.f32.mrb[0].mxu0
        %v1499 = vadd.f32 0.0, %v1498
        %v1500 = vpop.f32.mrb[0].mxu0
        %1501 = vmatprep.mubr.bf16.mxu0 0
        %1502 = vmatmul.mubr.bf16.gmra.mrb[0].mxu0 %v1407
        %v1503 = vpop.f32.mrb[0].mxu0
        %v1504 = vadd.f32 0.0, %v1503
        %v1505 = vpop.f32.mrb[0].mxu0
        %v1506 = vpop.f32.mrb[0].mxu0
        %v1507 = vadd.f32 0.0, %v1506
        %v1508 = vpop.f32.mrb[0].mxu0
        %1509 = vmatprep.mubr.bf16.mxu0 0
        %1510 = vmatmul.mubr.bf16.gmra.mrb[0].mxu0 %v1410
        %v1511 = vpop.f32.mrb[0].mxu0
        %v1512 = vadd.f32 0.0, %v1511
        %v1513 = vpop.f32.mrb[0].mxu0
        %v1514 = vpop.f32.mrb[0].mxu0
        %v1515 = vadd.f32 0.0, %v1514
        %v1516 = vpop.f32.mrb[0].mxu0
        %1517 = vmatprep.mubr.bf16.mxu0 0
        %1518 = vmatmul.mubr.bf16.gmra.mrb[0].mxu0 %v1413
        %v1519 = vpop.f32.mrb[0].mxu0
        %v1520 = vadd.f32 0.0, %v1519
        %v1521 = vpop.f32.mrb[0].mxu0
        %v1522 = vpop.f32.mrb[0].mxu0
        %v1523 = vadd.f32 0.0, %v1522
        %v1524 = vpop.f32.mrb[0].mxu0
        %1525 = vmatprep.mubr.bf16.mxu0 0
        %1526 = vmatmul.mubr.bf16.gmra.mrb[0].mxu0 %v1416
        %v1527 = vpop.f32.mrb[0].mxu0
        %v1528 = vadd.f32 0.0, %v1527
        %v1529 = vpop.f32.mrb[0].mxu0
        %v1530 = vpop.f32.mrb[0].mxu0
        %v1531 = vadd.f32 0.0, %v1530
        %v1532 = vpop.f32.mrb[0].mxu0
        %1533 = vmatprep.mubr.bf16.mxu0 0
        %1534 = vmatmul.mubr.bf16.gmra.mrb[0].mxu0 %v1419
        %v1535 = vpop.f32.mrb[0].mxu0
        %v1536 = vadd.f32 0.0, %v1535
        %v1537 = vpop.f32.mrb[0].mxu0
        %v1538 = vpop.f32.mrb[0].mxu0
        %v1539 = vadd.f32 0.0, %v1538
        %v1540 = vpop.f32.mrb[0].mxu0
        %1541 = vdwg.mxu0
        %v1542 = vmul.f32 %v1480, 0.17677669
        %v1543 = vmul.f32 %v1483, 0.17677669
        %v1544 = vmul.f32 %v1488, 0.17677669
        %v1545 = vmul.f32 %v1491, 0.17677669
        %v1546 = vmul.f32 %v1496, 0.17677669
        %v1547 = vmul.f32 %v1499, 0.17677669
        %v1548 = vmul.f32 %v1504, 0.17677669
        %v1549 = vmul.f32 %v1507, 0.17677669
        %v1550 = vmul.f32 %v1512, 0.17677669
        %v1551 = vmul.f32 %v1515, 0.17677669
        %v1552 = vmul.f32 %v1520, 0.17677669
        %v1553 = vmul.f32 %v1523, 0.17677669
        %v1554 = vmul.f32 %v1528, 0.17677669
        %v1555 = vmul.f32 %v1531, 0.17677669
        %v1556 = vmul.f32 %v1536, 0.17677669
        %v1557 = vmul.f32 %v1539, 0.17677669
        %v1558 = vadd.f32 %v1542, %v886
        %v1559 = vadd.f32 %v1543, %v887
        %v1560 = vadd.f32 %v1544, %v888
        %v1561 = vadd.f32 %v1545, %v889
        %v1562 = vadd.f32 %v1546, %v890
        %v1563 = vadd.f32 %v1547, %v891
        %v1564 = vadd.f32 %v1548, %v892
        %v1565 = vadd.f32 %v1549, %v893
        %v1566 = vadd.f32 %v1550, %v894
        %v1567 = vadd.f32 %v1551, %v895
        %v1568 = vadd.f32 %v1552, %v896
        %v1569 = vadd.f32 %v1553, %v897
        %v1570 = vadd.f32 %v1554, %v898
        %v1571 = vadd.f32 %v1555, %v899
        %v1572 = vadd.f32 %v1556, %v900
        %v1573 = vadd.f32 %v1557, %v901
        %1574 = vmax.xlane.f32.xlu0 %v1558
        %v1575 = vpop.xlane.xlu0 %1574
        %1576 = vmax.xlane.f32.xlu0 %v1559
        %v1577 = vpop.xlane.xlu0 %1576
        %1578 = vmax.xlane.f32.xlu0 %v1560
        %v1579 = vpop.xlane.xlu0 %1578
        %1580 = vmax.xlane.f32.xlu0 %v1561
        %v1581 = vpop.xlane.xlu0 %1580
        %1582 = vmax.xlane.f32.xlu0 %v1562
        %v1583 = vpop.xlane.xlu0 %1582
        %1584 = vmax.xlane.f32.xlu0 %v1563
        %v1585 = vpop.xlane.xlu0 %1584
        %1586 = vmax.xlane.f32.xlu0 %v1564
        %v1587 = vpop.xlane.xlu0 %1586
        %1588 = vmax.xlane.f32.xlu0 %v1565
        %v1589 = vpop.xlane.xlu0 %1588
        %1590 = vmax.xlane.f32.xlu0 %v1566
        %v1591 = vpop.xlane.xlu0 %1590
        %1592 = vmax.xlane.f32.xlu0 %v1567
        %v1593 = vpop.xlane.xlu0 %1592
        %1594 = vmax.xlane.f32.xlu0 %v1568
        %v1595 = vpop.xlane.xlu0 %1594
        %1596 = vmax.xlane.f32.xlu0 %v1569
        %v1597 = vpop.xlane.xlu0 %1596
        %1598 = vmax.xlane.f32.xlu0 %v1570
        %v1599 = vpop.xlane.xlu0 %1598
        %1600 = vmax.xlane.f32.xlu0 %v1571
        %v1601 = vpop.xlane.xlu0 %1600
        %1602 = vmax.xlane.f32.xlu0 %v1572
        %v1603 = vpop.xlane.xlu0 %1602
        %1604 = vmax.xlane.f32.xlu0 %v1573
        %v1605 = vpop.xlane.xlu0 %1604
        %v1606 = vsub.f32 %v1558, %v1575
        %v1607 = vsub.f32 %v1559, %v1577
        %v1608 = vsub.f32 %v1560, %v1579
        %v1609 = vsub.f32 %v1561, %v1581
        %v1610 = vsub.f32 %v1562, %v1583
        %v1611 = vsub.f32 %v1563, %v1585
        %v1612 = vsub.f32 %v1564, %v1587
        %v1613 = vsub.f32 %v1565, %v1589
        %v1614 = vsub.f32 %v1566, %v1591
        %v1615 = vsub.f32 %v1567, %v1593
        %v1616 = vsub.f32 %v1568, %v1595
        %v1617 = vsub.f32 %v1569, %v1597
        %v1618 = vsub.f32 %v1570, %v1599
        %v1619 = vsub.f32 %v1571, %v1601
        %v1620 = vsub.f32 %v1572, %v1603
        %v1621 = vsub.f32 %v1573, %v1605
        %v1622 = vmul.f32 %v1606, 1.442695
        %v1623 = vpow.pop %v1622
        %v1624 = vmul.f32 %v1607, 1.442695
        %v1625 = vpow.pop %v1624
        %v1626 = vmul.f32 %v1608, 1.442695
        %v1627 = vpow.pop %v1626
        %v1628 = vmul.f32 %v1609, 1.442695
        %v1629 = vpow.pop %v1628
        %v1630 = vmul.f32 %v1610, 1.442695
        %v1631 = vpow.pop %v1630
        %v1632 = vmul.f32 %v1611, 1.442695
        %v1633 = vpow.pop %v1632
        %v1634 = vmul.f32 %v1612, 1.442695
        %v1635 = vpow.pop %v1634
        %v1636 = vmul.f32 %v1613, 1.442695
        %v1637 = vpow.pop %v1636
        %v1638 = vmul.f32 %v1614, 1.442695
        %v1639 = vpow.pop %v1638
        %v1640 = vmul.f32 %v1615, 1.442695
        %v1641 = vpow.pop %v1640
        %v1642 = vmul.f32 %v1616, 1.442695
        %v1643 = vpow.pop %v1642
        %v1644 = vmul.f32 %v1617, 1.442695
        %v1645 = vpow.pop %v1644
        %v1646 = vmul.f32 %v1618, 1.442695
        %v1647 = vpow.pop %v1646
        %v1648 = vmul.f32 %v1619, 1.442695
        %v1649 = vpow.pop %v1648
        %v1650 = vmul.f32 %v1620, 1.442695
        %v1651 = vpow.pop %v1650
        %v1652 = vmul.f32 %v1621, 1.442695
        %v1653 = vpow.pop %v1652
        %1654 = vadd.xlane.f32.xlu0 %v1623
        %v1655 = vpop.xlane.xlu0 %1654
        %1656 = vadd.xlane.f32.xlu0 %v1625
        %v1657 = vpop.xlane.xlu0 %1656
        %1658 = vadd.xlane.f32.xlu0 %v1627
        %v1659 = vpop.xlane.xlu0 %1658
        %1660 = vadd.xlane.f32.xlu0 %v1629
        %v1661 = vpop.xlane.xlu0 %1660
        %1662 = vadd.xlane.f32.xlu0 %v1631
        %v1663 = vpop.xlane.xlu0 %1662
        %1664 = vadd.xlane.f32.xlu0 %v1633
        %v1665 = vpop.xlane.xlu0 %1664
        %1666 = vadd.xlane.f32.xlu0 %v1635
        %v1667 = vpop.xlane.xlu0 %1666
        %1668 = vadd.xlane.f32.xlu0 %v1637
        %v1669 = vpop.xlane.xlu0 %1668
        %1670 = vadd.xlane.f32.xlu0 %v1639
        %v1671 = vpop.xlane.xlu0 %1670
        %1672 = vadd.xlane.f32.xlu0 %v1641
        %v1673 = vpop.xlane.xlu0 %1672
        %1674 = vadd.xlane.f32.xlu0 %v1643
        %v1675 = vpop.xlane.xlu0 %1674
        %1676 = vadd.xlane.f32.xlu0 %v1645
        %v1677 = vpop.xlane.xlu0 %1676
        %1678 = vadd.xlane.f32.xlu0 %v1647
        %v1679 = vpop.xlane.xlu0 %1678
        %1680 = vadd.xlane.f32.xlu0 %v1649
        %v1681 = vpop.xlane.xlu0 %1680
        %1682 = vadd.xlane.f32.xlu0 %v1651
        %v1683 = vpop.xlane.xlu0 %1682
        %1684 = vadd.xlane.f32.xlu0 %v1653
        %v1685 = vpop.xlane.xlu0 %1684
        %v1686 = vrcp.pop %v1655
        %v1687 = vrcp.pop %v1657
        %v1688 = vrcp.pop %v1659
        %v1689 = vrcp.pop %v1661
        %v1690 = vrcp.pop %v1663
        %v1691 = vrcp.pop %v1665
        %v1692 = vrcp.pop %v1667
        %v1693 = vrcp.pop %v1669
        %v1694 = vrcp.pop %v1671
        %v1695 = vrcp.pop %v1673
        %v1696 = vrcp.pop %v1675
        %v1697 = vrcp.pop %v1677
        %v1698 = vrcp.pop %v1679
        %v1699 = vrcp.pop %v1681
        %v1700 = vrcp.pop %v1683
        %v1701 = vrcp.pop %v1685
        %v1702 = vmul.f32 %v1623, %v1686
        %v1703 = vmul.f32 %v1625, %v1687
        %v1704 = vmul.f32 %v1627, %v1688
        %v1705 = vmul.f32 %v1629, %v1689
        %v1706 = vmul.f32 %v1631, %v1690
        %v1707 = vmul.f32 %v1633, %v1691
        %v1708 = vmul.f32 %v1635, %v1692
        %v1709 = vmul.f32 %v1637, %v1693
        %v1710 = vmul.f32 %v1639, %v1694
        %v1711 = vmul.f32 %v1641, %v1695
        %v1712 = vmul.f32 %v1643, %v1696
        %v1713 = vmul.f32 %v1645, %v1697
        %v1714 = vmul.f32 %v1647, %v1698
        %v1715 = vmul.f32 %v1649, %v1699
        %v1716 = vmul.f32 %v1651, %v1700
        %v1717 = vmul.f32 %v1653, %v1701
        %v1718 = vpack.c.bf16 %v1703, %v1702
        %v1719 = vpack.c.bf16 %v1705, %v1704
        %v1720 = vpack.c.bf16 %v1707, %v1706
        %v1721 = vpack.c.bf16 %v1709, %v1708
        %v1722 = vpack.c.bf16 %v1711, %v1710
        %v1723 = vpack.c.bf16 %v1713, %v1712
        %v1724 = vpack.c.bf16 %v1715, %v1714
        %v1725 = vpack.c.bf16 %v1717, %v1716
        %1726 = vmatprep.subr.bf16.mxu0 0
        %1727 = vmatpush1.bf16.msra.mxu0 %v1388
        %1728 = vmatprep.subr.bf16.mxu0 0
        %1729 = vmatpush1.bf16.msra.mxu0 %v1389
        %1730 = vmatprep.subr.bf16.mxu0 0
        %1731 = vmatpush1.bf16.msra.mxu0 %v1390
        %1732 = vmatprep.subr.bf16.mxu0 0
        %1733 = vmatpush1.bf16.msra.mxu0 %v1391
        %1734 = vmatprep.subr.bf16.mxu0 0
        %1735 = vmatpush1.bf16.msra.mxu0 %v1392
        %1736 = vmatprep.subr.bf16.mxu0 0
        %1737 = vmatpush1.bf16.msra.mxu0 %v1393
        %1738 = vmatprep.subr.bf16.mxu0 0
        %1739 = vmatpush1.bf16.msra.mxu0 %v1394
        %1740 = vmatprep.subr.bf16.mxu0 0
        %1741 = vmatpush1.bf16.msra.mxu0 %v1395
        %1742 = vmatprep.subr.bf16.mxu0 0
        %1743 = vmatpush1.bf16.msra.mxu0 0
        %1744 = vmatprep.subr.bf16.mxu0 0
        %1745 = vmatpush1.bf16.msra.mxu0 0
        %1746 = vmatprep.subr.bf16.mxu0 0
        %1747 = vmatpush1.bf16.msra.mxu0 0
        %1748 = vmatprep.subr.bf16.mxu0 0
        %1749 = vmatpush1.bf16.msra.mxu0 0
        %1750 = vmatprep.subr.bf16.mxu0 0
        %1751 = vmatpush1.bf16.msra.mxu0 0
        %1752 = vmatprep.subr.bf16.mxu0 0
        %1753 = vmatpush1.bf16.msra.mxu0 0
        %1754 = vmatprep.subr.bf16.mxu0 0
        %1755 = vmatpush1.bf16.msra.mxu0 0
        %1756 = vmatprep.subr.bf16.mxu0 0
        %1757 = vmatpush1.bf16.msra.mxu0 0
        %1758 = vmatprep.mubr.bf16.mxu0 0
        %1759 = vmatmul.mubr.bf16.gmra.mrb[0].mxu0 %v1718
        %v1760 = vpop.f32.mrb[0].mxu0
        %v1761 = vadd.f32 0.0, %v1760
        %v1762 = vpop.f32.mrb[0].mxu0
        %v1763 = vpop.f32.mrb[0].mxu0
        %v1764 = vadd.f32 0.0, %v1763
        %v1765 = vpop.f32.mrb[0].mxu0
        %1766 = vmatprep.mubr.bf16.mxu0 0
        %1767 = vmatmul.mubr.bf16.gmra.mrb[0].mxu0 %v1719
        %v1768 = vpop.f32.mrb[0].mxu0
        %v1769 = vadd.f32 0.0, %v1768
        %v1770 = vpop.f32.mrb[0].mxu0
        %v1771 = vpop.f32.mrb[0].mxu0
        %v1772 = vadd.f32 0.0, %v1771
        %v1773 = vpop.f32.mrb[0].mxu0
        %1774 = vmatprep.mubr.bf16.mxu0 0
        %1775 = vmatmul.mubr.bf16.gmra.mrb[0].mxu0 %v1720
        %v1776 = vpop.f32.mrb[0].mxu0
        %v1777 = vadd.f32 0.0, %v1776
        %v1778 = vpop.f32.mrb[0].mxu0
        %v1779 = vpop.f32.mrb[0].mxu0
        %v1780 = vadd.f32 0.0, %v1779
        %v1781 = vpop.f32.mrb[0].mxu0
        %1782 = vmatprep.mubr.bf16.mxu0 0
        %1783 = vmatmul.mubr.bf16.gmra.mrb[0].mxu0 %v1721
        %v1784 = vpop.f32.mrb[0].mxu0
        %v1785 = vadd.f32 0.0, %v1784
        %v1786 = vpop.f32.mrb[0].mxu0
        %v1787 = vpop.f32.mrb[0].mxu0
        %v1788 = vadd.f32 0.0, %v1787
        %v1789 = vpop.f32.mrb[0].mxu0
        %1790 = vmatprep.mubr.bf16.mxu0 0
        %1791 = vmatmul.mubr.bf16.gmra.mrb[0].mxu0 %v1722
        %v1792 = vpop.f32.mrb[0].mxu0
        %v1793 = vadd.f32 0.0, %v1792
        %v1794 = vpop.f32.mrb[0].mxu0
        %v1795 = vpop.f32.mrb[0].mxu0
        %v1796 = vadd.f32 0.0, %v1795
        %v1797 = vpop.f32.mrb[0].mxu0
        %1798 = vmatprep.mubr.bf16.mxu0 0
        %1799 = vmatmul.mubr.bf16.gmra.mrb[0].mxu0 %v1723
        %v1800 = vpop.f32.mrb[0].mxu0
        %v1801 = vadd.f32 0.0, %v1800
        %v1802 = vpop.f32.mrb[0].mxu0
        %v1803 = vpop.f32.mrb[0].mxu0
        %v1804 = vadd.f32 0.0, %v1803
        %v1805 = vpop.f32.mrb[0].mxu0
        %1806 = vmatprep.mubr.bf16.mxu0 0
        %1807 = vmatmul.mubr.bf16.gmra.mrb[0].mxu0 %v1724
        %v1808 = vpop.f32.mrb[0].mxu0
        %v1809 = vadd.f32 0.0, %v1808
        %v1810 = vpop.f32.mrb[0].mxu0
        %v1811 = vpop.f32.mrb[0].mxu0
        %v1812 = vadd.f32 0.0, %v1811
        %v1813 = vpop.f32.mrb[0].mxu0
        %1814 = vmatprep.mubr.bf16.mxu0 0
        %1815 = vmatmul.mubr.bf16.gmra.mrb[0].mxu0 %v1725
        %v1816 = vpop.f32.mrb[0].mxu0
        %v1817 = vadd.f32 0.0, %v1816
        %v1818 = vpop.f32.mrb[0].mxu0
        %v1819 = vpop.f32.mrb[0].mxu0
        %v1820 = vadd.f32 0.0, %v1819
        %v1821 = vpop.f32.mrb[0].mxu0
        %1822 = vdwg.mxu0
        %1831 = vrot.lane.b32.xlu0 %v1372, 96
        %v1832 = vpop.permute.xlu0 %1831
        %1833 = vrot.lane.b32.xlu0 %v1373, 96
        %v1834 = vpop.permute.xlu0 %1833
        %1835 = vrot.lane.b32.xlu0 %v1374, 96
        %v1836 = vpop.permute.xlu0 %1835
        %1837 = vrot.lane.b32.xlu0 %v1375, 96
        %v1838 = vpop.permute.xlu0 %1837
        %1839 = vrot.lane.b32.xlu0 %v1376, 96
        %v1840 = vpop.permute.xlu0 %1839
        %1841 = vrot.lane.b32.xlu0 %v1377, 96
        %v1842 = vpop.permute.xlu0 %1841
        %1843 = vrot.lane.b32.xlu0 %v1378, 96
        %v1844 = vpop.permute.xlu0 %1843
        %1845 = vrot.lane.b32.xlu0 %v1379, 96
        %v1846 = vpop.permute.xlu0 %1845
        %1855 = vrot.lane.b32.xlu0 %v1380, 96
        %v1856 = vpop.permute.xlu0 %1855
        %1857 = vrot.lane.b32.xlu0 %v1381, 96
        %v1858 = vpop.permute.xlu0 %1857
        %1859 = vrot.lane.b32.xlu0 %v1382, 96
        %v1860 = vpop.permute.xlu0 %1859
        %1861 = vrot.lane.b32.xlu0 %v1383, 96
        %v1862 = vpop.permute.xlu0 %1861
        %1863 = vrot.lane.b32.xlu0 %v1384, 96
        %v1864 = vpop.permute.xlu0 %1863
        %1865 = vrot.lane.b32.xlu0 %v1385, 96
        %v1866 = vpop.permute.xlu0 %1865
        %1867 = vrot.lane.b32.xlu0 %v1386, 96
        %v1868 = vpop.permute.xlu0 %1867
        %1869 = vrot.lane.b32.xlu0 %v1387, 96
        %v1870 = vpop.permute.xlu0 %1869
        %v1872 = vsel %vm1396, %v1832, 0
        %v1875 = vsel %vm1396, %v1834, 0
        %v1878 = vsel %vm1396, %v1836, 0
        %v1881 = vsel %vm1396, %v1838, 0
        %v1884 = vsel %vm1396, %v1840, 0
        %v1887 = vsel %vm1396, %v1842, 0
        %v1890 = vsel %vm1396, %v1844, 0
        %v1893 = vsel %vm1396, %v1846, 0
        %v1896 = vsel %vm1396, %v1856, 0
        %v1899 = vsel %vm1396, %v1858, 0
        %v1902 = vsel %vm1396, %v1860, 0
        %v1905 = vsel %vm1396, %v1862, 0
        %v1908 = vsel %vm1396, %v1864, 0
        %v1911 = vsel %vm1396, %v1866, 0
        %v1914 = vsel %vm1396, %v1868, 0
        %v1917 = vsel %vm1396, %v1870, 0
        %1919 = vmatprep.subr.bf16.mxu0 0
        %1920 = vmatpush1.bf16.xpose.msra.mxu0 %v1896
        %1921 = vmatprep.subr.bf16.mxu0 0
        %1922 = vmatpush1.bf16.xpose.msra.mxu0 %v1899
        %1923 = vmatprep.subr.bf16.mxu0 0
        %1924 = vmatpush1.bf16.xpose.msra.mxu0 %v1902
        %1925 = vmatprep.subr.bf16.mxu0 0
        %1926 = vmatpush1.bf16.xpose.msra.mxu0 %v1905
        %1927 = vmatprep.subr.bf16.mxu0 0
        %1928 = vmatpush1.bf16.xpose.msra.mxu0 %v1908
        %1929 = vmatprep.subr.bf16.mxu0 0
        %1930 = vmatpush1.bf16.xpose.msra.mxu0 %v1911
        %1931 = vmatprep.subr.bf16.mxu0 0
        %1932 = vmatpush1.bf16.xpose.msra.mxu0 %v1914
        %1933 = vmatprep.subr.bf16.mxu0 0
        %1934 = vmatpush1.bf16.xpose.msra.mxu0 %v1917
        %1935 = vmatprep.subr.bf16.mxu0 0
        %1936 = vmatpush1.bf16.xpose.msra.mxu0 0
        %1937 = vmatprep.subr.bf16.mxu0 0
        %1938 = vmatpush1.bf16.xpose.msra.mxu0 0
        %1939 = vmatprep.subr.bf16.mxu0 0
        %1940 = vmatpush1.bf16.xpose.msra.mxu0 0
        %1941 = vmatprep.subr.bf16.mxu0 0
        %1942 = vmatpush1.bf16.xpose.msra.mxu0 0
        %1943 = vmatprep.subr.bf16.mxu0 0
        %1944 = vmatpush1.bf16.xpose.msra.mxu0 0
        %1945 = vmatprep.subr.bf16.mxu0 0
        %1946 = vmatpush1.bf16.xpose.msra.mxu0 0
        %1947 = vmatprep.subr.bf16.mxu0 0
        %1948 = vmatpush1.bf16.xpose.msra.mxu0 0
        %1949 = vmatprep.subr.bf16.mxu0 0
        %1950 = vmatpush1.bf16.xpose.msra.mxu0 0
        %1951 = vmatprep.mubr.bf16.mxu0 0
        %1952 = vmatmul.mubr.bf16.gmra.mrb[0].mxu0 %v1872
        %v1953 = vpop.f32.mrb[0].mxu0
        %v1954 = vadd.f32 0.0, %v1953
        %v1955 = vpop.f32.mrb[0].mxu0
        %v1956 = vpop.f32.mrb[0].mxu0
        %v1957 = vadd.f32 0.0, %v1956
        %v1958 = vpop.f32.mrb[0].mxu0
        %1959 = vmatprep.mubr.bf16.mxu0 0
        %1960 = vmatmul.mubr.bf16.gmra.mrb[0].mxu0 %v1875
        %v1961 = vpop.f32.mrb[0].mxu0
        %v1962 = vadd.f32 0.0, %v1961
        %v1963 = vpop.f32.mrb[0].mxu0
        %v1964 = vpop.f32.mrb[0].mxu0
        %v1965 = vadd.f32 0.0, %v1964
        %v1966 = vpop.f32.mrb[0].mxu0
        %1967 = vmatprep.mubr.bf16.mxu0 0
        %1968 = vmatmul.mubr.bf16.gmra.mrb[0].mxu0 %v1878
        %v1969 = vpop.f32.mrb[0].mxu0
        %v1970 = vadd.f32 0.0, %v1969
        %v1971 = vpop.f32.mrb[0].mxu0
        %v1972 = vpop.f32.mrb[0].mxu0
        %v1973 = vadd.f32 0.0, %v1972
        %v1974 = vpop.f32.mrb[0].mxu0
        %1975 = vmatprep.mubr.bf16.mxu0 0
        %1976 = vmatmul.mubr.bf16.gmra.mrb[0].mxu0 %v1881
        %v1977 = vpop.f32.mrb[0].mxu0
        %v1978 = vadd.f32 0.0, %v1977
        %v1979 = vpop.f32.mrb[0].mxu0
        %v1980 = vpop.f32.mrb[0].mxu0
        %v1981 = vadd.f32 0.0, %v1980
        %v1982 = vpop.f32.mrb[0].mxu0
        %1983 = vmatprep.mubr.bf16.mxu0 0
        %1984 = vmatmul.mubr.bf16.gmra.mrb[0].mxu0 %v1884
        %v1985 = vpop.f32.mrb[0].mxu0
        %v1986 = vadd.f32 0.0, %v1985
        %v1987 = vpop.f32.mrb[0].mxu0
        %v1988 = vpop.f32.mrb[0].mxu0
        %v1989 = vadd.f32 0.0, %v1988
        %v1990 = vpop.f32.mrb[0].mxu0
        %1991 = vmatprep.mubr.bf16.mxu0 0
        %1992 = vmatmul.mubr.bf16.gmra.mrb[0].mxu0 %v1887
        %v1993 = vpop.f32.mrb[0].mxu0
        %v1994 = vadd.f32 0.0, %v1993
        %v1995 = vpop.f32.mrb[0].mxu0
        %v1996 = vpop.f32.mrb[0].mxu0
        %v1997 = vadd.f32 0.0, %v1996
        %v1998 = vpop.f32.mrb[0].mxu0
        %1999 = vmatprep.mubr.bf16.mxu0 0
        %2000 = vmatmul.mubr.bf16.gmra.mrb[0].mxu0 %v1890
        %v2001 = vpop.f32.mrb[0].mxu0
        %v2002 = vadd.f32 0.0, %v2001
        %v2003 = vpop.f32.mrb[0].mxu0
        %v2004 = vpop.f32.mrb[0].mxu0
        %v2005 = vadd.f32 0.0, %v2004
        %v2006 = vpop.f32.mrb[0].mxu0
        %2007 = vmatprep.mubr.bf16.mxu0 0
        %2008 = vmatmul.mubr.bf16.gmra.mrb[0].mxu0 %v1893
        %v2009 = vpop.f32.mrb[0].mxu0
        %v2010 = vadd.f32 0.0, %v2009
        %v2011 = vpop.f32.mrb[0].mxu0
        %v2012 = vpop.f32.mrb[0].mxu0
        %v2013 = vadd.f32 0.0, %v2012
        %v2014 = vpop.f32.mrb[0].mxu0
        %2015 = vdwg.mxu0
        %v2016 = vmul.f32 %v1954, 0.17677669
        %v2017 = vmul.f32 %v1957, 0.17677669
        %v2018 = vmul.f32 %v1962, 0.17677669
        %v2019 = vmul.f32 %v1965, 0.17677669
        %v2020 = vmul.f32 %v1970, 0.17677669
        %v2021 = vmul.f32 %v1973, 0.17677669
        %v2022 = vmul.f32 %v1978, 0.17677669
        %v2023 = vmul.f32 %v1981, 0.17677669
        %v2024 = vmul.f32 %v1986, 0.17677669
        %v2025 = vmul.f32 %v1989, 0.17677669
        %v2026 = vmul.f32 %v1994, 0.17677669
        %v2027 = vmul.f32 %v1997, 0.17677669
        %v2028 = vmul.f32 %v2002, 0.17677669
        %v2029 = vmul.f32 %v2005, 0.17677669
        %v2030 = vmul.f32 %v2010, 0.17677669
        %v2031 = vmul.f32 %v2013, 0.17677669
        %v2032 = vadd.f32 %v2016, %v886
        %v2033 = vadd.f32 %v2017, %v887
        %v2034 = vadd.f32 %v2018, %v888
        %v2035 = vadd.f32 %v2019, %v889
        %v2036 = vadd.f32 %v2020, %v890
        %v2037 = vadd.f32 %v2021, %v891
        %v2038 = vadd.f32 %v2022, %v892
        %v2039 = vadd.f32 %v2023, %v893
        %v2040 = vadd.f32 %v2024, %v894
        %v2041 = vadd.f32 %v2025, %v895
        %v2042 = vadd.f32 %v2026, %v896
        %v2043 = vadd.f32 %v2027, %v897
        %v2044 = vadd.f32 %v2028, %v898
        %v2045 = vadd.f32 %v2029, %v899
        %v2046 = vadd.f32 %v2030, %v900
        %v2047 = vadd.f32 %v2031, %v901
        %2048 = vmax.xlane.f32.xlu0 %v2032
        %v2049 = vpop.xlane.xlu0 %2048
        %2050 = vmax.xlane.f32.xlu0 %v2033
        %v2051 = vpop.xlane.xlu0 %2050
        %2052 = vmax.xlane.f32.xlu0 %v2034
        %v2053 = vpop.xlane.xlu0 %2052
        %2054 = vmax.xlane.f32.xlu0 %v2035
        %v2055 = vpop.xlane.xlu0 %2054
        %2056 = vmax.xlane.f32.xlu0 %v2036
        %v2057 = vpop.xlane.xlu0 %2056
        %2058 = vmax.xlane.f32.xlu0 %v2037
        %v2059 = vpop.xlane.xlu0 %2058
        %2060 = vmax.xlane.f32.xlu0 %v2038
        %v2061 = vpop.xlane.xlu0 %2060
        %2062 = vmax.xlane.f32.xlu0 %v2039
        %v2063 = vpop.xlane.xlu0 %2062
        %2064 = vmax.xlane.f32.xlu0 %v2040
        %v2065 = vpop.xlane.xlu0 %2064
        %2066 = vmax.xlane.f32.xlu0 %v2041
        %v2067 = vpop.xlane.xlu0 %2066
        %2068 = vmax.xlane.f32.xlu0 %v2042
        %v2069 = vpop.xlane.xlu0 %2068
        %2070 = vmax.xlane.f32.xlu0 %v2043
        %v2071 = vpop.xlane.xlu0 %2070
        %2072 = vmax.xlane.f32.xlu0 %v2044
        %v2073 = vpop.xlane.xlu0 %2072
        %2074 = vmax.xlane.f32.xlu0 %v2045
        %v2075 = vpop.xlane.xlu0 %2074
        %2076 = vmax.xlane.f32.xlu0 %v2046
        %v2077 = vpop.xlane.xlu0 %2076
        %2078 = vmax.xlane.f32.xlu0 %v2047
        %v2079 = vpop.xlane.xlu0 %2078
        %v2080 = vsub.f32 %v2032, %v2049
        %v2081 = vsub.f32 %v2033, %v2051
        %v2082 = vsub.f32 %v2034, %v2053
        %v2083 = vsub.f32 %v2035, %v2055
        %v2084 = vsub.f32 %v2036, %v2057
        %v2085 = vsub.f32 %v2037, %v2059
        %v2086 = vsub.f32 %v2038, %v2061
        %v2087 = vsub.f32 %v2039, %v2063
        %v2088 = vsub.f32 %v2040, %v2065
        %v2089 = vsub.f32 %v2041, %v2067
        %v2090 = vsub.f32 %v2042, %v2069
        %v2091 = vsub.f32 %v2043, %v2071
        %v2092 = vsub.f32 %v2044, %v2073
        %v2093 = vsub.f32 %v2045, %v2075
        %v2094 = vsub.f32 %v2046, %v2077
        %v2095 = vsub.f32 %v2047, %v2079
        %v2096 = vmul.f32 %v2080, 1.442695
        %v2097 = vpow.pop %v2096
        %v2098 = vmul.f32 %v2081, 1.442695
        %v2099 = vpow.pop %v2098
        %v2100 = vmul.f32 %v2082, 1.442695
        %v2101 = vpow.pop %v2100
        %v2102 = vmul.f32 %v2083, 1.442695
        %v2103 = vpow.pop %v2102
        %v2104 = vmul.f32 %v2084, 1.442695
        %v2105 = vpow.pop %v2104
        %v2106 = vmul.f32 %v2085, 1.442695
        %v2107 = vpow.pop %v2106
        %v2108 = vmul.f32 %v2086, 1.442695
        %v2109 = vpow.pop %v2108
        %v2110 = vmul.f32 %v2087, 1.442695
        %v2111 = vpow.pop %v2110
        %v2112 = vmul.f32 %v2088, 1.442695
        %v2113 = vpow.pop %v2112
        %v2114 = vmul.f32 %v2089, 1.442695
        %v2115 = vpow.pop %v2114
        %v2116 = vmul.f32 %v2090, 1.442695
        %v2117 = vpow.pop %v2116
        %v2118 = vmul.f32 %v2091, 1.442695
        %v2119 = vpow.pop %v2118
        %v2120 = vmul.f32 %v2092, 1.442695
        %v2121 = vpow.pop %v2120
        %v2122 = vmul.f32 %v2093, 1.442695
        %v2123 = vpow.pop %v2122
        %v2124 = vmul.f32 %v2094, 1.442695
        %v2125 = vpow.pop %v2124
        %v2126 = vmul.f32 %v2095, 1.442695
        %v2127 = vpow.pop %v2126
        %2128 = vadd.xlane.f32.xlu0 %v2097
        %v2129 = vpop.xlane.xlu0 %2128
        %2130 = vadd.xlane.f32.xlu0 %v2099
        %v2131 = vpop.xlane.xlu0 %2130
        %2132 = vadd.xlane.f32.xlu0 %v2101
        %v2133 = vpop.xlane.xlu0 %2132
        %2134 = vadd.xlane.f32.xlu0 %v2103
        %v2135 = vpop.xlane.xlu0 %2134
        %2136 = vadd.xlane.f32.xlu0 %v2105
        %v2137 = vpop.xlane.xlu0 %2136
        %2138 = vadd.xlane.f32.xlu0 %v2107
        %v2139 = vpop.xlane.xlu0 %2138
        %2140 = vadd.xlane.f32.xlu0 %v2109
        %v2141 = vpop.xlane.xlu0 %2140
        %2142 = vadd.xlane.f32.xlu0 %v2111
        %v2143 = vpop.xlane.xlu0 %2142
        %2144 = vadd.xlane.f32.xlu0 %v2113
        %v2145 = vpop.xlane.xlu0 %2144
        %2146 = vadd.xlane.f32.xlu0 %v2115
        %v2147 = vpop.xlane.xlu0 %2146
        %2148 = vadd.xlane.f32.xlu0 %v2117
        %v2149 = vpop.xlane.xlu0 %2148
        %2150 = vadd.xlane.f32.xlu0 %v2119
        %v2151 = vpop.xlane.xlu0 %2150
        %2152 = vadd.xlane.f32.xlu0 %v2121
        %v2153 = vpop.xlane.xlu0 %2152
        %2154 = vadd.xlane.f32.xlu0 %v2123
        %v2155 = vpop.xlane.xlu0 %2154
        %2156 = vadd.xlane.f32.xlu0 %v2125
        %v2157 = vpop.xlane.xlu0 %2156
        %2158 = vadd.xlane.f32.xlu0 %v2127
        %v2159 = vpop.xlane.xlu0 %2158
        %v2160 = vrcp.pop %v2129
        %v2161 = vrcp.pop %v2131
        %v2162 = vrcp.pop %v2133
        %v2163 = vrcp.pop %v2135
        %v2164 = vrcp.pop %v2137
        %v2165 = vrcp.pop %v2139
        %v2166 = vrcp.pop %v2141
        %v2167 = vrcp.pop %v2143
        %v2168 = vrcp.pop %v2145
        %v2169 = vrcp.pop %v2147
        %v2170 = vrcp.pop %v2149
        %v2171 = vrcp.pop %v2151
        %v2172 = vrcp.pop %v2153
        %v2173 = vrcp.pop %v2155
        %v2174 = vrcp.pop %v2157
        %v2175 = vrcp.pop %v2159
        %v2176 = vmul.f32 %v2097, %v2160
        %v2177 = vmul.f32 %v2099, %v2161
        %v2178 = vmul.f32 %v2101, %v2162
        %v2179 = vmul.f32 %v2103, %v2163
        %v2180 = vmul.f32 %v2105, %v2164
        %v2181 = vmul.f32 %v2107, %v2165
        %v2182 = vmul.f32 %v2109, %v2166
        %v2183 = vmul.f32 %v2111, %v2167
        %v2184 = vmul.f32 %v2113, %v2168
        %v2185 = vmul.f32 %v2115, %v2169
        %v2186 = vmul.f32 %v2117, %v2170
        %v2187 = vmul.f32 %v2119, %v2171
        %v2188 = vmul.f32 %v2121, %v2172
        %v2189 = vmul.f32 %v2123, %v2173
        %v2190 = vmul.f32 %v2125, %v2174
        %v2191 = vmul.f32 %v2127, %v2175
        %v2192 = vpack.c.bf16 %v2177, %v2176
        %v2193 = vpack.c.bf16 %v2179, %v2178
        %v2194 = vpack.c.bf16 %v2181, %v2180
        %v2195 = vpack.c.bf16 %v2183, %v2182
        %v2196 = vpack.c.bf16 %v2185, %v2184
        %v2197 = vpack.c.bf16 %v2187, %v2186
        %v2198 = vpack.c.bf16 %v2189, %v2188
        %v2199 = vpack.c.bf16 %v2191, %v2190
        %2208 = vrot.lane.b32.xlu0 %v1388, 96
        %v2209 = vpop.permute.xlu0 %2208
        %2210 = vrot.lane.b32.xlu0 %v1389, 96
        %v2211 = vpop.permute.xlu0 %2210
        %2212 = vrot.lane.b32.xlu0 %v1390, 96
        %v2213 = vpop.permute.xlu0 %2212
        %2214 = vrot.lane.b32.xlu0 %v1391, 96
        %v2215 = vpop.permute.xlu0 %2214
        %2216 = vrot.lane.b32.xlu0 %v1392, 96
        %v2217 = vpop.permute.xlu0 %2216
        %2218 = vrot.lane.b32.xlu0 %v1393, 96
        %v2219 = vpop.permute.xlu0 %2218
        %2220 = vrot.lane.b32.xlu0 %v1394, 96
        %v2221 = vpop.permute.xlu0 %2220
        %2222 = vrot.lane.b32.xlu0 %v1395, 96
        %v2223 = vpop.permute.xlu0 %2222
        %2232 = vmatprep.subr.bf16.mxu0 0
        %2233 = vmatpush1.bf16.msra.mxu0 %v2209
        %2234 = vmatprep.subr.bf16.mxu0 0
        %2235 = vmatpush1.bf16.msra.mxu0 %v2211
        %2236 = vmatprep.subr.bf16.mxu0 0
        %2237 = vmatpush1.bf16.msra.mxu0 %v2213
        %2238 = vmatprep.subr.bf16.mxu0 0
        %2239 = vmatpush1.bf16.msra.mxu0 %v2215
        %2240 = vmatprep.subr.bf16.mxu0 0
        %2241 = vmatpush1.bf16.msra.mxu0 %v2217
        %2242 = vmatprep.subr.bf16.mxu0 0
        %2243 = vmatpush1.bf16.msra.mxu0 %v2219
        %2244 = vmatprep.subr.bf16.mxu0 0
        %2245 = vmatpush1.bf16.msra.mxu0 %v2221
        %2246 = vmatprep.subr.bf16.mxu0 0
        %2247 = vmatpush1.bf16.msra.mxu0 %v2223
        %2248 = vmatprep.subr.bf16.mxu0 0
        %2249 = vmatpush1.bf16.msra.mxu0 0
        %2250 = vmatprep.subr.bf16.mxu0 0
        %2251 = vmatpush1.bf16.msra.mxu0 0
        %2252 = vmatprep.subr.bf16.mxu0 0
        %2253 = vmatpush1.bf16.msra.mxu0 0
        %2254 = vmatprep.subr.bf16.mxu0 0
        %2255 = vmatpush1.bf16.msra.mxu0 0
        %2256 = vmatprep.subr.bf16.mxu0 0
        %2257 = vmatpush1.bf16.msra.mxu0 0
        %2258 = vmatprep.subr.bf16.mxu0 0
        %2259 = vmatpush1.bf16.msra.mxu0 0
        %2260 = vmatprep.subr.bf16.mxu0 0
        %2261 = vmatpush1.bf16.msra.mxu0 0
        %2262 = vmatprep.subr.bf16.mxu0 0
        %2263 = vmatpush1.bf16.msra.mxu0 0
        %2264 = vmatprep.mubr.bf16.mxu0 0
        %2265 = vmatmul.mubr.bf16.gmra.mrb[0].mxu0 %v2192
        %v2266 = vpop.f32.mrb[0].mxu0
        %v2267 = vadd.f32 0.0, %v2266
        %v2268 = vpop.f32.mrb[0].mxu0
        %v2269 = vpop.f32.mrb[0].mxu0
        %v2270 = vadd.f32 0.0, %v2269
        %v2271 = vpop.f32.mrb[0].mxu0
        %2272 = vmatprep.mubr.bf16.mxu0 0
        %2273 = vmatmul.mubr.bf16.gmra.mrb[0].mxu0 %v2193
        %v2274 = vpop.f32.mrb[0].mxu0
        %v2275 = vadd.f32 0.0, %v2274
        %v2276 = vpop.f32.mrb[0].mxu0
        %v2277 = vpop.f32.mrb[0].mxu0
        %v2278 = vadd.f32 0.0, %v2277
        %v2279 = vpop.f32.mrb[0].mxu0
        %2280 = vmatprep.mubr.bf16.mxu0 0
        %2281 = vmatmul.mubr.bf16.gmra.mrb[0].mxu0 %v2194
        %v2282 = vpop.f32.mrb[0].mxu0
        %v2283 = vadd.f32 0.0, %v2282
        %v2284 = vpop.f32.mrb[0].mxu0
        %v2285 = vpop.f32.mrb[0].mxu0
        %v2286 = vadd.f32 0.0, %v2285
        %v2287 = vpop.f32.mrb[0].mxu0
        %2288 = vmatprep.mubr.bf16.mxu0 0
        %2289 = vmatmul.mubr.bf16.gmra.mrb[0].mxu0 %v2195
        %v2290 = vpop.f32.mrb[0].mxu0
        %v2291 = vadd.f32 0.0, %v2290
        %v2292 = vpop.f32.mrb[0].mxu0
        %v2293 = vpop.f32.mrb[0].mxu0
        %v2294 = vadd.f32 0.0, %v2293
        %v2295 = vpop.f32.mrb[0].mxu0
        %2296 = vmatprep.mubr.bf16.mxu0 0
        %2297 = vmatmul.mubr.bf16.gmra.mrb[0].mxu0 %v2196
        %v2298 = vpop.f32.mrb[0].mxu0
        %v2299 = vadd.f32 0.0, %v2298
        %v2300 = vpop.f32.mrb[0].mxu0
        %v2301 = vpop.f32.mrb[0].mxu0
        %v2302 = vadd.f32 0.0, %v2301
        %v2303 = vpop.f32.mrb[0].mxu0
        %2304 = vmatprep.mubr.bf16.mxu0 0
        %2305 = vmatmul.mubr.bf16.gmra.mrb[0].mxu0 %v2197
        %v2306 = vpop.f32.mrb[0].mxu0
        %v2307 = vadd.f32 0.0, %v2306
        %v2308 = vpop.f32.mrb[0].mxu0
        %v2309 = vpop.f32.mrb[0].mxu0
        %v2310 = vadd.f32 0.0, %v2309
        %v2311 = vpop.f32.mrb[0].mxu0
        %2312 = vmatprep.mubr.bf16.mxu0 0
        %2313 = vmatmul.mubr.bf16.gmra.mrb[0].mxu0 %v2198
        %v2314 = vpop.f32.mrb[0].mxu0
        %v2315 = vadd.f32 0.0, %v2314
        %v2316 = vpop.f32.mrb[0].mxu0
        %v2317 = vpop.f32.mrb[0].mxu0
        %v2318 = vadd.f32 0.0, %v2317
        %v2319 = vpop.f32.mrb[0].mxu0
        %2320 = vmatprep.mubr.bf16.mxu0 0
        %2321 = vmatmul.mubr.bf16.gmra.mrb[0].mxu0 %v2199
        %v2322 = vpop.f32.mrb[0].mxu0
        %v2323 = vadd.f32 0.0, %v2322
        %v2324 = vpop.f32.mrb[0].mxu0
        %v2325 = vpop.f32.mrb[0].mxu0
        %v2326 = vadd.f32 0.0, %v2325
        %v2327 = vpop.f32.mrb[0].mxu0
        %2328 = vdwg.mxu0
        %2329 = vrot.lane.b32.xlu0 %v1372, 64
        %v2330 = vpop.permute.xlu0 %2329
        %2331 = vrot.lane.b32.xlu0 %v1373, 64
        %v2332 = vpop.permute.xlu0 %2331
        %2333 = vrot.lane.b32.xlu0 %v1374, 64
        %v2334 = vpop.permute.xlu0 %2333
        %2335 = vrot.lane.b32.xlu0 %v1375, 64
        %v2336 = vpop.permute.xlu0 %2335
        %2337 = vrot.lane.b32.xlu0 %v1376, 64
        %v2338 = vpop.permute.xlu0 %2337
        %2339 = vrot.lane.b32.xlu0 %v1377, 64
        %v2340 = vpop.permute.xlu0 %2339
        %2341 = vrot.lane.b32.xlu0 %v1378, 64
        %v2342 = vpop.permute.xlu0 %2341
        %2343 = vrot.lane.b32.xlu0 %v1379, 64
        %v2344 = vpop.permute.xlu0 %2343
        %2345 = vrot.lane.b32.xlu0 %v1380, 64
        %v2346 = vpop.permute.xlu0 %2345
        %2347 = vrot.lane.b32.xlu0 %v1381, 64
        %v2348 = vpop.permute.xlu0 %2347
        %2349 = vrot.lane.b32.xlu0 %v1382, 64
        %v2350 = vpop.permute.xlu0 %2349
        %2351 = vrot.lane.b32.xlu0 %v1383, 64
        %v2352 = vpop.permute.xlu0 %2351
        %2353 = vrot.lane.b32.xlu0 %v1384, 64
        %v2354 = vpop.permute.xlu0 %2353
        %2355 = vrot.lane.b32.xlu0 %v1385, 64
        %v2356 = vpop.permute.xlu0 %2355
        %2357 = vrot.lane.b32.xlu0 %v1386, 64
        %v2358 = vpop.permute.xlu0 %2357
        %2359 = vrot.lane.b32.xlu0 %v1387, 64
        %v2360 = vpop.permute.xlu0 %2359
        %v2362 = vsel %vm1396, %v2330, 0
        %v2365 = vsel %vm1396, %v2332, 0
        %v2368 = vsel %vm1396, %v2334, 0
        %v2371 = vsel %vm1396, %v2336, 0
        %v2374 = vsel %vm1396, %v2338, 0
        %v2377 = vsel %vm1396, %v2340, 0
        %v2380 = vsel %vm1396, %v2342, 0
        %v2383 = vsel %vm1396, %v2344, 0
        %v2386 = vsel %vm1396, %v2346, 0
        %v2389 = vsel %vm1396, %v2348, 0
        %v2392 = vsel %vm1396, %v2350, 0
        %v2395 = vsel %vm1396, %v2352, 0
        %v2398 = vsel %vm1396, %v2354, 0
        %v2401 = vsel %vm1396, %v2356, 0
        %v2404 = vsel %vm1396, %v2358, 0
        %v2407 = vsel %vm1396, %v2360, 0
        %2409 = vmatprep.subr.bf16.mxu0 0
        %2410 = vmatpush1.bf16.xpose.msra.mxu0 %v2386
        %2411 = vmatprep.subr.bf16.mxu0 0
        %2412 = vmatpush1.bf16.xpose.msra.mxu0 %v2389
        %2413 = vmatprep.subr.bf16.mxu0 0
        %2414 = vmatpush1.bf16.xpose.msra.mxu0 %v2392
        %2415 = vmatprep.subr.bf16.mxu0 0
        %2416 = vmatpush1.bf16.xpose.msra.mxu0 %v2395
        %2417 = vmatprep.subr.bf16.mxu0 0
        %2418 = vmatpush1.bf16.xpose.msra.mxu0 %v2398
        %2419 = vmatprep.subr.bf16.mxu0 0
        %2420 = vmatpush1.bf16.xpose.msra.mxu0 %v2401
        %2421 = vmatprep.subr.bf16.mxu0 0
        %2422 = vmatpush1.bf16.xpose.msra.mxu0 %v2404
        %2423 = vmatprep.subr.bf16.mxu0 0
        %2424 = vmatpush1.bf16.xpose.msra.mxu0 %v2407
        %2425 = vmatprep.subr.bf16.mxu0 0
        %2426 = vmatpush1.bf16.xpose.msra.mxu0 0
        %2427 = vmatprep.subr.bf16.mxu0 0
        %2428 = vmatpush1.bf16.xpose.msra.mxu0 0
        %2429 = vmatprep.subr.bf16.mxu0 0
        %2430 = vmatpush1.bf16.xpose.msra.mxu0 0
        %2431 = vmatprep.subr.bf16.mxu0 0
        %2432 = vmatpush1.bf16.xpose.msra.mxu0 0
        %2433 = vmatprep.subr.bf16.mxu0 0
        %2434 = vmatpush1.bf16.xpose.msra.mxu0 0
        %2435 = vmatprep.subr.bf16.mxu0 0
        %2436 = vmatpush1.bf16.xpose.msra.mxu0 0
        %2437 = vmatprep.subr.bf16.mxu0 0
        %2438 = vmatpush1.bf16.xpose.msra.mxu0 0
        %2439 = vmatprep.subr.bf16.mxu0 0
        %2440 = vmatpush1.bf16.xpose.msra.mxu0 0
        %2441 = vmatprep.mubr.bf16.mxu0 0
        %2442 = vmatmul.mubr.bf16.gmra.mrb[0].mxu0 %v2362
        %v2443 = vpop.f32.mrb[0].mxu0
        %v2444 = vadd.f32 0.0, %v2443
        %v2445 = vpop.f32.mrb[0].mxu0
        %v2446 = vpop.f32.mrb[0].mxu0
        %v2447 = vadd.f32 0.0, %v2446
        %v2448 = vpop.f32.mrb[0].mxu0
        %2449 = vmatprep.mubr.bf16.mxu0 0
        %2450 = vmatmul.mubr.bf16.gmra.mrb[0].mxu0 %v2365
        %v2451 = vpop.f32.mrb[0].mxu0
        %v2452 = vadd.f32 0.0, %v2451
        %v2453 = vpop.f32.mrb[0].mxu0
        %v2454 = vpop.f32.mrb[0].mxu0
        %v2455 = vadd.f32 0.0, %v2454
        %v2456 = vpop.f32.mrb[0].mxu0
        %2457 = vmatprep.mubr.bf16.mxu0 0
        %2458 = vmatmul.mubr.bf16.gmra.mrb[0].mxu0 %v2368
        %v2459 = vpop.f32.mrb[0].mxu0
        %v2460 = vadd.f32 0.0, %v2459
        %v2461 = vpop.f32.mrb[0].mxu0
        %v2462 = vpop.f32.mrb[0].mxu0
        %v2463 = vadd.f32 0.0, %v2462
        %v2464 = vpop.f32.mrb[0].mxu0
        %2465 = vmatprep.mubr.bf16.mxu0 0
        %2466 = vmatmul.mubr.bf16.gmra.mrb[0].mxu0 %v2371
        %v2467 = vpop.f32.mrb[0].mxu0
        %v2468 = vadd.f32 0.0, %v2467
        %v2469 = vpop.f32.mrb[0].mxu0
        %v2470 = vpop.f32.mrb[0].mxu0
        %v2471 = vadd.f32 0.0, %v2470
        %v2472 = vpop.f32.mrb[0].mxu0
        %2473 = vmatprep.mubr.bf16.mxu0 0
        %2474 = vmatmul.mubr.bf16.gmra.mrb[0].mxu0 %v2374
        %v2475 = vpop.f32.mrb[0].mxu0
        %v2476 = vadd.f32 0.0, %v2475
        %v2477 = vpop.f32.mrb[0].mxu0
        %v2478 = vpop.f32.mrb[0].mxu0
        %v2479 = vadd.f32 0.0, %v2478
        %v2480 = vpop.f32.mrb[0].mxu0
        %2481 = vmatprep.mubr.bf16.mxu0 0
        %2482 = vmatmul.mubr.bf16.gmra.mrb[0].mxu0 %v2377
        %v2483 = vpop.f32.mrb[0].mxu0
        %v2484 = vadd.f32 0.0, %v2483
        %v2485 = vpop.f32.mrb[0].mxu0
        %v2486 = vpop.f32.mrb[0].mxu0
        %v2487 = vadd.f32 0.0, %v2486
        %v2488 = vpop.f32.mrb[0].mxu0
        %2489 = vmatprep.mubr.bf16.mxu0 0
        %2490 = vmatmul.mubr.bf16.gmra.mrb[0].mxu0 %v2380
        %v2491 = vpop.f32.mrb[0].mxu0
        %v2492 = vadd.f32 0.0, %v2491
        %v2493 = vpop.f32.mrb[0].mxu0
        %v2494 = vpop.f32.mrb[0].mxu0
        %v2495 = vadd.f32 0.0, %v2494
        %v2496 = vpop.f32.mrb[0].mxu0
        %2497 = vmatprep.mubr.bf16.mxu0 0
        %2498 = vmatmul.mubr.bf16.gmra.mrb[0].mxu0 %v2383
        %v2499 = vpop.f32.mrb[0].mxu0
        %v2500 = vadd.f32 0.0, %v2499
        %v2501 = vpop.f32.mrb[0].mxu0
        %v2502 = vpop.f32.mrb[0].mxu0
        %v2503 = vadd.f32 0.0, %v2502
        %v2504 = vpop.f32.mrb[0].mxu0
        %2505 = vdwg.mxu0
        %v2506 = vmul.f32 %v2444, 0.17677669
        %v2507 = vmul.f32 %v2447, 0.17677669
        %v2508 = vmul.f32 %v2452, 0.17677669
        %v2509 = vmul.f32 %v2455, 0.17677669
        %v2510 = vmul.f32 %v2460, 0.17677669
        %v2511 = vmul.f32 %v2463, 0.17677669
        %v2512 = vmul.f32 %v2468, 0.17677669
        %v2513 = vmul.f32 %v2471, 0.17677669
        %v2514 = vmul.f32 %v2476, 0.17677669
        %v2515 = vmul.f32 %v2479, 0.17677669
        %v2516 = vmul.f32 %v2484, 0.17677669
        %v2517 = vmul.f32 %v2487, 0.17677669
        %v2518 = vmul.f32 %v2492, 0.17677669
        %v2519 = vmul.f32 %v2495, 0.17677669
        %v2520 = vmul.f32 %v2500, 0.17677669
        %v2521 = vmul.f32 %v2503, 0.17677669
        %v2522 = vadd.f32 %v2506, %v886
        %v2523 = vadd.f32 %v2507, %v887
        %v2524 = vadd.f32 %v2508, %v888
        %v2525 = vadd.f32 %v2509, %v889
        %v2526 = vadd.f32 %v2510, %v890
        %v2527 = vadd.f32 %v2511, %v891
        %v2528 = vadd.f32 %v2512, %v892
        %v2529 = vadd.f32 %v2513, %v893
        %v2530 = vadd.f32 %v2514, %v894
        %v2531 = vadd.f32 %v2515, %v895
        %v2532 = vadd.f32 %v2516, %v896
        %v2533 = vadd.f32 %v2517, %v897
        %v2534 = vadd.f32 %v2518, %v898
        %v2535 = vadd.f32 %v2519, %v899
        %v2536 = vadd.f32 %v2520, %v900
        %v2537 = vadd.f32 %v2521, %v901
        %2538 = vmax.xlane.f32.xlu0 %v2522
        %v2539 = vpop.xlane.xlu0 %2538
        %2540 = vmax.xlane.f32.xlu0 %v2523
        %v2541 = vpop.xlane.xlu0 %2540
        %2542 = vmax.xlane.f32.xlu0 %v2524
        %v2543 = vpop.xlane.xlu0 %2542
        %2544 = vmax.xlane.f32.xlu0 %v2525
        %v2545 = vpop.xlane.xlu0 %2544
        %2546 = vmax.xlane.f32.xlu0 %v2526
        %v2547 = vpop.xlane.xlu0 %2546
        %2548 = vmax.xlane.f32.xlu0 %v2527
        %v2549 = vpop.xlane.xlu0 %2548
        %2550 = vmax.xlane.f32.xlu0 %v2528
        %v2551 = vpop.xlane.xlu0 %2550
        %2552 = vmax.xlane.f32.xlu0 %v2529
        %v2553 = vpop.xlane.xlu0 %2552
        %2554 = vmax.xlane.f32.xlu0 %v2530
        %v2555 = vpop.xlane.xlu0 %2554
        %2556 = vmax.xlane.f32.xlu0 %v2531
        %v2557 = vpop.xlane.xlu0 %2556
        %2558 = vmax.xlane.f32.xlu0 %v2532
        %v2559 = vpop.xlane.xlu0 %2558
        %2560 = vmax.xlane.f32.xlu0 %v2533
        %v2561 = vpop.xlane.xlu0 %2560
        %2562 = vmax.xlane.f32.xlu0 %v2534
        %v2563 = vpop.xlane.xlu0 %2562
        %2564 = vmax.xlane.f32.xlu0 %v2535
        %v2565 = vpop.xlane.xlu0 %2564
        %2566 = vmax.xlane.f32.xlu0 %v2536
        %v2567 = vpop.xlane.xlu0 %2566
        %2568 = vmax.xlane.f32.xlu0 %v2537
        %v2569 = vpop.xlane.xlu0 %2568
        %v2570 = vsub.f32 %v2522, %v2539
        %v2571 = vsub.f32 %v2523, %v2541
        %v2572 = vsub.f32 %v2524, %v2543
        %v2573 = vsub.f32 %v2525, %v2545
        %v2574 = vsub.f32 %v2526, %v2547
        %v2575 = vsub.f32 %v2527, %v2549
        %v2576 = vsub.f32 %v2528, %v2551
        %v2577 = vsub.f32 %v2529, %v2553
        %v2578 = vsub.f32 %v2530, %v2555
        %v2579 = vsub.f32 %v2531, %v2557
        %v2580 = vsub.f32 %v2532, %v2559
        %v2581 = vsub.f32 %v2533, %v2561
        %v2582 = vsub.f32 %v2534, %v2563
        %v2583 = vsub.f32 %v2535, %v2565
        %v2584 = vsub.f32 %v2536, %v2567
        %v2585 = vsub.f32 %v2537, %v2569
        %v2586 = vmul.f32 %v2570, 1.442695
        %v2587 = vpow.pop %v2586
        %v2588 = vmul.f32 %v2571, 1.442695
        %v2589 = vpow.pop %v2588
        %v2590 = vmul.f32 %v2572, 1.442695
        %v2591 = vpow.pop %v2590
        %v2592 = vmul.f32 %v2573, 1.442695
        %v2593 = vpow.pop %v2592
        %v2594 = vmul.f32 %v2574, 1.442695
        %v2595 = vpow.pop %v2594
        %v2596 = vmul.f32 %v2575, 1.442695
        %v2597 = vpow.pop %v2596
        %v2598 = vmul.f32 %v2576, 1.442695
        %v2599 = vpow.pop %v2598
        %v2600 = vmul.f32 %v2577, 1.442695
        %v2601 = vpow.pop %v2600
        %v2602 = vmul.f32 %v2578, 1.442695
        %v2603 = vpow.pop %v2602
        %v2604 = vmul.f32 %v2579, 1.442695
        %v2605 = vpow.pop %v2604
        %v2606 = vmul.f32 %v2580, 1.442695
        %v2607 = vpow.pop %v2606
        %v2608 = vmul.f32 %v2581, 1.442695
        %v2609 = vpow.pop %v2608
        %v2610 = vmul.f32 %v2582, 1.442695
        %v2611 = vpow.pop %v2610
        %v2612 = vmul.f32 %v2583, 1.442695
        %v2613 = vpow.pop %v2612
        %v2614 = vmul.f32 %v2584, 1.442695
        %v2615 = vpow.pop %v2614
        %v2616 = vmul.f32 %v2585, 1.442695
        %v2617 = vpow.pop %v2616
        %2618 = vadd.xlane.f32.xlu0 %v2587
        %v2619 = vpop.xlane.xlu0 %2618
        %2620 = vadd.xlane.f32.xlu0 %v2589
        %v2621 = vpop.xlane.xlu0 %2620
        %2622 = vadd.xlane.f32.xlu0 %v2591
        %v2623 = vpop.xlane.xlu0 %2622
        %2624 = vadd.xlane.f32.xlu0 %v2593
        %v2625 = vpop.xlane.xlu0 %2624
        %2626 = vadd.xlane.f32.xlu0 %v2595
        %v2627 = vpop.xlane.xlu0 %2626
        %2628 = vadd.xlane.f32.xlu0 %v2597
        %v2629 = vpop.xlane.xlu0 %2628
        %2630 = vadd.xlane.f32.xlu0 %v2599
        %v2631 = vpop.xlane.xlu0 %2630
        %2632 = vadd.xlane.f32.xlu0 %v2601
        %v2633 = vpop.xlane.xlu0 %2632
        %2634 = vadd.xlane.f32.xlu0 %v2603
        %v2635 = vpop.xlane.xlu0 %2634
        %2636 = vadd.xlane.f32.xlu0 %v2605
        %v2637 = vpop.xlane.xlu0 %2636
        %2638 = vadd.xlane.f32.xlu0 %v2607
        %v2639 = vpop.xlane.xlu0 %2638
        %2640 = vadd.xlane.f32.xlu0 %v2609
        %v2641 = vpop.xlane.xlu0 %2640
        %2642 = vadd.xlane.f32.xlu0 %v2611
        %v2643 = vpop.xlane.xlu0 %2642
        %2644 = vadd.xlane.f32.xlu0 %v2613
        %v2645 = vpop.xlane.xlu0 %2644
        %2646 = vadd.xlane.f32.xlu0 %v2615
        %v2647 = vpop.xlane.xlu0 %2646
        %2648 = vadd.xlane.f32.xlu0 %v2617
        %v2649 = vpop.xlane.xlu0 %2648
        %v2650 = vrcp.pop %v2619
        %v2651 = vrcp.pop %v2621
        %v2652 = vrcp.pop %v2623
        %v2653 = vrcp.pop %v2625
        %v2654 = vrcp.pop %v2627
        %v2655 = vrcp.pop %v2629
        %v2656 = vrcp.pop %v2631
        %v2657 = vrcp.pop %v2633
        %v2658 = vrcp.pop %v2635
        %v2659 = vrcp.pop %v2637
        %v2660 = vrcp.pop %v2639
        %v2661 = vrcp.pop %v2641
        %v2662 = vrcp.pop %v2643
        %v2663 = vrcp.pop %v2645
        %v2664 = vrcp.pop %v2647
        %v2665 = vrcp.pop %v2649
        %v2666 = vmul.f32 %v2587, %v2650
        %v2667 = vmul.f32 %v2589, %v2651
        %v2668 = vmul.f32 %v2591, %v2652
        %v2669 = vmul.f32 %v2593, %v2653
        %v2670 = vmul.f32 %v2595, %v2654
        %v2671 = vmul.f32 %v2597, %v2655
        %v2672 = vmul.f32 %v2599, %v2656
        %v2673 = vmul.f32 %v2601, %v2657
        %v2674 = vmul.f32 %v2603, %v2658
        %v2675 = vmul.f32 %v2605, %v2659
        %v2676 = vmul.f32 %v2607, %v2660
        %v2677 = vmul.f32 %v2609, %v2661
        %v2678 = vmul.f32 %v2611, %v2662
        %v2679 = vmul.f32 %v2613, %v2663
        %v2680 = vmul.f32 %v2615, %v2664
        %v2681 = vmul.f32 %v2617, %v2665
        %v2682 = vpack.c.bf16 %v2667, %v2666
        %v2683 = vpack.c.bf16 %v2669, %v2668
        %v2684 = vpack.c.bf16 %v2671, %v2670
        %v2685 = vpack.c.bf16 %v2673, %v2672
        %v2686 = vpack.c.bf16 %v2675, %v2674
        %v2687 = vpack.c.bf16 %v2677, %v2676
        %v2688 = vpack.c.bf16 %v2679, %v2678
        %v2689 = vpack.c.bf16 %v2681, %v2680
        %2690 = vrot.lane.b32.xlu0 %v1388, 64
        %v2691 = vpop.permute.xlu0 %2690
        %2692 = vrot.lane.b32.xlu0 %v1389, 64
        %v2693 = vpop.permute.xlu0 %2692
        %2694 = vrot.lane.b32.xlu0 %v1390, 64
        %v2695 = vpop.permute.xlu0 %2694
        %2696 = vrot.lane.b32.xlu0 %v1391, 64
        %v2697 = vpop.permute.xlu0 %2696
        %2698 = vrot.lane.b32.xlu0 %v1392, 64
        %v2699 = vpop.permute.xlu0 %2698
        %2700 = vrot.lane.b32.xlu0 %v1393, 64
        %v2701 = vpop.permute.xlu0 %2700
        %2702 = vrot.lane.b32.xlu0 %v1394, 64
        %v2703 = vpop.permute.xlu0 %2702
        %2704 = vrot.lane.b32.xlu0 %v1395, 64
        %v2705 = vpop.permute.xlu0 %2704
        %2714 = vmatprep.subr.bf16.mxu0 0
        %2715 = vmatpush1.bf16.msra.mxu0 %v2691
        %2716 = vmatprep.subr.bf16.mxu0 0
        %2717 = vmatpush1.bf16.msra.mxu0 %v2693
        %2718 = vmatprep.subr.bf16.mxu0 0
        %2719 = vmatpush1.bf16.msra.mxu0 %v2695
        %2720 = vmatprep.subr.bf16.mxu0 0
        %2721 = vmatpush1.bf16.msra.mxu0 %v2697
        %2722 = vmatprep.subr.bf16.mxu0 0
        %2723 = vmatpush1.bf16.msra.mxu0 %v2699
        %2724 = vmatprep.subr.bf16.mxu0 0
        %2725 = vmatpush1.bf16.msra.mxu0 %v2701
        %2726 = vmatprep.subr.bf16.mxu0 0
        %2727 = vmatpush1.bf16.msra.mxu0 %v2703
        %2728 = vmatprep.subr.bf16.mxu0 0
        %2729 = vmatpush1.bf16.msra.mxu0 %v2705
        %2730 = vmatprep.subr.bf16.mxu0 0
        %2731 = vmatpush1.bf16.msra.mxu0 0
        %2732 = vmatprep.subr.bf16.mxu0 0
        %2733 = vmatpush1.bf16.msra.mxu0 0
        %2734 = vmatprep.subr.bf16.mxu0 0
        %2735 = vmatpush1.bf16.msra.mxu0 0
        %2736 = vmatprep.subr.bf16.mxu0 0
        %2737 = vmatpush1.bf16.msra.mxu0 0
        %2738 = vmatprep.subr.bf16.mxu0 0
        %2739 = vmatpush1.bf16.msra.mxu0 0
        %2740 = vmatprep.subr.bf16.mxu0 0
        %2741 = vmatpush1.bf16.msra.mxu0 0
        %2742 = vmatprep.subr.bf16.mxu0 0
        %2743 = vmatpush1.bf16.msra.mxu0 0
        %2744 = vmatprep.subr.bf16.mxu0 0
        %2745 = vmatpush1.bf16.msra.mxu0 0
        %2746 = vmatprep.mubr.bf16.mxu0 0
        %2747 = vmatmul.mubr.bf16.gmra.mrb[0].mxu0 %v2682
        %v2748 = vpop.f32.mrb[0].mxu0
        %v2749 = vadd.f32 0.0, %v2748
        %v2750 = vpop.f32.mrb[0].mxu0
        %v2751 = vpop.f32.mrb[0].mxu0
        %v2752 = vadd.f32 0.0, %v2751
        %v2753 = vpop.f32.mrb[0].mxu0
        %2754 = vmatprep.mubr.bf16.mxu0 0
        %2755 = vmatmul.mubr.bf16.gmra.mrb[0].mxu0 %v2683
        %v2756 = vpop.f32.mrb[0].mxu0
        %v2757 = vadd.f32 0.0, %v2756
        %v2758 = vpop.f32.mrb[0].mxu0
        %v2759 = vpop.f32.mrb[0].mxu0
        %v2760 = vadd.f32 0.0, %v2759
        %v2761 = vpop.f32.mrb[0].mxu0
        %2762 = vmatprep.mubr.bf16.mxu0 0
        %2763 = vmatmul.mubr.bf16.gmra.mrb[0].mxu0 %v2684
        %v2764 = vpop.f32.mrb[0].mxu0
        %v2765 = vadd.f32 0.0, %v2764
        %v2766 = vpop.f32.mrb[0].mxu0
        %v2767 = vpop.f32.mrb[0].mxu0
        %v2768 = vadd.f32 0.0, %v2767
        %v2769 = vpop.f32.mrb[0].mxu0
        %2770 = vmatprep.mubr.bf16.mxu0 0
        %2771 = vmatmul.mubr.bf16.gmra.mrb[0].mxu0 %v2685
        %v2772 = vpop.f32.mrb[0].mxu0
        %v2773 = vadd.f32 0.0, %v2772
        %v2774 = vpop.f32.mrb[0].mxu0
        %v2775 = vpop.f32.mrb[0].mxu0
        %v2776 = vadd.f32 0.0, %v2775
        %v2777 = vpop.f32.mrb[0].mxu0
        %2778 = vmatprep.mubr.bf16.mxu0 0
        %2779 = vmatmul.mubr.bf16.gmra.mrb[0].mxu0 %v2686
        %v2780 = vpop.f32.mrb[0].mxu0
        %v2781 = vadd.f32 0.0, %v2780
        %v2782 = vpop.f32.mrb[0].mxu0
        %v2783 = vpop.f32.mrb[0].mxu0
        %v2784 = vadd.f32 0.0, %v2783
        %v2785 = vpop.f32.mrb[0].mxu0
        %2786 = vmatprep.mubr.bf16.mxu0 0
        %2787 = vmatmul.mubr.bf16.gmra.mrb[0].mxu0 %v2687
        %v2788 = vpop.f32.mrb[0].mxu0
        %v2789 = vadd.f32 0.0, %v2788
        %v2790 = vpop.f32.mrb[0].mxu0
        %v2791 = vpop.f32.mrb[0].mxu0
        %v2792 = vadd.f32 0.0, %v2791
        %v2793 = vpop.f32.mrb[0].mxu0
        %2794 = vmatprep.mubr.bf16.mxu0 0
        %2795 = vmatmul.mubr.bf16.gmra.mrb[0].mxu0 %v2688
        %v2796 = vpop.f32.mrb[0].mxu0
        %v2797 = vadd.f32 0.0, %v2796
        %v2798 = vpop.f32.mrb[0].mxu0
        %v2799 = vpop.f32.mrb[0].mxu0
        %v2800 = vadd.f32 0.0, %v2799
        %v2801 = vpop.f32.mrb[0].mxu0
        %2802 = vmatprep.mubr.bf16.mxu0 0
        %2803 = vmatmul.mubr.bf16.gmra.mrb[0].mxu0 %v2689
        %v2804 = vpop.f32.mrb[0].mxu0
        %v2805 = vadd.f32 0.0, %v2804
        %v2806 = vpop.f32.mrb[0].mxu0
        %v2807 = vpop.f32.mrb[0].mxu0
        %v2808 = vadd.f32 0.0, %v2807
        %v2809 = vpop.f32.mrb[0].mxu0
        %2810 = vdwg.mxu0
        %2811 = vrot.lane.b32.xlu0 %v1372, 32
        %v2812 = vpop.permute.xlu0 %2811
        %2813 = vrot.lane.b32.xlu0 %v1373, 32
        %v2814 = vpop.permute.xlu0 %2813
        %2815 = vrot.lane.b32.xlu0 %v1374, 32
        %v2816 = vpop.permute.xlu0 %2815
        %2817 = vrot.lane.b32.xlu0 %v1375, 32
        %v2818 = vpop.permute.xlu0 %2817
        %2819 = vrot.lane.b32.xlu0 %v1376, 32
        %v2820 = vpop.permute.xlu0 %2819
        %2821 = vrot.lane.b32.xlu0 %v1377, 32
        %v2822 = vpop.permute.xlu0 %2821
        %2823 = vrot.lane.b32.xlu0 %v1378, 32
        %v2824 = vpop.permute.xlu0 %2823
        %2825 = vrot.lane.b32.xlu0 %v1379, 32
        %v2826 = vpop.permute.xlu0 %2825
        %2827 = vrot.lane.b32.xlu0 %v1380, 32
        %v2828 = vpop.permute.xlu0 %2827
        %2829 = vrot.lane.b32.xlu0 %v1381, 32
        %v2830 = vpop.permute.xlu0 %2829
        %2831 = vrot.lane.b32.xlu0 %v1382, 32
        %v2832 = vpop.permute.xlu0 %2831
        %2833 = vrot.lane.b32.xlu0 %v1383, 32
        %v2834 = vpop.permute.xlu0 %2833
        %2835 = vrot.lane.b32.xlu0 %v1384, 32
        %v2836 = vpop.permute.xlu0 %2835
        %2837 = vrot.lane.b32.xlu0 %v1385, 32
        %v2838 = vpop.permute.xlu0 %2837
        %2839 = vrot.lane.b32.xlu0 %v1386, 32
        %v2840 = vpop.permute.xlu0 %2839
        %2841 = vrot.lane.b32.xlu0 %v1387, 32
        %v2842 = vpop.permute.xlu0 %2841
        %v2844 = vsel %vm1396, %v2812, 0
        %v2847 = vsel %vm1396, %v2814, 0
        %v2850 = vsel %vm1396, %v2816, 0
        %v2853 = vsel %vm1396, %v2818, 0
        %v2856 = vsel %vm1396, %v2820, 0
        %v2859 = vsel %vm1396, %v2822, 0
        %v2862 = vsel %vm1396, %v2824, 0
        %v2865 = vsel %vm1396, %v2826, 0
        %v2868 = vsel %vm1396, %v2828, 0
        %v2871 = vsel %vm1396, %v2830, 0
        %v2874 = vsel %vm1396, %v2832, 0
        %v2877 = vsel %vm1396, %v2834, 0
        %v2880 = vsel %vm1396, %v2836, 0
        %v2883 = vsel %vm1396, %v2838, 0
        %v2886 = vsel %vm1396, %v2840, 0
        %v2889 = vsel %vm1396, %v2842, 0
        %2891 = vmatprep.subr.bf16.mxu0 0
        %2892 = vmatpush1.bf16.xpose.msra.mxu0 %v2868
        %2893 = vmatprep.subr.bf16.mxu0 0
        %2894 = vmatpush1.bf16.xpose.msra.mxu0 %v2871
        %2895 = vmatprep.subr.bf16.mxu0 0
        %2896 = vmatpush1.bf16.xpose.msra.mxu0 %v2874
        %2897 = vmatprep.subr.bf16.mxu0 0
        %2898 = vmatpush1.bf16.xpose.msra.mxu0 %v2877
        %2899 = vmatprep.subr.bf16.mxu0 0
        %2900 = vmatpush1.bf16.xpose.msra.mxu0 %v2880
        %2901 = vmatprep.subr.bf16.mxu0 0
        %2902 = vmatpush1.bf16.xpose.msra.mxu0 %v2883
        %2903 = vmatprep.subr.bf16.mxu0 0
        %2904 = vmatpush1.bf16.xpose.msra.mxu0 %v2886
        %2905 = vmatprep.subr.bf16.mxu0 0
        %2906 = vmatpush1.bf16.xpose.msra.mxu0 %v2889
        %2907 = vmatprep.subr.bf16.mxu0 0
        %2908 = vmatpush1.bf16.xpose.msra.mxu0 0
        %2909 = vmatprep.subr.bf16.mxu0 0
        %2910 = vmatpush1.bf16.xpose.msra.mxu0 0
        %2911 = vmatprep.subr.bf16.mxu0 0
        %2912 = vmatpush1.bf16.xpose.msra.mxu0 0
        %2913 = vmatprep.subr.bf16.mxu0 0
        %2914 = vmatpush1.bf16.xpose.msra.mxu0 0
        %2915 = vmatprep.subr.bf16.mxu0 0
        %2916 = vmatpush1.bf16.xpose.msra.mxu0 0
        %2917 = vmatprep.subr.bf16.mxu0 0
        %2918 = vmatpush1.bf16.xpose.msra.mxu0 0
        %2919 = vmatprep.subr.bf16.mxu0 0
        %2920 = vmatpush1.bf16.xpose.msra.mxu0 0
        %2921 = vmatprep.subr.bf16.mxu0 0
        %2922 = vmatpush1.bf16.xpose.msra.mxu0 0
        %2923 = vmatprep.mubr.bf16.mxu0 0
        %2924 = vmatmul.mubr.bf16.gmra.mrb[0].mxu0 %v2844
        %v2925 = vpop.f32.mrb[0].mxu0
        %v2926 = vadd.f32 0.0, %v2925
        %v2927 = vpop.f32.mrb[0].mxu0
        %v2928 = vpop.f32.mrb[0].mxu0
        %v2929 = vadd.f32 0.0, %v2928
        %v2930 = vpop.f32.mrb[0].mxu0
        %2931 = vmatprep.mubr.bf16.mxu0 0
        %2932 = vmatmul.mubr.bf16.gmra.mrb[0].mxu0 %v2847
        %v2933 = vpop.f32.mrb[0].mxu0
        %v2934 = vadd.f32 0.0, %v2933
        %v2935 = vpop.f32.mrb[0].mxu0
        %v2936 = vpop.f32.mrb[0].mxu0
        %v2937 = vadd.f32 0.0, %v2936
        %v2938 = vpop.f32.mrb[0].mxu0
        %2939 = vmatprep.mubr.bf16.mxu0 0
        %2940 = vmatmul.mubr.bf16.gmra.mrb[0].mxu0 %v2850
        %v2941 = vpop.f32.mrb[0].mxu0
        %v2942 = vadd.f32 0.0, %v2941
        %v2943 = vpop.f32.mrb[0].mxu0
        %v2944 = vpop.f32.mrb[0].mxu0
        %v2945 = vadd.f32 0.0, %v2944
        %v2946 = vpop.f32.mrb[0].mxu0
        %2947 = vmatprep.mubr.bf16.mxu0 0
        %2948 = vmatmul.mubr.bf16.gmra.mrb[0].mxu0 %v2853
        %v2949 = vpop.f32.mrb[0].mxu0
        %v2950 = vadd.f32 0.0, %v2949
        %v2951 = vpop.f32.mrb[0].mxu0
        %v2952 = vpop.f32.mrb[0].mxu0
        %v2953 = vadd.f32 0.0, %v2952
        %v2954 = vpop.f32.mrb[0].mxu0
        %2955 = vmatprep.mubr.bf16.mxu0 0
        %2956 = vmatmul.mubr.bf16.gmra.mrb[0].mxu0 %v2856
        %v2957 = vpop.f32.mrb[0].mxu0
        %v2958 = vadd.f32 0.0, %v2957
        %v2959 = vpop.f32.mrb[0].mxu0
        %v2960 = vpop.f32.mrb[0].mxu0
        %v2961 = vadd.f32 0.0, %v2960
        %v2962 = vpop.f32.mrb[0].mxu0
        %2963 = vmatprep.mubr.bf16.mxu0 0
        %2964 = vmatmul.mubr.bf16.gmra.mrb[0].mxu0 %v2859
        %v2965 = vpop.f32.mrb[0].mxu0
        %v2966 = vadd.f32 0.0, %v2965
        %v2967 = vpop.f32.mrb[0].mxu0
        %v2968 = vpop.f32.mrb[0].mxu0
        %v2969 = vadd.f32 0.0, %v2968
        %v2970 = vpop.f32.mrb[0].mxu0
        %2971 = vmatprep.mubr.bf16.mxu0 0
        %2972 = vmatmul.mubr.bf16.gmra.mrb[0].mxu0 %v2862
        %v2973 = vpop.f32.mrb[0].mxu0
        %v2974 = vadd.f32 0.0, %v2973
        %v2975 = vpop.f32.mrb[0].mxu0
        %v2976 = vpop.f32.mrb[0].mxu0
        %v2977 = vadd.f32 0.0, %v2976
        %v2978 = vpop.f32.mrb[0].mxu0
        %2979 = vmatprep.mubr.bf16.mxu0 0
        %2980 = vmatmul.mubr.bf16.gmra.mrb[0].mxu0 %v2865
        %v2981 = vpop.f32.mrb[0].mxu0
        %v2982 = vadd.f32 0.0, %v2981
        %v2983 = vpop.f32.mrb[0].mxu0
        %v2984 = vpop.f32.mrb[0].mxu0
        %v2985 = vadd.f32 0.0, %v2984
        %v2986 = vpop.f32.mrb[0].mxu0
        %2987 = vdwg.mxu0
        %v2988 = vmul.f32 %v2926, 0.17677669
        %v2989 = vmul.f32 %v2929, 0.17677669
        %v2990 = vmul.f32 %v2934, 0.17677669
        %v2991 = vmul.f32 %v2937, 0.17677669
        %v2992 = vmul.f32 %v2942, 0.17677669
        %v2993 = vmul.f32 %v2945, 0.17677669
        %v2994 = vmul.f32 %v2950, 0.17677669
        %v2995 = vmul.f32 %v2953, 0.17677669
        %v2996 = vmul.f32 %v2958, 0.17677669
        %v2997 = vmul.f32 %v2961, 0.17677669
        %v2998 = vmul.f32 %v2966, 0.17677669
        %v2999 = vmul.f32 %v2969, 0.17677669
        %v3000 = vmul.f32 %v2974, 0.17677669
        %v3001 = vmul.f32 %v2977, 0.17677669
        %v3002 = vmul.f32 %v2982, 0.17677669
        %v3003 = vmul.f32 %v2985, 0.17677669
        %v3004 = vadd.f32 %v2988, %v886
        %v3005 = vadd.f32 %v2989, %v887
        %v3006 = vadd.f32 %v2990, %v888
        %v3007 = vadd.f32 %v2991, %v889
        %v3008 = vadd.f32 %v2992, %v890
        %v3009 = vadd.f32 %v2993, %v891
        %v3010 = vadd.f32 %v2994, %v892
        %v3011 = vadd.f32 %v2995, %v893
        %v3012 = vadd.f32 %v2996, %v894
        %v3013 = vadd.f32 %v2997, %v895
        %v3014 = vadd.f32 %v2998, %v896
        %v3015 = vadd.f32 %v2999, %v897
        %v3016 = vadd.f32 %v3000, %v898
        %v3017 = vadd.f32 %v3001, %v899
        %v3018 = vadd.f32 %v3002, %v900
        %v3019 = vadd.f32 %v3003, %v901
        %3020 = vmax.xlane.f32.xlu0 %v3004
        %v3021 = vpop.xlane.xlu0 %3020
        %3022 = vmax.xlane.f32.xlu0 %v3005
        %v3023 = vpop.xlane.xlu0 %3022
        %3024 = vmax.xlane.f32.xlu0 %v3006
        %v3025 = vpop.xlane.xlu0 %3024
        %3026 = vmax.xlane.f32.xlu0 %v3007
        %v3027 = vpop.xlane.xlu0 %3026
        %3028 = vmax.xlane.f32.xlu0 %v3008
        %v3029 = vpop.xlane.xlu0 %3028
        %3030 = vmax.xlane.f32.xlu0 %v3009
        %v3031 = vpop.xlane.xlu0 %3030
        %3032 = vmax.xlane.f32.xlu0 %v3010
        %v3033 = vpop.xlane.xlu0 %3032
        %3034 = vmax.xlane.f32.xlu0 %v3011
        %v3035 = vpop.xlane.xlu0 %3034
        %3036 = vmax.xlane.f32.xlu0 %v3012
        %v3037 = vpop.xlane.xlu0 %3036
        %3038 = vmax.xlane.f32.xlu0 %v3013
        %v3039 = vpop.xlane.xlu0 %3038
        %3040 = vmax.xlane.f32.xlu0 %v3014
        %v3041 = vpop.xlane.xlu0 %3040
        %3042 = vmax.xlane.f32.xlu0 %v3015
        %v3043 = vpop.xlane.xlu0 %3042
        %3044 = vmax.xlane.f32.xlu0 %v3016
        %v3045 = vpop.xlane.xlu0 %3044
        %3046 = vmax.xlane.f32.xlu0 %v3017
        %v3047 = vpop.xlane.xlu0 %3046
        %3048 = vmax.xlane.f32.xlu0 %v3018
        %v3049 = vpop.xlane.xlu0 %3048
        %3050 = vmax.xlane.f32.xlu0 %v3019
        %v3051 = vpop.xlane.xlu0 %3050
        %v3052 = vsub.f32 %v3004, %v3021
        %v3053 = vsub.f32 %v3005, %v3023
        %v3054 = vsub.f32 %v3006, %v3025
        %v3055 = vsub.f32 %v3007, %v3027
        %v3056 = vsub.f32 %v3008, %v3029
        %v3057 = vsub.f32 %v3009, %v3031
        %v3058 = vsub.f32 %v3010, %v3033
        %v3059 = vsub.f32 %v3011, %v3035
        %v3060 = vsub.f32 %v3012, %v3037
        %v3061 = vsub.f32 %v3013, %v3039
        %v3062 = vsub.f32 %v3014, %v3041
        %v3063 = vsub.f32 %v3015, %v3043
        %v3064 = vsub.f32 %v3016, %v3045
        %v3065 = vsub.f32 %v3017, %v3047
        %v3066 = vsub.f32 %v3018, %v3049
        %v3067 = vsub.f32 %v3019, %v3051
        %v3068 = vmul.f32 %v3052, 1.442695
        %v3069 = vpow.pop %v3068
        %v3070 = vmul.f32 %v3053, 1.442695
        %v3071 = vpow.pop %v3070
        %v3072 = vmul.f32 %v3054, 1.442695
        %v3073 = vpow.pop %v3072
        %v3074 = vmul.f32 %v3055, 1.442695
        %v3075 = vpow.pop %v3074
        %v3076 = vmul.f32 %v3056, 1.442695
        %v3077 = vpow.pop %v3076
        %v3078 = vmul.f32 %v3057, 1.442695
        %v3079 = vpow.pop %v3078
        %v3080 = vmul.f32 %v3058, 1.442695
        %v3081 = vpow.pop %v3080
        %v3082 = vmul.f32 %v3059, 1.442695
        %v3083 = vpow.pop %v3082
        %v3084 = vmul.f32 %v3060, 1.442695
        %v3085 = vpow.pop %v3084
        %v3086 = vmul.f32 %v3061, 1.442695
        %v3087 = vpow.pop %v3086
        %v3088 = vmul.f32 %v3062, 1.442695
        %v3089 = vpow.pop %v3088
        %v3090 = vmul.f32 %v3063, 1.442695
        %v3091 = vpow.pop %v3090
        %v3092 = vmul.f32 %v3064, 1.442695
        %v3093 = vpow.pop %v3092
        %v3094 = vmul.f32 %v3065, 1.442695
        %v3095 = vpow.pop %v3094
        %v3096 = vmul.f32 %v3066, 1.442695
        %v3097 = vpow.pop %v3096
        %v3098 = vmul.f32 %v3067, 1.442695
        %v3099 = vpow.pop %v3098
        %3100 = vadd.xlane.f32.xlu0 %v3069
        %v3101 = vpop.xlane.xlu0 %3100
        %3102 = vadd.xlane.f32.xlu0 %v3071
        %v3103 = vpop.xlane.xlu0 %3102
        %3104 = vadd.xlane.f32.xlu0 %v3073
        %v3105 = vpop.xlane.xlu0 %3104
        %3106 = vadd.xlane.f32.xlu0 %v3075
        %v3107 = vpop.xlane.xlu0 %3106
        %3108 = vadd.xlane.f32.xlu0 %v3077
        %v3109 = vpop.xlane.xlu0 %3108
        %3110 = vadd.xlane.f32.xlu0 %v3079
        %v3111 = vpop.xlane.xlu0 %3110
        %3112 = vadd.xlane.f32.xlu0 %v3081
        %v3113 = vpop.xlane.xlu0 %3112
        %3114 = vadd.xlane.f32.xlu0 %v3083
        %v3115 = vpop.xlane.xlu0 %3114
        %3116 = vadd.xlane.f32.xlu0 %v3085
        %v3117 = vpop.xlane.xlu0 %3116
        %3118 = vadd.xlane.f32.xlu0 %v3087
        %v3119 = vpop.xlane.xlu0 %3118
        %3120 = vadd.xlane.f32.xlu0 %v3089
        %v3121 = vpop.xlane.xlu0 %3120
        %3122 = vadd.xlane.f32.xlu0 %v3091
        %v3123 = vpop.xlane.xlu0 %3122
        %3124 = vadd.xlane.f32.xlu0 %v3093
        %v3125 = vpop.xlane.xlu0 %3124
        %3126 = vadd.xlane.f32.xlu0 %v3095
        %v3127 = vpop.xlane.xlu0 %3126
        %3128 = vadd.xlane.f32.xlu0 %v3097
        %v3129 = vpop.xlane.xlu0 %3128
        %3130 = vadd.xlane.f32.xlu0 %v3099
        %v3131 = vpop.xlane.xlu0 %3130
        %v3132 = vrcp.pop %v3101
        %v3133 = vrcp.pop %v3103
        %v3134 = vrcp.pop %v3105
        %v3135 = vrcp.pop %v3107
        %v3136 = vrcp.pop %v3109
        %v3137 = vrcp.pop %v3111
        %v3138 = vrcp.pop %v3113
        %v3139 = vrcp.pop %v3115
        %v3140 = vrcp.pop %v3117
        %v3141 = vrcp.pop %v3119
        %v3142 = vrcp.pop %v3121
        %v3143 = vrcp.pop %v3123
        %v3144 = vrcp.pop %v3125
        %v3145 = vrcp.pop %v3127
        %v3146 = vrcp.pop %v3129
        %v3147 = vrcp.pop %v3131
        %v3148 = vmul.f32 %v3069, %v3132
        %v3149 = vmul.f32 %v3071, %v3133
        %v3150 = vmul.f32 %v3073, %v3134
        %v3151 = vmul.f32 %v3075, %v3135
        %v3152 = vmul.f32 %v3077, %v3136
        %v3153 = vmul.f32 %v3079, %v3137
        %v3154 = vmul.f32 %v3081, %v3138
        %v3155 = vmul.f32 %v3083, %v3139
        %v3156 = vmul.f32 %v3085, %v3140
        %v3157 = vmul.f32 %v3087, %v3141
        %v3158 = vmul.f32 %v3089, %v3142
        %v3159 = vmul.f32 %v3091, %v3143
        %v3160 = vmul.f32 %v3093, %v3144
        %v3161 = vmul.f32 %v3095, %v3145
        %v3162 = vmul.f32 %v3097, %v3146
        %v3163 = vmul.f32 %v3099, %v3147
        %v3164 = vpack.c.bf16 %v3149, %v3148
        %v3165 = vpack.c.bf16 %v3151, %v3150
        %v3166 = vpack.c.bf16 %v3153, %v3152
        %v3167 = vpack.c.bf16 %v3155, %v3154
        %v3168 = vpack.c.bf16 %v3157, %v3156
        %v3169 = vpack.c.bf16 %v3159, %v3158
        %v3170 = vpack.c.bf16 %v3161, %v3160
        %v3171 = vpack.c.bf16 %v3163, %v3162
        %3172 = vrot.lane.b32.xlu0 %v1388, 32
        %v3173 = vpop.permute.xlu0 %3172
        %3174 = vrot.lane.b32.xlu0 %v1389, 32
        %v3175 = vpop.permute.xlu0 %3174
        %3176 = vrot.lane.b32.xlu0 %v1390, 32
        %v3177 = vpop.permute.xlu0 %3176
        %3178 = vrot.lane.b32.xlu0 %v1391, 32
        %v3179 = vpop.permute.xlu0 %3178
        %3180 = vrot.lane.b32.xlu0 %v1392, 32
        %v3181 = vpop.permute.xlu0 %3180
        %3182 = vrot.lane.b32.xlu0 %v1393, 32
        %v3183 = vpop.permute.xlu0 %3182
        %3184 = vrot.lane.b32.xlu0 %v1394, 32
        %v3185 = vpop.permute.xlu0 %3184
        %3186 = vrot.lane.b32.xlu0 %v1395, 32
        %v3187 = vpop.permute.xlu0 %3186
        %3196 = vmatprep.subr.bf16.mxu0 0
        %3197 = vmatpush1.bf16.msra.mxu0 %v3173
        %3198 = vmatprep.subr.bf16.mxu0 0
        %3199 = vmatpush1.bf16.msra.mxu0 %v3175
        %3200 = vmatprep.subr.bf16.mxu0 0
        %3201 = vmatpush1.bf16.msra.mxu0 %v3177
        %3202 = vmatprep.subr.bf16.mxu0 0
        %3203 = vmatpush1.bf16.msra.mxu0 %v3179
        %3204 = vmatprep.subr.bf16.mxu0 0
        %3205 = vmatpush1.bf16.msra.mxu0 %v3181
        %3206 = vmatprep.subr.bf16.mxu0 0
        %3207 = vmatpush1.bf16.msra.mxu0 %v3183
        %3208 = vmatprep.subr.bf16.mxu0 0
        %3209 = vmatpush1.bf16.msra.mxu0 %v3185
        %3210 = vmatprep.subr.bf16.mxu0 0
        %3211 = vmatpush1.bf16.msra.mxu0 %v3187
        %3212 = vmatprep.subr.bf16.mxu0 0
        %3213 = vmatpush1.bf16.msra.mxu0 0
        %3214 = vmatprep.subr.bf16.mxu0 0
        %3215 = vmatpush1.bf16.msra.mxu0 0
        %3216 = vmatprep.subr.bf16.mxu0 0
        %3217 = vmatpush1.bf16.msra.mxu0 0
        %3218 = vmatprep.subr.bf16.mxu0 0
        %3219 = vmatpush1.bf16.msra.mxu0 0
        %3220 = vmatprep.subr.bf16.mxu0 0
        %3221 = vmatpush1.bf16.msra.mxu0 0
        %3222 = vmatprep.subr.bf16.mxu0 0
        %3223 = vmatpush1.bf16.msra.mxu0 0
        %3224 = vmatprep.subr.bf16.mxu0 0
        %3225 = vmatpush1.bf16.msra.mxu0 0
        %3226 = vmatprep.subr.bf16.mxu0 0
        %3227 = vmatpush1.bf16.msra.mxu0 0
        %3228 = vmatprep.mubr.bf16.mxu0 0
        %3229 = vmatmul.mubr.bf16.gmra.mrb[0].mxu0 %v3164
        %v3230 = vpop.f32.mrb[0].mxu0
        %v3231 = vadd.f32 0.0, %v3230
        %v3232 = vpop.f32.mrb[0].mxu0
        %v3233 = vpop.f32.mrb[0].mxu0
        %v3234 = vadd.f32 0.0, %v3233
        %v3235 = vpop.f32.mrb[0].mxu0
        %3236 = vmatprep.mubr.bf16.mxu0 0
        %3237 = vmatmul.mubr.bf16.gmra.mrb[0].mxu0 %v3165
        %v3238 = vpop.f32.mrb[0].mxu0
        %v3239 = vadd.f32 0.0, %v3238
        %v3240 = vpop.f32.mrb[0].mxu0
        %v3241 = vpop.f32.mrb[0].mxu0
        %v3242 = vadd.f32 0.0, %v3241
        %v3243 = vpop.f32.mrb[0].mxu0
        %3244 = vmatprep.mubr.bf16.mxu0 0
        %3245 = vmatmul.mubr.bf16.gmra.mrb[0].mxu0 %v3166
        %v3246 = vpop.f32.mrb[0].mxu0
        %v3247 = vadd.f32 0.0, %v3246
        %v3248 = vpop.f32.mrb[0].mxu0
        %v3249 = vpop.f32.mrb[0].mxu0
        %v3250 = vadd.f32 0.0, %v3249
        %v3251 = vpop.f32.mrb[0].mxu0
        %3252 = vmatprep.mubr.bf16.mxu0 0
        %3253 = vmatmul.mubr.bf16.gmra.mrb[0].mxu0 %v3167
        %v3254 = vpop.f32.mrb[0].mxu0
        %v3255 = vadd.f32 0.0, %v3254
        %v3256 = vpop.f32.mrb[0].mxu0
        %v3257 = vpop.f32.mrb[0].mxu0
        %v3258 = vadd.f32 0.0, %v3257
        %v3259 = vpop.f32.mrb[0].mxu0
        %3260 = vmatprep.mubr.bf16.mxu0 0
        %3261 = vmatmul.mubr.bf16.gmra.mrb[0].mxu0 %v3168
        %v3262 = vpop.f32.mrb[0].mxu0
        %v3263 = vadd.f32 0.0, %v3262
        %v3264 = vpop.f32.mrb[0].mxu0
        %v3265 = vpop.f32.mrb[0].mxu0
        %v3266 = vadd.f32 0.0, %v3265
        %v3267 = vpop.f32.mrb[0].mxu0
        %3268 = vmatprep.mubr.bf16.mxu0 0
        %3269 = vmatmul.mubr.bf16.gmra.mrb[0].mxu0 %v3169
        %v3270 = vpop.f32.mrb[0].mxu0
        %v3271 = vadd.f32 0.0, %v3270
        %v3272 = vpop.f32.mrb[0].mxu0
        %v3273 = vpop.f32.mrb[0].mxu0
        %v3274 = vadd.f32 0.0, %v3273
        %v3275 = vpop.f32.mrb[0].mxu0
        %3276 = vmatprep.mubr.bf16.mxu0 0
        %3277 = vmatmul.mubr.bf16.gmra.mrb[0].mxu0 %v3170
        %v3278 = vpop.f32.mrb[0].mxu0
        %v3279 = vadd.f32 0.0, %v3278
        %v3280 = vpop.f32.mrb[0].mxu0
        %v3281 = vpop.f32.mrb[0].mxu0
        %v3282 = vadd.f32 0.0, %v3281
        %v3283 = vpop.f32.mrb[0].mxu0
        %3284 = vmatprep.mubr.bf16.mxu0 0
        %3285 = vmatmul.mubr.bf16.gmra.mrb[0].mxu0 %v3171
        %v3286 = vpop.f32.mrb[0].mxu0
        %v3287 = vadd.f32 0.0, %v3286
        %v3288 = vpop.f32.mrb[0].mxu0
        %v3289 = vpop.f32.mrb[0].mxu0
        %v3290 = vadd.f32 0.0, %v3289
        %v3291 = vpop.f32.mrb[0].mxu0
        %3292 = vdwg.mxu0
        %3309 = vrot.lane.b32.xlu0 %v2267, 32
        %v3310 = vpop.permute.xlu0 %3309
        %3311 = vrot.lane.b32.xlu0 %v2270, 32
        %v3312 = vpop.permute.xlu0 %3311
        %3313 = vrot.lane.b32.xlu0 %v2275, 32
        %v3314 = vpop.permute.xlu0 %3313
        %3315 = vrot.lane.b32.xlu0 %v2278, 32
        %v3316 = vpop.permute.xlu0 %3315
        %3317 = vrot.lane.b32.xlu0 %v2283, 32
        %v3318 = vpop.permute.xlu0 %3317
        %3319 = vrot.lane.b32.xlu0 %v2286, 32
        %v3320 = vpop.permute.xlu0 %3319
        %3321 = vrot.lane.b32.xlu0 %v2291, 32
        %v3322 = vpop.permute.xlu0 %3321
        %3323 = vrot.lane.b32.xlu0 %v2294, 32
        %v3324 = vpop.permute.xlu0 %3323
        %3325 = vrot.lane.b32.xlu0 %v2299, 32
        %v3326 = vpop.permute.xlu0 %3325
        %3327 = vrot.lane.b32.xlu0 %v2302, 32
        %v3328 = vpop.permute.xlu0 %3327
        %3329 = vrot.lane.b32.xlu0 %v2307, 32
        %v3330 = vpop.permute.xlu0 %3329
        %3331 = vrot.lane.b32.xlu0 %v2310, 32
        %v3332 = vpop.permute.xlu0 %3331
        %3333 = vrot.lane.b32.xlu0 %v2315, 32
        %v3334 = vpop.permute.xlu0 %3333
        %3335 = vrot.lane.b32.xlu0 %v2318, 32
        %v3336 = vpop.permute.xlu0 %3335
        %3337 = vrot.lane.b32.xlu0 %v2323, 32
        %v3338 = vpop.permute.xlu0 %3337
        %3339 = vrot.lane.b32.xlu0 %v2326, 32
        %v3340 = vpop.permute.xlu0 %3339
        %3373 = vrot.lane.b32.xlu0 %v2749, 64
        %v3374 = vpop.permute.xlu0 %3373
        %3375 = vrot.lane.b32.xlu0 %v2752, 64
        %v3376 = vpop.permute.xlu0 %3375
        %3377 = vrot.lane.b32.xlu0 %v2757, 64
        %v3378 = vpop.permute.xlu0 %3377
        %3379 = vrot.lane.b32.xlu0 %v2760, 64
        %v3380 = vpop.permute.xlu0 %3379
        %3381 = vrot.lane.b32.xlu0 %v2765, 64
        %v3382 = vpop.permute.xlu0 %3381
        %3383 = vrot.lane.b32.xlu0 %v2768, 64
        %v3384 = vpop.permute.xlu0 %3383
        %3385 = vrot.lane.b32.xlu0 %v2773, 64
        %v3386 = vpop.permute.xlu0 %3385
        %3387 = vrot.lane.b32.xlu0 %v2776, 64
        %v3388 = vpop.permute.xlu0 %3387
        %3389 = vrot.lane.b32.xlu0 %v2781, 64
        %v3390 = vpop.permute.xlu0 %3389
        %3391 = vrot.lane.b32.xlu0 %v2784, 64
        %v3392 = vpop.permute.xlu0 %3391
        %3393 = vrot.lane.b32.xlu0 %v2789, 64
        %v3394 = vpop.permute.xlu0 %3393
        %3395 = vrot.lane.b32.xlu0 %v2792, 64
        %v3396 = vpop.permute.xlu0 %3395
        %3397 = vrot.lane.b32.xlu0 %v2797, 64
        %v3398 = vpop.permute.xlu0 %3397
        %3399 = vrot.lane.b32.xlu0 %v2800, 64
        %v3400 = vpop.permute.xlu0 %3399
        %3401 = vrot.lane.b32.xlu0 %v2805, 64
        %v3402 = vpop.permute.xlu0 %3401
        %3403 = vrot.lane.b32.xlu0 %v2808, 64
        %v3404 = vpop.permute.xlu0 %3403
        %3437 = vrot.lane.b32.xlu0 %v3231, 96
        %v3438 = vpop.permute.xlu0 %3437
        %3439 = vrot.lane.b32.xlu0 %v3234, 96
        %v3440 = vpop.permute.xlu0 %3439
        %3441 = vrot.lane.b32.xlu0 %v3239, 96
        %v3442 = vpop.permute.xlu0 %3441
        %3443 = vrot.lane.b32.xlu0 %v3242, 96
        %v3444 = vpop.permute.xlu0 %3443
        %3445 = vrot.lane.b32.xlu0 %v3247, 96
        %v3446 = vpop.permute.xlu0 %3445
        %3447 = vrot.lane.b32.xlu0 %v3250, 96
        %v3448 = vpop.permute.xlu0 %3447
        %3449 = vrot.lane.b32.xlu0 %v3255, 96
        %v3450 = vpop.permute.xlu0 %3449
        %3451 = vrot.lane.b32.xlu0 %v3258, 96
        %v3452 = vpop.permute.xlu0 %3451
        %3453 = vrot.lane.b32.xlu0 %v3263, 96
        %v3454 = vpop.permute.xlu0 %3453
        %3455 = vrot.lane.b32.xlu0 %v3266, 96
        %v3456 = vpop.permute.xlu0 %3455
        %3457 = vrot.lane.b32.xlu0 %v3271, 96
        %v3458 = vpop.permute.xlu0 %3457
        %3459 = vrot.lane.b32.xlu0 %v3274, 96
        %v3460 = vpop.permute.xlu0 %3459
        %3461 = vrot.lane.b32.xlu0 %v3279, 96
        %v3462 = vpop.permute.xlu0 %3461
        %3463 = vrot.lane.b32.xlu0 %v3282, 96
        %v3464 = vpop.permute.xlu0 %3463
        %3465 = vrot.lane.b32.xlu0 %v3287, 96
        %v3466 = vpop.permute.xlu0 %3465
        %3467 = vrot.lane.b32.xlu0 %v3290, 96
        %v3468 = vpop.permute.xlu0 %3467
        %v3485 = vsel %vm1396, %v1761, %v3310
        %v3486 = vsel %vm1396, %v1764, %v3312
        %v3487 = vsel %vm1396, %v1769, %v3314
        %v3488 = vsel %vm1396, %v1772, %v3316
        %v3489 = vsel %vm1396, %v1777, %v3318
        %v3490 = vsel %vm1396, %v1780, %v3320
        %v3491 = vsel %vm1396, %v1785, %v3322
        %v3492 = vsel %vm1396, %v1788, %v3324
        %v3493 = vsel %vm1396, %v1793, %v3326
        %v3494 = vsel %vm1396, %v1796, %v3328
        %v3495 = vsel %vm1396, %v1801, %v3330
        %v3496 = vsel %vm1396, %v1804, %v3332
        %v3497 = vsel %vm1396, %v1809, %v3334
        %v3498 = vsel %vm1396, %v1812, %v3336
        %v3499 = vsel %vm1396, %v1817, %v3338
        %v3500 = vsel %vm1396, %v1820, %v3340
        %vm3501 = vcmask 523264
        %v3502 = vsel %vm3501, %v3485, %v3374
        %v3503 = vsel %vm3501, %v3486, %v3376
        %v3504 = vsel %vm3501, %v3487, %v3378
        %v3505 = vsel %vm3501, %v3488, %v3380
        %v3506 = vsel %vm3501, %v3489, %v3382
        %v3507 = vsel %vm3501, %v3490, %v3384
        %v3508 = vsel %vm3501, %v3491, %v3386
        %v3509 = vsel %vm3501, %v3492, %v3388
        %v3510 = vsel %vm3501, %v3493, %v3390
        %v3511 = vsel %vm3501, %v3494, %v3392
        %v3512 = vsel %vm3501, %v3495, %v3394
        %v3513 = vsel %vm3501, %v3496, %v3396
        %v3514 = vsel %vm3501, %v3497, %v3398
        %v3515 = vsel %vm3501, %v3498, %v3400
        %v3516 = vsel %vm3501, %v3499, %v3402
        %v3517 = vsel %vm3501, %v3500, %v3404
        %vm3518 = vcmask 785408
        %v3519 = vsel %vm3518, %v3502, %v3438
        %v3520 = vsel %vm3518, %v3503, %v3440
        %v3521 = vsel %vm3518, %v3504, %v3442
        %v3522 = vsel %vm3518, %v3505, %v3444
        %v3523 = vsel %vm3518, %v3506, %v3446
        %v3524 = vsel %vm3518, %v3507, %v3448
        %v3525 = vsel %vm3518, %v3508, %v3450
        %v3526 = vsel %vm3518, %v3509, %v3452
        %v3527 = vsel %vm3518, %v3510, %v3454
        %v3528 = vsel %vm3518, %v3511, %v3456
        %v3529 = vsel %vm3518, %v3512, %v3458
        %v3530 = vsel %vm3518, %v3513, %v3460
        %v3531 = vsel %vm3518, %v3514, %v3462
        %v3532 = vsel %vm3518, %v3515, %v3464
        %v3533 = vsel %vm3518, %v3516, %v3466
        %v3534 = vsel %vm3518, %v3517, %v3468
        %v3535 = vpack.c.bf16 %v3520, %v3519
        %v3536 = vpack.c.bf16 %v3522, %v3521
        %v3537 = vpack.c.bf16 %v3524, %v3523
        %v3538 = vpack.c.bf16 %v3526, %v3525
        %v3539 = vpack.c.bf16 %v3528, %v3527
        %v3540 = vpack.c.bf16 %v3530, %v3529
        %v3541 = vpack.c.bf16 %v3532, %v3531
        %v3542 = vpack.c.bf16 %v3534, %v3533
        %v3543 = vlaneseq
        %v3544 = vshrl.u32 %v3543, 7
        %v3545 = vsub.s32 3, %v3544
        %v3546 = vrot.slane %v884, %v3545
        %v3563 = vunpack.c.l.b16 %v1356
        %v3564 = vunpack.c.l.b16 %v1357
        %v3565 = vunpack.c.l.b16 %v1358
        %v3566 = vunpack.c.l.b16 %v1359
        %v3567 = vunpack.c.l.b16 %v1360
        %v3568 = vunpack.c.l.b16 %v1361
        %v3569 = vunpack.c.l.b16 %v1362
        %v3570 = vunpack.c.l.b16 %v1363
        %v3571 = vunpack.c.l.b16 %v1364
        %v3572 = vunpack.c.l.b16 %v1365
        %v3573 = vunpack.c.l.b16 %v1366
        %v3574 = vunpack.c.l.b16 %v1367
        %v3575 = vunpack.c.l.b16 %v1368
        %v3576 = vunpack.c.l.b16 %v1369
        %v3577 = vunpack.c.l.b16 %v1370
        %v3578 = vunpack.c.l.b16 %v1371
        %v3579 = vpack.c.b16 %v3564, %v3563
        %v3580 = vpack.c.b16 %v3566, %v3565
        %v3581 = vpack.c.b16 %v3568, %v3567
        %v3582 = vpack.c.b16 %v3570, %v3569
        %v3583 = vpack.c.b16 %v3572, %v3571
        %v3584 = vpack.c.b16 %v3574, %v3573
        %v3585 = vpack.c.b16 %v3576, %v3575
        %v3586 = vpack.c.b16 %v3578, %v3577
        %3595 = vmatprep.subr.bf16.mxu0 0
        %3596 = vmatpush1.bf16.msra.mxu0 %v3579
        %3597 = vmatprep.subr.bf16.mxu0 0
        %3598 = vmatpush1.bf16.msra.mxu0 %v3580
        %3599 = vmatprep.subr.bf16.mxu0 0
        %3600 = vmatpush1.bf16.msra.mxu0 %v3581
        %3601 = vmatprep.subr.bf16.mxu0 0
        %3602 = vmatpush1.bf16.msra.mxu0 %v3582
        %3603 = vmatprep.subr.bf16.mxu0 0
        %3604 = vmatpush1.bf16.msra.mxu0 %v3583
        %3605 = vmatprep.subr.bf16.mxu0 0
        %3606 = vmatpush1.bf16.msra.mxu0 %v3584
        %3607 = vmatprep.subr.bf16.mxu0 0
        %3608 = vmatpush1.bf16.msra.mxu0 %v3585
        %3609 = vmatprep.subr.bf16.mxu0 0
        %3610 = vmatpush1.bf16.msra.mxu0 %v3586
        %3611 = vmatprep.subr.bf16.mxu0 0
        %3612 = vmatpush1.bf16.msra.mxu0 0
        %3613 = vmatprep.subr.bf16.mxu0 0
        %3614 = vmatpush1.bf16.msra.mxu0 0
        %3615 = vmatprep.subr.bf16.mxu0 0
        %3616 = vmatpush1.bf16.msra.mxu0 0
        %3617 = vmatprep.subr.bf16.mxu0 0
        %3618 = vmatpush1.bf16.msra.mxu0 0
        %3619 = vmatprep.subr.bf16.mxu0 0
        %3620 = vmatpush1.bf16.msra.mxu0 0
        %3621 = vmatprep.subr.bf16.mxu0 0
        %3622 = vmatpush1.bf16.msra.mxu0 0
        %3623 = vmatprep.subr.bf16.mxu0 0
        %3624 = vmatpush1.bf16.msra.mxu0 0
        %3625 = vmatprep.subr.bf16.mxu0 0
        %3626 = vmatpush1.bf16.msra.mxu0 0
        %3627 = vmatprep.mubr.bf16.mxu0 0
        %3628 = vmatmul.mubr.bf16.gmra.mrb[0].mxu0 %v3535
        %v3629 = vpop.f32.mrb[0].mxu0
        %v3630 = vadd.f32 %v3546, %v3629
        %v3631 = vpop.f32.mrb[0].mxu0
        %v3632 = vpop.f32.mrb[0].mxu0
        %v3633 = vadd.f32 %v3546, %v3632
        %v3634 = vpop.f32.mrb[0].mxu0
        %3635 = vmatprep.mubr.bf16.mxu0 0
        %3636 = vmatmul.mubr.bf16.gmra.mrb[0].mxu0 %v3536
        %v3637 = vpop.f32.mrb[0].mxu0
        %v3638 = vadd.f32 %v3546, %v3637
        %v3639 = vpop.f32.mrb[0].mxu0
        %v3640 = vpop.f32.mrb[0].mxu0
        %v3641 = vadd.f32 %v3546, %v3640
        %v3642 = vpop.f32.mrb[0].mxu0
        %3643 = vmatprep.mubr.bf16.mxu0 0
        %3644 = vmatmul.mubr.bf16.gmra.mrb[0].mxu0 %v3537
        %v3645 = vpop.f32.mrb[0].mxu0
        %v3646 = vadd.f32 %v3546, %v3645
        %v3647 = vpop.f32.mrb[0].mxu0
        %v3648 = vpop.f32.mrb[0].mxu0
        %v3649 = vadd.f32 %v3546, %v3648
        %v3650 = vpop.f32.mrb[0].mxu0
        %3651 = vmatprep.mubr.bf16.mxu0 0
        %3652 = vmatmul.mubr.bf16.gmra.mrb[0].mxu0 %v3538
        %v3653 = vpop.f32.mrb[0].mxu0
        %v3654 = vadd.f32 %v3546, %v3653
        %v3655 = vpop.f32.mrb[0].mxu0
        %v3656 = vpop.f32.mrb[0].mxu0
        %v3657 = vadd.f32 %v3546, %v3656
        %v3658 = vpop.f32.mrb[0].mxu0
        %3659 = vmatprep.mubr.bf16.mxu0 0
        %3660 = vmatmul.mubr.bf16.gmra.mrb[0].mxu0 %v3539
        %v3661 = vpop.f32.mrb[0].mxu0
        %v3662 = vadd.f32 %v3546, %v3661
        %v3663 = vpop.f32.mrb[0].mxu0
        %v3664 = vpop.f32.mrb[0].mxu0
        %v3665 = vadd.f32 %v3546, %v3664
        %v3666 = vpop.f32.mrb[0].mxu0
        %3667 = vmatprep.mubr.bf16.mxu0 0
        %3668 = vmatmul.mubr.bf16.gmra.mrb[0].mxu0 %v3540
        %v3669 = vpop.f32.mrb[0].mxu0
        %v3670 = vadd.f32 %v3546, %v3669
        %v3671 = vpop.f32.mrb[0].mxu0
        %v3672 = vpop.f32.mrb[0].mxu0
        %v3673 = vadd.f32 %v3546, %v3672
        %v3674 = vpop.f32.mrb[0].mxu0
        %3675 = vmatprep.mubr.bf16.mxu0 0
        %3676 = vmatmul.mubr.bf16.gmra.mrb[0].mxu0 %v3541
        %v3677 = vpop.f32.mrb[0].mxu0
        %v3678 = vadd.f32 %v3546, %v3677
        %v3679 = vpop.f32.mrb[0].mxu0
        %v3680 = vpop.f32.mrb[0].mxu0
        %v3681 = vadd.f32 %v3546, %v3680
        %v3682 = vpop.f32.mrb[0].mxu0
        %3683 = vmatprep.mubr.bf16.mxu0 0
        %3684 = vmatmul.mubr.bf16.gmra.mrb[0].mxu0 %v3542
        %v3685 = vpop.f32.mrb[0].mxu0
        %v3686 = vadd.f32 %v3546, %v3685
        %v3687 = vpop.f32.mrb[0].mxu0
        %v3688 = vpop.f32.mrb[0].mxu0
        %v3689 = vadd.f32 %v3546, %v3688
        %v3690 = vpop.f32.mrb[0].mxu0
        %3691 = vdwg.mxu0
        %v3692 = vadd.f32 %v3630, %v868
        %v3693 = vadd.f32 %v3633, %v869
        %v3694 = vadd.f32 %v3638, %v870
        %v3695 = vadd.f32 %v3641, %v871
        %v3696 = vadd.f32 %v3646, %v872
        %v3697 = vadd.f32 %v3649, %v873
        %v3698 = vadd.f32 %v3654, %v874
        %v3699 = vadd.f32 %v3657, %v875
        %v3700 = vadd.f32 %v3662, %v876
        %v3701 = vadd.f32 %v3665, %v877
        %v3702 = vadd.f32 %v3670, %v878
        %v3703 = vadd.f32 %v3673, %v879
        %v3704 = vadd.f32 %v3678, %v880
        %v3705 = vadd.f32 %v3681, %v881
        %v3706 = vadd.f32 %v3686, %v882
        %v3707 = vadd.f32 %v3689, %v883
        %3708 = vadd.xlane.f32.xlu0 %v3692
        %v3709 = vpop.xlane.xlu0 %3708
        %3710 = vadd.xlane.f32.xlu0 %v3693
        %v3711 = vpop.xlane.xlu0 %3710
        %3712 = vadd.xlane.f32.xlu0 %v3694
        %v3713 = vpop.xlane.xlu0 %3712
        %3714 = vadd.xlane.f32.xlu0 %v3695
        %v3715 = vpop.xlane.xlu0 %3714
        %3716 = vadd.xlane.f32.xlu0 %v3696
        %v3717 = vpop.xlane.xlu0 %3716
        %3718 = vadd.xlane.f32.xlu0 %v3697
        %v3719 = vpop.xlane.xlu0 %3718
        %3720 = vadd.xlane.f32.xlu0 %v3698
        %v3721 = vpop.xlane.xlu0 %3720
        %3722 = vadd.xlane.f32.xlu0 %v3699
        %v3723 = vpop.xlane.xlu0 %3722
        %3724 = vadd.xlane.f32.xlu0 %v3700
        %v3725 = vpop.xlane.xlu0 %3724
        %3726 = vadd.xlane.f32.xlu0 %v3701
        %v3727 = vpop.xlane.xlu0 %3726
        %3728 = vadd.xlane.f32.xlu0 %v3702
        %v3729 = vpop.xlane.xlu0 %3728
        %3730 = vadd.xlane.f32.xlu0 %v3703
        %v3731 = vpop.xlane.xlu0 %3730
        %3732 = vadd.xlane.f32.xlu0 %v3704
        %v3733 = vpop.xlane.xlu0 %3732
        %3734 = vadd.xlane.f32.xlu0 %v3705
        %v3735 = vpop.xlane.xlu0 %3734
        %3736 = vadd.xlane.f32.xlu0 %v3706
        %v3737 = vpop.xlane.xlu0 %3736
        %3738 = vadd.xlane.f32.xlu0 %v3707
        %v3739 = vpop.xlane.xlu0 %3738
        %v3740 = vrcp.pop 128.0
        %v3741 = vmul.f32 %v3709, %v3740
        %v3742 = vmul.f32 %v3711, %v3740
        %v3743 = vmul.f32 %v3713, %v3740
        %v3744 = vmul.f32 %v3715, %v3740
        %v3745 = vmul.f32 %v3717, %v3740
        %v3746 = vmul.f32 %v3719, %v3740
        %v3747 = vmul.f32 %v3721, %v3740
        %v3748 = vmul.f32 %v3723, %v3740
        %v3749 = vmul.f32 %v3725, %v3740
        %v3750 = vmul.f32 %v3727, %v3740
        %v3751 = vmul.f32 %v3729, %v3740
        %v3752 = vmul.f32 %v3731, %v3740
        %v3753 = vmul.f32 %v3733, %v3740
        %v3754 = vmul.f32 %v3735, %v3740
        %v3755 = vmul.f32 %v3737, %v3740
        %v3756 = vmul.f32 %v3739, %v3740
        %v3757 = vsub.f32 %v3692, %v3741
        %v3758 = vsub.f32 %v3693, %v3742
        %v3759 = vsub.f32 %v3694, %v3743
        %v3760 = vsub.f32 %v3695, %v3744
        %v3761 = vsub.f32 %v3696, %v3745
        %v3762 = vsub.f32 %v3697, %v3746
        %v3763 = vsub.f32 %v3698, %v3747
        %v3764 = vsub.f32 %v3699, %v3748
        %v3765 = vsub.f32 %v3700, %v3749
        %v3766 = vsub.f32 %v3701, %v3750
        %v3767 = vsub.f32 %v3702, %v3751
        %v3768 = vsub.f32 %v3703, %v3752
        %v3769 = vsub.f32 %v3704, %v3753
        %v3770 = vsub.f32 %v3705, %v3754
        %v3771 = vsub.f32 %v3706, %v3755
        %v3772 = vsub.f32 %v3707, %v3756
        %v3773 = vmul.f32 %v3757, %v3757
        %v3774 = vmul.f32 %v3758, %v3758
        %v3775 = vmul.f32 %v3759, %v3759
        %v3776 = vmul.f32 %v3760, %v3760
        %v3777 = vmul.f32 %v3761, %v3761
        %v3778 = vmul.f32 %v3762, %v3762
        %v3779 = vmul.f32 %v3763, %v3763
        %v3780 = vmul.f32 %v3764, %v3764
        %v3781 = vmul.f32 %v3765, %v3765
        %v3782 = vmul.f32 %v3766, %v3766
        %v3783 = vmul.f32 %v3767, %v3767
        %v3784 = vmul.f32 %v3768, %v3768
        %v3785 = vmul.f32 %v3769, %v3769
        %v3786 = vmul.f32 %v3770, %v3770
        %v3787 = vmul.f32 %v3771, %v3771
        %v3788 = vmul.f32 %v3772, %v3772
        %3789 = vadd.xlane.f32.xlu0 %v3773
        %v3790 = vpop.xlane.xlu0 %3789
        %3791 = vadd.xlane.f32.xlu0 %v3774
        %v3792 = vpop.xlane.xlu0 %3791
        %3793 = vadd.xlane.f32.xlu0 %v3775
        %v3794 = vpop.xlane.xlu0 %3793
        %3795 = vadd.xlane.f32.xlu0 %v3776
        %v3796 = vpop.xlane.xlu0 %3795
        %3797 = vadd.xlane.f32.xlu0 %v3777
        %v3798 = vpop.xlane.xlu0 %3797
        %3799 = vadd.xlane.f32.xlu0 %v3778
        %v3800 = vpop.xlane.xlu0 %3799
        %3801 = vadd.xlane.f32.xlu0 %v3779
        %v3802 = vpop.xlane.xlu0 %3801
        %3803 = vadd.xlane.f32.xlu0 %v3780
        %v3804 = vpop.xlane.xlu0 %3803
        %3805 = vadd.xlane.f32.xlu0 %v3781
        %v3806 = vpop.xlane.xlu0 %3805
        %3807 = vadd.xlane.f32.xlu0 %v3782
        %v3808 = vpop.xlane.xlu0 %3807
        %3809 = vadd.xlane.f32.xlu0 %v3783
        %v3810 = vpop.xlane.xlu0 %3809
        %3811 = vadd.xlane.f32.xlu0 %v3784
        %v3812 = vpop.xlane.xlu0 %3811
        %3813 = vadd.xlane.f32.xlu0 %v3785
        %v3814 = vpop.xlane.xlu0 %3813
        %3815 = vadd.xlane.f32.xlu0 %v3786
        %v3816 = vpop.xlane.xlu0 %3815
        %3817 = vadd.xlane.f32.xlu0 %v3787
        %v3818 = vpop.xlane.xlu0 %3817
        %3819 = vadd.xlane.f32.xlu0 %v3788
        %v3820 = vpop.xlane.xlu0 %3819
        %v3821 = vmul.f32 %v3790, %v3740
        %v3822 = vmul.f32 %v3792, %v3740
        %v3823 = vmul.f32 %v3794, %v3740
        %v3824 = vmul.f32 %v3796, %v3740
        %v3825 = vmul.f32 %v3798, %v3740
        %v3826 = vmul.f32 %v3800, %v3740
        %v3827 = vmul.f32 %v3802, %v3740
        %v3828 = vmul.f32 %v3804, %v3740
        %v3829 = vmul.f32 %v3806, %v3740
        %v3830 = vmul.f32 %v3808, %v3740
        %v3831 = vmul.f32 %v3810, %v3740
        %v3832 = vmul.f32 %v3812, %v3740
        %v3833 = vmul.f32 %v3814, %v3740
        %v3834 = vmul.f32 %v3816, %v3740
        %v3835 = vmul.f32 %v3818, %v3740
        %v3836 = vmul.f32 %v3820, %v3740
        %v3837 = vadd.f32 %v3821, 1e-12
        %v3838 = vadd.f32 %v3822, 1e-12
        %v3839 = vadd.f32 %v3823, 1e-12
        %v3840 = vadd.f32 %v3824, 1e-12
        %v3841 = vadd.f32 %v3825, 1e-12
        %v3842 = vadd.f32 %v3826, 1e-12
        %v3843 = vadd.f32 %v3827, 1e-12
        %v3844 = vadd.f32 %v3828, 1e-12
        %v3845 = vadd.f32 %v3829, 1e-12
        %v3846 = vadd.f32 %v3830, 1e-12
        %v3847 = vadd.f32 %v3831, 1e-12
        %v3848 = vadd.f32 %v3832, 1e-12
        %v3849 = vadd.f32 %v3833, 1e-12
        %v3850 = vadd.f32 %v3834, 1e-12
        %v3851 = vadd.f32 %v3835, 1e-12
        %v3852 = vadd.f32 %v3836, 1e-12
        %v3853 = vrsqrt.pop %v3837
        %v3854 = vrsqrt.pop %v3838
        %v3855 = vrsqrt.pop %v3839
        %v3856 = vrsqrt.pop %v3840
        %v3857 = vrsqrt.pop %v3841
        %v3858 = vrsqrt.pop %v3842
        %v3859 = vrsqrt.pop %v3843
        %v3860 = vrsqrt.pop %v3844
        %v3861 = vrsqrt.pop %v3845
        %v3862 = vrsqrt.pop %v3846
        %v3863 = vrsqrt.pop %v3847
        %v3864 = vrsqrt.pop %v3848
        %v3865 = vrsqrt.pop %v3849
        %v3866 = vrsqrt.pop %v3850
        %v3867 = vrsqrt.pop %v3851
        %v3868 = vrsqrt.pop %v3852
        %v3869 = vmul.f32 %v3757, %v3853
        %v3870 = vmul.f32 %v3758, %v3854
        %v3871 = vmul.f32 %v3759, %v3855
        %v3872 = vmul.f32 %v3760, %v3856
        %v3873 = vmul.f32 %v3761, %v3857
        %v3874 = vmul.f32 %v3762, %v3858
        %v3875 = vmul.f32 %v3763, %v3859
        %v3876 = vmul.f32 %v3764, %v3860
        %v3877 = vmul.f32 %v3765, %v3861
        %v3878 = vmul.f32 %v3766, %v3862
        %v3879 = vmul.f32 %v3767, %v3863
        %v3880 = vmul.f32 %v3768, %v3864
        %v3881 = vmul.f32 %v3769, %v3865
        %v3882 = vmul.f32 %v3770, %v3866
        %v3883 = vmul.f32 %v3771, %v3867
        %v3884 = vmul.f32 %v3772, %v3868
        %v3885 = vlaneseq
        %v3886 = vshrl.u32 %v3885, 7
        %v3887 = vsub.s32 4, %v3886
        %v3888 = vrot.slane %v884, %v3887
        %v3889 = vmul.f32 %v3888, %v3869
        %v3890 = vmul.f32 %v3888, %v3870
        %v3891 = vmul.f32 %v3888, %v3871
        %v3892 = vmul.f32 %v3888, %v3872
        %v3893 = vmul.f32 %v3888, %v3873
        %v3894 = vmul.f32 %v3888, %v3874
        %v3895 = vmul.f32 %v3888, %v3875
        %v3896 = vmul.f32 %v3888, %v3876
        %v3897 = vmul.f32 %v3888, %v3877
        %v3898 = vmul.f32 %v3888, %v3878
        %v3899 = vmul.f32 %v3888, %v3879
        %v3900 = vmul.f32 %v3888, %v3880
        %v3901 = vmul.f32 %v3888, %v3881
        %v3902 = vmul.f32 %v3888, %v3882
        %v3903 = vmul.f32 %v3888, %v3883
        %v3904 = vmul.f32 %v3888, %v3884
        %v3905 = vlaneseq
        %v3906 = vshrl.u32 %v3905, 7
        %v3907 = vsub.s32 5, %v3906
        %v3908 = vrot.slane %v884, %v3907
        %v3909 = vadd.f32 %v3889, %v3908
        %v3910 = vadd.f32 %v3890, %v3908
        %v3911 = vadd.f32 %v3891, %v3908
        %v3912 = vadd.f32 %v3892, %v3908
        %v3913 = vadd.f32 %v3893, %v3908
        %v3914 = vadd.f32 %v3894, %v3908
        %v3915 = vadd.f32 %v3895, %v3908
        %v3916 = vadd.f32 %v3896, %v3908
        %v3917 = vadd.f32 %v3897, %v3908
        %v3918 = vadd.f32 %v3898, %v3908
        %v3919 = vadd.f32 %v3899, %v3908
        %v3920 = vadd.f32 %v3900, %v3908
        %v3921 = vadd.f32 %v3901, %v3908
        %v3922 = vadd.f32 %v3902, %v3908
        %v3923 = vadd.f32 %v3903, %v3908
        %v3924 = vadd.f32 %v3904, %v3908
        %v3925 = vld [vmem:[#allocation6] sm:$0xf]
        %v3926 = vld [vmem:[#allocation6 + $0x4] sm:$0xf]
        %v3927 = vld [vmem:[#allocation6 + $0x8] sm:$0xf]
        %v3928 = vld [vmem:[#allocation6 + $0xc] sm:$0xf]
        %v3929 = vld [vmem:[#allocation6 + $0x10] sm:$0xf]
        %v3930 = vld [vmem:[#allocation6 + $0x14] sm:$0xf]
        %v3931 = vld [vmem:[#allocation6 + $0x18] sm:$0xf]
        %v3932 = vld [vmem:[#allocation6 + $0x1c] sm:$0xf]
        %v3933 = vld [vmem:[#allocation6 + $0x20] sm:$0xf]
        %v3934 = vld [vmem:[#allocation6 + $0x24] sm:$0xf]
        %v3935 = vld [vmem:[#allocation6 + $0x28] sm:$0xf]
        %v3936 = vld [vmem:[#allocation6 + $0x2c] sm:$0xf]
        %v3937 = vld [vmem:[#allocation6 + $0x30] sm:$0xf]
        %v3938 = vld [vmem:[#allocation6 + $0x34] sm:$0xf]
        %v3939 = vld [vmem:[#allocation6 + $0x38] sm:$0xf]
        %v3940 = vld [vmem:[#allocation6 + $0x3c] sm:$0xf]
        %v3941 = vpack.c.bf16 %v3910, %v3909
        %v3942 = vpack.c.bf16 %v3912, %v3911
        %v3943 = vpack.c.bf16 %v3914, %v3913
        %v3944 = vpack.c.bf16 %v3916, %v3915
        %v3945 = vpack.c.bf16 %v3918, %v3917
        %v3946 = vpack.c.bf16 %v3920, %v3919
        %v3947 = vpack.c.bf16 %v3922, %v3921
        %v3948 = vpack.c.bf16 %v3924, %v3923
        %v3949 = vld [vmem:[%s702] sm:$0xf]
        %v3950 = vld [vmem:[%s702 + $0x4] sm:$0xf]
        %v3951 = vld [vmem:[%s702 + $0x8] sm:$0xf]
        %v3952 = vld [vmem:[%s702 + $0xc] sm:$0xf]
        %v3953 = vld [vmem:[%s702 + $0x10] sm:$0xf]
        %v3954 = vld [vmem:[%s702 + $0x14] sm:$0xf]
        %v3955 = vld [vmem:[%s702 + $0x18] sm:$0xf]
        %v3956 = vld [vmem:[%s702 + $0x1c] sm:$0xf]
        %v3957 = vld [vmem:[%s702 + $0x20] sm:$0xf]
        %v3958 = vld [vmem:[%s702 + $0x24] sm:$0xf]
        %v3959 = vld [vmem:[%s702 + $0x28] sm:$0xf]
        %v3960 = vld [vmem:[%s702 + $0x2c] sm:$0xf]
        %v3961 = vld [vmem:[%s702 + $0x30] sm:$0xf]
        %v3962 = vld [vmem:[%s702 + $0x34] sm:$0xf]
        %v3963 = vld [vmem:[%s702 + $0x38] sm:$0xf]
        %v3964 = vld [vmem:[%s702 + $0x3c] sm:$0xf]
        %v3965 = vlaneseq
        %v3966 = vshrl.u32 %v3965, 7
        %v3967 = vsub.s32 6, %v3966
        %v3968 = vrot.slane %v884, %v3967
        %v3985 = vunpack.c.l.b16 %v3949
        %v3986 = vunpack.c.l.b16 %v3950
        %v3987 = vunpack.c.l.b16 %v3951
        %v3988 = vunpack.c.l.b16 %v3952
        %v3989 = vunpack.c.l.b16 %v3953
        %v3990 = vunpack.c.l.b16 %v3954
        %v3991 = vunpack.c.l.b16 %v3955
        %v3992 = vunpack.c.l.b16 %v3956
        %v3993 = vunpack.c.l.b16 %v3957
        %v3994 = vunpack.c.l.b16 %v3958
        %v3995 = vunpack.c.l.b16 %v3959
        %v3996 = vunpack.c.l.b16 %v3960
        %v3997 = vunpack.c.l.b16 %v3961
        %v3998 = vunpack.c.l.b16 %v3962
        %v3999 = vunpack.c.l.b16 %v3963
        %v4000 = vunpack.c.l.b16 %v3964
        %v4001 = vpack.c.b16 %v3986, %v3985
        %v4002 = vpack.c.b16 %v3988, %v3987
        %v4003 = vpack.c.b16 %v3990, %v3989
        %v4004 = vpack.c.b16 %v3992, %v3991
        %v4005 = vpack.c.b16 %v3994, %v3993
        %v4006 = vpack.c.b16 %v3996, %v3995
        %v4007 = vpack.c.b16 %v3998, %v3997
        %v4008 = vpack.c.b16 %v4000, %v3999
        %4017 = vmatprep.subr.bf16.mxu0 0
        %4018 = vmatpush1.bf16.msra.mxu0 %v4001
        %4019 = vmatprep.subr.bf16.mxu0 0
        %4020 = vmatpush1.bf16.msra.mxu0 %v4002
        %4021 = vmatprep.subr.bf16.mxu0 0
        %4022 = vmatpush1.bf16.msra.mxu0 %v4003
        %4023 = vmatprep.subr.bf16.mxu0 0
        %4024 = vmatpush1.bf16.msra.mxu0 %v4004
        %4025 = vmatprep.subr.bf16.mxu0 0
        %4026 = vmatpush1.bf16.msra.mxu0 %v4005
        %4027 = vmatprep.subr.bf16.mxu0 0
        %4028 = vmatpush1.bf16.msra.mxu0 %v4006
        %4029 = vmatprep.subr.bf16.mxu0 0
        %4030 = vmatpush1.bf16.msra.mxu0 %v4007
        %4031 = vmatprep.subr.bf16.mxu0 0
        %4032 = vmatpush1.bf16.msra.mxu0 %v4008
        %4033 = vmatprep.subr.bf16.mxu0 0
        %4034 = vmatpush1.bf16.msra.mxu0 0
        %4035 = vmatprep.subr.bf16.mxu0 0
        %4036 = vmatpush1.bf16.msra.mxu0 0
        %4037 = vmatprep.subr.bf16.mxu0 0
        %4038 = vmatpush1.bf16.msra.mxu0 0
        %4039 = vmatprep.subr.bf16.mxu0 0
        %4040 = vmatpush1.bf16.msra.mxu0 0
        %4041 = vmatprep.subr.bf16.mxu0 0
        %4042 = vmatpush1.bf16.msra.mxu0 0
        %4043 = vmatprep.subr.bf16.mxu0 0
        %4044 = vmatpush1.bf16.msra.mxu0 0
        %4045 = vmatprep.subr.bf16.mxu0 0
        %4046 = vmatpush1.bf16.msra.mxu0 0
        %4047 = vmatprep.subr.bf16.mxu0 0
        %4048 = vmatpush1.bf16.msra.mxu0 0
        %4049 = vmatprep.mubr.bf16.mxu0 0
        %4050 = vmatmul.mubr.bf16.gmra.mrb[0].mxu0 %v3941
        %v4051 = vpop.f32.mrb[0].mxu0
        %v4052 = vadd.f32 %v3968, %v4051
        %v4053 = vpop.f32.mrb[0].mxu0
        %v4054 = vpop.f32.mrb[0].mxu0
        %v4055 = vadd.f32 %v3968, %v4054
        %v4056 = vpop.f32.mrb[0].mxu0
        %4057 = vmatprep.mubr.bf16.mxu0 0
        %4058 = vmatmul.mubr.bf16.gmra.mrb[0].mxu0 %v3942
        %v4059 = vpop.f32.mrb[0].mxu0
        %v4060 = vadd.f32 %v3968, %v4059
        %v4061 = vpop.f32.mrb[0].mxu0
        %v4062 = vpop.f32.mrb[0].mxu0
        %v4063 = vadd.f32 %v3968, %v4062
        %v4064 = vpop.f32.mrb[0].mxu0
        %4065 = vmatprep.mubr.bf16.mxu0 0
        %4066 = vmatmul.mubr.bf16.gmra.mrb[0].mxu0 %v3943
        %v4067 = vpop.f32.mrb[0].mxu0
        %v4068 = vadd.f32 %v3968, %v4067
        %v4069 = vpop.f32.mrb[0].mxu0
        %v4070 = vpop.f32.mrb[0].mxu0
        %v4071 = vadd.f32 %v3968, %v4070
        %v4072 = vpop.f32.mrb[0].mxu0
        %4073 = vmatprep.mubr.bf16.mxu0 0
        %4074 = vmatmul.mubr.bf16.gmra.mrb[0].mxu0 %v3944
        %v4075 = vpop.f32.mrb[0].mxu0
        %v4076 = vadd.f32 %v3968, %v4075
        %v4077 = vpop.f32.mrb[0].mxu0
        %v4078 = vpop.f32.mrb[0].mxu0
        %v4079 = vadd.f32 %v3968, %v4078
        %v4080 = vpop.f32.mrb[0].mxu0
        %4081 = vmatprep.mubr.bf16.mxu0 0
        %4082 = vmatmul.mubr.bf16.gmra.mrb[0].mxu0 %v3945
        %v4083 = vpop.f32.mrb[0].mxu0
        %v4084 = vadd.f32 %v3968, %v4083
        %v4085 = vpop.f32.mrb[0].mxu0
        %v4086 = vpop.f32.mrb[0].mxu0
        %v4087 = vadd.f32 %v3968, %v4086
        %v4088 = vpop.f32.mrb[0].mxu0
        %4089 = vmatprep.mubr.bf16.mxu0 0
        %4090 = vmatmul.mubr.bf16.gmra.mrb[0].mxu0 %v3946
        %v4091 = vpop.f32.mrb[0].mxu0
        %v4092 = vadd.f32 %v3968, %v4091
        %v4093 = vpop.f32.mrb[0].mxu0
        %v4094 = vpop.f32.mrb[0].mxu0
        %v4095 = vadd.f32 %v3968, %v4094
        %v4096 = vpop.f32.mrb[0].mxu0
        %4097 = vmatprep.mubr.bf16.mxu0 0
        %4098 = vmatmul.mubr.bf16.gmra.mrb[0].mxu0 %v3947
        %v4099 = vpop.f32.mrb[0].mxu0
        %v4100 = vadd.f32 %v3968, %v4099
        %v4101 = vpop.f32.mrb[0].mxu0
        %v4102 = vpop.f32.mrb[0].mxu0
        %v4103 = vadd.f32 %v3968, %v4102
        %v4104 = vpop.f32.mrb[0].mxu0
        %4105 = vmatprep.mubr.bf16.mxu0 0
        %4106 = vmatmul.mubr.bf16.gmra.mrb[0].mxu0 %v3948
        %v4107 = vpop.f32.mrb[0].mxu0
        %v4108 = vadd.f32 %v3968, %v4107
        %v4109 = vpop.f32.mrb[0].mxu0
        %v4110 = vpop.f32.mrb[0].mxu0
        %v4111 = vadd.f32 %v3968, %v4110
        %v4112 = vpop.f32.mrb[0].mxu0
        %4113 = vdwg.mxu0
        %v4114 = vld [vmem:[%s711] sm:$0xff]
        %v4115 = vld [vmem:[%s711 + $0x8] sm:$0xff]
        %v4116 = vld [vmem:[%s711 + $0x10] sm:$0xff]
        %v4117 = vld [vmem:[%s711 + $0x18] sm:$0xff]
        %v4118 = vld [vmem:[%s711 + $0x20] sm:$0xff]
        %v4119 = vld [vmem:[%s711 + $0x28] sm:$0xff]
        %v4120 = vld [vmem:[%s711 + $0x30] sm:$0xff]
        %v4121 = vld [vmem:[%s711 + $0x38] sm:$0xff]
        %v4122 = vld [vmem:[%s711 + $0x40] sm:$0xff]
        %v4123 = vld [vmem:[%s711 + $0x48] sm:$0xff]
        %v4124 = vld [vmem:[%s711 + $0x50] sm:$0xff]
        %v4125 = vld [vmem:[%s711 + $0x58] sm:$0xff]
        %v4126 = vld [vmem:[%s711 + $0x60] sm:$0xff]
        %v4127 = vld [vmem:[%s711 + $0x68] sm:$0xff]
        %v4128 = vld [vmem:[%s711 + $0x70] sm:$0xff]
        %v4129 = vld [vmem:[%s711 + $0x78] sm:$0xff]
        %v4146 = vunpack.c.l.b16 %v3925
        %v4147 = vunpack.c.l.b16 %v3926
        %v4148 = vunpack.c.l.b16 %v3927
        %v4149 = vunpack.c.l.b16 %v3928
        %v4150 = vunpack.c.l.b16 %v3929
        %v4151 = vunpack.c.l.b16 %v3930
        %v4152 = vunpack.c.l.b16 %v3931
        %v4153 = vunpack.c.l.b16 %v3932
        %v4154 = vunpack.c.l.b16 %v3933
        %v4155 = vunpack.c.l.b16 %v3934
        %v4156 = vunpack.c.l.b16 %v3935
        %v4157 = vunpack.c.l.b16 %v3936
        %v4158 = vunpack.c.l.b16 %v3937
        %v4159 = vunpack.c.l.b16 %v3938
        %v4160 = vunpack.c.l.b16 %v3939
        %v4161 = vunpack.c.l.b16 %v3940
        %v4162 = vpack.c.b16 %v4147, %v4146
        %v4163 = vpack.c.b16 %v4149, %v4148
        %v4164 = vpack.c.b16 %v4151, %v4150
        %v4165 = vpack.c.b16 %v4153, %v4152
        %v4166 = vpack.c.b16 %v4155, %v4154
        %v4167 = vpack.c.b16 %v4157, %v4156
        %v4168 = vpack.c.b16 %v4159, %v4158
        %v4169 = vpack.c.b16 %v4161, %v4160
        %v4194 = vunpack.c.l.b16 %v4114
        %v4195 = vunpack.c.h.b16 %v4114
        %v4196 = vunpack.c.l.b16 %v4115
        %v4197 = vunpack.c.h.b16 %v4115
        %v4198 = vunpack.c.l.b16 %v4116
        %v4199 = vunpack.c.h.b16 %v4116
        %v4200 = vunpack.c.l.b16 %v4117
        %v4201 = vunpack.c.h.b16 %v4117
        %v4202 = vunpack.c.l.b16 %v4118
        %v4203 = vunpack.c.h.b16 %v4118
        %v4204 = vunpack.c.l.b16 %v4119
        %v4205 = vunpack.c.h.b16 %v4119
        %v4206 = vunpack.c.l.b16 %v4120
        %v4207 = vunpack.c.h.b16 %v4120
        %v4208 = vunpack.c.l.b16 %v4121
        %v4209 = vunpack.c.h.b16 %v4121
        %v4210 = vunpack.c.l.b16 %v4122
        %v4211 = vunpack.c.h.b16 %v4122
        %v4212 = vunpack.c.l.b16 %v4123
        %v4213 = vunpack.c.h.b16 %v4123
        %v4214 = vunpack.c.l.b16 %v4124
        %v4215 = vunpack.c.h.b16 %v4124
        %v4216 = vunpack.c.l.b16 %v4125
        %v4217 = vunpack.c.h.b16 %v4125
        %v4218 = vunpack.c.l.b16 %v4126
        %v4219 = vunpack.c.h.b16 %v4126
        %v4220 = vunpack.c.l.b16 %v4127
        %v4221 = vunpack.c.h.b16 %v4127
        %v4222 = vunpack.c.l.b16 %v4128
        %v4223 = vunpack.c.h.b16 %v4128
        %v4224 = vunpack.c.l.b16 %v4129
        %v4225 = vunpack.c.h.b16 %v4129
        %v4226 = vpack.c.b16 %v4196, %v4194
        %v4227 = vpack.c.b16 %v4197, %v4195
        %v4228 = vpack.c.b16 %v4200, %v4198
        %v4229 = vpack.c.b16 %v4201, %v4199
        %v4230 = vpack.c.b16 %v4204, %v4202
        %v4231 = vpack.c.b16 %v4205, %v4203
        %v4232 = vpack.c.b16 %v4208, %v4206
        %v4233 = vpack.c.b16 %v4209, %v4207
        %v4234 = vpack.c.b16 %v4212, %v4210
        %v4235 = vpack.c.b16 %v4213, %v4211
        %v4236 = vpack.c.b16 %v4216, %v4214
        %v4237 = vpack.c.b16 %v4217, %v4215
        %v4238 = vpack.c.b16 %v4220, %v4218
        %v4239 = vpack.c.b16 %v4221, %v4219
        %v4240 = vpack.c.b16 %v4224, %v4222
        %v4241 = vpack.c.b16 %v4225, %v4223
        %4258 = vmatprep.subr.bf16.mxu0 %v4227
        %4259 = vmatpush1.bf16.msra.mxu0 %v4226
        %4260 = vmatprep.subr.bf16.mxu0 %v4229
        %4261 = vmatpush1.bf16.msra.mxu0 %v4228
        %4262 = vmatprep.subr.bf16.mxu0 %v4231
        %4263 = vmatpush1.bf16.msra.mxu0 %v4230
        %4264 = vmatprep.subr.bf16.mxu0 %v4233
        %4265 = vmatpush1.bf16.msra.mxu0 %v4232
        %4266 = vmatprep.subr.bf16.mxu0 %v4235
        %4267 = vmatpush1.bf16.msra.mxu0 %v4234
        %4268 = vmatprep.subr.bf16.mxu0 %v4237
        %4269 = vmatpush1.bf16.msra.mxu0 %v4236
        %4270 = vmatprep.subr.bf16.mxu0 %v4239
        %4271 = vmatpush1.bf16.msra.mxu0 %v4238
        %4272 = vmatprep.subr.bf16.mxu0 %v4241
        %4273 = vmatpush1.bf16.msra.mxu0 %v4240
        %4274 = vmatprep.subr.bf16.mxu0 0
        %4275 = vmatpush1.bf16.msra.mxu0 0
        %4276 = vmatprep.subr.bf16.mxu0 0
        %4277 = vmatpush1.bf16.msra.mxu0 0
        %4278 = vmatprep.subr.bf16.mxu0 0
        %4279 = vmatpush1.bf16.msra.mxu0 0
        %4280 = vmatprep.subr.bf16.mxu0 0
        %4281 = vmatpush1.bf16.msra.mxu0 0
        %4282 = vmatprep.subr.bf16.mxu0 0
        %4283 = vmatpush1.bf16.msra.mxu0 0
        %4284 = vmatprep.subr.bf16.mxu0 0
        %4285 = vmatpush1.bf16.msra.mxu0 0
        %4286 = vmatprep.subr.bf16.mxu0 0
        %4287 = vmatpush1.bf16.msra.mxu0 0
        %4288 = vmatprep.subr.bf16.mxu0 0
        %4289 = vmatpush1.bf16.msra.mxu0 0
        %4290 = vmatprep.mubr.bf16.mxu0 0
        %4291 = vmatmul.mubr.bf16.gmra.mrb[0].mxu0 %v4162
        %v4292 = vpop.f32.mrb[0].mxu0
        %v4293 = vadd.f32 0.0, %v4292
        %v4294 = vpop.f32.mrb[0].mxu0
        %v4295 = vadd.f32 0.0, %v4294
        %v4296 = vpop.f32.mrb[0].mxu0
        %v4297 = vadd.f32 0.0, %v4296
        %v4298 = vpop.f32.mrb[0].mxu0
        %v4299 = vadd.f32 0.0, %v4298
        %4300 = vmatprep.mubr.bf16.mxu0 0
        %4301 = vmatmul.mubr.bf16.gmra.mrb[0].mxu0 %v4163
        %v4302 = vpop.f32.mrb[0].mxu0
        %v4303 = vadd.f32 0.0, %v4302
        %v4304 = vpop.f32.mrb[0].mxu0
        %v4305 = vadd.f32 0.0, %v4304
        %v4306 = vpop.f32.mrb[0].mxu0
        %v4307 = vadd.f32 0.0, %v4306
        %v4308 = vpop.f32.mrb[0].mxu0
        %v4309 = vadd.f32 0.0, %v4308
        %4310 = vmatprep.mubr.bf16.mxu0 0
        %4311 = vmatmul.mubr.bf16.gmra.mrb[0].mxu0 %v4164
        %v4312 = vpop.f32.mrb[0].mxu0
        %v4313 = vadd.f32 0.0, %v4312
        %v4314 = vpop.f32.mrb[0].mxu0
        %v4315 = vadd.f32 0.0, %v4314
        %v4316 = vpop.f32.mrb[0].mxu0
        %v4317 = vadd.f32 0.0, %v4316
        %v4318 = vpop.f32.mrb[0].mxu0
        %v4319 = vadd.f32 0.0, %v4318
        %4320 = vmatprep.mubr.bf16.mxu0 0
        %4321 = vmatmul.mubr.bf16.gmra.mrb[0].mxu0 %v4165
        %v4322 = vpop.f32.mrb[0].mxu0
        %v4323 = vadd.f32 0.0, %v4322
        %v4324 = vpop.f32.mrb[0].mxu0
        %v4325 = vadd.f32 0.0, %v4324
        %v4326 = vpop.f32.mrb[0].mxu0
        %v4327 = vadd.f32 0.0, %v4326
        %v4328 = vpop.f32.mrb[0].mxu0
        %v4329 = vadd.f32 0.0, %v4328
        %4330 = vmatprep.mubr.bf16.mxu0 0
        %4331 = vmatmul.mubr.bf16.gmra.mrb[0].mxu0 %v4166
        %v4332 = vpop.f32.mrb[0].mxu0
        %v4333 = vadd.f32 0.0, %v4332
        %v4334 = vpop.f32.mrb[0].mxu0
        %v4335 = vadd.f32 0.0, %v4334
        %v4336 = vpop.f32.mrb[0].mxu0
        %v4337 = vadd.f32 0.0, %v4336
        %v4338 = vpop.f32.mrb[0].mxu0
        %v4339 = vadd.f32 0.0, %v4338
        %4340 = vmatprep.mubr.bf16.mxu0 0
        %4341 = vmatmul.mubr.bf16.gmra.mrb[0].mxu0 %v4167
        %v4342 = vpop.f32.mrb[0].mxu0
        %v4343 = vadd.f32 0.0, %v4342
        %v4344 = vpop.f32.mrb[0].mxu0
        %v4345 = vadd.f32 0.0, %v4344
        %v4346 = vpop.f32.mrb[0].mxu0
        %v4347 = vadd.f32 0.0, %v4346
        %v4348 = vpop.f32.mrb[0].mxu0
        %v4349 = vadd.f32 0.0, %v4348
        %4350 = vmatprep.mubr.bf16.mxu0 0
        %4351 = vmatmul.mubr.bf16.gmra.mrb[0].mxu0 %v4168
        %v4352 = vpop.f32.mrb[0].mxu0
        %v4353 = vadd.f32 0.0, %v4352
        %v4354 = vpop.f32.mrb[0].mxu0
        %v4355 = vadd.f32 0.0, %v4354
        %v4356 = vpop.f32.mrb[0].mxu0
        %v4357 = vadd.f32 0.0, %v4356
        %v4358 = vpop.f32.mrb[0].mxu0
        %v4359 = vadd.f32 0.0, %v4358
        %4360 = vmatprep.mubr.bf16.mxu0 0
        %4361 = vmatmul.mubr.bf16.gmra.mrb[0].mxu0 %v4169
        %v4362 = vpop.f32.mrb[0].mxu0
        %v4363 = vadd.f32 0.0, %v4362
        %v4364 = vpop.f32.mrb[0].mxu0
        %v4365 = vadd.f32 0.0, %v4364
        %v4366 = vpop.f32.mrb[0].mxu0
        %v4367 = vadd.f32 0.0, %v4366
        %v4368 = vpop.f32.mrb[0].mxu0
        %v4369 = vadd.f32 0.0, %v4368
        %4370 = vdwg.mxu0
        %v4371 = vlaneseq
        %v4372 = vshrl.u32 %v4371, 7
        %v4373 = vsub.s32 7, %v4372
        %v4374 = vrot.slane %v884, %v4373
        %v4375 = vadd.f32 %v4293, %v4374
        %v4376 = vadd.f32 %v4297, %v4374
        %v4377 = vadd.f32 %v4303, %v4374
        %v4378 = vadd.f32 %v4307, %v4374
        %v4379 = vadd.f32 %v4313, %v4374
        %v4380 = vadd.f32 %v4317, %v4374
        %v4381 = vadd.f32 %v4323, %v4374
        %v4382 = vadd.f32 %v4327, %v4374
        %v4383 = vadd.f32 %v4333, %v4374
        %v4384 = vadd.f32 %v4337, %v4374
        %v4385 = vadd.f32 %v4343, %v4374
        %v4386 = vadd.f32 %v4347, %v4374
        %v4387 = vadd.f32 %v4353, %v4374
        %v4388 = vadd.f32 %v4357, %v4374
        %v4389 = vadd.f32 %v4363, %v4374
        %v4390 = vadd.f32 %v4367, %v4374
        %v4391 = vlaneseq
        %v4392 = vshrl.u32 %v4391, 7
        %v4393 = vsub.s32 0, %v4392
        %v4394 = vrot.slane %v885, %v4393
        %v4395 = vadd.f32 %v4295, %v4394
        %v4396 = vadd.f32 %v4299, %v4394
        %v4397 = vadd.f32 %v4305, %v4394
        %v4398 = vadd.f32 %v4309, %v4394
        %v4399 = vadd.f32 %v4315, %v4394
        %v4400 = vadd.f32 %v4319, %v4394
        %v4401 = vadd.f32 %v4325, %v4394
        %v4402 = vadd.f32 %v4329, %v4394
        %v4403 = vadd.f32 %v4335, %v4394
        %v4404 = vadd.f32 %v4339, %v4394
        %v4405 = vadd.f32 %v4345, %v4394
        %v4406 = vadd.f32 %v4349, %v4394
        %v4407 = vadd.f32 %v4355, %v4394
        %v4408 = vadd.f32 %v4359, %v4394
        %v4409 = vadd.f32 %v4365, %v4394
        %v4410 = vadd.f32 %v4369, %v4394
        %v4411 = vld [vmem:[%s720] sm:$0xf]
        %v4412 = vld [vmem:[%s720 + $0x4] sm:$0xf]
        %v4413 = vld [vmem:[%s720 + $0x8] sm:$0xf]
        %v4414 = vld [vmem:[%s720 + $0xc] sm:$0xf]
        %v4415 = vld [vmem:[%s720 + $0x10] sm:$0xf]
        %v4416 = vld [vmem:[%s720 + $0x14] sm:$0xf]
        %v4417 = vld [vmem:[%s720 + $0x18] sm:$0xf]
        %v4418 = vld [vmem:[%s720 + $0x1c] sm:$0xf]
        %v4419 = vld [vmem:[%s720 + $0x20] sm:$0xf]
        %v4420 = vld [vmem:[%s720 + $0x24] sm:$0xf]
        %v4421 = vld [vmem:[%s720 + $0x28] sm:$0xf]
        %v4422 = vld [vmem:[%s720 + $0x2c] sm:$0xf]
        %v4423 = vld [vmem:[%s720 + $0x30] sm:$0xf]
        %v4424 = vld [vmem:[%s720 + $0x34] sm:$0xf]
        %v4425 = vld [vmem:[%s720 + $0x38] sm:$0xf]
        %v4426 = vld [vmem:[%s720 + $0x3c] sm:$0xf]
        %v4427 = vpack.c.bf16 %v4055, %v4052
        %v4428 = vpack.c.bf16 %v4063, %v4060
        %v4429 = vpack.c.bf16 %v4071, %v4068
        %v4430 = vpack.c.bf16 %v4079, %v4076
        %v4431 = vpack.c.bf16 %v4087, %v4084
        %v4432 = vpack.c.bf16 %v4095, %v4092
        %v4433 = vpack.c.bf16 %v4103, %v4100
        %v4434 = vpack.c.bf16 %v4111, %v4108
        %v4435 = vpack.c.bf16 %v4376, %v4375
        %v4436 = vpack.c.bf16 %v4378, %v4377
        %v4437 = vpack.c.bf16 %v4380, %v4379
        %v4438 = vpack.c.bf16 %v4382, %v4381
        %v4439 = vpack.c.bf16 %v4384, %v4383
        %v4440 = vpack.c.bf16 %v4386, %v4385
        %v4441 = vpack.c.bf16 %v4388, %v4387
        %v4442 = vpack.c.bf16 %v4390, %v4389
        %v4443 = vpack.c.bf16 %v4396, %v4395
        %v4444 = vpack.c.bf16 %v4398, %v4397
        %v4445 = vpack.c.bf16 %v4400, %v4399
        %v4446 = vpack.c.bf16 %v4402, %v4401
        %v4447 = vpack.c.bf16 %v4404, %v4403
        %v4448 = vpack.c.bf16 %v4406, %v4405
        %v4449 = vpack.c.bf16 %v4408, %v4407
        %v4450 = vpack.c.bf16 %v4410, %v4409
        %v4452 = vsel %vm1396, %v4427, 0
        %v4455 = vsel %vm1396, %v4428, 0
        %v4458 = vsel %vm1396, %v4429, 0
        %v4461 = vsel %vm1396, %v4430, 0
        %v4464 = vsel %vm1396, %v4431, 0
        %v4467 = vsel %vm1396, %v4432, 0
        %v4470 = vsel %vm1396, %v4433, 0
        %v4473 = vsel %vm1396, %v4434, 0
        %v4476 = vsel %vm1396, %v4435, 0
        %v4479 = vsel %vm1396, %v4436, 0
        %v4482 = vsel %vm1396, %v4437, 0
        %v4485 = vsel %vm1396, %v4438, 0
        %v4488 = vsel %vm1396, %v4439, 0
        %v4491 = vsel %vm1396, %v4440, 0
        %v4494 = vsel %vm1396, %v4441, 0
        %v4497 = vsel %vm1396, %v4442, 0
        %4499 = vmatprep.subr.bf16.mxu0 0
        %4500 = vmatpush1.bf16.xpose.msra.mxu0 %v4476
        %4501 = vmatprep.subr.bf16.mxu0 0
        %4502 = vmatpush1.bf16.xpose.msra.mxu0 %v4479
        %4503 = vmatprep.subr.bf16.mxu0 0
        %4504 = vmatpush1.bf16.xpose.msra.mxu0 %v4482
        %4505 = vmatprep.subr.bf16.mxu0 0
        %4506 = vmatpush1.bf16.xpose.msra.mxu0 %v4485
        %4507 = vmatprep.subr.bf16.mxu0 0
        %4508 = vmatpush1.bf16.xpose.msra.mxu0 %v4488
        %4509 = vmatprep.subr.bf16.mxu0 0
        %4510 = vmatpush1.bf16.xpose.msra.mxu0 %v4491
        %4511 = vmatprep.subr.bf16.mxu0 0
        %4512 = vmatpush1.bf16.xpose.msra.mxu0 %v4494
        %4513 = vmatprep.subr.bf16.mxu0 0
        %4514 = vmatpush1.bf16.xpose.msra.mxu0 %v4497
        %4515 = vmatprep.subr.bf16.mxu0 0
        %4516 = vmatpush1.bf16.xpose.msra.mxu0 0
        %4517 = vmatprep.subr.bf16.mxu0 0
        %4518 = vmatpush1.bf16.xpose.msra.mxu0 0
        %4519 = vmatprep.subr.bf16.mxu0 0
        %4520 = vmatpush1.bf16.xpose.msra.mxu0 0
        %4521 = vmatprep.subr.bf16.mxu0 0
        %4522 = vmatpush1.bf16.xpose.msra.mxu0 0
        %4523 = vmatprep.subr.bf16.mxu0 0
        %4524 = vmatpush1.bf16.xpose.msra.mxu0 0
        %4525 = vmatprep.subr.bf16.mxu0 0
        %4526 = vmatpush1.bf16.xpose.msra.mxu0 0
        %4527 = vmatprep.subr.bf16.mxu0 0
        %4528 = vmatpush1.bf16.xpose.msra.mxu0 0
        %4529 = vmatprep.subr.bf16.mxu0 0
        %4530 = vmatpush1.bf16.xpose.msra.mxu0 0
        %4531 = vmatprep.mubr.bf16.mxu0 0
        %4532 = vmatmul.mubr.bf16.gmra.mrb[0].mxu0 %v4452
        %v4533 = vpop.f32.mrb[0].mxu0
        %v4534 = vadd.f32 0.0, %v4533
        %v4535 = vpop.f32.mrb[0].mxu0
        %v4536 = vpop.f32.mrb[0].mxu0
        %v4537 = vadd.f32 0.0, %v4536
        %v4538 = vpop.f32.mrb[0].mxu0
        %4539 = vmatprep.mubr.bf16.mxu0 0
        %4540 = vmatmul.mubr.bf16.gmra.mrb[0].mxu0 %v4455
        %v4541 = vpop.f32.mrb[0].mxu0
        %v4542 = vadd.f32 0.0, %v4541
        %v4543 = vpop.f32.mrb[0].mxu0
        %v4544 = vpop.f32.mrb[0].mxu0
        %v4545 = vadd.f32 0.0, %v4544
        %v4546 = vpop.f32.mrb[0].mxu0
        %4547 = vmatprep.mubr.bf16.mxu0 0
        %4548 = vmatmul.mubr.bf16.gmra.mrb[0].mxu0 %v4458
        %v4549 = vpop.f32.mrb[0].mxu0
        %v4550 = vadd.f32 0.0, %v4549
        %v4551 = vpop.f32.mrb[0].mxu0
        %v4552 = vpop.f32.mrb[0].mxu0
        %v4553 = vadd.f32 0.0, %v4552
        %v4554 = vpop.f32.mrb[0].mxu0
        %4555 = vmatprep.mubr.bf16.mxu0 0
        %4556 = vmatmul.mubr.bf16.gmra.mrb[0].mxu0 %v4461
        %v4557 = vpop.f32.mrb[0].mxu0
        %v4558 = vadd.f32 0.0, %v4557
        %v4559 = vpop.f32.mrb[0].mxu0
        %v4560 = vpop.f32.mrb[0].mxu0
        %v4561 = vadd.f32 0.0, %v4560
        %v4562 = vpop.f32.mrb[0].mxu0
        %4563 = vmatprep.mubr.bf16.mxu0 0
        %4564 = vmatmul.mubr.bf16.gmra.mrb[0].mxu0 %v4464
        %v4565 = vpop.f32.mrb[0].mxu0
        %v4566 = vadd.f32 0.0, %v4565
        %v4567 = vpop.f32.mrb[0].mxu0
        %v4568 = vpop.f32.mrb[0].mxu0
        %v4569 = vadd.f32 0.0, %v4568
        %v4570 = vpop.f32.mrb[0].mxu0
        %4571 = vmatprep.mubr.bf16.mxu0 0
        %4572 = vmatmul.mubr.bf16.gmra.mrb[0].mxu0 %v4467
        %v4573 = vpop.f32.mrb[0].mxu0
        %v4574 = vadd.f32 0.0, %v4573
        %v4575 = vpop.f32.mrb[0].mxu0
        %v4576 = vpop.f32.mrb[0].mxu0
        %v4577 = vadd.f32 0.0, %v4576
        %v4578 = vpop.f32.mrb[0].mxu0
        %4579 = vmatprep.mubr.bf16.mxu0 0
        %4580 = vmatmul.mubr.bf16.gmra.mrb[0].mxu0 %v4470
        %v4581 = vpop.f32.mrb[0].mxu0
        %v4582 = vadd.f32 0.0, %v4581
        %v4583 = vpop.f32.mrb[0].mxu0
        %v4584 = vpop.f32.mrb[0].mxu0
        %v4585 = vadd.f32 0.0, %v4584
        %v4586 = vpop.f32.mrb[0].mxu0
        %4587 = vmatprep.mubr.bf16.mxu0 0
        %4588 = vmatmul.mubr.bf16.gmra.mrb[0].mxu0 %v4473
        %v4589 = vpop.f32.mrb[0].mxu0
        %v4590 = vadd.f32 0.0, %v4589
        %v4591 = vpop.f32.mrb[0].mxu0
        %v4592 = vpop.f32.mrb[0].mxu0
        %v4593 = vadd.f32 0.0, %v4592
        %v4594 = vpop.f32.mrb[0].mxu0
        %4595 = vdwg.mxu0
        %v4596 = vmul.f32 %v4534, 0.17677669
        %v4597 = vmul.f32 %v4537, 0.17677669
        %v4598 = vmul.f32 %v4542, 0.17677669
        %v4599 = vmul.f32 %v4545, 0.17677669
        %v4600 = vmul.f32 %v4550, 0.17677669
        %v4601 = vmul.f32 %v4553, 0.17677669
        %v4602 = vmul.f32 %v4558, 0.17677669
        %v4603 = vmul.f32 %v4561, 0.17677669
        %v4604 = vmul.f32 %v4566, 0.17677669
        %v4605 = vmul.f32 %v4569, 0.17677669
        %v4606 = vmul.f32 %v4574, 0.17677669
        %v4607 = vmul.f32 %v4577, 0.17677669
        %v4608 = vmul.f32 %v4582, 0.17677669
        %v4609 = vmul.f32 %v4585, 0.17677669
        %v4610 = vmul.f32 %v4590, 0.17677669
        %v4611 = vmul.f32 %v4593, 0.17677669
        %v4612 = vadd.f32 %v4596, %v902
        %v4613 = vadd.f32 %v4597, %v903
        %v4614 = vadd.f32 %v4598, %v904
        %v4615 = vadd.f32 %v4599, %v905
        %v4616 = vadd.f32 %v4600, %v906
        %v4617 = vadd.f32 %v4601, %v907
        %v4618 = vadd.f32 %v4602, %v908
        %v4619 = vadd.f32 %v4603, %v909
        %v4620 = vadd.f32 %v4604, %v910
        %v4621 = vadd.f32 %v4605, %v911
        %v4622 = vadd.f32 %v4606, %v912
        %v4623 = vadd.f32 %v4607, %v913
        %v4624 = vadd.f32 %v4608, %v914
        %v4625 = vadd.f32 %v4609, %v915
        %v4626 = vadd.f32 %v4610, %v916
        %v4627 = vadd.f32 %v4611, %v917
        %4628 = vmax.xlane.f32.xlu0 %v4612
        %v4629 = vpop.xlane.xlu0 %4628
        %4630 = vmax.xlane.f32.xlu0 %v4613
        %v4631 = vpop.xlane.xlu0 %4630
        %4632 = vmax.xlane.f32.xlu0 %v4614
        %v4633 = vpop.xlane.xlu0 %4632
        %4634 = vmax.xlane.f32.xlu0 %v4615
        %v4635 = vpop.xlane.xlu0 %4634
        %4636 = vmax.xlane.f32.xlu0 %v4616
        %v4637 = vpop.xlane.xlu0 %4636
        %4638 = vmax.xlane.f32.xlu0 %v4617
        %v4639 = vpop.xlane.xlu0 %4638
        %4640 = vmax.xlane.f32.xlu0 %v4618
        %v4641 = vpop.xlane.xlu0 %4640
        %4642 = vmax.xlane.f32.xlu0 %v4619
        %v4643 = vpop.xlane.xlu0 %4642
        %4644 = vmax.xlane.f32.xlu0 %v4620
        %v4645 = vpop.xlane.xlu0 %4644
        %4646 = vmax.xlane.f32.xlu0 %v4621
        %v4647 = vpop.xlane.xlu0 %4646
        %4648 = vmax.xlane.f32.xlu0 %v4622
        %v4649 = vpop.xlane.xlu0 %4648
        %4650 = vmax.xlane.f32.xlu0 %v4623
        %v4651 = vpop.xlane.xlu0 %4650
        %4652 = vmax.xlane.f32.xlu0 %v4624
        %v4653 = vpop.xlane.xlu0 %4652
        %4654 = vmax.xlane.f32.xlu0 %v4625
        %v4655 = vpop.xlane.xlu0 %4654
        %4656 = vmax.xlane.f32.xlu0 %v4626
        %v4657 = vpop.xlane.xlu0 %4656
        %4658 = vmax.xlane.f32.xlu0 %v4627
        %v4659 = vpop.xlane.xlu0 %4658
        %v4660 = vsub.f32 %v4612, %v4629
        %v4661 = vsub.f32 %v4613, %v4631
        %v4662 = vsub.f32 %v4614, %v4633
        %v4663 = vsub.f32 %v4615, %v4635
        %v4664 = vsub.f32 %v4616, %v4637
        %v4665 = vsub.f32 %v4617, %v4639
        %v4666 = vsub.f32 %v4618, %v4641
        %v4667 = vsub.f32 %v4619, %v4643
        %v4668 = vsub.f32 %v4620, %v4645
        %v4669 = vsub.f32 %v4621, %v4647
        %v4670 = vsub.f32 %v4622, %v4649
        %v4671 = vsub.f32 %v4623, %v4651
        %v4672 = vsub.f32 %v4624, %v4653
        %v4673 = vsub.f32 %v4625, %v4655
        %v4674 = vsub.f32 %v4626, %v4657
        %v4675 = vsub.f32 %v4627, %v4659
        %v4676 = vmul.f32 %v4660, 1.442695
        %v4677 = vpow.pop %v4676
        %v4678 = vmul.f32 %v4661, 1.442695
        %v4679 = vpow.pop %v4678
        %v4680 = vmul.f32 %v4662, 1.442695
        %v4681 = vpow.pop %v4680
        %v4682 = vmul.f32 %v4663, 1.442695
        %v4683 = vpow.pop %v4682
        %v4684 = vmul.f32 %v4664, 1.442695
        %v4685 = vpow.pop %v4684
        %v4686 = vmul.f32 %v4665, 1.442695
        %v4687 = vpow.pop %v4686
        %v4688 = vmul.f32 %v4666, 1.442695
        %v4689 = vpow.pop %v4688
        %v4690 = vmul.f32 %v4667, 1.442695
        %v4691 = vpow.pop %v4690
        %v4692 = vmul.f32 %v4668, 1.442695
        %v4693 = vpow.pop %v4692
        %v4694 = vmul.f32 %v4669, 1.442695
        %v4695 = vpow.pop %v4694
        %v4696 = vmul.f32 %v4670, 1.442695
        %v4697 = vpow.pop %v4696
        %v4698 = vmul.f32 %v4671, 1.442695
        %v4699 = vpow.pop %v4698
        %v4700 = vmul.f32 %v4672, 1.442695
        %v4701 = vpow.pop %v4700
        %v4702 = vmul.f32 %v4673, 1.442695
        %v4703 = vpow.pop %v4702
        %v4704 = vmul.f32 %v4674, 1.442695
        %v4705 = vpow.pop %v4704
        %v4706 = vmul.f32 %v4675, 1.442695
        %v4707 = vpow.pop %v4706
        %4708 = vadd.xlane.f32.xlu0 %v4677
        %v4709 = vpop.xlane.xlu0 %4708
        %4710 = vadd.xlane.f32.xlu0 %v4679
        %v4711 = vpop.xlane.xlu0 %4710
        %4712 = vadd.xlane.f32.xlu0 %v4681
        %v4713 = vpop.xlane.xlu0 %4712
        %4714 = vadd.xlane.f32.xlu0 %v4683
        %v4715 = vpop.xlane.xlu0 %4714
        %4716 = vadd.xlane.f32.xlu0 %v4685
        %v4717 = vpop.xlane.xlu0 %4716
        %4718 = vadd.xlane.f32.xlu0 %v4687
        %v4719 = vpop.xlane.xlu0 %4718
        %4720 = vadd.xlane.f32.xlu0 %v4689
        %v4721 = vpop.xlane.xlu0 %4720
        %4722 = vadd.xlane.f32.xlu0 %v4691
        %v4723 = vpop.xlane.xlu0 %4722
        %4724 = vadd.xlane.f32.xlu0 %v4693
        %v4725 = vpop.xlane.xlu0 %4724
        %4726 = vadd.xlane.f32.xlu0 %v4695
        %v4727 = vpop.xlane.xlu0 %4726
        %4728 = vadd.xlane.f32.xlu0 %v4697
        %v4729 = vpop.xlane.xlu0 %4728
        %4730 = vadd.xlane.f32.xlu0 %v4699
        %v4731 = vpop.xlane.xlu0 %4730
        %4732 = vadd.xlane.f32.xlu0 %v4701
        %v4733 = vpop.xlane.xlu0 %4732
        %4734 = vadd.xlane.f32.xlu0 %v4703
        %v4735 = vpop.xlane.xlu0 %4734
        %4736 = vadd.xlane.f32.xlu0 %v4705
        %v4737 = vpop.xlane.xlu0 %4736
        %4738 = vadd.xlane.f32.xlu0 %v4707
        %v4739 = vpop.xlane.xlu0 %4738
        %v4740 = vrcp.pop %v4709
        %v4741 = vrcp.pop %v4711
        %v4742 = vrcp.pop %v4713
        %v4743 = vrcp.pop %v4715
        %v4744 = vrcp.pop %v4717
        %v4745 = vrcp.pop %v4719
        %v4746 = vrcp.pop %v4721
        %v4747 = vrcp.pop %v4723
        %v4748 = vrcp.pop %v4725
        %v4749 = vrcp.pop %v4727
        %v4750 = vrcp.pop %v4729
        %v4751 = vrcp.pop %v4731
        %v4752 = vrcp.pop %v4733
        %v4753 = vrcp.pop %v4735
        %v4754 = vrcp.pop %v4737
        %v4755 = vrcp.pop %v4739
        %v4756 = vmul.f32 %v4677, %v4740
        %v4757 = vmul.f32 %v4679, %v4741
        %v4758 = vmul.f32 %v4681, %v4742
        %v4759 = vmul.f32 %v4683, %v4743
        %v4760 = vmul.f32 %v4685, %v4744
        %v4761 = vmul.f32 %v4687, %v4745
        %v4762 = vmul.f32 %v4689, %v4746
        %v4763 = vmul.f32 %v4691, %v4747
        %v4764 = vmul.f32 %v4693, %v4748
        %v4765 = vmul.f32 %v4695, %v4749
        %v4766 = vmul.f32 %v4697, %v4750
        %v4767 = vmul.f32 %v4699, %v4751
        %v4768 = vmul.f32 %v4701, %v4752
        %v4769 = vmul.f32 %v4703, %v4753
        %v4770 = vmul.f32 %v4705, %v4754
        %v4771 = vmul.f32 %v4707, %v4755
        %v4772 = vpack.c.bf16 %v4757, %v4756
        %v4773 = vpack.c.bf16 %v4759, %v4758
        %v4774 = vpack.c.bf16 %v4761, %v4760
        %v4775 = vpack.c.bf16 %v4763, %v4762
        %v4776 = vpack.c.bf16 %v4765, %v4764
        %v4777 = vpack.c.bf16 %v4767, %v4766
        %v4778 = vpack.c.bf16 %v4769, %v4768
        %v4779 = vpack.c.bf16 %v4771, %v4770
        %4780 = vmatprep.subr.bf16.mxu0 0
        %4781 = vmatpush1.bf16.msra.mxu0 %v4443
        %4782 = vmatprep.subr.bf16.mxu0 0
        %4783 = vmatpush1.bf16.msra.mxu0 %v4444
        %4784 = vmatprep.subr.bf16.mxu0 0
        %4785 = vmatpush1.bf16.msra.mxu0 %v4445
        %4786 = vmatprep.subr.bf16.mxu0 0
        %4787 = vmatpush1.bf16.msra.mxu0 %v4446
        %4788 = vmatprep.subr.bf16.mxu0 0
        %4789 = vmatpush1.bf16.msra.mxu0 %v4447
        %4790 = vmatprep.subr.bf16.mxu0 0
        %4791 = vmatpush1.bf16.msra.mxu0 %v4448
        %4792 = vmatprep.subr.bf16.mxu0 0
        %4793 = vmatpush1.bf16.msra.mxu0 %v4449
        %4794 = vmatprep.subr.bf16.mxu0 0
        %4795 = vmatpush1.bf16.msra.mxu0 %v4450
        %4796 = vmatprep.subr.bf16.mxu0 0
        %4797 = vmatpush1.bf16.msra.mxu0 0
        %4798 = vmatprep.subr.bf16.mxu0 0
        %4799 = vmatpush1.bf16.msra.mxu0 0
        %4800 = vmatprep.subr.bf16.mxu0 0
        %4801 = vmatpush1.bf16.msra.mxu0 0
        %4802 = vmatprep.subr.bf16.mxu0 0
        %4803 = vmatpush1.bf16.msra.mxu0 0
        %4804 = vmatprep.subr.bf16.mxu0 0
        %4805 = vmatpush1.bf16.msra.mxu0 0
        %4806 = vmatprep.subr.bf16.mxu0 0
        %4807 = vmatpush1.bf16.msra.mxu0 0
        %4808 = vmatprep.subr.bf16.mxu0 0
        %4809 = vmatpush1.bf16.msra.mxu0 0
        %4810 = vmatprep.subr.bf16.mxu0 0
        %4811 = vmatpush1.bf16.msra.mxu0 0
        %4812 = vmatprep.mubr.bf16.mxu0 0
        %4813 = vmatmul.mubr.bf16.gmra.mrb[0].mxu0 %v4772
        %v4814 = vpop.f32.mrb[0].mxu0
        %v4815 = vadd.f32 0.0, %v4814
        %v4816 = vpop.f32.mrb[0].mxu0
        %v4817 = vpop.f32.mrb[0].mxu0
        %v4818 = vadd.f32 0.0, %v4817
        %v4819 = vpop.f32.mrb[0].mxu0
        %4820 = vmatprep.mubr.bf16.mxu0 0
        %4821 = vmatmul.mubr.bf16.gmra.mrb[0].mxu0 %v4773
        %v4822 = vpop.f32.mrb[0].mxu0
        %v4823 = vadd.f32 0.0, %v4822
        %v4824 = vpop.f32.mrb[0].mxu0
        %v4825 = vpop.f32.mrb[0].mxu0
        %v4826 = vadd.f32 0.0, %v4825
        %v4827 = vpop.f32.mrb[0].mxu0
        %4828 = vmatprep.mubr.bf16.mxu0 0
        %4829 = vmatmul.mubr.bf16.gmra.mrb[0].mxu0 %v4774
        %v4830 = vpop.f32.mrb[0].mxu0
        %v4831 = vadd.f32 0.0, %v4830
        %v4832 = vpop.f32.mrb[0].mxu0
        %v4833 = vpop.f32.mrb[0].mxu0
        %v4834 = vadd.f32 0.0, %v4833
        %v4835 = vpop.f32.mrb[0].mxu0
        %4836 = vmatprep.mubr.bf16.mxu0 0
        %4837 = vmatmul.mubr.bf16.gmra.mrb[0].mxu0 %v4775
        %v4838 = vpop.f32.mrb[0].mxu0
        %v4839 = vadd.f32 0.0, %v4838
        %v4840 = vpop.f32.mrb[0].mxu0
        %v4841 = vpop.f32.mrb[0].mxu0
        %v4842 = vadd.f32 0.0, %v4841
        %v4843 = vpop.f32.mrb[0].mxu0
        %4844 = vmatprep.mubr.bf16.mxu0 0
        %4845 = vmatmul.mubr.bf16.gmra.mrb[0].mxu0 %v4776
        %v4846 = vpop.f32.mrb[0].mxu0
        %v4847 = vadd.f32 0.0, %v4846
        %v4848 = vpop.f32.mrb[0].mxu0
        %v4849 = vpop.f32.mrb[0].mxu0
        %v4850 = vadd.f32 0.0, %v4849
        %v4851 = vpop.f32.mrb[0].mxu0
        %4852 = vmatprep.mubr.bf16.mxu0 0
        %4853 = vmatmul.mubr.bf16.gmra.mrb[0].mxu0 %v4777
        %v4854 = vpop.f32.mrb[0].mxu0
        %v4855 = vadd.f32 0.0, %v4854
        %v4856 = vpop.f32.mrb[0].mxu0
        %v4857 = vpop.f32.mrb[0].mxu0
        %v4858 = vadd.f32 0.0, %v4857
        %v4859 = vpop.f32.mrb[0].mxu0
        %4860 = vmatprep.mubr.bf16.mxu0 0
        %4861 = vmatmul.mubr.bf16.gmra.mrb[0].mxu0 %v4778
        %v4862 = vpop.f32.mrb[0].mxu0
        %v4863 = vadd.f32 0.0, %v4862
        %v4864 = vpop.f32.mrb[0].mxu0
        %v4865 = vpop.f32.mrb[0].mxu0
        %v4866 = vadd.f32 0.0, %v4865
        %v4867 = vpop.f32.mrb[0].mxu0
        %4868 = vmatprep.mubr.bf16.mxu0 0
        %4869 = vmatmul.mubr.bf16.gmra.mrb[0].mxu0 %v4779
        %v4870 = vpop.f32.mrb[0].mxu0
        %v4871 = vadd.f32 0.0, %v4870
        %v4872 = vpop.f32.mrb[0].mxu0
        %v4873 = vpop.f32.mrb[0].mxu0
        %v4874 = vadd.f32 0.0, %v4873
        %v4875 = vpop.f32.mrb[0].mxu0
        %4876 = vdwg.mxu0
        %4885 = vrot.lane.b32.xlu0 %v4427, 96
        %v4886 = vpop.permute.xlu0 %4885
        %4887 = vrot.lane.b32.xlu0 %v4428, 96
        %v4888 = vpop.permute.xlu0 %4887
        %4889 = vrot.lane.b32.xlu0 %v4429, 96
        %v4890 = vpop.permute.xlu0 %4889
        %4891 = vrot.lane.b32.xlu0 %v4430, 96
        %v4892 = vpop.permute.xlu0 %4891
        %4893 = vrot.lane.b32.xlu0 %v4431, 96
        %v4894 = vpop.permute.xlu0 %4893
        %4895 = vrot.lane.b32.xlu0 %v4432, 96
        %v4896 = vpop.permute.xlu0 %4895
        %4897 = vrot.lane.b32.xlu0 %v4433, 96
        %v4898 = vpop.permute.xlu0 %4897
        %4899 = vrot.lane.b32.xlu0 %v4434, 96
        %v4900 = vpop.permute.xlu0 %4899
        %4909 = vrot.lane.b32.xlu0 %v4435, 96
        %v4910 = vpop.permute.xlu0 %4909
        %4911 = vrot.lane.b32.xlu0 %v4436, 96
        %v4912 = vpop.permute.xlu0 %4911
        %4913 = vrot.lane.b32.xlu0 %v4437, 96
        %v4914 = vpop.permute.xlu0 %4913
        %4915 = vrot.lane.b32.xlu0 %v4438, 96
        %v4916 = vpop.permute.xlu0 %4915
        %4917 = vrot.lane.b32.xlu0 %v4439, 96
        %v4918 = vpop.permute.xlu0 %4917
        %4919 = vrot.lane.b32.xlu0 %v4440, 96
        %v4920 = vpop.permute.xlu0 %4919
        %4921 = vrot.lane.b32.xlu0 %v4441, 96
        %v4922 = vpop.permute.xlu0 %4921
        %4923 = vrot.lane.b32.xlu0 %v4442, 96
        %v4924 = vpop.permute.xlu0 %4923
        %v4926 = vsel %vm1396, %v4886, 0
        %v4929 = vsel %vm1396, %v4888, 0
        %v4932 = vsel %vm1396, %v4890, 0
        %v4935 = vsel %vm1396, %v4892, 0
        %v4938 = vsel %vm1396, %v4894, 0
        %v4941 = vsel %vm1396, %v4896, 0
        %v4944 = vsel %vm1396, %v4898, 0
        %v4947 = vsel %vm1396, %v4900, 0
        %v4950 = vsel %vm1396, %v4910, 0
        %v4953 = vsel %vm1396, %v4912, 0
        %v4956 = vsel %vm1396, %v4914, 0
        %v4959 = vsel %vm1396, %v4916, 0
        %v4962 = vsel %vm1396, %v4918, 0
        %v4965 = vsel %vm1396, %v4920, 0
        %v4968 = vsel %vm1396, %v4922, 0
        %v4971 = vsel %vm1396, %v4924, 0
        %4973 = vmatprep.subr.bf16.mxu0 0
        %4974 = vmatpush1.bf16.xpose.msra.mxu0 %v4950
        %4975 = vmatprep.subr.bf16.mxu0 0
        %4976 = vmatpush1.bf16.xpose.msra.mxu0 %v4953
        %4977 = vmatprep.subr.bf16.mxu0 0
        %4978 = vmatpush1.bf16.xpose.msra.mxu0 %v4956
        %4979 = vmatprep.subr.bf16.mxu0 0
        %4980 = vmatpush1.bf16.xpose.msra.mxu0 %v4959
        %4981 = vmatprep.subr.bf16.mxu0 0
        %4982 = vmatpush1.bf16.xpose.msra.mxu0 %v4962
        %4983 = vmatprep.subr.bf16.mxu0 0
        %4984 = vmatpush1.bf16.xpose.msra.mxu0 %v4965
        %4985 = vmatprep.subr.bf16.mxu0 0
        %4986 = vmatpush1.bf16.xpose.msra.mxu0 %v4968
        %4987 = vmatprep.subr.bf16.mxu0 0
        %4988 = vmatpush1.bf16.xpose.msra.mxu0 %v4971
        %4989 = vmatprep.subr.bf16.mxu0 0
        %4990 = vmatpush1.bf16.xpose.msra.mxu0 0
        %4991 = vmatprep.subr.bf16.mxu0 0
        %4992 = vmatpush1.bf16.xpose.msra.mxu0 0
        %4993 = vmatprep.subr.bf16.mxu0 0
        %4994 = vmatpush1.bf16.xpose.msra.mxu0 0
        %4995 = vmatprep.subr.bf16.mxu0 0
        %4996 = vmatpush1.bf16.xpose.msra.mxu0 0
        %4997 = vmatprep.subr.bf16.mxu0 0
        %4998 = vmatpush1.bf16.xpose.msra.mxu0 0
        %4999 = vmatprep.subr.bf16.mxu0 0
        %5000 = vmatpush1.bf16.xpose.msra.mxu0 0
        %5001 = vmatprep.subr.bf16.mxu0 0
        %5002 = vmatpush1.bf16.xpose.msra.mxu0 0
        %5003 = vmatprep.subr.bf16.mxu0 0
        %5004 = vmatpush1.bf16.xpose.msra.mxu0 0
        %5005 = vmatprep.mubr.bf16.mxu0 0
        %5006 = vmatmul.mubr.bf16.gmra.mrb[0].mxu0 %v4926
        %v5007 = vpop.f32.mrb[0].mxu0
        %v5008 = vadd.f32 0.0, %v5007
        %v5009 = vpop.f32.mrb[0].mxu0
        %v5010 = vpop.f32.mrb[0].mxu0
        %v5011 = vadd.f32 0.0, %v5010
        %v5012 = vpop.f32.mrb[0].mxu0
        %5013 = vmatprep.mubr.bf16.mxu0 0
        %5014 = vmatmul.mubr.bf16.gmra.mrb[0].mxu0 %v4929
        %v5015 = vpop.f32.mrb[0].mxu0
        %v5016 = vadd.f32 0.0, %v5015
        %v5017 = vpop.f32.mrb[0].mxu0
        %v5018 = vpop.f32.mrb[0].mxu0
        %v5019 = vadd.f32 0.0, %v5018
        %v5020 = vpop.f32.mrb[0].mxu0
        %5021 = vmatprep.mubr.bf16.mxu0 0
        %5022 = vmatmul.mubr.bf16.gmra.mrb[0].mxu0 %v4932
        %v5023 = vpop.f32.mrb[0].mxu0
        %v5024 = vadd.f32 0.0, %v5023
        %v5025 = vpop.f32.mrb[0].mxu0
        %v5026 = vpop.f32.mrb[0].mxu0
        %v5027 = vadd.f32 0.0, %v5026
        %v5028 = vpop.f32.mrb[0].mxu0
        %5029 = vmatprep.mubr.bf16.mxu0 0
        %5030 = vmatmul.mubr.bf16.gmra.mrb[0].mxu0 %v4935
        %v5031 = vpop.f32.mrb[0].mxu0
        %v5032 = vadd.f32 0.0, %v5031
        %v5033 = vpop.f32.mrb[0].mxu0
        %v5034 = vpop.f32.mrb[0].mxu0
        %v5035 = vadd.f32 0.0, %v5034
        %v5036 = vpop.f32.mrb[0].mxu0
        %5037 = vmatprep.mubr.bf16.mxu0 0
        %5038 = vmatmul.mubr.bf16.gmra.mrb[0].mxu0 %v4938
        %v5039 = vpop.f32.mrb[0].mxu0
        %v5040 = vadd.f32 0.0, %v5039
        %v5041 = vpop.f32.mrb[0].mxu0
        %v5042 = vpop.f32.mrb[0].mxu0
        %v5043 = vadd.f32 0.0, %v5042
        %v5044 = vpop.f32.mrb[0].mxu0
        %5045 = vmatprep.mubr.bf16.mxu0 0
        %5046 = vmatmul.mubr.bf16.gmra.mrb[0].mxu0 %v4941
        %v5047 = vpop.f32.mrb[0].mxu0
        %v5048 = vadd.f32 0.0, %v5047
        %v5049 = vpop.f32.mrb[0].mxu0
        %v5050 = vpop.f32.mrb[0].mxu0
        %v5051 = vadd.f32 0.0, %v5050
        %v5052 = vpop.f32.mrb[0].mxu0
        %5053 = vmatprep.mubr.bf16.mxu0 0
        %5054 = vmatmul.mubr.bf16.gmra.mrb[0].mxu0 %v4944
        %v5055 = vpop.f32.mrb[0].mxu0
        %v5056 = vadd.f32 0.0, %v5055
        %v5057 = vpop.f32.mrb[0].mxu0
        %v5058 = vpop.f32.mrb[0].mxu0
        %v5059 = vadd.f32 0.0, %v5058
        %v5060 = vpop.f32.mrb[0].mxu0
        %5061 = vmatprep.mubr.bf16.mxu0 0
        %5062 = vmatmul.mubr.bf16.gmra.mrb[0].mxu0 %v4947
        %v5063 = vpop.f32.mrb[0].mxu0
        %v5064 = vadd.f32 0.0, %v5063
        %v5065 = vpop.f32.mrb[0].mxu0
        %v5066 = vpop.f32.mrb[0].mxu0
        %v5067 = vadd.f32 0.0, %v5066
        %v5068 = vpop.f32.mrb[0].mxu0
        %5069 = vdwg.mxu0
        %v5070 = vmul.f32 %v5008, 0.17677669
        %v5071 = vmul.f32 %v5011, 0.17677669
        %v5072 = vmul.f32 %v5016, 0.17677669
        %v5073 = vmul.f32 %v5019, 0.17677669
        %v5074 = vmul.f32 %v5024, 0.17677669
        %v5075 = vmul.f32 %v5027, 0.17677669
        %v5076 = vmul.f32 %v5032, 0.17677669
        %v5077 = vmul.f32 %v5035, 0.17677669
        %v5078 = vmul.f32 %v5040, 0.17677669
        %v5079 = vmul.f32 %v5043, 0.17677669
        %v5080 = vmul.f32 %v5048, 0.17677669
        %v5081 = vmul.f32 %v5051, 0.17677669
        %v5082 = vmul.f32 %v5056, 0.17677669
        %v5083 = vmul.f32 %v5059, 0.17677669
        %v5084 = vmul.f32 %v5064, 0.17677669
        %v5085 = vmul.f32 %v5067, 0.17677669
        %v5086 = vadd.f32 %v5070, %v902
        %v5087 = vadd.f32 %v5071, %v903
        %v5088 = vadd.f32 %v5072, %v904
        %v5089 = vadd.f32 %v5073, %v905
        %v5090 = vadd.f32 %v5074, %v906
        %v5091 = vadd.f32 %v5075, %v907
        %v5092 = vadd.f32 %v5076, %v908
        %v5093 = vadd.f32 %v5077, %v909
        %v5094 = vadd.f32 %v5078, %v910
        %v5095 = vadd.f32 %v5079, %v911
        %v5096 = vadd.f32 %v5080, %v912
        %v5097 = vadd.f32 %v5081, %v913
        %v5098 = vadd.f32 %v5082, %v914
        %v5099 = vadd.f32 %v5083, %v915
        %v5100 = vadd.f32 %v5084, %v916
        %v5101 = vadd.f32 %v5085, %v917
        %5102 = vmax.xlane.f32.xlu0 %v5086
        %v5103 = vpop.xlane.xlu0 %5102
        %5104 = vmax.xlane.f32.xlu0 %v5087
        %v5105 = vpop.xlane.xlu0 %5104
        %5106 = vmax.xlane.f32.xlu0 %v5088
        %v5107 = vpop.xlane.xlu0 %5106
        %5108 = vmax.xlane.f32.xlu0 %v5089
        %v5109 = vpop.xlane.xlu0 %5108
        %5110 = vmax.xlane.f32.xlu0 %v5090
        %v5111 = vpop.xlane.xlu0 %5110
        %5112 = vmax.xlane.f32.xlu0 %v5091
        %v5113 = vpop.xlane.xlu0 %5112
        %5114 = vmax.xlane.f32.xlu0 %v5092
        %v5115 = vpop.xlane.xlu0 %5114
        %5116 = vmax.xlane.f32.xlu0 %v5093
        %v5117 = vpop.xlane.xlu0 %5116
        %5118 = vmax.xlane.f32.xlu0 %v5094
        %v5119 = vpop.xlane.xlu0 %5118
        %5120 = vmax.xlane.f32.xlu0 %v5095
        %v5121 = vpop.xlane.xlu0 %5120
        %5122 = vmax.xlane.f32.xlu0 %v5096
        %v5123 = vpop.xlane.xlu0 %5122
        %5124 = vmax.xlane.f32.xlu0 %v5097
        %v5125 = vpop.xlane.xlu0 %5124
        %5126 = vmax.xlane.f32.xlu0 %v5098
        %v5127 = vpop.xlane.xlu0 %5126
        %5128 = vmax.xlane.f32.xlu0 %v5099
        %v5129 = vpop.xlane.xlu0 %5128
        %5130 = vmax.xlane.f32.xlu0 %v5100
        %v5131 = vpop.xlane.xlu0 %5130
        %5132 = vmax.xlane.f32.xlu0 %v5101
        %v5133 = vpop.xlane.xlu0 %5132
        %v5134 = vsub.f32 %v5086, %v5103
        %v5135 = vsub.f32 %v5087, %v5105
        %v5136 = vsub.f32 %v5088, %v5107
        %v5137 = vsub.f32 %v5089, %v5109
        %v5138 = vsub.f32 %v5090, %v5111
        %v5139 = vsub.f32 %v5091, %v5113
        %v5140 = vsub.f32 %v5092, %v5115
        %v5141 = vsub.f32 %v5093, %v5117
        %v5142 = vsub.f32 %v5094, %v5119
        %v5143 = vsub.f32 %v5095, %v5121
        %v5144 = vsub.f32 %v5096, %v5123
        %v5145 = vsub.f32 %v5097, %v5125
        %v5146 = vsub.f32 %v5098, %v5127
        %v5147 = vsub.f32 %v5099, %v5129
        %v5148 = vsub.f32 %v5100, %v5131
        %v5149 = vsub.f32 %v5101, %v5133
        %v5150 = vmul.f32 %v5134, 1.442695
        %v5151 = vpow.pop %v5150
        %v5152 = vmul.f32 %v5135, 1.442695
        %v5153 = vpow.pop %v5152
        %v5154 = vmul.f32 %v5136, 1.442695
        %v5155 = vpow.pop %v5154
        %v5156 = vmul.f32 %v5137, 1.442695
        %v5157 = vpow.pop %v5156
        %v5158 = vmul.f32 %v5138, 1.442695
        %v5159 = vpow.pop %v5158
        %v5160 = vmul.f32 %v5139, 1.442695
        %v5161 = vpow.pop %v5160
        %v5162 = vmul.f32 %v5140, 1.442695
        %v5163 = vpow.pop %v5162
        %v5164 = vmul.f32 %v5141, 1.442695
        %v5165 = vpow.pop %v5164
        %v5166 = vmul.f32 %v5142, 1.442695
        %v5167 = vpow.pop %v5166
        %v5168 = vmul.f32 %v5143, 1.442695
        %v5169 = vpow.pop %v5168
        %v5170 = vmul.f32 %v5144, 1.442695
        %v5171 = vpow.pop %v5170
        %v5172 = vmul.f32 %v5145, 1.442695
        %v5173 = vpow.pop %v5172
        %v5174 = vmul.f32 %v5146, 1.442695
        %v5175 = vpow.pop %v5174
        %v5176 = vmul.f32 %v5147, 1.442695
        %v5177 = vpow.pop %v5176
        %v5178 = vmul.f32 %v5148, 1.442695
        %v5179 = vpow.pop %v5178
        %v5180 = vmul.f32 %v5149, 1.442695
        %v5181 = vpow.pop %v5180
        %5182 = vadd.xlane.f32.xlu0 %v5151
        %v5183 = vpop.xlane.xlu0 %5182
        %5184 = vadd.xlane.f32.xlu0 %v5153
        %v5185 = vpop.xlane.xlu0 %5184
        %5186 = vadd.xlane.f32.xlu0 %v5155
        %v5187 = vpop.xlane.xlu0 %5186
        %5188 = vadd.xlane.f32.xlu0 %v5157
        %v5189 = vpop.xlane.xlu0 %5188
        %5190 = vadd.xlane.f32.xlu0 %v5159
        %v5191 = vpop.xlane.xlu0 %5190
        %5192 = vadd.xlane.f32.xlu0 %v5161
        %v5193 = vpop.xlane.xlu0 %5192
        %5194 = vadd.xlane.f32.xlu0 %v5163
        %v5195 = vpop.xlane.xlu0 %5194
        %5196 = vadd.xlane.f32.xlu0 %v5165
        %v5197 = vpop.xlane.xlu0 %5196
        %5198 = vadd.xlane.f32.xlu0 %v5167
        %v5199 = vpop.xlane.xlu0 %5198
        %5200 = vadd.xlane.f32.xlu0 %v5169
        %v5201 = vpop.xlane.xlu0 %5200
        %5202 = vadd.xlane.f32.xlu0 %v5171
        %v5203 = vpop.xlane.xlu0 %5202
        %5204 = vadd.xlane.f32.xlu0 %v5173
        %v5205 = vpop.xlane.xlu0 %5204
        %5206 = vadd.xlane.f32.xlu0 %v5175
        %v5207 = vpop.xlane.xlu0 %5206
        %5208 = vadd.xlane.f32.xlu0 %v5177
        %v5209 = vpop.xlane.xlu0 %5208
        %5210 = vadd.xlane.f32.xlu0 %v5179
        %v5211 = vpop.xlane.xlu0 %5210
        %5212 = vadd.xlane.f32.xlu0 %v5181
        %v5213 = vpop.xlane.xlu0 %5212
        %v5214 = vrcp.pop %v5183
        %v5215 = vrcp.pop %v5185
        %v5216 = vrcp.pop %v5187
        %v5217 = vrcp.pop %v5189
        %v5218 = vrcp.pop %v5191
        %v5219 = vrcp.pop %v5193
        %v5220 = vrcp.pop %v5195
        %v5221 = vrcp.pop %v5197
        %v5222 = vrcp.pop %v5199
        %v5223 = vrcp.pop %v5201
        %v5224 = vrcp.pop %v5203
        %v5225 = vrcp.pop %v5205
        %v5226 = vrcp.pop %v5207
        %v5227 = vrcp.pop %v5209
        %v5228 = vrcp.pop %v5211
        %v5229 = vrcp.pop %v5213
        %v5230 = vmul.f32 %v5151, %v5214
        %v5231 = vmul.f32 %v5153, %v5215
        %v5232 = vmul.f32 %v5155, %v5216
        %v5233 = vmul.f32 %v5157, %v5217
        %v5234 = vmul.f32 %v5159, %v5218
        %v5235 = vmul.f32 %v5161, %v5219
        %v5236 = vmul.f32 %v5163, %v5220
        %v5237 = vmul.f32 %v5165, %v5221
        %v5238 = vmul.f32 %v5167, %v5222
        %v5239 = vmul.f32 %v5169, %v5223
        %v5240 = vmul.f32 %v5171, %v5224
        %v5241 = vmul.f32 %v5173, %v5225
        %v5242 = vmul.f32 %v5175, %v5226
        %v5243 = vmul.f32 %v5177, %v5227
        %v5244 = vmul.f32 %v5179, %v5228
        %v5245 = vmul.f32 %v5181, %v5229
        %v5246 = vpack.c.bf16 %v5231, %v5230
        %v5247 = vpack.c.bf16 %v5233, %v5232
        %v5248 = vpack.c.bf16 %v5235, %v5234
        %v5249 = vpack.c.bf16 %v5237, %v5236
        %v5250 = vpack.c.bf16 %v5239, %v5238
        %v5251 = vpack.c.bf16 %v5241, %v5240
        %v5252 = vpack.c.bf16 %v5243, %v5242
        %v5253 = vpack.c.bf16 %v5245, %v5244
        %5262 = vrot.lane.b32.xlu0 %v4443, 96
        %v5263 = vpop.permute.xlu0 %5262
        %5264 = vrot.lane.b32.xlu0 %v4444, 96
        %v5265 = vpop.permute.xlu0 %5264
        %5266 = vrot.lane.b32.xlu0 %v4445, 96
        %v5267 = vpop.permute.xlu0 %5266
        %5268 = vrot.lane.b32.xlu0 %v4446, 96
        %v5269 = vpop.permute.xlu0 %5268
        %5270 = vrot.lane.b32.xlu0 %v4447, 96
        %v5271 = vpop.permute.xlu0 %5270
        %5272 = vrot.lane.b32.xlu0 %v4448, 96
        %v5273 = vpop.permute.xlu0 %5272
        %5274 = vrot.lane.b32.xlu0 %v4449, 96
        %v5275 = vpop.permute.xlu0 %5274
        %5276 = vrot.lane.b32.xlu0 %v4450, 96
        %v5277 = vpop.permute.xlu0 %5276
        %5286 = vmatprep.subr.bf16.mxu0 0
        %5287 = vmatpush1.bf16.msra.mxu0 %v5263
        %5288 = vmatprep.subr.bf16.mxu0 0
        %5289 = vmatpush1.bf16.msra.mxu0 %v5265
        %5290 = vmatprep.subr.bf16.mxu0 0
        %5291 = vmatpush1.bf16.msra.mxu0 %v5267
        %5292 = vmatprep.subr.bf16.mxu0 0
        %5293 = vmatpush1.bf16.msra.mxu0 %v5269
        %5294 = vmatprep.subr.bf16.mxu0 0
        %5295 = vmatpush1.bf16.msra.mxu0 %v5271
        %5296 = vmatprep.subr.bf16.mxu0 0
        %5297 = vmatpush1.bf16.msra.mxu0 %v5273
        %5298 = vmatprep.subr.bf16.mxu0 0
        %5299 = vmatpush1.bf16.msra.mxu0 %v5275
        %5300 = vmatprep.subr.bf16.mxu0 0
        %5301 = vmatpush1.bf16.msra.mxu0 %v5277
        %5302 = vmatprep.subr.bf16.mxu0 0
        %5303 = vmatpush1.bf16.msra.mxu0 0
        %5304 = vmatprep.subr.bf16.mxu0 0
        %5305 = vmatpush1.bf16.msra.mxu0 0
        %5306 = vmatprep.subr.bf16.mxu0 0
        %5307 = vmatpush1.bf16.msra.mxu0 0
        %5308 = vmatprep.subr.bf16.mxu0 0
        %5309 = vmatpush1.bf16.msra.mxu0 0
        %5310 = vmatprep.subr.bf16.mxu0 0
        %5311 = vmatpush1.bf16.msra.mxu0 0
        %5312 = vmatprep.subr.bf16.mxu0 0
        %5313 = vmatpush1.bf16.msra.mxu0 0
        %5314 = vmatprep.subr.bf16.mxu0 0
        %5315 = vmatpush1.bf16.msra.mxu0 0
        %5316 = vmatprep.subr.bf16.mxu0 0
        %5317 = vmatpush1.bf16.msra.mxu0 0
        %5318 = vmatprep.mubr.bf16.mxu0 0
        %5319 = vmatmul.mubr.bf16.gmra.mrb[0].mxu0 %v5246
        %v5320 = vpop.f32.mrb[0].mxu0
        %v5321 = vadd.f32 0.0, %v5320
        %v5322 = vpop.f32.mrb[0].mxu0
        %v5323 = vpop.f32.mrb[0].mxu0
        %v5324 = vadd.f32 0.0, %v5323
        %v5325 = vpop.f32.mrb[0].mxu0
        %5326 = vmatprep.mubr.bf16.mxu0 0
        %5327 = vmatmul.mubr.bf16.gmra.mrb[0].mxu0 %v5247
        %v5328 = vpop.f32.mrb[0].mxu0
        %v5329 = vadd.f32 0.0, %v5328
        %v5330 = vpop.f32.mrb[0].mxu0
        %v5331 = vpop.f32.mrb[0].mxu0
        %v5332 = vadd.f32 0.0, %v5331
        %v5333 = vpop.f32.mrb[0].mxu0
        %5334 = vmatprep.mubr.bf16.mxu0 0
        %5335 = vmatmul.mubr.bf16.gmra.mrb[0].mxu0 %v5248
        %v5336 = vpop.f32.mrb[0].mxu0
        %v5337 = vadd.f32 0.0, %v5336
        %v5338 = vpop.f32.mrb[0].mxu0
        %v5339 = vpop.f32.mrb[0].mxu0
        %v5340 = vadd.f32 0.0, %v5339
        %v5341 = vpop.f32.mrb[0].mxu0
        %5342 = vmatprep.mubr.bf16.mxu0 0
        %5343 = vmatmul.mubr.bf16.gmra.mrb[0].mxu0 %v5249
        %v5344 = vpop.f32.mrb[0].mxu0
        %v5345 = vadd.f32 0.0, %v5344
        %v5346 = vpop.f32.mrb[0].mxu0
        %v5347 = vpop.f32.mrb[0].mxu0
        %v5348 = vadd.f32 0.0, %v5347
        %v5349 = vpop.f32.mrb[0].mxu0
        %5350 = vmatprep.mubr.bf16.mxu0 0
        %5351 = vmatmul.mubr.bf16.gmra.mrb[0].mxu0 %v5250
        %v5352 = vpop.f32.mrb[0].mxu0
        %v5353 = vadd.f32 0.0, %v5352
        %v5354 = vpop.f32.mrb[0].mxu0
        %v5355 = vpop.f32.mrb[0].mxu0
        %v5356 = vadd.f32 0.0, %v5355
        %v5357 = vpop.f32.mrb[0].mxu0
        %5358 = vmatprep.mubr.bf16.mxu0 0
        %5359 = vmatmul.mubr.bf16.gmra.mrb[0].mxu0 %v5251
        %v5360 = vpop.f32.mrb[0].mxu0
        %v5361 = vadd.f32 0.0, %v5360
        %v5362 = vpop.f32.mrb[0].mxu0
        %v5363 = vpop.f32.mrb[0].mxu0
        %v5364 = vadd.f32 0.0, %v5363
        %v5365 = vpop.f32.mrb[0].mxu0
        %5366 = vmatprep.mubr.bf16.mxu0 0
        %5367 = vmatmul.mubr.bf16.gmra.mrb[0].mxu0 %v5252
        %v5368 = vpop.f32.mrb[0].mxu0
        %v5369 = vadd.f32 0.0, %v5368
        %v5370 = vpop.f32.mrb[0].mxu0
        %v5371 = vpop.f32.mrb[0].mxu0
        %v5372 = vadd.f32 0.0, %v5371
        %v5373 = vpop.f32.mrb[0].mxu0
        %5374 = vmatprep.mubr.bf16.mxu0 0
        %5375 = vmatmul.mubr.bf16.gmra.mrb[0].mxu0 %v5253
        %v5376 = vpop.f32.mrb[0].mxu0
        %v5377 = vadd.f32 0.0, %v5376
        %v5378 = vpop.f32.mrb[0].mxu0
        %v5379 = vpop.f32.mrb[0].mxu0
        %v5380 = vadd.f32 0.0, %v5379
        %v5381 = vpop.f32.mrb[0].mxu0
        %5382 = vdwg.mxu0
        %5383 = vrot.lane.b32.xlu0 %v4427, 64
        %v5384 = vpop.permute.xlu0 %5383
        %5385 = vrot.lane.b32.xlu0 %v4428, 64
        %v5386 = vpop.permute.xlu0 %5385
        %5387 = vrot.lane.b32.xlu0 %v4429, 64
        %v5388 = vpop.permute.xlu0 %5387
        %5389 = vrot.lane.b32.xlu0 %v4430, 64
        %v5390 = vpop.permute.xlu0 %5389
        %5391 = vrot.lane.b32.xlu0 %v4431, 64
        %v5392 = vpop.permute.xlu0 %5391
        %5393 = vrot.lane.b32.xlu0 %v4432, 64
        %v5394 = vpop.permute.xlu0 %5393
        %5395 = vrot.lane.b32.xlu0 %v4433, 64
        %v5396 = vpop.permute.xlu0 %5395
        %5397 = vrot.lane.b32.xlu0 %v4434, 64
        %v5398 = vpop.permute.xlu0 %5397
        %5399 = vrot.lane.b32.xlu0 %v4435, 64
        %v5400 = vpop.permute.xlu0 %5399
        %5401 = vrot.lane.b32.xlu0 %v4436, 64
        %v5402 = vpop.permute.xlu0 %5401
        %5403 = vrot.lane.b32.xlu0 %v4437, 64
        %v5404 = vpop.permute.xlu0 %5403
        %5405 = vrot.lane.b32.xlu0 %v4438, 64
        %v5406 = vpop.permute.xlu0 %5405
        %5407 = vrot.lane.b32.xlu0 %v4439, 64
        %v5408 = vpop.permute.xlu0 %5407
        %5409 = vrot.lane.b32.xlu0 %v4440, 64
        %v5410 = vpop.permute.xlu0 %5409
        %5411 = vrot.lane.b32.xlu0 %v4441, 64
        %v5412 = vpop.permute.xlu0 %5411
        %5413 = vrot.lane.b32.xlu0 %v4442, 64
        %v5414 = vpop.permute.xlu0 %5413
        %v5416 = vsel %vm1396, %v5384, 0
        %v5419 = vsel %vm1396, %v5386, 0
        %v5422 = vsel %vm1396, %v5388, 0
        %v5425 = vsel %vm1396, %v5390, 0
        %v5428 = vsel %vm1396, %v5392, 0
        %v5431 = vsel %vm1396, %v5394, 0
        %v5434 = vsel %vm1396, %v5396, 0
        %v5437 = vsel %vm1396, %v5398, 0
        %v5440 = vsel %vm1396, %v5400, 0
        %v5443 = vsel %vm1396, %v5402, 0
        %v5446 = vsel %vm1396, %v5404, 0
        %v5449 = vsel %vm1396, %v5406, 0
        %v5452 = vsel %vm1396, %v5408, 0
        %v5455 = vsel %vm1396, %v5410, 0
        %v5458 = vsel %vm1396, %v5412, 0
        %v5461 = vsel %vm1396, %v5414, 0
        %5463 = vmatprep.subr.bf16.mxu0 0
        %5464 = vmatpush1.bf16.xpose.msra.mxu0 %v5440
        %5465 = vmatprep.subr.bf16.mxu0 0
        %5466 = vmatpush1.bf16.xpose.msra.mxu0 %v5443
        %5467 = vmatprep.subr.bf16.mxu0 0
        %5468 = vmatpush1.bf16.xpose.msra.mxu0 %v5446
        %5469 = vmatprep.subr.bf16.mxu0 0
        %5470 = vmatpush1.bf16.xpose.msra.mxu0 %v5449
        %5471 = vmatprep.subr.bf16.mxu0 0
        %5472 = vmatpush1.bf16.xpose.msra.mxu0 %v5452
        %5473 = vmatprep.subr.bf16.mxu0 0
        %5474 = vmatpush1.bf16.xpose.msra.mxu0 %v5455
        %5475 = vmatprep.subr.bf16.mxu0 0
        %5476 = vmatpush1.bf16.xpose.msra.mxu0 %v5458
        %5477 = vmatprep.subr.bf16.mxu0 0
        %5478 = vmatpush1.bf16.xpose.msra.mxu0 %v5461
        %5479 = vmatprep.subr.bf16.mxu0 0
        %5480 = vmatpush1.bf16.xpose.msra.mxu0 0
        %5481 = vmatprep.subr.bf16.mxu0 0
        %5482 = vmatpush1.bf16.xpose.msra.mxu0 0
        %5483 = vmatprep.subr.bf16.mxu0 0
        %5484 = vmatpush1.bf16.xpose.msra.mxu0 0
        %5485 = vmatprep.subr.bf16.mxu0 0
        %5486 = vmatpush1.bf16.xpose.msra.mxu0 0
        %5487 = vmatprep.subr.bf16.mxu0 0
        %5488 = vmatpush1.bf16.xpose.msra.mxu0 0
        %5489 = vmatprep.subr.bf16.mxu0 0
        %5490 = vmatpush1.bf16.xpose.msra.mxu0 0
        %5491 = vmatprep.subr.bf16.mxu0 0
        %5492 = vmatpush1.bf16.xpose.msra.mxu0 0
        %5493 = vmatprep.subr.bf16.mxu0 0
        %5494 = vmatpush1.bf16.xpose.msra.mxu0 0
        %5495 = vmatprep.mubr.bf16.mxu0 0
        %5496 = vmatmul.mubr.bf16.gmra.mrb[0].mxu0 %v5416
        %v5497 = vpop.f32.mrb[0].mxu0
        %v5498 = vadd.f32 0.0, %v5497
        %v5499 = vpop.f32.mrb[0].mxu0
        %v5500 = vpop.f32.mrb[0].mxu0
        %v5501 = vadd.f32 0.0, %v5500
        %v5502 = vpop.f32.mrb[0].mxu0
        %5503 = vmatprep.mubr.bf16.mxu0 0
        %5504 = vmatmul.mubr.bf16.gmra.mrb[0].mxu0 %v5419
        %v5505 = vpop.f32.mrb[0].mxu0
        %v5506 = vadd.f32 0.0, %v5505
        %v5507 = vpop.f32.mrb[0].mxu0
        %v5508 = vpop.f32.mrb[0].mxu0
        %v5509 = vadd.f32 0.0, %v5508
        %v5510 = vpop.f32.mrb[0].mxu0
        %5511 = vmatprep.mubr.bf16.mxu0 0
        %5512 = vmatmul.mubr.bf16.gmra.mrb[0].mxu0 %v5422
        %v5513 = vpop.f32.mrb[0].mxu0
        %v5514 = vadd.f32 0.0, %v5513
        %v5515 = vpop.f32.mrb[0].mxu0
        %v5516 = vpop.f32.mrb[0].mxu0
        %v5517 = vadd.f32 0.0, %v5516
        %v5518 = vpop.f32.mrb[0].mxu0
        %5519 = vmatprep.mubr.bf16.mxu0 0
        %5520 = vmatmul.mubr.bf16.gmra.mrb[0].mxu0 %v5425
        %v5521 = vpop.f32.mrb[0].mxu0
        %v5522 = vadd.f32 0.0, %v5521
        %v5523 = vpop.f32.mrb[0].mxu0
        %v5524 = vpop.f32.mrb[0].mxu0
        %v5525 = vadd.f32 0.0, %v5524
        %v5526 = vpop.f32.mrb[0].mxu0
        %5527 = vmatprep.mubr.bf16.mxu0 0
        %5528 = vmatmul.mubr.bf16.gmra.mrb[0].mxu0 %v5428
        %v5529 = vpop.f32.mrb[0].mxu0
        %v5530 = vadd.f32 0.0, %v5529
        %v5531 = vpop.f32.mrb[0].mxu0
        %v5532 = vpop.f32.mrb[0].mxu0
        %v5533 = vadd.f32 0.0, %v5532
        %v5534 = vpop.f32.mrb[0].mxu0
        %5535 = vmatprep.mubr.bf16.mxu0 0
        %5536 = vmatmul.mubr.bf16.gmra.mrb[0].mxu0 %v5431
        %v5537 = vpop.f32.mrb[0].mxu0
        %v5538 = vadd.f32 0.0, %v5537
        %v5539 = vpop.f32.mrb[0].mxu0
        %v5540 = vpop.f32.mrb[0].mxu0
        %v5541 = vadd.f32 0.0, %v5540
        %v5542 = vpop.f32.mrb[0].mxu0
        %5543 = vmatprep.mubr.bf16.mxu0 0
        %5544 = vmatmul.mubr.bf16.gmra.mrb[0].mxu0 %v5434
        %v5545 = vpop.f32.mrb[0].mxu0
        %v5546 = vadd.f32 0.0, %v5545
        %v5547 = vpop.f32.mrb[0].mxu0
        %v5548 = vpop.f32.mrb[0].mxu0
        %v5549 = vadd.f32 0.0, %v5548
        %v5550 = vpop.f32.mrb[0].mxu0
        %5551 = vmatprep.mubr.bf16.mxu0 0
        %5552 = vmatmul.mubr.bf16.gmra.mrb[0].mxu0 %v5437
        %v5553 = vpop.f32.mrb[0].mxu0
        %v5554 = vadd.f32 0.0, %v5553
        %v5555 = vpop.f32.mrb[0].mxu0
        %v5556 = vpop.f32.mrb[0].mxu0
        %v5557 = vadd.f32 0.0, %v5556
        %v5558 = vpop.f32.mrb[0].mxu0
        %5559 = vdwg.mxu0
        %v5560 = vmul.f32 %v5498, 0.17677669
        %v5561 = vmul.f32 %v5501, 0.17677669
        %v5562 = vmul.f32 %v5506, 0.17677669
        %v5563 = vmul.f32 %v5509, 0.17677669
        %v5564 = vmul.f32 %v5514, 0.17677669
        %v5565 = vmul.f32 %v5517, 0.17677669
        %v5566 = vmul.f32 %v5522, 0.17677669
        %v5567 = vmul.f32 %v5525, 0.17677669
        %v5568 = vmul.f32 %v5530, 0.17677669
        %v5569 = vmul.f32 %v5533, 0.17677669
        %v5570 = vmul.f32 %v5538, 0.17677669
        %v5571 = vmul.f32 %v5541, 0.17677669
        %v5572 = vmul.f32 %v5546, 0.17677669
        %v5573 = vmul.f32 %v5549, 0.17677669
        %v5574 = vmul.f32 %v5554, 0.17677669
        %v5575 = vmul.f32 %v5557, 0.17677669
        %v5576 = vadd.f32 %v5560, %v902
        %v5577 = vadd.f32 %v5561, %v903
        %v5578 = vadd.f32 %v5562, %v904
        %v5579 = vadd.f32 %v5563, %v905
        %v5580 = vadd.f32 %v5564, %v906
        %v5581 = vadd.f32 %v5565, %v907
        %v5582 = vadd.f32 %v5566, %v908
        %v5583 = vadd.f32 %v5567, %v909
        %v5584 = vadd.f32 %v5568, %v910
        %v5585 = vadd.f32 %v5569, %v911
        %v5586 = vadd.f32 %v5570, %v912
        %v5587 = vadd.f32 %v5571, %v913
        %v5588 = vadd.f32 %v5572, %v914
        %v5589 = vadd.f32 %v5573, %v915
        %v5590 = vadd.f32 %v5574, %v916
        %v5591 = vadd.f32 %v5575, %v917
        %5592 = vmax.xlane.f32.xlu0 %v5576
        %v5593 = vpop.xlane.xlu0 %5592
        %5594 = vmax.xlane.f32.xlu0 %v5577
        %v5595 = vpop.xlane.xlu0 %5594
        %5596 = vmax.xlane.f32.xlu0 %v5578
        %v5597 = vpop.xlane.xlu0 %5596
        %5598 = vmax.xlane.f32.xlu0 %v5579
        %v5599 = vpop.xlane.xlu0 %5598
        %5600 = vmax.xlane.f32.xlu0 %v5580
        %v5601 = vpop.xlane.xlu0 %5600
        %5602 = vmax.xlane.f32.xlu0 %v5581
        %v5603 = vpop.xlane.xlu0 %5602
        %5604 = vmax.xlane.f32.xlu0 %v5582
        %v5605 = vpop.xlane.xlu0 %5604
        %5606 = vmax.xlane.f32.xlu0 %v5583
        %v5607 = vpop.xlane.xlu0 %5606
        %5608 = vmax.xlane.f32.xlu0 %v5584
        %v5609 = vpop.xlane.xlu0 %5608
        %5610 = vmax.xlane.f32.xlu0 %v5585
        %v5611 = vpop.xlane.xlu0 %5610
        %5612 = vmax.xlane.f32.xlu0 %v5586
        %v5613 = vpop.xlane.xlu0 %5612
        %5614 = vmax.xlane.f32.xlu0 %v5587
        %v5615 = vpop.xlane.xlu0 %5614
        %5616 = vmax.xlane.f32.xlu0 %v5588
        %v5617 = vpop.xlane.xlu0 %5616
        %5618 = vmax.xlane.f32.xlu0 %v5589
        %v5619 = vpop.xlane.xlu0 %5618
        %5620 = vmax.xlane.f32.xlu0 %v5590
        %v5621 = vpop.xlane.xlu0 %5620
        %5622 = vmax.xlane.f32.xlu0 %v5591
        %v5623 = vpop.xlane.xlu0 %5622
        %v5624 = vsub.f32 %v5576, %v5593
        %v5625 = vsub.f32 %v5577, %v5595
        %v5626 = vsub.f32 %v5578, %v5597
        %v5627 = vsub.f32 %v5579, %v5599
        %v5628 = vsub.f32 %v5580, %v5601
        %v5629 = vsub.f32 %v5581, %v5603
        %v5630 = vsub.f32 %v5582, %v5605
        %v5631 = vsub.f32 %v5583, %v5607
        %v5632 = vsub.f32 %v5584, %v5609
        %v5633 = vsub.f32 %v5585, %v5611
        %v5634 = vsub.f32 %v5586, %v5613
        %v5635 = vsub.f32 %v5587, %v5615
        %v5636 = vsub.f32 %v5588, %v5617
        %v5637 = vsub.f32 %v5589, %v5619
        %v5638 = vsub.f32 %v5590, %v5621
        %v5639 = vsub.f32 %v5591, %v5623
        %v5640 = vmul.f32 %v5624, 1.442695
        %v5641 = vpow.pop %v5640
        %v5642 = vmul.f32 %v5625, 1.442695
        %v5643 = vpow.pop %v5642
        %v5644 = vmul.f32 %v5626, 1.442695
        %v5645 = vpow.pop %v5644
        %v5646 = vmul.f32 %v5627, 1.442695
        %v5647 = vpow.pop %v5646
        %v5648 = vmul.f32 %v5628, 1.442695
        %v5649 = vpow.pop %v5648
        %v5650 = vmul.f32 %v5629, 1.442695
        %v5651 = vpow.pop %v5650
        %v5652 = vmul.f32 %v5630, 1.442695
        %v5653 = vpow.pop %v5652
        %v5654 = vmul.f32 %v5631, 1.442695
        %v5655 = vpow.pop %v5654
        %v5656 = vmul.f32 %v5632, 1.442695
        %v5657 = vpow.pop %v5656
        %v5658 = vmul.f32 %v5633, 1.442695
        %v5659 = vpow.pop %v5658
        %v5660 = vmul.f32 %v5634, 1.442695
        %v5661 = vpow.pop %v5660
        %v5662 = vmul.f32 %v5635, 1.442695
        %v5663 = vpow.pop %v5662
        %v5664 = vmul.f32 %v5636, 1.442695
        %v5665 = vpow.pop %v5664
        %v5666 = vmul.f32 %v5637, 1.442695
        %v5667 = vpow.pop %v5666
        %v5668 = vmul.f32 %v5638, 1.442695
        %v5669 = vpow.pop %v5668
        %v5670 = vmul.f32 %v5639, 1.442695
        %v5671 = vpow.pop %v5670
        %5672 = vadd.xlane.f32.xlu0 %v5641
        %v5673 = vpop.xlane.xlu0 %5672
        %5674 = vadd.xlane.f32.xlu0 %v5643
        %v5675 = vpop.xlane.xlu0 %5674
        %5676 = vadd.xlane.f32.xlu0 %v5645
        %v5677 = vpop.xlane.xlu0 %5676
        %5678 = vadd.xlane.f32.xlu0 %v5647
        %v5679 = vpop.xlane.xlu0 %5678
        %5680 = vadd.xlane.f32.xlu0 %v5649
        %v5681 = vpop.xlane.xlu0 %5680
        %5682 = vadd.xlane.f32.xlu0 %v5651
        %v5683 = vpop.xlane.xlu0 %5682
        %5684 = vadd.xlane.f32.xlu0 %v5653
        %v5685 = vpop.xlane.xlu0 %5684
        %5686 = vadd.xlane.f32.xlu0 %v5655
        %v5687 = vpop.xlane.xlu0 %5686
        %5688 = vadd.xlane.f32.xlu0 %v5657
        %v5689 = vpop.xlane.xlu0 %5688
        %5690 = vadd.xlane.f32.xlu0 %v5659
        %v5691 = vpop.xlane.xlu0 %5690
        %5692 = vadd.xlane.f32.xlu0 %v5661
        %v5693 = vpop.xlane.xlu0 %5692
        %5694 = vadd.xlane.f32.xlu0 %v5663
        %v5695 = vpop.xlane.xlu0 %5694
        %5696 = vadd.xlane.f32.xlu0 %v5665
        %v5697 = vpop.xlane.xlu0 %5696
        %5698 = vadd.xlane.f32.xlu0 %v5667
        %v5699 = vpop.xlane.xlu0 %5698
        %5700 = vadd.xlane.f32.xlu0 %v5669
        %v5701 = vpop.xlane.xlu0 %5700
        %5702 = vadd.xlane.f32.xlu0 %v5671
        %v5703 = vpop.xlane.xlu0 %5702
        %v5704 = vrcp.pop %v5673
        %v5705 = vrcp.pop %v5675
        %v5706 = vrcp.pop %v5677
        %v5707 = vrcp.pop %v5679
        %v5708 = vrcp.pop %v5681
        %v5709 = vrcp.pop %v5683
        %v5710 = vrcp.pop %v5685
        %v5711 = vrcp.pop %v5687
        %v5712 = vrcp.pop %v5689
        %v5713 = vrcp.pop %v5691
        %v5714 = vrcp.pop %v5693
        %v5715 = vrcp.pop %v5695
        %v5716 = vrcp.pop %v5697
        %v5717 = vrcp.pop %v5699
        %v5718 = vrcp.pop %v5701
        %v5719 = vrcp.pop %v5703
        %v5720 = vmul.f32 %v5641, %v5704
        %v5721 = vmul.f32 %v5643, %v5705
        %v5722 = vmul.f32 %v5645, %v5706
        %v5723 = vmul.f32 %v5647, %v5707
        %v5724 = vmul.f32 %v5649, %v5708
        %v5725 = vmul.f32 %v5651, %v5709
        %v5726 = vmul.f32 %v5653, %v5710
        %v5727 = vmul.f32 %v5655, %v5711
        %v5728 = vmul.f32 %v5657, %v5712
        %v5729 = vmul.f32 %v5659, %v5713
        %v5730 = vmul.f32 %v5661, %v5714
        %v5731 = vmul.f32 %v5663, %v5715
        %v5732 = vmul.f32 %v5665, %v5716
        %v5733 = vmul.f32 %v5667, %v5717
        %v5734 = vmul.f32 %v5669, %v5718
        %v5735 = vmul.f32 %v5671, %v5719
        %v5736 = vpack.c.bf16 %v5721, %v5720
        %v5737 = vpack.c.bf16 %v5723, %v5722
        %v5738 = vpack.c.bf16 %v5725, %v5724
        %v5739 = vpack.c.bf16 %v5727, %v5726
        %v5740 = vpack.c.bf16 %v5729, %v5728
        %v5741 = vpack.c.bf16 %v5731, %v5730
        %v5742 = vpack.c.bf16 %v5733, %v5732
        %v5743 = vpack.c.bf16 %v5735, %v5734
        %5744 = vrot.lane.b32.xlu0 %v4443, 64
        %v5745 = vpop.permute.xlu0 %5744
        %5746 = vrot.lane.b32.xlu0 %v4444, 64
        %v5747 = vpop.permute.xlu0 %5746
        %5748 = vrot.lane.b32.xlu0 %v4445, 64
        %v5749 = vpop.permute.xlu0 %5748
        %5750 = vrot.lane.b32.xlu0 %v4446, 64
        %v5751 = vpop.permute.xlu0 %5750
        %5752 = vrot.lane.b32.xlu0 %v4447, 64
        %v5753 = vpop.permute.xlu0 %5752
        %5754 = vrot.lane.b32.xlu0 %v4448, 64
        %v5755 = vpop.permute.xlu0 %5754
        %5756 = vrot.lane.b32.xlu0 %v4449, 64
        %v5757 = vpop.permute.xlu0 %5756
        %5758 = vrot.lane.b32.xlu0 %v4450, 64
        %v5759 = vpop.permute.xlu0 %5758
        %5768 = vmatprep.subr.bf16.mxu0 0
        %5769 = vmatpush1.bf16.msra.mxu0 %v5745
        %5770 = vmatprep.subr.bf16.mxu0 0
        %5771 = vmatpush1.bf16.msra.mxu0 %v5747
        %5772 = vmatprep.subr.bf16.mxu0 0
        %5773 = vmatpush1.bf16.msra.mxu0 %v5749
        %5774 = vmatprep.subr.bf16.mxu0 0
        %5775 = vmatpush1.bf16.msra.mxu0 %v5751
        %5776 = vmatprep.subr.bf16.mxu0 0
        %5777 = vmatpush1.bf16.msra.mxu0 %v5753
        %5778 = vmatprep.subr.bf16.mxu0 0
        %5779 = vmatpush1.bf16.msra.mxu0 %v5755
        %5780 = vmatprep.subr.bf16.mxu0 0
        %5781 = vmatpush1.bf16.msra.mxu0 %v5757
        %5782 = vmatprep.subr.bf16.mxu0 0
        %5783 = vmatpush1.bf16.msra.mxu0 %v5759
        %5784 = vmatprep.subr.bf16.mxu0 0
        %5785 = vmatpush1.bf16.msra.mxu0 0
        %5786 = vmatprep.subr.bf16.mxu0 0
        %5787 = vmatpush1.bf16.msra.mxu0 0
        %5788 = vmatprep.subr.bf16.mxu0 0
        %5789 = vmatpush1.bf16.msra.mxu0 0
        %5790 = vmatprep.subr.bf16.mxu0 0
        %5791 = vmatpush1.bf16.msra.mxu0 0
        %5792 = vmatprep.subr.bf16.mxu0 0
        %5793 = vmatpush1.bf16.msra.mxu0 0
        %5794 = vmatprep.subr.bf16.mxu0 0
        %5795 = vmatpush1.bf16.msra.mxu0 0
        %5796 = vmatprep.subr.bf16.mxu0 0
        %5797 = vmatpush1.bf16.msra.mxu0 0
        %5798 = vmatprep.subr.bf16.mxu0 0
        %5799 = vmatpush1.bf16.msra.mxu0 0
        %5800 = vmatprep.mubr.bf16.mxu0 0
        %5801 = vmatmul.mubr.bf16.gmra.mrb[0].mxu0 %v5736
        %v5802 = vpop.f32.mrb[0].mxu0
        %v5803 = vadd.f32 0.0, %v5802
        %v5804 = vpop.f32.mrb[0].mxu0
        %v5805 = vpop.f32.mrb[0].mxu0
        %v5806 = vadd.f32 0.0, %v5805
        %v5807 = vpop.f32.mrb[0].mxu0
        %5808 = vmatprep.mubr.bf16.mxu0 0
        %5809 = vmatmul.mubr.bf16.gmra.mrb[0].mxu0 %v5737
        %v5810 = vpop.f32.mrb[0].mxu0
        %v5811 = vadd.f32 0.0, %v5810
        %v5812 = vpop.f32.mrb[0].mxu0
        %v5813 = vpop.f32.mrb[0].mxu0
        %v5814 = vadd.f32 0.0, %v5813
        %v5815 = vpop.f32.mrb[0].mxu0
        %5816 = vmatprep.mubr.bf16.mxu0 0
        %5817 = vmatmul.mubr.bf16.gmra.mrb[0].mxu0 %v5738
        %v5818 = vpop.f32.mrb[0].mxu0
        %v5819 = vadd.f32 0.0, %v5818
        %v5820 = vpop.f32.mrb[0].mxu0
        %v5821 = vpop.f32.mrb[0].mxu0
        %v5822 = vadd.f32 0.0, %v5821
        %v5823 = vpop.f32.mrb[0].mxu0
        %5824 = vmatprep.mubr.bf16.mxu0 0
        %5825 = vmatmul.mubr.bf16.gmra.mrb[0].mxu0 %v5739
        %v5826 = vpop.f32.mrb[0].mxu0
        %v5827 = vadd.f32 0.0, %v5826
        %v5828 = vpop.f32.mrb[0].mxu0
        %v5829 = vpop.f32.mrb[0].mxu0
        %v5830 = vadd.f32 0.0, %v5829
        %v5831 = vpop.f32.mrb[0].mxu0
        %5832 = vmatprep.mubr.bf16.mxu0 0
        %5833 = vmatmul.mubr.bf16.gmra.mrb[0].mxu0 %v5740
        %v5834 = vpop.f32.mrb[0].mxu0
        %v5835 = vadd.f32 0.0, %v5834
        %v5836 = vpop.f32.mrb[0].mxu0
        %v5837 = vpop.f32.mrb[0].mxu0
        %v5838 = vadd.f32 0.0, %v5837
        %v5839 = vpop.f32.mrb[0].mxu0
        %5840 = vmatprep.mubr.bf16.mxu0 0
        %5841 = vmatmul.mubr.bf16.gmra.mrb[0].mxu0 %v5741
        %v5842 = vpop.f32.mrb[0].mxu0
        %v5843 = vadd.f32 0.0, %v5842
        %v5844 = vpop.f32.mrb[0].mxu0
        %v5845 = vpop.f32.mrb[0].mxu0
        %v5846 = vadd.f32 0.0, %v5845
        %v5847 = vpop.f32.mrb[0].mxu0
        %5848 = vmatprep.mubr.bf16.mxu0 0
        %5849 = vmatmul.mubr.bf16.gmra.mrb[0].mxu0 %v5742
        %v5850 = vpop.f32.mrb[0].mxu0
        %v5851 = vadd.f32 0.0, %v5850
        %v5852 = vpop.f32.mrb[0].mxu0
        %v5853 = vpop.f32.mrb[0].mxu0
        %v5854 = vadd.f32 0.0, %v5853
        %v5855 = vpop.f32.mrb[0].mxu0
        %5856 = vmatprep.mubr.bf16.mxu0 0
        %5857 = vmatmul.mubr.bf16.gmra.mrb[0].mxu0 %v5743
        %v5858 = vpop.f32.mrb[0].mxu0
        %v5859 = vadd.f32 0.0, %v5858
        %v5860 = vpop.f32.mrb[0].mxu0
        %v5861 = vpop.f32.mrb[0].mxu0
        %v5862 = vadd.f32 0.0, %v5861
        %v5863 = vpop.f32.mrb[0].mxu0
        %5864 = vdwg.mxu0
        %5865 = vrot.lane.b32.xlu0 %v4427, 32
        %v5866 = vpop.permute.xlu0 %5865
        %5867 = vrot.lane.b32.xlu0 %v4428, 32
        %v5868 = vpop.permute.xlu0 %5867
        %5869 = vrot.lane.b32.xlu0 %v4429, 32
        %v5870 = vpop.permute.xlu0 %5869
        %5871 = vrot.lane.b32.xlu0 %v4430, 32
        %v5872 = vpop.permute.xlu0 %5871
        %5873 = vrot.lane.b32.xlu0 %v4431, 32
        %v5874 = vpop.permute.xlu0 %5873
        %5875 = vrot.lane.b32.xlu0 %v4432, 32
        %v5876 = vpop.permute.xlu0 %5875
        %5877 = vrot.lane.b32.xlu0 %v4433, 32
        %v5878 = vpop.permute.xlu0 %5877
        %5879 = vrot.lane.b32.xlu0 %v4434, 32
        %v5880 = vpop.permute.xlu0 %5879
        %5881 = vrot.lane.b32.xlu0 %v4435, 32
        %v5882 = vpop.permute.xlu0 %5881
        %5883 = vrot.lane.b32.xlu0 %v4436, 32
        %v5884 = vpop.permute.xlu0 %5883
        %5885 = vrot.lane.b32.xlu0 %v4437, 32
        %v5886 = vpop.permute.xlu0 %5885
        %5887 = vrot.lane.b32.xlu0 %v4438, 32
        %v5888 = vpop.permute.xlu0 %5887
        %5889 = vrot.lane.b32.xlu0 %v4439, 32
        %v5890 = vpop.permute.xlu0 %5889
        %5891 = vrot.lane.b32.xlu0 %v4440, 32
        %v5892 = vpop.permute.xlu0 %5891
        %5893 = vrot.lane.b32.xlu0 %v4441, 32
        %v5894 = vpop.permute.xlu0 %5893
        %5895 = vrot.lane.b32.xlu0 %v4442, 32
        %v5896 = vpop.permute.xlu0 %5895
        %v5898 = vsel %vm1396, %v5866, 0
        %v5901 = vsel %vm1396, %v5868, 0
        %v5904 = vsel %vm1396, %v5870, 0
        %v5907 = vsel %vm1396, %v5872, 0
        %v5910 = vsel %vm1396, %v5874, 0
        %v5913 = vsel %vm1396, %v5876, 0
        %v5916 = vsel %vm1396, %v5878, 0
        %v5919 = vsel %vm1396, %v5880, 0
        %v5922 = vsel %vm1396, %v5882, 0
        %v5925 = vsel %vm1396, %v5884, 0
        %v5928 = vsel %vm1396, %v5886, 0
        %v5931 = vsel %vm1396, %v5888, 0
        %v5934 = vsel %vm1396, %v5890, 0
        %v5937 = vsel %vm1396, %v5892, 0
        %v5940 = vsel %vm1396, %v5894, 0
        %v5943 = vsel %vm1396, %v5896, 0
        %5945 = vmatprep.subr.bf16.mxu0 0
        %5946 = vmatpush1.bf16.xpose.msra.mxu0 %v5922
        %5947 = vmatprep.subr.bf16.mxu0 0
        %5948 = vmatpush1.bf16.xpose.msra.mxu0 %v5925
        %5949 = vmatprep.subr.bf16.mxu0 0
        %5950 = vmatpush1.bf16.xpose.msra.mxu0 %v5928
        %5951 = vmatprep.subr.bf16.mxu0 0
        %5952 = vmatpush1.bf16.xpose.msra.mxu0 %v5931
        %5953 = vmatprep.subr.bf16.mxu0 0
        %5954 = vmatpush1.bf16.xpose.msra.mxu0 %v5934
        %5955 = vmatprep.subr.bf16.mxu0 0
        %5956 = vmatpush1.bf16.xpose.msra.mxu0 %v5937
        %5957 = vmatprep.subr.bf16.mxu0 0
        %5958 = vmatpush1.bf16.xpose.msra.mxu0 %v5940
        %5959 = vmatprep.subr.bf16.mxu0 0
        %5960 = vmatpush1.bf16.xpose.msra.mxu0 %v5943
        %5961 = vmatprep.subr.bf16.mxu0 0
        %5962 = vmatpush1.bf16.xpose.msra.mxu0 0
        %5963 = vmatprep.subr.bf16.mxu0 0
        %5964 = vmatpush1.bf16.xpose.msra.mxu0 0
        %5965 = vmatprep.subr.bf16.mxu0 0
        %5966 = vmatpush1.bf16.xpose.msra.mxu0 0
        %5967 = vmatprep.subr.bf16.mxu0 0
        %5968 = vmatpush1.bf16.xpose.msra.mxu0 0
        %5969 = vmatprep.subr.bf16.mxu0 0
        %5970 = vmatpush1.bf16.xpose.msra.mxu0 0
        %5971 = vmatprep.subr.bf16.mxu0 0
        %5972 = vmatpush1.bf16.xpose.msra.mxu0 0
        %5973 = vmatprep.subr.bf16.mxu0 0
        %5974 = vmatpush1.bf16.xpose.msra.mxu0 0
        %5975 = vmatprep.subr.bf16.mxu0 0
        %5976 = vmatpush1.bf16.xpose.msra.mxu0 0
        %5977 = vmatprep.mubr.bf16.mxu0 0
        %5978 = vmatmul.mubr.bf16.gmra.mrb[0].mxu0 %v5898
        %v5979 = vpop.f32.mrb[0].mxu0
        %v5980 = vadd.f32 0.0, %v5979
        %v5981 = vpop.f32.mrb[0].mxu0
        %v5982 = vpop.f32.mrb[0].mxu0
        %v5983 = vadd.f32 0.0, %v5982
        %v5984 = vpop.f32.mrb[0].mxu0
        %5985 = vmatprep.mubr.bf16.mxu0 0
        %5986 = vmatmul.mubr.bf16.gmra.mrb[0].mxu0 %v5901
        %v5987 = vpop.f32.mrb[0].mxu0
        %v5988 = vadd.f32 0.0, %v5987
        %v5989 = vpop.f32.mrb[0].mxu0
        %v5990 = vpop.f32.mrb[0].mxu0
        %v5991 = vadd.f32 0.0, %v5990
        %v5992 = vpop.f32.mrb[0].mxu0
        %5993 = vmatprep.mubr.bf16.mxu0 0
        %5994 = vmatmul.mubr.bf16.gmra.mrb[0].mxu0 %v5904
        %v5995 = vpop.f32.mrb[0].mxu0
        %v5996 = vadd.f32 0.0, %v5995
        %v5997 = vpop.f32.mrb[0].mxu0
        %v5998 = vpop.f32.mrb[0].mxu0
        %v5999 = vadd.f32 0.0, %v5998
        %v6000 = vpop.f32.mrb[0].mxu0
        %6001 = vmatprep.mubr.bf16.mxu0 0
        %6002 = vmatmul.mubr.bf16.gmra.mrb[0].mxu0 %v5907
        %v6003 = vpop.f32.mrb[0].mxu0
        %v6004 = vadd.f32 0.0, %v6003
        %v6005 = vpop.f32.mrb[0].mxu0
        %v6006 = vpop.f32.mrb[0].mxu0
        %v6007 = vadd.f32 0.0, %v6006
        %v6008 = vpop.f32.mrb[0].mxu0
        %6009 = vmatprep.mubr.bf16.mxu0 0
        %6010 = vmatmul.mubr.bf16.gmra.mrb[0].mxu0 %v5910
        %v6011 = vpop.f32.mrb[0].mxu0
        %v6012 = vadd.f32 0.0, %v6011
        %v6013 = vpop.f32.mrb[0].mxu0
        %v6014 = vpop.f32.mrb[0].mxu0
        %v6015 = vadd.f32 0.0, %v6014
        %v6016 = vpop.f32.mrb[0].mxu0
        %6017 = vmatprep.mubr.bf16.mxu0 0
        %6018 = vmatmul.mubr.bf16.gmra.mrb[0].mxu0 %v5913
        %v6019 = vpop.f32.mrb[0].mxu0
        %v6020 = vadd.f32 0.0, %v6019
        %v6021 = vpop.f32.mrb[0].mxu0
        %v6022 = vpop.f32.mrb[0].mxu0
        %v6023 = vadd.f32 0.0, %v6022
        %v6024 = vpop.f32.mrb[0].mxu0
        %6025 = vmatprep.mubr.bf16.mxu0 0
        %6026 = vmatmul.mubr.bf16.gmra.mrb[0].mxu0 %v5916
        %v6027 = vpop.f32.mrb[0].mxu0
        %v6028 = vadd.f32 0.0, %v6027
        %v6029 = vpop.f32.mrb[0].mxu0
        %v6030 = vpop.f32.mrb[0].mxu0
        %v6031 = vadd.f32 0.0, %v6030
        %v6032 = vpop.f32.mrb[0].mxu0
        %6033 = vmatprep.mubr.bf16.mxu0 0
        %6034 = vmatmul.mubr.bf16.gmra.mrb[0].mxu0 %v5919
        %v6035 = vpop.f32.mrb[0].mxu0
        %v6036 = vadd.f32 0.0, %v6035
        %v6037 = vpop.f32.mrb[0].mxu0
        %v6038 = vpop.f32.mrb[0].mxu0
        %v6039 = vadd.f32 0.0, %v6038
        %v6040 = vpop.f32.mrb[0].mxu0
        %6041 = vdwg.mxu0
        %v6042 = vmul.f32 %v5980, 0.17677669
        %v6043 = vmul.f32 %v5983, 0.17677669
        %v6044 = vmul.f32 %v5988, 0.17677669
        %v6045 = vmul.f32 %v5991, 0.17677669
        %v6046 = vmul.f32 %v5996, 0.17677669
        %v6047 = vmul.f32 %v5999, 0.17677669
        %v6048 = vmul.f32 %v6004, 0.17677669
        %v6049 = vmul.f32 %v6007, 0.17677669
        %v6050 = vmul.f32 %v6012, 0.17677669
        %v6051 = vmul.f32 %v6015, 0.17677669
        %v6052 = vmul.f32 %v6020, 0.17677669
        %v6053 = vmul.f32 %v6023, 0.17677669
        %v6054 = vmul.f32 %v6028, 0.17677669
        %v6055 = vmul.f32 %v6031, 0.17677669
        %v6056 = vmul.f32 %v6036, 0.17677669
        %v6057 = vmul.f32 %v6039, 0.17677669
        %v6058 = vadd.f32 %v6042, %v902
        %v6059 = vadd.f32 %v6043, %v903
        %v6060 = vadd.f32 %v6044, %v904
        %v6061 = vadd.f32 %v6045, %v905
        %v6062 = vadd.f32 %v6046, %v906
        %v6063 = vadd.f32 %v6047, %v907
        %v6064 = vadd.f32 %v6048, %v908
        %v6065 = vadd.f32 %v6049, %v909
        %v6066 = vadd.f32 %v6050, %v910
        %v6067 = vadd.f32 %v6051, %v911
        %v6068 = vadd.f32 %v6052, %v912
        %v6069 = vadd.f32 %v6053, %v913
        %v6070 = vadd.f32 %v6054, %v914
        %v6071 = vadd.f32 %v6055, %v915
        %v6072 = vadd.f32 %v6056, %v916
        %v6073 = vadd.f32 %v6057, %v917
        %6074 = vmax.xlane.f32.xlu0 %v6058
        %v6075 = vpop.xlane.xlu0 %6074
        %6076 = vmax.xlane.f32.xlu0 %v6059
        %v6077 = vpop.xlane.xlu0 %6076
        %6078 = vmax.xlane.f32.xlu0 %v6060
        %v6079 = vpop.xlane.xlu0 %6078
        %6080 = vmax.xlane.f32.xlu0 %v6061
        %v6081 = vpop.xlane.xlu0 %6080
        %6082 = vmax.xlane.f32.xlu0 %v6062
        %v6083 = vpop.xlane.xlu0 %6082
        %6084 = vmax.xlane.f32.xlu0 %v6063
        %v6085 = vpop.xlane.xlu0 %6084
        %6086 = vmax.xlane.f32.xlu0 %v6064
        %v6087 = vpop.xlane.xlu0 %6086
        %6088 = vmax.xlane.f32.xlu0 %v6065
        %v6089 = vpop.xlane.xlu0 %6088
        %6090 = vmax.xlane.f32.xlu0 %v6066
        %v6091 = vpop.xlane.xlu0 %6090
        %6092 = vmax.xlane.f32.xlu0 %v6067
        %v6093 = vpop.xlane.xlu0 %6092
        %6094 = vmax.xlane.f32.xlu0 %v6068
        %v6095 = vpop.xlane.xlu0 %6094
        %6096 = vmax.xlane.f32.xlu0 %v6069
        %v6097 = vpop.xlane.xlu0 %6096
        %6098 = vmax.xlane.f32.xlu0 %v6070
        %v6099 = vpop.xlane.xlu0 %6098
        %6100 = vmax.xlane.f32.xlu0 %v6071
        %v6101 = vpop.xlane.xlu0 %6100
        %6102 = vmax.xlane.f32.xlu0 %v6072
        %v6103 = vpop.xlane.xlu0 %6102
        %6104 = vmax.xlane.f32.xlu0 %v6073
        %v6105 = vpop.xlane.xlu0 %6104
        %v6106 = vsub.f32 %v6058, %v6075
        %v6107 = vsub.f32 %v6059, %v6077
        %v6108 = vsub.f32 %v6060, %v6079
        %v6109 = vsub.f32 %v6061, %v6081
        %v6110 = vsub.f32 %v6062, %v6083
        %v6111 = vsub.f32 %v6063, %v6085
        %v6112 = vsub.f32 %v6064, %v6087
        %v6113 = vsub.f32 %v6065, %v6089
        %v6114 = vsub.f32 %v6066, %v6091
        %v6115 = vsub.f32 %v6067, %v6093
        %v6116 = vsub.f32 %v6068, %v6095
        %v6117 = vsub.f32 %v6069, %v6097
        %v6118 = vsub.f32 %v6070, %v6099
        %v6119 = vsub.f32 %v6071, %v6101
        %v6120 = vsub.f32 %v6072, %v6103
        %v6121 = vsub.f32 %v6073, %v6105
        %v6122 = vmul.f32 %v6106, 1.442695
        %v6123 = vpow.pop %v6122
        %v6124 = vmul.f32 %v6107, 1.442695
        %v6125 = vpow.pop %v6124
        %v6126 = vmul.f32 %v6108, 1.442695
        %v6127 = vpow.pop %v6126
        %v6128 = vmul.f32 %v6109, 1.442695
        %v6129 = vpow.pop %v6128
        %v6130 = vmul.f32 %v6110, 1.442695
        %v6131 = vpow.pop %v6130
        %v6132 = vmul.f32 %v6111, 1.442695
        %v6133 = vpow.pop %v6132
        %v6134 = vmul.f32 %v6112, 1.442695
        %v6135 = vpow.pop %v6134
        %v6136 = vmul.f32 %v6113, 1.442695
        %v6137 = vpow.pop %v6136
        %v6138 = vmul.f32 %v6114, 1.442695
        %v6139 = vpow.pop %v6138
        %v6140 = vmul.f32 %v6115, 1.442695
        %v6141 = vpow.pop %v6140
        %v6142 = vmul.f32 %v6116, 1.442695
        %v6143 = vpow.pop %v6142
        %v6144 = vmul.f32 %v6117, 1.442695
        %v6145 = vpow.pop %v6144
        %v6146 = vmul.f32 %v6118, 1.442695
        %v6147 = vpow.pop %v6146
        %v6148 = vmul.f32 %v6119, 1.442695
        %v6149 = vpow.pop %v6148
        %v6150 = vmul.f32 %v6120, 1.442695
        %v6151 = vpow.pop %v6150
        %v6152 = vmul.f32 %v6121, 1.442695
        %v6153 = vpow.pop %v6152
        %6154 = vadd.xlane.f32.xlu0 %v6123
        %v6155 = vpop.xlane.xlu0 %6154
        %6156 = vadd.xlane.f32.xlu0 %v6125
        %v6157 = vpop.xlane.xlu0 %6156
        %6158 = vadd.xlane.f32.xlu0 %v6127
        %v6159 = vpop.xlane.xlu0 %6158
        %6160 = vadd.xlane.f32.xlu0 %v6129
        %v6161 = vpop.xlane.xlu0 %6160
        %6162 = vadd.xlane.f32.xlu0 %v6131
        %v6163 = vpop.xlane.xlu0 %6162
        %6164 = vadd.xlane.f32.xlu0 %v6133
        %v6165 = vpop.xlane.xlu0 %6164
        %6166 = vadd.xlane.f32.xlu0 %v6135
        %v6167 = vpop.xlane.xlu0 %6166
        %6168 = vadd.xlane.f32.xlu0 %v6137
        %v6169 = vpop.xlane.xlu0 %6168
        %6170 = vadd.xlane.f32.xlu0 %v6139
        %v6171 = vpop.xlane.xlu0 %6170
        %6172 = vadd.xlane.f32.xlu0 %v6141
        %v6173 = vpop.xlane.xlu0 %6172
        %6174 = vadd.xlane.f32.xlu0 %v6143
        %v6175 = vpop.xlane.xlu0 %6174
        %6176 = vadd.xlane.f32.xlu0 %v6145
        %v6177 = vpop.xlane.xlu0 %6176
        %6178 = vadd.xlane.f32.xlu0 %v6147
        %v6179 = vpop.xlane.xlu0 %6178
        %6180 = vadd.xlane.f32.xlu0 %v6149
        %v6181 = vpop.xlane.xlu0 %6180
        %6182 = vadd.xlane.f32.xlu0 %v6151
        %v6183 = vpop.xlane.xlu0 %6182
        %6184 = vadd.xlane.f32.xlu0 %v6153
        %v6185 = vpop.xlane.xlu0 %6184
        %v6186 = vrcp.pop %v6155
        %v6187 = vrcp.pop %v6157
        %v6188 = vrcp.pop %v6159
        %v6189 = vrcp.pop %v6161
        %v6190 = vrcp.pop %v6163
        %v6191 = vrcp.pop %v6165
        %v6192 = vrcp.pop %v6167
        %v6193 = vrcp.pop %v6169
        %v6194 = vrcp.pop %v6171
        %v6195 = vrcp.pop %v6173
        %v6196 = vrcp.pop %v6175
        %v6197 = vrcp.pop %v6177
        %v6198 = vrcp.pop %v6179
        %v6199 = vrcp.pop %v6181
        %v6200 = vrcp.pop %v6183
        %v6201 = vrcp.pop %v6185
        %v6202 = vmul.f32 %v6123, %v6186
        %v6203 = vmul.f32 %v6125, %v6187
        %v6204 = vmul.f32 %v6127, %v6188
        %v6205 = vmul.f32 %v6129, %v6189
        %v6206 = vmul.f32 %v6131, %v6190
        %v6207 = vmul.f32 %v6133, %v6191
        %v6208 = vmul.f32 %v6135, %v6192
        %v6209 = vmul.f32 %v6137, %v6193
        %v6210 = vmul.f32 %v6139, %v6194
        %v6211 = vmul.f32 %v6141, %v6195
        %v6212 = vmul.f32 %v6143, %v6196
        %v6213 = vmul.f32 %v6145, %v6197
        %v6214 = vmul.f32 %v6147, %v6198
        %v6215 = vmul.f32 %v6149, %v6199
        %v6216 = vmul.f32 %v6151, %v6200
        %v6217 = vmul.f32 %v6153, %v6201
        %v6218 = vpack.c.bf16 %v6203, %v6202
        %v6219 = vpack.c.bf16 %v6205, %v6204
        %v6220 = vpack.c.bf16 %v6207, %v6206
        %v6221 = vpack.c.bf16 %v6209, %v6208
        %v6222 = vpack.c.bf16 %v6211, %v6210
        %v6223 = vpack.c.bf16 %v6213, %v6212
        %v6224 = vpack.c.bf16 %v6215, %v6214
        %v6225 = vpack.c.bf16 %v6217, %v6216
        %6226 = vrot.lane.b32.xlu0 %v4443, 32
        %v6227 = vpop.permute.xlu0 %6226
        %6228 = vrot.lane.b32.xlu0 %v4444, 32
        %v6229 = vpop.permute.xlu0 %6228
        %6230 = vrot.lane.b32.xlu0 %v4445, 32
        %v6231 = vpop.permute.xlu0 %6230
        %6232 = vrot.lane.b32.xlu0 %v4446, 32
        %v6233 = vpop.permute.xlu0 %6232
        %6234 = vrot.lane.b32.xlu0 %v4447, 32
        %v6235 = vpop.permute.xlu0 %6234
        %6236 = vrot.lane.b32.xlu0 %v4448, 32
        %v6237 = vpop.permute.xlu0 %6236
        %6238 = vrot.lane.b32.xlu0 %v4449, 32
        %v6239 = vpop.permute.xlu0 %6238
        %6240 = vrot.lane.b32.xlu0 %v4450, 32
        %v6241 = vpop.permute.xlu0 %6240
        %6250 = vmatprep.subr.bf16.mxu0 0
        %6251 = vmatpush1.bf16.msra.mxu0 %v6227
        %6252 = vmatprep.subr.bf16.mxu0 0
        %6253 = vmatpush1.bf16.msra.mxu0 %v6229
        %6254 = vmatprep.subr.bf16.mxu0 0
        %6255 = vmatpush1.bf16.msra.mxu0 %v6231
        %6256 = vmatprep.subr.bf16.mxu0 0
        %6257 = vmatpush1.bf16.msra.mxu0 %v6233
        %6258 = vmatprep.subr.bf16.mxu0 0
        %6259 = vmatpush1.bf16.msra.mxu0 %v6235
        %6260 = vmatprep.subr.bf16.mxu0 0
        %6261 = vmatpush1.bf16.msra.mxu0 %v6237
        %6262 = vmatprep.subr.bf16.mxu0 0
        %6263 = vmatpush1.bf16.msra.mxu0 %v6239
        %6264 = vmatprep.subr.bf16.mxu0 0
        %6265 = vmatpush1.bf16.msra.mxu0 %v6241
        %6266 = vmatprep.subr.bf16.mxu0 0
        %6267 = vmatpush1.bf16.msra.mxu0 0
        %6268 = vmatprep.subr.bf16.mxu0 0
        %6269 = vmatpush1.bf16.msra.mxu0 0
        %6270 = vmatprep.subr.bf16.mxu0 0
        %6271 = vmatpush1.bf16.msra.mxu0 0
        %6272 = vmatprep.subr.bf16.mxu0 0
        %6273 = vmatpush1.bf16.msra.mxu0 0
        %6274 = vmatprep.subr.bf16.mxu0 0
        %6275 = vmatpush1.bf16.msra.mxu0 0
        %6276 = vmatprep.subr.bf16.mxu0 0
        %6277 = vmatpush1.bf16.msra.mxu0 0
        %6278 = vmatprep.subr.bf16.mxu0 0
        %6279 = vmatpush1.bf16.msra.mxu0 0
        %6280 = vmatprep.subr.bf16.mxu0 0
        %6281 = vmatpush1.bf16.msra.mxu0 0
        %6282 = vmatprep.mubr.bf16.mxu0 0
        %6283 = vmatmul.mubr.bf16.gmra.mrb[0].mxu0 %v6218
        %v6284 = vpop.f32.mrb[0].mxu0
        %v6285 = vadd.f32 0.0, %v6284
        %v6286 = vpop.f32.mrb[0].mxu0
        %v6287 = vpop.f32.mrb[0].mxu0
        %v6288 = vadd.f32 0.0, %v6287
        %v6289 = vpop.f32.mrb[0].mxu0
        %6290 = vmatprep.mubr.bf16.mxu0 0
        %6291 = vmatmul.mubr.bf16.gmra.mrb[0].mxu0 %v6219
        %v6292 = vpop.f32.mrb[0].mxu0
        %v6293 = vadd.f32 0.0, %v6292
        %v6294 = vpop.f32.mrb[0].mxu0
        %v6295 = vpop.f32.mrb[0].mxu0
        %v6296 = vadd.f32 0.0, %v6295
        %v6297 = vpop.f32.mrb[0].mxu0
        %6298 = vmatprep.mubr.bf16.mxu0 0
        %6299 = vmatmul.mubr.bf16.gmra.mrb[0].mxu0 %v6220
        %v6300 = vpop.f32.mrb[0].mxu0
        %v6301 = vadd.f32 0.0, %v6300
        %v6302 = vpop.f32.mrb[0].mxu0
        %v6303 = vpop.f32.mrb[0].mxu0
        %v6304 = vadd.f32 0.0, %v6303
        %v6305 = vpop.f32.mrb[0].mxu0
        %6306 = vmatprep.mubr.bf16.mxu0 0
        %6307 = vmatmul.mubr.bf16.gmra.mrb[0].mxu0 %v6221
        %v6308 = vpop.f32.mrb[0].mxu0
        %v6309 = vadd.f32 0.0, %v6308
        %v6310 = vpop.f32.mrb[0].mxu0
        %v6311 = vpop.f32.mrb[0].mxu0
        %v6312 = vadd.f32 0.0, %v6311
        %v6313 = vpop.f32.mrb[0].mxu0
        %6314 = vmatprep.mubr.bf16.mxu0 0
        %6315 = vmatmul.mubr.bf16.gmra.mrb[0].mxu0 %v6222
        %v6316 = vpop.f32.mrb[0].mxu0
        %v6317 = vadd.f32 0.0, %v6316
        %v6318 = vpop.f32.mrb[0].mxu0
        %v6319 = vpop.f32.mrb[0].mxu0
        %v6320 = vadd.f32 0.0, %v6319
        %v6321 = vpop.f32.mrb[0].mxu0
        %6322 = vmatprep.mubr.bf16.mxu0 0
        %6323 = vmatmul.mubr.bf16.gmra.mrb[0].mxu0 %v6223
        %v6324 = vpop.f32.mrb[0].mxu0
        %v6325 = vadd.f32 0.0, %v6324
        %v6326 = vpop.f32.mrb[0].mxu0
        %v6327 = vpop.f32.mrb[0].mxu0
        %v6328 = vadd.f32 0.0, %v6327
        %v6329 = vpop.f32.mrb[0].mxu0
        %6330 = vmatprep.mubr.bf16.mxu0 0
        %6331 = vmatmul.mubr.bf16.gmra.mrb[0].mxu0 %v6224
        %v6332 = vpop.f32.mrb[0].mxu0
        %v6333 = vadd.f32 0.0, %v6332
        %v6334 = vpop.f32.mrb[0].mxu0
        %v6335 = vpop.f32.mrb[0].mxu0
        %v6336 = vadd.f32 0.0, %v6335
        %v6337 = vpop.f32.mrb[0].mxu0
        %6338 = vmatprep.mubr.bf16.mxu0 0
        %6339 = vmatmul.mubr.bf16.gmra.mrb[0].mxu0 %v6225
        %v6340 = vpop.f32.mrb[0].mxu0
        %v6341 = vadd.f32 0.0, %v6340
        %v6342 = vpop.f32.mrb[0].mxu0
        %v6343 = vpop.f32.mrb[0].mxu0
        %v6344 = vadd.f32 0.0, %v6343
        %v6345 = vpop.f32.mrb[0].mxu0
        %6346 = vdwg.mxu0
        %6363 = vrot.lane.b32.xlu0 %v5321, 32
        %v6364 = vpop.permute.xlu0 %6363
        %6365 = vrot.lane.b32.xlu0 %v5324, 32
        %v6366 = vpop.permute.xlu0 %6365
        %6367 = vrot.lane.b32.xlu0 %v5329, 32
        %v6368 = vpop.permute.xlu0 %6367
        %6369 = vrot.lane.b32.xlu0 %v5332, 32
        %v6370 = vpop.permute.xlu0 %6369
        %6371 = vrot.lane.b32.xlu0 %v5337, 32
        %v6372 = vpop.permute.xlu0 %6371
        %6373 = vrot.lane.b32.xlu0 %v5340, 32
        %v6374 = vpop.permute.xlu0 %6373
        %6375 = vrot.lane.b32.xlu0 %v5345, 32
        %v6376 = vpop.permute.xlu0 %6375
        %6377 = vrot.lane.b32.xlu0 %v5348, 32
        %v6378 = vpop.permute.xlu0 %6377
        %6379 = vrot.lane.b32.xlu0 %v5353, 32
        %v6380 = vpop.permute.xlu0 %6379
        %6381 = vrot.lane.b32.xlu0 %v5356, 32
        %v6382 = vpop.permute.xlu0 %6381
        %6383 = vrot.lane.b32.xlu0 %v5361, 32
        %v6384 = vpop.permute.xlu0 %6383
        %6385 = vrot.lane.b32.xlu0 %v5364, 32
        %v6386 = vpop.permute.xlu0 %6385
        %6387 = vrot.lane.b32.xlu0 %v5369, 32
        %v6388 = vpop.permute.xlu0 %6387
        %6389 = vrot.lane.b32.xlu0 %v5372, 32
        %v6390 = vpop.permute.xlu0 %6389
        %6391 = vrot.lane.b32.xlu0 %v5377, 32
        %v6392 = vpop.permute.xlu0 %6391
        %6393 = vrot.lane.b32.xlu0 %v5380, 32
        %v6394 = vpop.permute.xlu0 %6393
        %6427 = vrot.lane.b32.xlu0 %v5803, 64
        %v6428 = vpop.permute.xlu0 %6427
        %6429 = vrot.lane.b32.xlu0 %v5806, 64
        %v6430 = vpop.permute.xlu0 %6429
        %6431 = vrot.lane.b32.xlu0 %v5811, 64
        %v6432 = vpop.permute.xlu0 %6431
        %6433 = vrot.lane.b32.xlu0 %v5814, 64
        %v6434 = vpop.permute.xlu0 %6433
        %6435 = vrot.lane.b32.xlu0 %v5819, 64
        %v6436 = vpop.permute.xlu0 %6435
        %6437 = vrot.lane.b32.xlu0 %v5822, 64
        %v6438 = vpop.permute.xlu0 %6437
        %6439 = vrot.lane.b32.xlu0 %v5827, 64
        %v6440 = vpop.permute.xlu0 %6439
        %6441 = vrot.lane.b32.xlu0 %v5830, 64
        %v6442 = vpop.permute.xlu0 %6441
        %6443 = vrot.lane.b32.xlu0 %v5835, 64
        %v6444 = vpop.permute.xlu0 %6443
        %6445 = vrot.lane.b32.xlu0 %v5838, 64
        %v6446 = vpop.permute.xlu0 %6445
        %6447 = vrot.lane.b32.xlu0 %v5843, 64
        %v6448 = vpop.permute.xlu0 %6447
        %6449 = vrot.lane.b32.xlu0 %v5846, 64
        %v6450 = vpop.permute.xlu0 %6449
        %6451 = vrot.lane.b32.xlu0 %v5851, 64
        %v6452 = vpop.permute.xlu0 %6451
        %6453 = vrot.lane.b32.xlu0 %v5854, 64
        %v6454 = vpop.permute.xlu0 %6453
        %6455 = vrot.lane.b32.xlu0 %v5859, 64
        %v6456 = vpop.permute.xlu0 %6455
        %6457 = vrot.lane.b32.xlu0 %v5862, 64
        %v6458 = vpop.permute.xlu0 %6457
        %6491 = vrot.lane.b32.xlu0 %v6285, 96
        %v6492 = vpop.permute.xlu0 %6491
        %6493 = vrot.lane.b32.xlu0 %v6288, 96
        %v6494 = vpop.permute.xlu0 %6493
        %6495 = vrot.lane.b32.xlu0 %v6293, 96
        %v6496 = vpop.permute.xlu0 %6495
        %6497 = vrot.lane.b32.xlu0 %v6296, 96
        %v6498 = vpop.permute.xlu0 %6497
        %6499 = vrot.lane.b32.xlu0 %v6301, 96
        %v6500 = vpop.permute.xlu0 %6499
        %6501 = vrot.lane.b32.xlu0 %v6304, 96
        %v6502 = vpop.permute.xlu0 %6501
        %6503 = vrot.lane.b32.xlu0 %v6309, 96
        %v6504 = vpop.permute.xlu0 %6503
        %6505 = vrot.lane.b32.xlu0 %v6312, 96
        %v6506 = vpop.permute.xlu0 %6505
        %6507 = vrot.lane.b32.xlu0 %v6317, 96
        %v6508 = vpop.permute.xlu0 %6507
        %6509 = vrot.lane.b32.xlu0 %v6320, 96
        %v6510 = vpop.permute.xlu0 %6509
        %6511 = vrot.lane.b32.xlu0 %v6325, 96
        %v6512 = vpop.permute.xlu0 %6511
        %6513 = vrot.lane.b32.xlu0 %v6328, 96
        %v6514 = vpop.permute.xlu0 %6513
        %6515 = vrot.lane.b32.xlu0 %v6333, 96
        %v6516 = vpop.permute.xlu0 %6515
        %6517 = vrot.lane.b32.xlu0 %v6336, 96
        %v6518 = vpop.permute.xlu0 %6517
        %6519 = vrot.lane.b32.xlu0 %v6341, 96
        %v6520 = vpop.permute.xlu0 %6519
        %6521 = vrot.lane.b32.xlu0 %v6344, 96
        %v6522 = vpop.permute.xlu0 %6521
        %v6539 = vsel %vm1396, %v4815, %v6364
        %v6540 = vsel %vm1396, %v4818, %v6366
        %v6541 = vsel %vm1396, %v4823, %v6368
        %v6542 = vsel %vm1396, %v4826, %v6370
        %v6543 = vsel %vm1396, %v4831, %v6372
        %v6544 = vsel %vm1396, %v4834, %v6374
        %v6545 = vsel %vm1396, %v4839, %v6376
        %v6546 = vsel %vm1396, %v4842, %v6378
        %v6547 = vsel %vm1396, %v4847, %v6380
        %v6548 = vsel %vm1396, %v4850, %v6382
        %v6549 = vsel %vm1396, %v4855, %v6384
        %v6550 = vsel %vm1396, %v4858, %v6386
        %v6551 = vsel %vm1396, %v4863, %v6388
        %v6552 = vsel %vm1396, %v4866, %v6390
        %v6553 = vsel %vm1396, %v4871, %v6392
        %v6554 = vsel %vm1396, %v4874, %v6394
        %v6555 = vsel %vm3501, %v6539, %v6428
        %v6556 = vsel %vm3501, %v6540, %v6430
        %v6557 = vsel %vm3501, %v6541, %v6432
        %v6558 = vsel %vm3501, %v6542, %v6434
        %v6559 = vsel %vm3501, %v6543, %v6436
        %v6560 = vsel %vm3501, %v6544, %v6438
        %v6561 = vsel %vm3501, %v6545, %v6440
        %v6562 = vsel %vm3501, %v6546, %v6442
        %v6563 = vsel %vm3501, %v6547, %v6444
        %v6564 = vsel %vm3501, %v6548, %v6446
        %v6565 = vsel %vm3501, %v6549, %v6448
        %v6566 = vsel %vm3501, %v6550, %v6450
        %v6567 = vsel %vm3501, %v6551, %v6452
        %v6568 = vsel %vm3501, %v6552, %v6454
        %v6569 = vsel %vm3501, %v6553, %v6456
        %v6570 = vsel %vm3501, %v6554, %v6458
        %v6571 = vsel %vm3518, %v6555, %v6492
        %v6572 = vsel %vm3518, %v6556, %v6494
        %v6573 = vsel %vm3518, %v6557, %v6496
        %v6574 = vsel %vm3518, %v6558, %v6498
        %v6575 = vsel %vm3518, %v6559, %v6500
        %v6576 = vsel %vm3518, %v6560, %v6502
        %v6577 = vsel %vm3518, %v6561, %v6504
        %v6578 = vsel %vm3518, %v6562, %v6506
        %v6579 = vsel %vm3518, %v6563, %v6508
        %v6580 = vsel %vm3518, %v6564, %v6510
        %v6581 = vsel %vm3518, %v6565, %v6512
        %v6582 = vsel %vm3518, %v6566, %v6514
        %v6583 = vsel %vm3518, %v6567, %v6516
        %v6584 = vsel %vm3518, %v6568, %v6518
        %v6585 = vsel %vm3518, %v6569, %v6520
        %v6586 = vsel %vm3518, %v6570, %v6522
        %v6587 = vpack.c.bf16 %v6572, %v6571
        %v6588 = vpack.c.bf16 %v6574, %v6573
        %v6589 = vpack.c.bf16 %v6576, %v6575
        %v6590 = vpack.c.bf16 %v6578, %v6577
        %v6591 = vpack.c.bf16 %v6580, %v6579
        %v6592 = vpack.c.bf16 %v6582, %v6581
        %v6593 = vpack.c.bf16 %v6584, %v6583
        %v6594 = vpack.c.bf16 %v6586, %v6585
        %v6595 = vlaneseq
        %v6596 = vshrl.u32 %v6595, 7
        %v6597 = vsub.s32 1, %v6596
        %v6598 = vrot.slane %v885, %v6597
        %v6615 = vunpack.c.l.b16 %v4411
        %v6616 = vunpack.c.l.b16 %v4412
        %v6617 = vunpack.c.l.b16 %v4413
        %v6618 = vunpack.c.l.b16 %v4414
        %v6619 = vunpack.c.l.b16 %v4415
        %v6620 = vunpack.c.l.b16 %v4416
        %v6621 = vunpack.c.l.b16 %v4417
        %v6622 = vunpack.c.l.b16 %v4418
        %v6623 = vunpack.c.l.b16 %v4419
        %v6624 = vunpack.c.l.b16 %v4420
        %v6625 = vunpack.c.l.b16 %v4421
        %v6626 = vunpack.c.l.b16 %v4422
        %v6627 = vunpack.c.l.b16 %v4423
        %v6628 = vunpack.c.l.b16 %v4424
        %v6629 = vunpack.c.l.b16 %v4425
        %v6630 = vunpack.c.l.b16 %v4426
        %v6631 = vpack.c.b16 %v6616, %v6615
        %v6632 = vpack.c.b16 %v6618, %v6617
        %v6633 = vpack.c.b16 %v6620, %v6619
        %v6634 = vpack.c.b16 %v6622, %v6621
        %v6635 = vpack.c.b16 %v6624, %v6623
        %v6636 = vpack.c.b16 %v6626, %v6625
        %v6637 = vpack.c.b16 %v6628, %v6627
        %v6638 = vpack.c.b16 %v6630, %v6629
        %6647 = vmatprep.subr.bf16.mxu0 0
        %6648 = vmatpush1.bf16.msra.mxu0 %v6631
        %6649 = vmatprep.subr.bf16.mxu0 0
        %6650 = vmatpush1.bf16.msra.mxu0 %v6632
        %6651 = vmatprep.subr.bf16.mxu0 0
        %6652 = vmatpush1.bf16.msra.mxu0 %v6633
        %6653 = vmatprep.subr.bf16.mxu0 0
        %6654 = vmatpush1.bf16.msra.mxu0 %v6634
        %6655 = vmatprep.subr.bf16.mxu0 0
        %6656 = vmatpush1.bf16.msra.mxu0 %v6635
        %6657 = vmatprep.subr.bf16.mxu0 0
        %6658 = vmatpush1.bf16.msra.mxu0 %v6636
        %6659 = vmatprep.subr.bf16.mxu0 0
        %6660 = vmatpush1.bf16.msra.mxu0 %v6637
        %6661 = vmatprep.subr.bf16.mxu0 0
        %6662 = vmatpush1.bf16.msra.mxu0 %v6638
        %6663 = vmatprep.subr.bf16.mxu0 0
        %6664 = vmatpush1.bf16.msra.mxu0 0
        %6665 = vmatprep.subr.bf16.mxu0 0
        %6666 = vmatpush1.bf16.msra.mxu0 0
        %6667 = vmatprep.subr.bf16.mxu0 0
        %6668 = vmatpush1.bf16.msra.mxu0 0
        %6669 = vmatprep.subr.bf16.mxu0 0
        %6670 = vmatpush1.bf16.msra.mxu0 0
        %6671 = vmatprep.subr.bf16.mxu0 0
        %6672 = vmatpush1.bf16.msra.mxu0 0
        %6673 = vmatprep.subr.bf16.mxu0 0
        %6674 = vmatpush1.bf16.msra.mxu0 0
        %6675 = vmatprep.subr.bf16.mxu0 0
        %6676 = vmatpush1.bf16.msra.mxu0 0
        %6677 = vmatprep.subr.bf16.mxu0 0
        %6678 = vmatpush1.bf16.msra.mxu0 0
        %6679 = vmatprep.mubr.bf16.mxu0 0
        %6680 = vmatmul.mubr.bf16.gmra.mrb[0].mxu0 %v6587
        %v6681 = vpop.f32.mrb[0].mxu0
        %v6682 = vadd.f32 %v6598, %v6681
        %v6683 = vpop.f32.mrb[0].mxu0
        %v6684 = vpop.f32.mrb[0].mxu0
        %v6685 = vadd.f32 %v6598, %v6684
        %v6686 = vpop.f32.mrb[0].mxu0
        %6687 = vmatprep.mubr.bf16.mxu0 0
        %6688 = vmatmul.mubr.bf16.gmra.mrb[0].mxu0 %v6588
        %v6689 = vpop.f32.mrb[0].mxu0
        %v6690 = vadd.f32 %v6598, %v6689
        %v6691 = vpop.f32.mrb[0].mxu0
        %v6692 = vpop.f32.mrb[0].mxu0
        %v6693 = vadd.f32 %v6598, %v6692
        %v6694 = vpop.f32.mrb[0].mxu0
        %6695 = vmatprep.mubr.bf16.mxu0 0
        %6696 = vmatmul.mubr.bf16.gmra.mrb[0].mxu0 %v6589
        %v6697 = vpop.f32.mrb[0].mxu0
        %v6698 = vadd.f32 %v6598, %v6697
        %v6699 = vpop.f32.mrb[0].mxu0
        %v6700 = vpop.f32.mrb[0].mxu0
        %v6701 = vadd.f32 %v6598, %v6700
        %v6702 = vpop.f32.mrb[0].mxu0
        %6703 = vmatprep.mubr.bf16.mxu0 0
        %6704 = vmatmul.mubr.bf16.gmra.mrb[0].mxu0 %v6590
        %v6705 = vpop.f32.mrb[0].mxu0
        %v6706 = vadd.f32 %v6598, %v6705
        %v6707 = vpop.f32.mrb[0].mxu0
        %v6708 = vpop.f32.mrb[0].mxu0
        %v6709 = vadd.f32 %v6598, %v6708
        %v6710 = vpop.f32.mrb[0].mxu0
        %6711 = vmatprep.mubr.bf16.mxu0 0
        %6712 = vmatmul.mubr.bf16.gmra.mrb[0].mxu0 %v6591
        %v6713 = vpop.f32.mrb[0].mxu0
        %v6714 = vadd.f32 %v6598, %v6713
        %v6715 = vpop.f32.mrb[0].mxu0
        %v6716 = vpop.f32.mrb[0].mxu0
        %v6717 = vadd.f32 %v6598, %v6716
        %v6718 = vpop.f32.mrb[0].mxu0
        %6719 = vmatprep.mubr.bf16.mxu0 0
        %6720 = vmatmul.mubr.bf16.gmra.mrb[0].mxu0 %v6592
        %v6721 = vpop.f32.mrb[0].mxu0
        %v6722 = vadd.f32 %v6598, %v6721
        %v6723 = vpop.f32.mrb[0].mxu0
        %v6724 = vpop.f32.mrb[0].mxu0
        %v6725 = vadd.f32 %v6598, %v6724
        %v6726 = vpop.f32.mrb[0].mxu0
        %6727 = vmatprep.mubr.bf16.mxu0 0
        %6728 = vmatmul.mubr.bf16.gmra.mrb[0].mxu0 %v6593
        %v6729 = vpop.f32.mrb[0].mxu0
        %v6730 = vadd.f32 %v6598, %v6729
        %v6731 = vpop.f32.mrb[0].mxu0
        %v6732 = vpop.f32.mrb[0].mxu0
        %v6733 = vadd.f32 %v6598, %v6732
        %v6734 = vpop.f32.mrb[0].mxu0
        %6735 = vmatprep.mubr.bf16.mxu0 0
        %6736 = vmatmul.mubr.bf16.gmra.mrb[0].mxu0 %v6594
        %v6737 = vpop.f32.mrb[0].mxu0
        %v6738 = vadd.f32 %v6598, %v6737
        %v6739 = vpop.f32.mrb[0].mxu0
        %v6740 = vpop.f32.mrb[0].mxu0
        %v6741 = vadd.f32 %v6598, %v6740
        %v6742 = vpop.f32.mrb[0].mxu0
        %6743 = vdwg.mxu0
        %v6744 = vadd.f32 %v6682, %v3909
        %v6745 = vadd.f32 %v6685, %v3910
        %v6746 = vadd.f32 %v6690, %v3911
        %v6747 = vadd.f32 %v6693, %v3912
        %v6748 = vadd.f32 %v6698, %v3913
        %v6749 = vadd.f32 %v6701, %v3914
        %v6750 = vadd.f32 %v6706, %v3915
        %v6751 = vadd.f32 %v6709, %v3916
        %v6752 = vadd.f32 %v6714, %v3917
        %v6753 = vadd.f32 %v6717, %v3918
        %v6754 = vadd.f32 %v6722, %v3919
        %v6755 = vadd.f32 %v6725, %v3920
        %v6756 = vadd.f32 %v6730, %v3921
        %v6757 = vadd.f32 %v6733, %v3922
        %v6758 = vadd.f32 %v6738, %v3923
        %v6759 = vadd.f32 %v6741, %v3924
        %6760 = vadd.xlane.f32.xlu0 %v6744
        %v6761 = vpop.xlane.xlu0 %6760
        %6762 = vadd.xlane.f32.xlu0 %v6745
        %v6763 = vpop.xlane.xlu0 %6762
        %6764 = vadd.xlane.f32.xlu0 %v6746
        %v6765 = vpop.xlane.xlu0 %6764
        %6766 = vadd.xlane.f32.xlu0 %v6747
        %v6767 = vpop.xlane.xlu0 %6766
        %6768 = vadd.xlane.f32.xlu0 %v6748
        %v6769 = vpop.xlane.xlu0 %6768
        %6770 = vadd.xlane.f32.xlu0 %v6749
        %v6771 = vpop.xlane.xlu0 %6770
        %6772 = vadd.xlane.f32.xlu0 %v6750
        %v6773 = vpop.xlane.xlu0 %6772
        %6774 = vadd.xlane.f32.xlu0 %v6751
        %v6775 = vpop.xlane.xlu0 %6774
        %6776 = vadd.xlane.f32.xlu0 %v6752
        %v6777 = vpop.xlane.xlu0 %6776
        %6778 = vadd.xlane.f32.xlu0 %v6753
        %v6779 = vpop.xlane.xlu0 %6778
        %6780 = vadd.xlane.f32.xlu0 %v6754
        %v6781 = vpop.xlane.xlu0 %6780
        %6782 = vadd.xlane.f32.xlu0 %v6755
        %v6783 = vpop.xlane.xlu0 %6782
        %6784 = vadd.xlane.f32.xlu0 %v6756
        %v6785 = vpop.xlane.xlu0 %6784
        %6786 = vadd.xlane.f32.xlu0 %v6757
        %v6787 = vpop.xlane.xlu0 %6786
        %6788 = vadd.xlane.f32.xlu0 %v6758
        %v6789 = vpop.xlane.xlu0 %6788
        %6790 = vadd.xlane.f32.xlu0 %v6759
        %v6791 = vpop.xlane.xlu0 %6790
        %v6792 = vmul.f32 %v6761, %v3740
        %v6793 = vmul.f32 %v6763, %v3740
        %v6794 = vmul.f32 %v6765, %v3740
        %v6795 = vmul.f32 %v6767, %v3740
        %v6796 = vmul.f32 %v6769, %v3740
        %v6797 = vmul.f32 %v6771, %v3740
        %v6798 = vmul.f32 %v6773, %v3740
        %v6799 = vmul.f32 %v6775, %v3740
        %v6800 = vmul.f32 %v6777, %v3740
        %v6801 = vmul.f32 %v6779, %v3740
        %v6802 = vmul.f32 %v6781, %v3740
        %v6803 = vmul.f32 %v6783, %v3740
        %v6804 = vmul.f32 %v6785, %v3740
        %v6805 = vmul.f32 %v6787, %v3740
        %v6806 = vmul.f32 %v6789, %v3740
        %v6807 = vmul.f32 %v6791, %v3740
        %v6808 = vsub.f32 %v6744, %v6792
        %v6809 = vsub.f32 %v6745, %v6793
        %v6810 = vsub.f32 %v6746, %v6794
        %v6811 = vsub.f32 %v6747, %v6795
        %v6812 = vsub.f32 %v6748, %v6796
        %v6813 = vsub.f32 %v6749, %v6797
        %v6814 = vsub.f32 %v6750, %v6798
        %v6815 = vsub.f32 %v6751, %v6799
        %v6816 = vsub.f32 %v6752, %v6800
        %v6817 = vsub.f32 %v6753, %v6801
        %v6818 = vsub.f32 %v6754, %v6802
        %v6819 = vsub.f32 %v6755, %v6803
        %v6820 = vsub.f32 %v6756, %v6804
        %v6821 = vsub.f32 %v6757, %v6805
        %v6822 = vsub.f32 %v6758, %v6806
        %v6823 = vsub.f32 %v6759, %v6807
        %v6824 = vmul.f32 %v6808, %v6808
        %v6825 = vmul.f32 %v6809, %v6809
        %v6826 = vmul.f32 %v6810, %v6810
        %v6827 = vmul.f32 %v6811, %v6811
        %v6828 = vmul.f32 %v6812, %v6812
        %v6829 = vmul.f32 %v6813, %v6813
        %v6830 = vmul.f32 %v6814, %v6814
        %v6831 = vmul.f32 %v6815, %v6815
        %v6832 = vmul.f32 %v6816, %v6816
        %v6833 = vmul.f32 %v6817, %v6817
        %v6834 = vmul.f32 %v6818, %v6818
        %v6835 = vmul.f32 %v6819, %v6819
        %v6836 = vmul.f32 %v6820, %v6820
        %v6837 = vmul.f32 %v6821, %v6821
        %v6838 = vmul.f32 %v6822, %v6822
        %v6839 = vmul.f32 %v6823, %v6823
        %6840 = vadd.xlane.f32.xlu0 %v6824
        %v6841 = vpop.xlane.xlu0 %6840
        %6842 = vadd.xlane.f32.xlu0 %v6825
        %v6843 = vpop.xlane.xlu0 %6842
        %6844 = vadd.xlane.f32.xlu0 %v6826
        %v6845 = vpop.xlane.xlu0 %6844
        %6846 = vadd.xlane.f32.xlu0 %v6827
        %v6847 = vpop.xlane.xlu0 %6846
        %6848 = vadd.xlane.f32.xlu0 %v6828
        %v6849 = vpop.xlane.xlu0 %6848
        %6850 = vadd.xlane.f32.xlu0 %v6829
        %v6851 = vpop.xlane.xlu0 %6850
        %6852 = vadd.xlane.f32.xlu0 %v6830
        %v6853 = vpop.xlane.xlu0 %6852
        %6854 = vadd.xlane.f32.xlu0 %v6831
        %v6855 = vpop.xlane.xlu0 %6854
        %6856 = vadd.xlane.f32.xlu0 %v6832
        %v6857 = vpop.xlane.xlu0 %6856
        %6858 = vadd.xlane.f32.xlu0 %v6833
        %v6859 = vpop.xlane.xlu0 %6858
        %6860 = vadd.xlane.f32.xlu0 %v6834
        %v6861 = vpop.xlane.xlu0 %6860
        %6862 = vadd.xlane.f32.xlu0 %v6835
        %v6863 = vpop.xlane.xlu0 %6862
        %6864 = vadd.xlane.f32.xlu0 %v6836
        %v6865 = vpop.xlane.xlu0 %6864
        %6866 = vadd.xlane.f32.xlu0 %v6837
        %v6867 = vpop.xlane.xlu0 %6866
        %6868 = vadd.xlane.f32.xlu0 %v6838
        %v6869 = vpop.xlane.xlu0 %6868
        %6870 = vadd.xlane.f32.xlu0 %v6839
        %v6871 = vpop.xlane.xlu0 %6870
        %v6872 = vmul.f32 %v6841, %v3740
        %v6873 = vmul.f32 %v6843, %v3740
        %v6874 = vmul.f32 %v6845, %v3740
        %v6875 = vmul.f32 %v6847, %v3740
        %v6876 = vmul.f32 %v6849, %v3740
        %v6877 = vmul.f32 %v6851, %v3740
        %v6878 = vmul.f32 %v6853, %v3740
        %v6879 = vmul.f32 %v6855, %v3740
        %v6880 = vmul.f32 %v6857, %v3740
        %v6881 = vmul.f32 %v6859, %v3740
        %v6882 = vmul.f32 %v6861, %v3740
        %v6883 = vmul.f32 %v6863, %v3740
        %v6884 = vmul.f32 %v6865, %v3740
        %v6885 = vmul.f32 %v6867, %v3740
        %v6886 = vmul.f32 %v6869, %v3740
        %v6887 = vmul.f32 %v6871, %v3740
        %v6888 = vadd.f32 %v6872, 1e-12
        %v6889 = vadd.f32 %v6873, 1e-12
        %v6890 = vadd.f32 %v6874, 1e-12
        %v6891 = vadd.f32 %v6875, 1e-12
        %v6892 = vadd.f32 %v6876, 1e-12
        %v6893 = vadd.f32 %v6877, 1e-12
        %v6894 = vadd.f32 %v6878, 1e-12
        %v6895 = vadd.f32 %v6879, 1e-12
        %v6896 = vadd.f32 %v6880, 1e-12
        %v6897 = vadd.f32 %v6881, 1e-12
        %v6898 = vadd.f32 %v6882, 1e-12
        %v6899 = vadd.f32 %v6883, 1e-12
        %v6900 = vadd.f32 %v6884, 1e-12
        %v6901 = vadd.f32 %v6885, 1e-12
        %v6902 = vadd.f32 %v6886, 1e-12
        %v6903 = vadd.f32 %v6887, 1e-12
        %v6904 = vrsqrt.pop %v6888
        %v6905 = vrsqrt.pop %v6889
        %v6906 = vrsqrt.pop %v6890
        %v6907 = vrsqrt.pop %v6891
        %v6908 = vrsqrt.pop %v6892
        %v6909 = vrsqrt.pop %v6893
        %v6910 = vrsqrt.pop %v6894
        %v6911 = vrsqrt.pop %v6895
        %v6912 = vrsqrt.pop %v6896
        %v6913 = vrsqrt.pop %v6897
        %v6914 = vrsqrt.pop %v6898
        %v6915 = vrsqrt.pop %v6899
        %v6916 = vrsqrt.pop %v6900
        %v6917 = vrsqrt.pop %v6901
        %v6918 = vrsqrt.pop %v6902
        %v6919 = vrsqrt.pop %v6903
        %v6920 = vmul.f32 %v6808, %v6904
        %v6921 = vmul.f32 %v6809, %v6905
        %v6922 = vmul.f32 %v6810, %v6906
        %v6923 = vmul.f32 %v6811, %v6907
        %v6924 = vmul.f32 %v6812, %v6908
        %v6925 = vmul.f32 %v6813, %v6909
        %v6926 = vmul.f32 %v6814, %v6910
        %v6927 = vmul.f32 %v6815, %v6911
        %v6928 = vmul.f32 %v6816, %v6912
        %v6929 = vmul.f32 %v6817, %v6913
        %v6930 = vmul.f32 %v6818, %v6914
        %v6931 = vmul.f32 %v6819, %v6915
        %v6932 = vmul.f32 %v6820, %v6916
        %v6933 = vmul.f32 %v6821, %v6917
        %v6934 = vmul.f32 %v6822, %v6918
        %v6935 = vmul.f32 %v6823, %v6919
        %v6936 = vlaneseq
        %v6937 = vshrl.u32 %v6936, 7
        %v6938 = vsub.s32 2, %v6937
        %v6939 = vrot.slane %v885, %v6938
        %v6940 = vmul.f32 %v6939, %v6920
        %v6941 = vmul.f32 %v6939, %v6921
        %v6942 = vmul.f32 %v6939, %v6922
        %v6943 = vmul.f32 %v6939, %v6923
        %v6944 = vmul.f32 %v6939, %v6924
        %v6945 = vmul.f32 %v6939, %v6925
        %v6946 = vmul.f32 %v6939, %v6926
        %v6947 = vmul.f32 %v6939, %v6927
        %v6948 = vmul.f32 %v6939, %v6928
        %v6949 = vmul.f32 %v6939, %v6929
        %v6950 = vmul.f32 %v6939, %v6930
        %v6951 = vmul.f32 %v6939, %v6931
        %v6952 = vmul.f32 %v6939, %v6932
        %v6953 = vmul.f32 %v6939, %v6933
        %v6954 = vmul.f32 %v6939, %v6934
        %v6955 = vmul.f32 %v6939, %v6935
        %v6956 = vlaneseq
        %v6957 = vshrl.u32 %v6956, 7
        %v6958 = vsub.s32 3, %v6957
        %v6959 = vrot.slane %v885, %v6958
        %v6960 = vadd.f32 %v6940, %v6959
        %v6961 = vadd.f32 %v6941, %v6959
        %v6962 = vadd.f32 %v6942, %v6959
        %v6963 = vadd.f32 %v6943, %v6959
        %v6964 = vadd.f32 %v6944, %v6959
        %v6965 = vadd.f32 %v6945, %v6959
        %v6966 = vadd.f32 %v6946, %v6959
        %v6967 = vadd.f32 %v6947, %v6959
        %v6968 = vadd.f32 %v6948, %v6959
        %v6969 = vadd.f32 %v6949, %v6959
        %v6970 = vadd.f32 %v6950, %v6959
        %v6971 = vadd.f32 %v6951, %v6959
        %v6972 = vadd.f32 %v6952, %v6959
        %v6973 = vadd.f32 %v6953, %v6959
        %v6974 = vadd.f32 %v6954, %v6959
        %v6975 = vadd.f32 %v6955, %v6959
        %v6976 = vpack.c.bf16 %v6961, %v6960
        %v6977 = vpack.c.bf16 %v6963, %v6962
        %v6978 = vpack.c.bf16 %v6965, %v6964
        %v6979 = vpack.c.bf16 %v6967, %v6966
        %v6980 = vpack.c.bf16 %v6969, %v6968
        %v6981 = vpack.c.bf16 %v6971, %v6970
        %v6982 = vpack.c.bf16 %v6973, %v6972
        %v6983 = vpack.c.bf16 %v6975, %v6974
        %v6984 = vld [vmem:[%s729] sm:$0xff]
        %v6985 = vld [vmem:[%s729 + $0x8] sm:$0xff]
        %v6986 = vld [vmem:[%s729 + $0x10] sm:$0xff]
        %v6987 = vld [vmem:[%s729 + $0x18] sm:$0xff]
        %v6988 = vld [vmem:[%s729 + $0x20] sm:$0xff]
        %v6989 = vld [vmem:[%s729 + $0x28] sm:$0xff]
        %v6990 = vld [vmem:[%s729 + $0x30] sm:$0xff]
        %v6991 = vld [vmem:[%s729 + $0x38] sm:$0xff]
        %v6992 = vld [vmem:[%s729 + $0x40] sm:$0xff]
        %v6993 = vld [vmem:[%s729 + $0x48] sm:$0xff]
        %v6994 = vld [vmem:[%s729 + $0x50] sm:$0xff]
        %v6995 = vld [vmem:[%s729 + $0x58] sm:$0xff]
        %v6996 = vld [vmem:[%s729 + $0x60] sm:$0xff]
        %v6997 = vld [vmem:[%s729 + $0x68] sm:$0xff]
        %v6998 = vld [vmem:[%s729 + $0x70] sm:$0xff]
        %v6999 = vld [vmem:[%s729 + $0x78] sm:$0xff]
        %v7000 = vld [vmem:[%s829] sm:$0x3]
        %v7002 = vlaneseq
        %v7003 = vshrl.u32 %v7002, 7
        %v7004 = vsub.s32 0, %v7003
        %v7005 = vrot.slane %v7000, %v7004
        %v7006 = vlaneseq
        %v7007 = vshrl.u32 %v7006, 7
        %v7008 = vsub.s32 1, %v7007
        %v7009 = vrot.slane %v7000, %v7008
        %v7028 = vunpack.c.l.b16 %v6984
        %v7029 = vunpack.c.h.b16 %v6984
        %v7030 = vunpack.c.l.b16 %v6985
        %v7031 = vunpack.c.h.b16 %v6985
        %v7032 = vunpack.c.l.b16 %v6986
        %v7033 = vunpack.c.h.b16 %v6986
        %v7034 = vunpack.c.l.b16 %v6987
        %v7035 = vunpack.c.h.b16 %v6987
        %v7036 = vunpack.c.l.b16 %v6988
        %v7037 = vunpack.c.h.b16 %v6988
        %v7038 = vunpack.c.l.b16 %v6989
        %v7039 = vunpack.c.h.b16 %v6989
        %v7040 = vunpack.c.l.b16 %v6990
        %v7041 = vunpack.c.h.b16 %v6990
        %v7042 = vunpack.c.l.b16 %v6991
        %v7043 = vunpack.c.h.b16 %v6991
        %v7044 = vunpack.c.l.b16 %v6992
        %v7045 = vunpack.c.h.b16 %v6992
        %v7046 = vunpack.c.l.b16 %v6993
        %v7047 = vunpack.c.h.b16 %v6993
        %v7048 = vunpack.c.l.b16 %v6994
        %v7049 = vunpack.c.h.b16 %v6994
        %v7050 = vunpack.c.l.b16 %v6995
        %v7051 = vunpack.c.h.b16 %v6995
        %v7052 = vunpack.c.l.b16 %v6996
        %v7053 = vunpack.c.h.b16 %v6996
        %v7054 = vunpack.c.l.b16 %v6997
        %v7055 = vunpack.c.h.b16 %v6997
        %v7056 = vunpack.c.l.b16 %v6998
        %v7057 = vunpack.c.h.b16 %v6998
        %v7058 = vunpack.c.l.b16 %v6999
        %v7059 = vunpack.c.h.b16 %v6999
        %v7060 = vpack.c.b16 %v7030, %v7028
        %v7061 = vpack.c.b16 %v7031, %v7029
        %v7062 = vpack.c.b16 %v7034, %v7032
        %v7063 = vpack.c.b16 %v7035, %v7033
        %v7064 = vpack.c.b16 %v7038, %v7036
        %v7065 = vpack.c.b16 %v7039, %v7037
        %v7066 = vpack.c.b16 %v7042, %v7040
        %v7067 = vpack.c.b16 %v7043, %v7041
        %v7068 = vpack.c.b16 %v7046, %v7044
        %v7069 = vpack.c.b16 %v7047, %v7045
        %v7070 = vpack.c.b16 %v7050, %v7048
        %v7071 = vpack.c.b16 %v7051, %v7049
        %v7072 = vpack.c.b16 %v7054, %v7052
        %v7073 = vpack.c.b16 %v7055, %v7053
        %v7074 = vpack.c.b16 %v7058, %v7056
        %v7075 = vpack.c.b16 %v7059, %v7057
        %7092 = vmatprep.subr.bf16.mxu0 %v7061
        %7093 = vmatpush1.bf16.msra.mxu0 %v7060
        %7094 = vmatprep.subr.bf16.mxu0 %v7063
        %7095 = vmatpush1.bf16.msra.mxu0 %v7062
        %7096 = vmatprep.subr.bf16.mxu0 %v7065
        %7097 = vmatpush1.bf16.msra.mxu0 %v7064
        %7098 = vmatprep.subr.bf16.mxu0 %v7067
        %7099 = vmatpush1.bf16.msra.mxu0 %v7066
        %7100 = vmatprep.subr.bf16.mxu0 %v7069
        %7101 = vmatpush1.bf16.msra.mxu0 %v7068
        %7102 = vmatprep.subr.bf16.mxu0 %v7071
        %7103 = vmatpush1.bf16.msra.mxu0 %v7070
        %7104 = vmatprep.subr.bf16.mxu0 %v7073
        %7105 = vmatpush1.bf16.msra.mxu0 %v7072
        %7106 = vmatprep.subr.bf16.mxu0 %v7075
        %7107 = vmatpush1.bf16.msra.mxu0 %v7074
        %7108 = vmatprep.subr.bf16.mxu0 0
        %7109 = vmatpush1.bf16.msra.mxu0 0
        %7110 = vmatprep.subr.bf16.mxu0 0
        %7111 = vmatpush1.bf16.msra.mxu0 0
        %7112 = vmatprep.subr.bf16.mxu0 0
        %7113 = vmatpush1.bf16.msra.mxu0 0
        %7114 = vmatprep.subr.bf16.mxu0 0
        %7115 = vmatpush1.bf16.msra.mxu0 0
        %7116 = vmatprep.subr.bf16.mxu0 0
        %7117 = vmatpush1.bf16.msra.mxu0 0
        %7118 = vmatprep.subr.bf16.mxu0 0
        %7119 = vmatpush1.bf16.msra.mxu0 0
        %7120 = vmatprep.subr.bf16.mxu0 0
        %7121 = vmatpush1.bf16.msra.mxu0 0
        %7122 = vmatprep.subr.bf16.mxu0 0
        %7123 = vmatpush1.bf16.msra.mxu0 0
        %7124 = vmatprep.mubr.bf16.mxu0 0
        %7125 = vmatmul.mubr.bf16.gmra.mrb[0].mxu0 %v6976
        %v7126 = vpop.f32.mrb[0].mxu0
        %v7127 = vadd.f32 %v7005, %v7126
        %v7128 = vpop.f32.mrb[0].mxu0
        %v7129 = vadd.f32 %v7009, %v7128
        %v7130 = vpop.f32.mrb[0].mxu0
        %v7131 = vadd.f32 %v7005, %v7130
        %v7132 = vpop.f32.mrb[0].mxu0
        %v7133 = vadd.f32 %v7009, %v7132
        %7134 = vmatprep.mubr.bf16.mxu0 0
        %7135 = vmatmul.mubr.bf16.gmra.mrb[0].mxu0 %v6977
        %v7136 = vpop.f32.mrb[0].mxu0
        %v7137 = vadd.f32 %v7005, %v7136
        %v7138 = vpop.f32.mrb[0].mxu0
        %v7139 = vadd.f32 %v7009, %v7138
        %v7140 = vpop.f32.mrb[0].mxu0
        %v7141 = vadd.f32 %v7005, %v7140
        %v7142 = vpop.f32.mrb[0].mxu0
        %v7143 = vadd.f32 %v7009, %v7142
        %7144 = vmatprep.mubr.bf16.mxu0 0
        %7145 = vmatmul.mubr.bf16.gmra.mrb[0].mxu0 %v6978
        %v7146 = vpop.f32.mrb[0].mxu0
        %v7147 = vadd.f32 %v7005, %v7146
        %v7148 = vpop.f32.mrb[0].mxu0
        %v7149 = vadd.f32 %v7009, %v7148
        %v7150 = vpop.f32.mrb[0].mxu0
        %v7151 = vadd.f32 %v7005, %v7150
        %v7152 = vpop.f32.mrb[0].mxu0
        %v7153 = vadd.f32 %v7009, %v7152
        %7154 = vmatprep.mubr.bf16.mxu0 0
        %7155 = vmatmul.mubr.bf16.gmra.mrb[0].mxu0 %v6979
        %v7156 = vpop.f32.mrb[0].mxu0
        %v7157 = vadd.f32 %v7005, %v7156
        %v7158 = vpop.f32.mrb[0].mxu0
        %v7159 = vadd.f32 %v7009, %v7158
        %v7160 = vpop.f32.mrb[0].mxu0
        %v7161 = vadd.f32 %v7005, %v7160
        %v7162 = vpop.f32.mrb[0].mxu0
        %v7163 = vadd.f32 %v7009, %v7162
        %7164 = vmatprep.mubr.bf16.mxu0 0
        %7165 = vmatmul.mubr.bf16.gmra.mrb[0].mxu0 %v6980
        %v7166 = vpop.f32.mrb[0].mxu0
        %v7167 = vadd.f32 %v7005, %v7166
        %v7168 = vpop.f32.mrb[0].mxu0
        %v7169 = vadd.f32 %v7009, %v7168
        %v7170 = vpop.f32.mrb[0].mxu0
        %v7171 = vadd.f32 %v7005, %v7170
        %v7172 = vpop.f32.mrb[0].mxu0
        %v7173 = vadd.f32 %v7009, %v7172
        %7174 = vmatprep.mubr.bf16.mxu0 0
        %7175 = vmatmul.mubr.bf16.gmra.mrb[0].mxu0 %v6981
        %v7176 = vpop.f32.mrb[0].mxu0
        %v7177 = vadd.f32 %v7005, %v7176
        %v7178 = vpop.f32.mrb[0].mxu0
        %v7179 = vadd.f32 %v7009, %v7178
        %v7180 = vpop.f32.mrb[0].mxu0
        %v7181 = vadd.f32 %v7005, %v7180
        %v7182 = vpop.f32.mrb[0].mxu0
        %v7183 = vadd.f32 %v7009, %v7182
        %7184 = vmatprep.mubr.bf16.mxu0 0
        %7185 = vmatmul.mubr.bf16.gmra.mrb[0].mxu0 %v6982
        %v7186 = vpop.f32.mrb[0].mxu0
        %v7187 = vadd.f32 %v7005, %v7186
        %v7188 = vpop.f32.mrb[0].mxu0
        %v7189 = vadd.f32 %v7009, %v7188
        %v7190 = vpop.f32.mrb[0].mxu0
        %v7191 = vadd.f32 %v7005, %v7190
        %v7192 = vpop.f32.mrb[0].mxu0
        %v7193 = vadd.f32 %v7009, %v7192
        %7194 = vmatprep.mubr.bf16.mxu0 0
        %7195 = vmatmul.mubr.bf16.gmra.mrb[0].mxu0 %v6983
        %v7196 = vpop.f32.mrb[0].mxu0
        %v7197 = vadd.f32 %v7005, %v7196
        %v7198 = vpop.f32.mrb[0].mxu0
        %v7199 = vadd.f32 %v7009, %v7198
        %v7200 = vpop.f32.mrb[0].mxu0
        %v7201 = vadd.f32 %v7005, %v7200
        %v7202 = vpop.f32.mrb[0].mxu0
        %v7203 = vadd.f32 %v7009, %v7202
        %7204 = vdwg.mxu0
        %v7205 = vmax.f32 %v7127, 0.0
        %v7206 = vmax.f32 %v7129, 0.0
        %v7207 = vmax.f32 %v7131, 0.0
        %v7208 = vmax.f32 %v7133, 0.0
        %v7209 = vmax.f32 %v7137, 0.0
        %v7210 = vmax.f32 %v7139, 0.0
        %v7211 = vmax.f32 %v7141, 0.0
        %v7212 = vmax.f32 %v7143, 0.0
        %v7213 = vmax.f32 %v7147, 0.0
        %v7214 = vmax.f32 %v7149, 0.0
        %v7215 = vmax.f32 %v7151, 0.0
        %v7216 = vmax.f32 %v7153, 0.0
        %v7217 = vmax.f32 %v7157, 0.0
        %v7218 = vmax.f32 %v7159, 0.0
        %v7219 = vmax.f32 %v7161, 0.0
        %v7220 = vmax.f32 %v7163, 0.0
        %v7221 = vmax.f32 %v7167, 0.0
        %v7222 = vmax.f32 %v7169, 0.0
        %v7223 = vmax.f32 %v7171, 0.0
        %v7224 = vmax.f32 %v7173, 0.0
        %v7225 = vmax.f32 %v7177, 0.0
        %v7226 = vmax.f32 %v7179, 0.0
        %v7227 = vmax.f32 %v7181, 0.0
        %v7228 = vmax.f32 %v7183, 0.0
        %v7229 = vmax.f32 %v7187, 0.0
        %v7230 = vmax.f32 %v7189, 0.0
        %v7231 = vmax.f32 %v7191, 0.0
        %v7232 = vmax.f32 %v7193, 0.0
        %v7233 = vmax.f32 %v7197, 0.0
        %v7234 = vmax.f32 %v7199, 0.0
        %v7235 = vmax.f32 %v7201, 0.0
        %v7236 = vmax.f32 %v7203, 0.0
        %v7237 = vpack.c.bf16 %v7207, %v7205
        %v7238 = vpack.c.bf16 %v7208, %v7206
        %v7239 = vpack.c.bf16 %v7211, %v7209
        %v7240 = vpack.c.bf16 %v7212, %v7210
        %v7241 = vpack.c.bf16 %v7215, %v7213
        %v7242 = vpack.c.bf16 %v7216, %v7214
        %v7243 = vpack.c.bf16 %v7219, %v7217
        %v7244 = vpack.c.bf16 %v7220, %v7218
        %v7245 = vpack.c.bf16 %v7223, %v7221
        %v7246 = vpack.c.bf16 %v7224, %v7222
        %v7247 = vpack.c.bf16 %v7227, %v7225
        %v7248 = vpack.c.bf16 %v7228, %v7226
        %v7249 = vpack.c.bf16 %v7231, %v7229
        %v7250 = vpack.c.bf16 %v7232, %v7230
        %v7251 = vpack.c.bf16 %v7235, %v7233
        %v7252 = vpack.c.bf16 %v7236, %v7234
        %v7253 = vld [vmem:[%s738] sm:$0xf]
        %v7254 = vld [vmem:[%s738 + $0x4] sm:$0xf]
        %v7255 = vld [vmem:[%s738 + $0x8] sm:$0xf]
        %v7256 = vld [vmem:[%s738 + $0xc] sm:$0xf]
        %v7257 = vld [vmem:[%s738 + $0x10] sm:$0xf]
        %v7258 = vld [vmem:[%s738 + $0x14] sm:$0xf]
        %v7259 = vld [vmem:[%s738 + $0x18] sm:$0xf]
        %v7260 = vld [vmem:[%s738 + $0x1c] sm:$0xf]
        %v7261 = vld [vmem:[%s738 + $0x20] sm:$0xf]
        %v7262 = vld [vmem:[%s738 + $0x24] sm:$0xf]
        %v7263 = vld [vmem:[%s738 + $0x28] sm:$0xf]
        %v7264 = vld [vmem:[%s738 + $0x2c] sm:$0xf]
        %v7265 = vld [vmem:[%s738 + $0x30] sm:$0xf]
        %v7266 = vld [vmem:[%s738 + $0x34] sm:$0xf]
        %v7267 = vld [vmem:[%s738 + $0x38] sm:$0xf]
        %v7268 = vld [vmem:[%s738 + $0x3c] sm:$0xf]
        %v7269 = vld [vmem:[%s738 + $0x40] sm:$0xf]
        %v7270 = vld [vmem:[%s738 + $0x44] sm:$0xf]
        %v7271 = vld [vmem:[%s738 + $0x48] sm:$0xf]
        %v7272 = vld [vmem:[%s738 + $0x4c] sm:$0xf]
        %v7273 = vld [vmem:[%s738 + $0x50] sm:$0xf]
        %v7274 = vld [vmem:[%s738 + $0x54] sm:$0xf]
        %v7275 = vld [vmem:[%s738 + $0x58] sm:$0xf]
        %v7276 = vld [vmem:[%s738 + $0x5c] sm:$0xf]
        %v7277 = vld [vmem:[%s738 + $0x60] sm:$0xf]
        %v7278 = vld [vmem:[%s738 + $0x64] sm:$0xf]
        %v7279 = vld [vmem:[%s738 + $0x68] sm:$0xf]
        %v7280 = vld [vmem:[%s738 + $0x6c] sm:$0xf]
        %v7281 = vld [vmem:[%s738 + $0x70] sm:$0xf]
        %v7282 = vld [vmem:[%s738 + $0x74] sm:$0xf]
        %v7283 = vld [vmem:[%s738 + $0x78] sm:$0xf]
        %v7284 = vld [vmem:[%s738 + $0x7c] sm:$0xf]
        %v7285 = vlaneseq
        %v7286 = vshrl.u32 %v7285, 7
        %v7287 = vsub.s32 4, %v7286
        %v7288 = vrot.slane %v885, %v7287
        %v7321 = vunpack.c.l.b16 %v7253
        %v7322 = vunpack.c.l.b16 %v7254
        %v7323 = vunpack.c.l.b16 %v7255
        %v7324 = vunpack.c.l.b16 %v7256
        %v7325 = vunpack.c.l.b16 %v7257
        %v7326 = vunpack.c.l.b16 %v7258
        %v7327 = vunpack.c.l.b16 %v7259
        %v7328 = vunpack.c.l.b16 %v7260
        %v7329 = vunpack.c.l.b16 %v7261
        %v7330 = vunpack.c.l.b16 %v7262
        %v7331 = vunpack.c.l.b16 %v7263
        %v7332 = vunpack.c.l.b16 %v7264
        %v7333 = vunpack.c.l.b16 %v7265
        %v7334 = vunpack.c.l.b16 %v7266
        %v7335 = vunpack.c.l.b16 %v7267
        %v7336 = vunpack.c.l.b16 %v7268
        %v7337 = vunpack.c.l.b16 %v7269
        %v7338 = vunpack.c.l.b16 %v7270
        %v7339 = vunpack.c.l.b16 %v7271
        %v7340 = vunpack.c.l.b16 %v7272
        %v7341 = vunpack.c.l.b16 %v7273
        %v7342 = vunpack.c.l.b16 %v7274
        %v7343 = vunpack.c.l.b16 %v7275
        %v7344 = vunpack.c.l.b16 %v7276
        %v7345 = vunpack.c.l.b16 %v7277
        %v7346 = vunpack.c.l.b16 %v7278
        %v7347 = vunpack.c.l.b16 %v7279
        %v7348 = vunpack.c.l.b16 %v7280
        %v7349 = vunpack.c.l.b16 %v7281
        %v7350 = vunpack.c.l.b16 %v7282
        %v7351 = vunpack.c.l.b16 %v7283
        %v7352 = vunpack.c.l.b16 %v7284
        %v7353 = vpack.c.b16 %v7322, %v7321
        %v7354 = vpack.c.b16 %v7324, %v7323
        %v7355 = vpack.c.b16 %v7326, %v7325
        %v7356 = vpack.c.b16 %v7328, %v7327
        %v7357 = vpack.c.b16 %v7330, %v7329
        %v7358 = vpack.c.b16 %v7332, %v7331
        %v7359 = vpack.c.b16 %v7334, %v7333
        %v7360 = vpack.c.b16 %v7336, %v7335
        %v7361 = vpack.c.b16 %v7338, %v7337
        %v7362 = vpack.c.b16 %v7340, %v7339
        %v7363 = vpack.c.b16 %v7342, %v7341
        %v7364 = vpack.c.b16 %v7344, %v7343
        %v7365 = vpack.c.b16 %v7346, %v7345
        %v7366 = vpack.c.b16 %v7348, %v7347
        %v7367 = vpack.c.b16 %v7350, %v7349
        %v7368 = vpack.c.b16 %v7352, %v7351
        %7385 = vmatprep.subr.bf16.mxu0 0
        %7386 = vmatpush1.bf16.msra.mxu0 %v7353
        %7387 = vmatprep.subr.bf16.mxu0 0
        %7388 = vmatpush1.bf16.msra.mxu0 %v7354
        %7389 = vmatprep.subr.bf16.mxu0 0
        %7390 = vmatpush1.bf16.msra.mxu0 %v7355
        %7391 = vmatprep.subr.bf16.mxu0 0
        %7392 = vmatpush1.bf16.msra.mxu0 %v7356
        %7393 = vmatprep.subr.bf16.mxu0 0
        %7394 = vmatpush1.bf16.msra.mxu0 %v7357
        %7395 = vmatprep.subr.bf16.mxu0 0
        %7396 = vmatpush1.bf16.msra.mxu0 %v7358
        %7397 = vmatprep.subr.bf16.mxu0 0
        %7398 = vmatpush1.bf16.msra.mxu0 %v7359
        %7399 = vmatprep.subr.bf16.mxu0 0
        %7400 = vmatpush1.bf16.msra.mxu0 %v7360
        %7401 = vmatprep.subr.bf16.mxu0 0
        %7402 = vmatpush1.bf16.msra.mxu0 %v7361
        %7403 = vmatprep.subr.bf16.mxu0 0
        %7404 = vmatpush1.bf16.msra.mxu0 %v7362
        %7405 = vmatprep.subr.bf16.mxu0 0
        %7406 = vmatpush1.bf16.msra.mxu0 %v7363
        %7407 = vmatprep.subr.bf16.mxu0 0
        %7408 = vmatpush1.bf16.msra.mxu0 %v7364
        %7409 = vmatprep.subr.bf16.mxu0 0
        %7410 = vmatpush1.bf16.msra.mxu0 %v7365
        %7411 = vmatprep.subr.bf16.mxu0 0
        %7412 = vmatpush1.bf16.msra.mxu0 %v7366
        %7413 = vmatprep.subr.bf16.mxu0 0
        %7414 = vmatpush1.bf16.msra.mxu0 %v7367
        %7415 = vmatprep.subr.bf16.mxu0 0
        %7416 = vmatpush1.bf16.msra.mxu0 %v7368
        %7417 = vmatprep.mubr.bf16.mxu0 %v7238
        %7418 = vmatmul.mubr.bf16.gmra.mrb[0].mxu0 %v7237
        %v7419 = vpop.f32.mrb[0].mxu0
        %v7420 = vadd.f32 %v7288, %v7419
        %v7421 = vpop.f32.mrb[0].mxu0
        %v7422 = vpop.f32.mrb[0].mxu0
        %v7423 = vadd.f32 %v7288, %v7422
        %v7424 = vpop.f32.mrb[0].mxu0
        %7425 = vmatprep.mubr.bf16.mxu0 %v7240
        %7426 = vmatmul.mubr.bf16.gmra.mrb[0].mxu0 %v7239
        %v7427 = vpop.f32.mrb[0].mxu0
        %v7428 = vadd.f32 %v7288, %v7427
        %v7429 = vpop.f32.mrb[0].mxu0
        %v7430 = vpop.f32.mrb[0].mxu0
        %v7431 = vadd.f32 %v7288, %v7430
        %v7432 = vpop.f32.mrb[0].mxu0
        %7433 = vmatprep.mubr.bf16.mxu0 %v7242
        %7434 = vmatmul.mubr.bf16.gmra.mrb[0].mxu0 %v7241
        %v7435 = vpop.f32.mrb[0].mxu0
        %v7436 = vadd.f32 %v7288, %v7435
        %v7437 = vpop.f32.mrb[0].mxu0
        %v7438 = vpop.f32.mrb[0].mxu0
        %v7439 = vadd.f32 %v7288, %v7438
        %v7440 = vpop.f32.mrb[0].mxu0
        %7441 = vmatprep.mubr.bf16.mxu0 %v7244
        %7442 = vmatmul.mubr.bf16.gmra.mrb[0].mxu0 %v7243
        %v7443 = vpop.f32.mrb[0].mxu0
        %v7444 = vadd.f32 %v7288, %v7443
        %v7445 = vpop.f32.mrb[0].mxu0
        %v7446 = vpop.f32.mrb[0].mxu0
        %v7447 = vadd.f32 %v7288, %v7446
        %v7448 = vpop.f32.mrb[0].mxu0
        %7449 = vmatprep.mubr.bf16.mxu0 %v7246
        %7450 = vmatmul.mubr.bf16.gmra.mrb[0].mxu0 %v7245
        %v7451 = vpop.f32.mrb[0].mxu0
        %v7452 = vadd.f32 %v7288, %v7451
        %v7453 = vpop.f32.mrb[0].mxu0
        %v7454 = vpop.f32.mrb[0].mxu0
        %v7455 = vadd.f32 %v7288, %v7454
        %v7456 = vpop.f32.mrb[0].mxu0
        %7457 = vmatprep.mubr.bf16.mxu0 %v7248
        %7458 = vmatmul.mubr.bf16.gmra.mrb[0].mxu0 %v7247
        %v7459 = vpop.f32.mrb[0].mxu0
        %v7460 = vadd.f32 %v7288, %v7459
        %v7461 = vpop.f32.mrb[0].mxu0
        %v7462 = vpop.f32.mrb[0].mxu0
        %v7463 = vadd.f32 %v7288, %v7462
        %v7464 = vpop.f32.mrb[0].mxu0
        %7465 = vmatprep.mubr.bf16.mxu0 %v7250
        %7466 = vmatmul.mubr.bf16.gmra.mrb[0].mxu0 %v7249
        %v7467 = vpop.f32.mrb[0].mxu0
        %v7468 = vadd.f32 %v7288, %v7467
        %v7469 = vpop.f32.mrb[0].mxu0
        %v7470 = vpop.f32.mrb[0].mxu0
        %v7471 = vadd.f32 %v7288, %v7470
        %v7472 = vpop.f32.mrb[0].mxu0
        %7473 = vmatprep.mubr.bf16.mxu0 %v7252
        %7474 = vmatmul.mubr.bf16.gmra.mrb[0].mxu0 %v7251
        %v7475 = vpop.f32.mrb[0].mxu0
        %v7476 = vadd.f32 %v7288, %v7475
        %v7477 = vpop.f32.mrb[0].mxu0
        %v7478 = vpop.f32.mrb[0].mxu0
        %v7479 = vadd.f32 %v7288, %v7478
        %v7480 = vpop.f32.mrb[0].mxu0
        %7481 = vdwg.mxu0
        %v7482 = vadd.f32 %v7420, %v6960
        %v7483 = vadd.f32 %v7423, %v6961
        %v7484 = vadd.f32 %v7428, %v6962
        %v7485 = vadd.f32 %v7431, %v6963
        %v7486 = vadd.f32 %v7436, %v6964
        %v7487 = vadd.f32 %v7439, %v6965
        %v7488 = vadd.f32 %v7444, %v6966
        %v7489 = vadd.f32 %v7447, %v6967
        %v7490 = vadd.f32 %v7452, %v6968
        %v7491 = vadd.f32 %v7455, %v6969
        %v7492 = vadd.f32 %v7460, %v6970
        %v7493 = vadd.f32 %v7463, %v6971
        %v7494 = vadd.f32 %v7468, %v6972
        %v7495 = vadd.f32 %v7471, %v6973
        %v7496 = vadd.f32 %v7476, %v6974
        %v7497 = vadd.f32 %v7479, %v6975
        %7498 = vadd.xlane.f32.xlu0 %v7482
        %v7499 = vpop.xlane.xlu0 %7498
        %7500 = vadd.xlane.f32.xlu0 %v7483
        %v7501 = vpop.xlane.xlu0 %7500
        %7502 = vadd.xlane.f32.xlu0 %v7484
        %v7503 = vpop.xlane.xlu0 %7502
        %7504 = vadd.xlane.f32.xlu0 %v7485
        %v7505 = vpop.xlane.xlu0 %7504
        %7506 = vadd.xlane.f32.xlu0 %v7486
        %v7507 = vpop.xlane.xlu0 %7506
        %7508 = vadd.xlane.f32.xlu0 %v7487
        %v7509 = vpop.xlane.xlu0 %7508
        %7510 = vadd.xlane.f32.xlu0 %v7488
        %v7511 = vpop.xlane.xlu0 %7510
        %7512 = vadd.xlane.f32.xlu0 %v7489
        %v7513 = vpop.xlane.xlu0 %7512
        %7514 = vadd.xlane.f32.xlu0 %v7490
        %v7515 = vpop.xlane.xlu0 %7514
        %7516 = vadd.xlane.f32.xlu0 %v7491
        %v7517 = vpop.xlane.xlu0 %7516
        %7518 = vadd.xlane.f32.xlu0 %v7492
        %v7519 = vpop.xlane.xlu0 %7518
        %7520 = vadd.xlane.f32.xlu0 %v7493
        %v7521 = vpop.xlane.xlu0 %7520
        %7522 = vadd.xlane.f32.xlu0 %v7494
        %v7523 = vpop.xlane.xlu0 %7522
        %7524 = vadd.xlane.f32.xlu0 %v7495
        %v7525 = vpop.xlane.xlu0 %7524
        %7526 = vadd.xlane.f32.xlu0 %v7496
        %v7527 = vpop.xlane.xlu0 %7526
        %7528 = vadd.xlane.f32.xlu0 %v7497
        %v7529 = vpop.xlane.xlu0 %7528
        %v7530 = vmul.f32 %v7499, %v3740
        %v7531 = vmul.f32 %v7501, %v3740
        %v7532 = vmul.f32 %v7503, %v3740
        %v7533 = vmul.f32 %v7505, %v3740
        %v7534 = vmul.f32 %v7507, %v3740
        %v7535 = vmul.f32 %v7509, %v3740
        %v7536 = vmul.f32 %v7511, %v3740
        %v7537 = vmul.f32 %v7513, %v3740
        %v7538 = vmul.f32 %v7515, %v3740
        %v7539 = vmul.f32 %v7517, %v3740
        %v7540 = vmul.f32 %v7519, %v3740
        %v7541 = vmul.f32 %v7521, %v3740
        %v7542 = vmul.f32 %v7523, %v3740
        %v7543 = vmul.f32 %v7525, %v3740
        %v7544 = vmul.f32 %v7527, %v3740
        %v7545 = vmul.f32 %v7529, %v3740
        %v7546 = vsub.f32 %v7482, %v7530
        %v7547 = vsub.f32 %v7483, %v7531
        %v7548 = vsub.f32 %v7484, %v7532
        %v7549 = vsub.f32 %v7485, %v7533
        %v7550 = vsub.f32 %v7486, %v7534
        %v7551 = vsub.f32 %v7487, %v7535
        %v7552 = vsub.f32 %v7488, %v7536
        %v7553 = vsub.f32 %v7489, %v7537
        %v7554 = vsub.f32 %v7490, %v7538
        %v7555 = vsub.f32 %v7491, %v7539
        %v7556 = vsub.f32 %v7492, %v7540
        %v7557 = vsub.f32 %v7493, %v7541
        %v7558 = vsub.f32 %v7494, %v7542
        %v7559 = vsub.f32 %v7495, %v7543
        %v7560 = vsub.f32 %v7496, %v7544
        %v7561 = vsub.f32 %v7497, %v7545
        %v7562 = vmul.f32 %v7546, %v7546
        %v7563 = vmul.f32 %v7547, %v7547
        %v7564 = vmul.f32 %v7548, %v7548
        %v7565 = vmul.f32 %v7549, %v7549
        %v7566 = vmul.f32 %v7550, %v7550
        %v7567 = vmul.f32 %v7551, %v7551
        %v7568 = vmul.f32 %v7552, %v7552
        %v7569 = vmul.f32 %v7553, %v7553
        %v7570 = vmul.f32 %v7554, %v7554
        %v7571 = vmul.f32 %v7555, %v7555
        %v7572 = vmul.f32 %v7556, %v7556
        %v7573 = vmul.f32 %v7557, %v7557
        %v7574 = vmul.f32 %v7558, %v7558
        %v7575 = vmul.f32 %v7559, %v7559
        %v7576 = vmul.f32 %v7560, %v7560
        %v7577 = vmul.f32 %v7561, %v7561
        %7578 = vadd.xlane.f32.xlu0 %v7562
        %v7579 = vpop.xlane.xlu0 %7578
        %7580 = vadd.xlane.f32.xlu0 %v7563
        %v7581 = vpop.xlane.xlu0 %7580
        %7582 = vadd.xlane.f32.xlu0 %v7564
        %v7583 = vpop.xlane.xlu0 %7582
        %7584 = vadd.xlane.f32.xlu0 %v7565
        %v7585 = vpop.xlane.xlu0 %7584
        %7586 = vadd.xlane.f32.xlu0 %v7566
        %v7587 = vpop.xlane.xlu0 %7586
        %7588 = vadd.xlane.f32.xlu0 %v7567
        %v7589 = vpop.xlane.xlu0 %7588
        %7590 = vadd.xlane.f32.xlu0 %v7568
        %v7591 = vpop.xlane.xlu0 %7590
        %7592 = vadd.xlane.f32.xlu0 %v7569
        %v7593 = vpop.xlane.xlu0 %7592
        %7594 = vadd.xlane.f32.xlu0 %v7570
        %v7595 = vpop.xlane.xlu0 %7594
        %7596 = vadd.xlane.f32.xlu0 %v7571
        %v7597 = vpop.xlane.xlu0 %7596
        %7598 = vadd.xlane.f32.xlu0 %v7572
        %v7599 = vpop.xlane.xlu0 %7598
        %7600 = vadd.xlane.f32.xlu0 %v7573
        %v7601 = vpop.xlane.xlu0 %7600
        %7602 = vadd.xlane.f32.xlu0 %v7574
        %v7603 = vpop.xlane.xlu0 %7602
        %7604 = vadd.xlane.f32.xlu0 %v7575
        %v7605 = vpop.xlane.xlu0 %7604
        %7606 = vadd.xlane.f32.xlu0 %v7576
        %v7607 = vpop.xlane.xlu0 %7606
        %7608 = vadd.xlane.f32.xlu0 %v7577
        %v7609 = vpop.xlane.xlu0 %7608
        %v7610 = vmul.f32 %v7579, %v3740
        %v7611 = vmul.f32 %v7581, %v3740
        %v7612 = vmul.f32 %v7583, %v3740
        %v7613 = vmul.f32 %v7585, %v3740
        %v7614 = vmul.f32 %v7587, %v3740
        %v7615 = vmul.f32 %v7589, %v3740
        %v7616 = vmul.f32 %v7591, %v3740
        %v7617 = vmul.f32 %v7593, %v3740
        %v7618 = vmul.f32 %v7595, %v3740
        %v7619 = vmul.f32 %v7597, %v3740
        %v7620 = vmul.f32 %v7599, %v3740
        %v7621 = vmul.f32 %v7601, %v3740
        %v7622 = vmul.f32 %v7603, %v3740
        %v7623 = vmul.f32 %v7605, %v3740
        %v7624 = vmul.f32 %v7607, %v3740
        %v7625 = vmul.f32 %v7609, %v3740
        %v7626 = vadd.f32 %v7610, 1e-12
        %v7627 = vadd.f32 %v7611, 1e-12
        %v7628 = vadd.f32 %v7612, 1e-12
        %v7629 = vadd.f32 %v7613, 1e-12
        %v7630 = vadd.f32 %v7614, 1e-12
        %v7631 = vadd.f32 %v7615, 1e-12
        %v7632 = vadd.f32 %v7616, 1e-12
        %v7633 = vadd.f32 %v7617, 1e-12
        %v7634 = vadd.f32 %v7618, 1e-12
        %v7635 = vadd.f32 %v7619, 1e-12
        %v7636 = vadd.f32 %v7620, 1e-12
        %v7637 = vadd.f32 %v7621, 1e-12
        %v7638 = vadd.f32 %v7622, 1e-12
        %v7639 = vadd.f32 %v7623, 1e-12
        %v7640 = vadd.f32 %v7624, 1e-12
        %v7641 = vadd.f32 %v7625, 1e-12
        %v7642 = vrsqrt.pop %v7626
        %v7643 = vrsqrt.pop %v7627
        %v7644 = vrsqrt.pop %v7628
        %v7645 = vrsqrt.pop %v7629
        %v7646 = vrsqrt.pop %v7630
        %v7647 = vrsqrt.pop %v7631
        %v7648 = vrsqrt.pop %v7632
        %v7649 = vrsqrt.pop %v7633
        %v7650 = vrsqrt.pop %v7634
        %v7651 = vrsqrt.pop %v7635
        %v7652 = vrsqrt.pop %v7636
        %v7653 = vrsqrt.pop %v7637
        %v7654 = vrsqrt.pop %v7638
        %v7655 = vrsqrt.pop %v7639
        %v7656 = vrsqrt.pop %v7640
        %v7657 = vrsqrt.pop %v7641
        %v7658 = vmul.f32 %v7546, %v7642
        %v7659 = vmul.f32 %v7547, %v7643
        %v7660 = vmul.f32 %v7548, %v7644
        %v7661 = vmul.f32 %v7549, %v7645
        %v7662 = vmul.f32 %v7550, %v7646
        %v7663 = vmul.f32 %v7551, %v7647
        %v7664 = vmul.f32 %v7552, %v7648
        %v7665 = vmul.f32 %v7553, %v7649
        %v7666 = vmul.f32 %v7554, %v7650
        %v7667 = vmul.f32 %v7555, %v7651
        %v7668 = vmul.f32 %v7556, %v7652
        %v7669 = vmul.f32 %v7557, %v7653
        %v7670 = vmul.f32 %v7558, %v7654
        %v7671 = vmul.f32 %v7559, %v7655
        %v7672 = vmul.f32 %v7560, %v7656
        %v7673 = vmul.f32 %v7561, %v7657
        %v7674 = vlaneseq
        %v7675 = vshrl.u32 %v7674, 7
        %v7676 = vsub.s32 5, %v7675
        %v7677 = vrot.slane %v885, %v7676
        %v7678 = vmul.f32 %v7677, %v7658
        %v7679 = vmul.f32 %v7677, %v7659
        %v7680 = vmul.f32 %v7677, %v7660
        %v7681 = vmul.f32 %v7677, %v7661
        %v7682 = vmul.f32 %v7677, %v7662
        %v7683 = vmul.f32 %v7677, %v7663
        %v7684 = vmul.f32 %v7677, %v7664
        %v7685 = vmul.f32 %v7677, %v7665
        %v7686 = vmul.f32 %v7677, %v7666
        %v7687 = vmul.f32 %v7677, %v7667
        %v7688 = vmul.f32 %v7677, %v7668
        %v7689 = vmul.f32 %v7677, %v7669
        %v7690 = vmul.f32 %v7677, %v7670
        %v7691 = vmul.f32 %v7677, %v7671
        %v7692 = vmul.f32 %v7677, %v7672
        %v7693 = vmul.f32 %v7677, %v7673
        %v7694 = vlaneseq
        %v7695 = vshrl.u32 %v7694, 7
        %v7696 = vsub.s32 6, %v7695
        %v7697 = vrot.slane %v885, %v7696
        %v7698 = vadd.f32 %v7678, %v7697
        %v7699 = vadd.f32 %v7679, %v7697
        %v7700 = vadd.f32 %v7680, %v7697
        %v7701 = vadd.f32 %v7681, %v7697
        %v7702 = vadd.f32 %v7682, %v7697
        %v7703 = vadd.f32 %v7683, %v7697
        %v7704 = vadd.f32 %v7684, %v7697
        %v7705 = vadd.f32 %v7685, %v7697
        %v7706 = vadd.f32 %v7686, %v7697
        %v7707 = vadd.f32 %v7687, %v7697
        %v7708 = vadd.f32 %v7688, %v7697
        %v7709 = vadd.f32 %v7689, %v7697
        %v7710 = vadd.f32 %v7690, %v7697
        %v7711 = vadd.f32 %v7691, %v7697
        %v7712 = vadd.f32 %v7692, %v7697
        %v7713 = vadd.f32 %v7693, %v7697
        %7714 = vst [vmem:[#allocation2] sm:$0xff] %v7698
        %7715 = vst [vmem:[#allocation2 + $0x8] sm:$0xff] %v7699
        %7716 = vst [vmem:[#allocation2 + $0x10] sm:$0xff] %v7700
        %7717 = vst [vmem:[#allocation2 + $0x18] sm:$0xff] %v7701
        %7718 = vst [vmem:[#allocation2 + $0x20] sm:$0xff] %v7702
        %7719 = vst [vmem:[#allocation2 + $0x28] sm:$0xff] %v7703
        %7720 = vst [vmem:[#allocation2 + $0x30] sm:$0xff] %v7704
        %7721 = vst [vmem:[#allocation2 + $0x38] sm:$0xff] %v7705
        %7722 = vst [vmem:[#allocation2 + $0x40] sm:$0xff] %v7706
        %7723 = vst [vmem:[#allocation2 + $0x48] sm:$0xff] %v7707
        %7724 = vst [vmem:[#allocation2 + $0x50] sm:$0xff] %v7708
        %7725 = vst [vmem:[#allocation2 + $0x58] sm:$0xff] %v7709
        %7726 = vst [vmem:[#allocation2 + $0x60] sm:$0xff] %v7710
        %7727 = vst [vmem:[#allocation2 + $0x68] sm:$0xff] %v7711
        %7728 = vst [vmem:[#allocation2 + $0x70] sm:$0xff] %v7712
        %7729 = vst [vmem:[#allocation2 + $0x78] sm:$0xff] %v7713
        %p7730 = scmp.eq.s32.totalorder %s33, 2
        // Predicated region
        $region125: #{tpu_custom_call.1} parent=71 // pred_check
          %p7731 = pneg %p7730
        $region126: #{tpu_custom_call.1} parent=71 // pred_check_branch
          %7733 = sbr.rel (%p7731) target = $region128
        $region127: #{tpu_custom_call.1} parent=71 // pred_region
          %7734 = vst [vmem:[#allocation19] sm:$0xff] %v7698
          %7735 = vst [vmem:[#allocation19 + $0x8] sm:$0xff] %v7699
          %7736 = vst [vmem:[#allocation19 + $0x10] sm:$0xff] %v7700
          %7737 = vst [vmem:[#allocation19 + $0x18] sm:$0xff] %v7701
          %7738 = vst [vmem:[#allocation19 + $0x20] sm:$0xff] %v7702
          %7739 = vst [vmem:[#allocation19 + $0x28] sm:$0xff] %v7703
          %7740 = vst [vmem:[#allocation19 + $0x30] sm:$0xff] %v7704
          %7741 = vst [vmem:[#allocation19 + $0x38] sm:$0xff] %v7705
          %7742 = vst [vmem:[#allocation19 + $0x40] sm:$0xff] %v7706
          %7743 = vst [vmem:[#allocation19 + $0x48] sm:$0xff] %v7707
          %7744 = vst [vmem:[#allocation19 + $0x50] sm:$0xff] %v7708
          %7745 = vst [vmem:[#allocation19 + $0x58] sm:$0xff] %v7709
          %7746 = vst [vmem:[#allocation19 + $0x60] sm:$0xff] %v7710
          %7747 = vst [vmem:[#allocation19 + $0x68] sm:$0xff] %v7711
          %7748 = vst [vmem:[#allocation19 + $0x70] sm:$0xff] %v7712
          %7749 = vst [vmem:[#allocation19 + $0x78] sm:$0xff] %v7713
        $region128: #{tpu_custom_call.1} parent=71 // pred_fallthru
          _
        // Predicated region
        $region129: #{tpu_custom_call.1} parent=71 // pred_check
          %p7750 = pneg %p396
        $region130: #{tpu_custom_call.1} parent=71 // pred_check_branch
          %7752 = sbr.rel (%p7750) target = $region132
        $region131: #{tpu_custom_call.1} parent=71 // pred_region
          %s7753 = smul.u32 16, %s32
          %s7755 = ssub.s32 2048, 2048
          %7756 = vsyncadd [#allocation5], %s7755
          %s7757 = smul.addr %s7753, 128
          %s7758 = scalar_lea.hbm %s13, %s7757
          %s7759 = sshll.u32 [#allocation19], 4
          %s7760 = int_to_ptr.vmem [resolvable:$true] %s7759
          %7765 = dma.vmem_to_hbm [thread:$0]  %s7760, 2048, %s7758, [#allocation5], 128, 128, 8
        $region132: #{tpu_custom_call.1} parent=71 // pred_fallthru
          _
        // Predicated region
        $region133: #{tpu_custom_call.1} parent=71 // pred_check
          %p7766 = pneg %p396
        $region134: #{tpu_custom_call.1} parent=71 // pred_check_branch
          %7768 = sbr.rel (%p7766) target = $region136
        $region135: #{tpu_custom_call.1} parent=71 // pred_region
          %7769 = dma.done [#allocation5], 2048
        $region136: #{tpu_custom_call.1} parent=71 // pred_fallthru
          _
      $region72: #{tpu_custom_call.1} parent=5 // pred_fallthru
        _
      %p7770 = scmp.le.s32.totalorder 2, %s23
      // Predicated region
      $region137: #{tpu_custom_call.1} parent=5 // pred_check
        %p7771 = pneg %p7770
      $region138: #{tpu_custom_call.1} parent=5 // pred_check_branch
        %7773 = sbr.rel (%p7771) target = $region140
      $region139: #{tpu_custom_call.1} parent=5 // pred_region
        %s7774 = ssub.s32 %s23, 2
      $region140: #{tpu_custom_call.1} parent=5 // pred_fallthru
        _
    $region6: #{tpu_custom_call.1} parent=1 // loop_footer
      %s27 = sadd.s32 1, %s23
    $region7: #{tpu_custom_call.1} parent=1 // loop_footer_branch
      %22 = sbr.rel target = $region3
    $region8: #{tpu_custom_call.1} parent=1 // loop_exit
      _
    %7775 = vsyncpa [#allocation4], 1
    %s7776 = scalar_lea.sflag [#allocation4], 1
    %7777 = vsyncpa %s7776, 1
    %7778 = vsyncpa [#allocation7], 1
    %7779 = vsyncpa [#allocation10], 1
    %7780 = vsyncpa [#allocation5], 1
    %s7781 = scalar_lea.sflag [#allocation5], 1
    %7782 = vsyncpa %s7781, 1

</llo_original>
